<compile_context>
chip_gen: v7x
topology: tpu7x:2x2x1
jax: 0.10.0
libtpu: 0.0.40
codegen_flags: <defaults>
</compile_context>

<pallas_src>
import functools

import jax
import jax.numpy as jnp
from jax import lax
from jax.experimental import pallas as pl
from jax.experimental.pallas import tpu as pltpu

NF = 64                 # feature width
K1 = 7 * 7 * 3          # F_ext first-stage im2col K
K1_PAD = 160            # padded to a lane/sublane-friendly multiple
N_BLOCKS = 16
N_AFF = N_BLOCKS + 2    # 16 body + hr + out affine modulations
N_HEAD = N_AFF * NF     # 1152 (= 9*128), lane-aligned prompt-head width


# --------------------------------------------------------------------------
# Pallas kernels
# --------------------------------------------------------------------------
def _trunk_kernel(H, W, C, n_blocks, x_ref, w_ref, b_ref, sc_ref, sh_ref, o_ref):
    """Fused SRResNet_AP trunk for one batch element (grid=(B,), 'parallel').

    x_ref : (1, H+2, W+2, C) zero-padded input (channels zero-padded 3->C)
    w_ref : (L, 9*C, C)      bf16 stacked conv weights (tap-major rows)
    b_ref : (L, 1, C)        f32 biases
    sc_ref/sh_ref : (1, n_blocks+2, 1, C) per-image affine scale/shift table
    o_ref : (1, H, W, C)
    """
    HW = H * W

    def pad_hw(interior):                              # (H, W, C) -> (H+2, W+2, C)
        zc = jnp.zeros((H, 1, C), jnp.float32)
        t = jnp.concatenate([zc, interior, zc], axis=1)
        zr = jnp.zeros((1, W + 2, C), jnp.float32)
        return jnp.concatenate([zr, t, zr], axis=0)

    def conv3x3(src_pad, w, b, act):
        # im2col in VMEM: 9 shifted windows -> (HW, 9*C), one deep-K matmul.
        cols = [src_pad[dy:dy + H, dx:dx + W, :]
                for dy in range(3) for dx in range(3)]
        slab = jnp.concatenate(cols, axis=-1).reshape(HW, 9 * C)
        acc = jnp.dot(slab.astype(jnp.bfloat16), w,
                      preferred_element_type=jnp.float32)
        acc = acc + b                                   # (HW, C) f32
        if act == "relu":
            acc = jnp.maximum(acc, 0.0)
        elif act == "lrelu":
            acc = jnp.where(acc >= 0.0, acc, 0.1 * acc)
        return acc

    # conv_first + lrelu
    feat = conv3x3(x_ref[0], w_ref[0], b_ref[0], "lrelu")          # (HW, C)

    # 16 residual blocks (conv-relu-conv + identity), each followed by the
    # prompt affine: feat = body*(1+scale) + shift   (== body*scale+shift+body)
    def block_body(blk, feat):
        li = 1 + 2 * blk
        t = conv3x3(pad_hw(feat.reshape(H, W, C)), w_ref[li], b_ref[li], "relu")
        body = feat + conv3x3(pad_hw(t.reshape(H, W, C)),
                              w_ref[li + 1], b_ref[li + 1], "none")
        return body * (1.0 + sc_ref[0, blk]) + sh_ref[0, blk]

    feat = lax.fori_loop(0, n_blocks, block_body, feat)

    li = 1 + 2 * n_blocks
    # conv_hr + lrelu + affine
    h = conv3x3(pad_hw(feat.reshape(H, W, C)), w_ref[li], b_ref[li], "lrelu")
    feat = h * (1.0 + sc_ref[0, n_blocks]) + sh_ref[0, n_blocks]
    # conv_last + affine (Cout 3 zero-padded to C; sliced back in the wrapper)
    h = conv3x3(pad_hw(feat.reshape(H, W, C)), w_ref[li + 1], b_ref[li + 1], "none")
    out = h * (1.0 + sc_ref[0, n_blocks + 1]) + sh_ref[0, n_blocks + 1]
    o_ref[...] = out.reshape(1, H, W, C)


def trunk_forward(xpad, w, b, scales, shifts):
    B, Hp2, Wp2, C = xpad.shape
    H, W = Hp2 - 2, Wp2 - 2
    L = w.shape[0]
    n_blocks = (L - 3) // 2
    n_aff = n_blocks + 2
    kernel = functools.partial(_trunk_kernel, H, W, C, n_blocks)
    return pl.pallas_call(
        kernel,
        out_shape=jax.ShapeDtypeStruct((B, H, W, C), jnp.float32),
        grid=(B,),
        in_specs=[
            pl.BlockSpec((1, Hp2, Wp2, C), lambda i: (i, 0, 0, 0)),
            pl.BlockSpec((L, 9 * C, C), lambda i: (0, 0, 0)),
            pl.BlockSpec((L, 1, C), lambda i: (0, 0, 0)),
            pl.BlockSpec((1, n_aff, 1, C), lambda i: (i, 0, 0, 0)),
            pl.BlockSpec((1, n_aff, 1, C), lambda i: (i, 0, 0, 0)),
        ],
        out_specs=pl.BlockSpec((1, H, W, C), lambda i: (i, 0, 0, 0)),
        compiler_params=pltpu.CompilerParams(
            dimension_semantics=("parallel",),
            vmem_limit_bytes=32 * 1024 * 1024),
    )(xpad, w, b, scales, shifts)


def _mm_relu_kernel(x_ref, w_ref, b_ref, o_ref):
    acc = jnp.dot(x_ref[...].astype(jnp.bfloat16), w_ref[...],
                  preferred_element_type=jnp.float32) + b_ref[...]
    o_ref[...] = jnp.maximum(acc, 0.0)


def mm_relu(x, w, b):
    """x: (M, K) f32, w: (K, N) bf16, b: (1, N) f32 -> relu(x@w + b), one step."""
    M, K = x.shape
    N = w.shape[-1]
    return pl.pallas_call(
        _mm_relu_kernel,
        out_shape=jax.ShapeDtypeStruct((M, N), jnp.float32),
        grid=(1,),
        in_specs=[pl.BlockSpec((M, K), lambda i: (0, 0)),
                  pl.BlockSpec((K, N), lambda i: (0, 0)),
                  pl.BlockSpec((1, N), lambda i: (0, 0))],
        out_specs=pl.BlockSpec((M, N), lambda i: (0, 0)),
    )(x, w, b)


def _fext_head_kernel(B, P, x_ref, w3_ref, b3_ref, sw_ref, sb_ref,
                      tw_ref, tb_ref, sc_ref, sh_ref):
    """F_ext stage 3 (conv3 as matmul + relu) + spatial mean + both prompt heads."""
    K = x_ref.shape[-1]
    C = w3_ref.shape[-1]
    x = x_ref[...].reshape(B * P, K).astype(jnp.bfloat16)
    h = jnp.dot(x, w3_ref[...], preferred_element_type=jnp.float32) + b3_ref[...]
    h = jnp.maximum(h, 0.0)
    prompt = jnp.mean(h.reshape(B, P, C), axis=1)        # (B, C) spatial mean
    pb = prompt.astype(jnp.bfloat16)
    sc_ref[...] = jnp.dot(pb, sw_ref[...],
                          preferred_element_type=jnp.float32) + sb_ref[...]
    sh_ref[...] = jnp.dot(pb, tw_ref[...],
                          preferred_element_type=jnp.float32) + tb_ref[...]


def fext_head(pat, w3, b3, sw, sb, tw, tb):
    B, P, K = pat.shape
    C = w3.shape[-1]
    N = sw.shape[-1]
    kernel = functools.partial(_fext_head_kernel, B, P)
    return pl.pallas_call(
        kernel,
        out_shape=(jax.ShapeDtypeStruct((B, N), jnp.float32),
                   jax.ShapeDtypeStruct((B, N), jnp.float32)),
        grid=(1,),
        in_specs=[pl.BlockSpec((B, P, K), lambda i: (0, 0, 0)),
                  pl.BlockSpec((K, C), lambda i: (0, 0)),
                  pl.BlockSpec((1, C), lambda i: (0, 0)),
                  pl.BlockSpec((C, N), lambda i: (0, 0)),
                  pl.BlockSpec((1, N), lambda i: (0, 0)),
                  pl.BlockSpec((C, N), lambda i: (0, 0)),
                  pl.BlockSpec((1, N), lambda i: (0, 0))],
        out_specs=(pl.BlockSpec((B, N), lambda i: (0, 0)),
                   pl.BlockSpec((B, N), lambda i: (0, 0))),
    )(pat, w3, b3, sw, sb, tw, tb)


# --------------------------------------------------------------------------
# JAX wrapper glue (layout plumbing only)
# --------------------------------------------------------------------------
def im2col(x, k, stride):
    """x: (B, H, W, C) already padded -> (B, Ho*Wo, k*k*C)."""
    B, H, W, C = x.shape
    Ho = (H - k) // stride + 1
    Wo = (W - k) // stride + 1
    cols = []
    for dy in range(k):
        for dx in range(k):
            cols.append(x[:, dy:dy + stride * (Ho - 1) + 1:stride,
                          dx:dx + stride * (Wo - 1) + 1:stride, :])
    patches = jnp.stack(cols, axis=3)                  # (B, Ho, Wo, k*k, C)
    return patches.reshape(B, Ho * Wo, k * k * C), Ho, Wo


def f_ext_and_heads(p_img, params):
    """F_ext (ZeroPad(1)+conv7s2+relu, 2x ZeroPad(1)+conv3s2+relu, spatial mean)
    fused with all 36 prompt Linear heads -> (scales, shifts), (B, N_AFF, 1, NF)."""
    B = p_img.shape[0]
    x = jnp.transpose(p_img, (0, 2, 3, 1))             # NCHW -> NHWC
    x = jnp.pad(x, ((0, 0), (1, 1), (1, 1), (0, 0)))
    pat, Ho, Wo = im2col(x, 7, 2)
    pat = jnp.pad(pat, ((0, 0), (0, 0), (0, K1_PAD - K1)))   # K 147 -> 160
    h = mm_relu(pat.reshape(B * Ho * Wo, K1_PAD), params["fe_w1"], params["fe_b1"])
    h = h.reshape(B, Ho, Wo, NF)

    h = jnp.pad(h, ((0, 0), (1, 1), (1, 1), (0, 0)))
    pat, Ho, Wo = im2col(h, 3, 2)
    h = mm_relu(pat.reshape(B * Ho * Wo, 9 * NF), params["fe_w2"], params["fe_b2"])
    h = h.reshape(B, Ho, Wo, NF)

    h = jnp.pad(h, ((0, 0), (1, 1), (1, 1), (0, 0)))
    pat, _, _ = im2col(h, 3, 2)                        # (B, 16, 576)
    scales, shifts = fext_head(pat, params["fe_w3"], params["fe_b3"],
                               params["scale_w"], params["scale_b"],
                               params["shift_w"], params["shift_b"])
    return (scales.reshape(B, N_AFF, 1, NF),
            shifts.reshape(B, N_AFF, 1, NF))


def bilinear_resize(x, scale):
    """F.interpolate(..., mode='bilinear', align_corners=False) on NHWC."""
    if scale == 1:
        return x
    B, H, W, C = x.shape
    Ho, Wo = H * scale, W * scale

    def coords(n_out, n_in):
        c = (jnp.arange(n_out, dtype=jnp.float32) + 0.5) / scale - 0.5
        c = jnp.clip(c, 0.0, n_in - 1.0)
        lo = jnp.floor(c).astype(jnp.int32)
        hi = jnp.minimum(lo + 1, n_in - 1)
        return lo, hi, c - lo.astype(jnp.float32)

    y0, y1, fy = coords(Ho, H)
    x0_, x1_, fx = coords(Wo, W)
    fx = fx[None, None, :, None]
    fy = fy[None, :, None, None]
    top = x[:, y0][:, :, x0_] * (1 - fx) + x[:, y0][:, :, x1_] * fx
    bot = x[:, y1][:, :, x0_] * (1 - fx) + x[:, y1][:, :, x1_] * fx
    return top * (1 - fy) + bot * fy


# --------------------------------------------------------------------------
# Parameters (deterministic synthetic init)
# --------------------------------------------------------------------------
def init_params(key):
    keys = iter(jax.random.split(key, 256))

    def nrm(shape, s=0.05):
        return s * jax.random.normal(next(keys), shape, jnp.float32)

    p = {}
    # F_ext
    p["fe_w1"] = jnp.pad(nrm((K1, NF)), ((0, K1_PAD - K1), (0, 0))).astype(jnp.bfloat16)
    p["fe_b1"] = nrm((1, NF), 0.01)
    p["fe_w2"] = nrm((9 * NF, NF)).astype(jnp.bfloat16)
    p["fe_b2"] = nrm((1, NF), 0.01)
    p["fe_w3"] = nrm((9 * NF, NF)).astype(jnp.bfloat16)
    p["fe_b3"] = nrm((1, NF), 0.01)

    # prompt Linear heads: 16 body + hr (64->64) + out (64->3, zero-padded to 64)
    def head():
        ws = [nrm((NF, NF)) for _ in range(N_AFF - 1)]
        ws.append(jnp.pad(nrm((NF, 3)), ((0, 0), (0, NF - 3))))
        bs = [nrm((NF,), 0.01) for _ in range(N_AFF - 1)]
        bs.append(jnp.pad(nrm((3,), 0.01), (0, NF - 3)))
        return (jnp.concatenate(ws, axis=1).astype(jnp.bfloat16),   # (64, 1152)
                jnp.concatenate(bs).reshape(1, N_HEAD))             # (1, 1152)

    p["scale_w"], p["scale_b"] = head()
    p["shift_w"], p["shift_b"] = head()

    # trunk: conv_first + 16*(conv,conv) + conv_hr + conv_last, stacked.
    # Each slab is (9, Cin, Cout) flattened tap-major to (576, 64).
    ws, bs = [], []
    ws.append(jnp.pad(nrm((9, 3, NF)), ((0, 0), (0, NF - 3), (0, 0))).reshape(9 * NF, NF))
    bs.append(nrm((NF,), 0.01))                                     # conv_first
    for _ in range(N_BLOCKS):
        for _ in range(2):
            ws.append(nrm((9, NF, NF)).reshape(9 * NF, NF))
            bs.append(nrm((NF,), 0.01))
    ws.append(nrm((9, NF, NF)).reshape(9 * NF, NF))                 # conv_hr
    bs.append(nrm((NF,), 0.01))
    ws.append(jnp.pad(nrm((9, NF, 3)), ((0, 0), (0, 0), (0, NF - 3))).reshape(9 * NF, NF))
    bs.append(jnp.pad(nrm((3,), 0.01), (0, NF - 3)))                # conv_last
    p["trunk_w"] = jnp.stack(ws).astype(jnp.bfloat16)               # (35, 576, 64)
    p["trunk_b"] = jnp.stack(bs).reshape(len(bs), 1, NF)            # (35, 1, 64)
    return p


# --------------------------------------------------------------------------
# Forward pass (SRResNet_AP)
# --------------------------------------------------------------------------
def srresnet_ap_forward(x0, x1, params, upscale=1):
    """x0: LR image (B,3,H,W) NCHW; x1: prompt image (B,3,Hp,Wp) NCHW."""
    scales, shifts = f_ext_and_heads(x1, params)

    x_nhwc = jnp.transpose(x0, (0, 2, 3, 1))                        # (B, H, W, 3)
    xpad = jnp.pad(x_nhwc, ((0, 0), (1, 1), (1, 1), (0, NF - 3)))   # halo + ch 3->64
    out64 = trunk_forward(xpad, params["trunk_w"], params["trunk_b"],
                          scales, shifts)                            # (B, H, W, 64)
    out = out64[..., :3]

    # TODO(synk): the reference arch has no pixel-shuffle, so upscale>1 makes
    # `out += base` shape-mismatched in PyTorch too; we run with upscale=1.
    base = bilinear_resize(x_nhwc, upscale)
    out = out + base
    return jnp.transpose(out, (0, 3, 1, 2))                          # back to NCHW


# --------------------------------------------------------------------------
if __name__ == "__main__":
    UPSCALE = 1
    key = jax.random.PRNGKey(0)
    kp, kx0, kx1 = jax.random.split(key, 3)
    params = init_params(kp)

    B, H, W = 2, 16, 16
    Hp = Wp = 32
    x0 = jax.random.normal(kx0, (B, 3, H, W), jnp.float32)          # LR image
    x1 = jax.random.normal(kx1, (B, 3, Hp, Wp), jnp.float32)        # prompt image

    fwd = jax.jit(lambda a, b, p: srresnet_ap_forward(a, b, p, upscale=UPSCALE))
    out = jax.block_until_ready(fwd(x0, x1, params))

    assert out.shape == (B, 3, H * UPSCALE, W * UPSCALE), out.shape
    assert bool(jnp.all(jnp.isfinite(out)))
    print("KERNEL_OK")
</pallas_src>

<mosaic_0001>
module attributes {stable_mosaic.version = 11 : i64} {
  func.func @_mm_relu_kernel(%arg0: i32, %arg1: memref<392x160xf32, #tpu.memory_space<vmem>>, %arg2: memref<160x64xbf16, #tpu.memory_space<vmem>>, %arg3: memref<1x64xf32, #tpu.memory_space<vmem>>, %arg4: memref<392x64xf32, #tpu.memory_space<vmem>>) attributes {dimension_semantics = [#tpu.dimension_semantics<arbitrary>], iteration_bounds = array<i64: 1>, scalar_prefetch = 0 : i64, scratch_operands = 0 : i64, tpu.core_type = #tpu.core_type<tc>, window_params = [{pipeline_mode = #tpu.pipeline_mode<synchronous>, transform_indices = @transform_0, window_bounds = array<i64: 392, 160>}, {pipeline_mode = #tpu.pipeline_mode<synchronous>, transform_indices = @transform_1, window_bounds = array<i64: 160, 64>}, {pipeline_mode = #tpu.pipeline_mode<synchronous>, transform_indices = @transform_2, window_bounds = array<i64: 1, 64>}, {pipeline_mode = #tpu.pipeline_mode<synchronous>, transform_indices = @transform_3, window_bounds = array<i64: 392, 64>}]} {
    %c0 = arith.constant 0 : index
    %c0_0 = arith.constant 0 : index
    %0 = vector.load %arg1[%c0, %c0_0] : memref<392x160xf32, #tpu.memory_space<vmem>>, vector<392x160xf32>
    %1 = arith.truncf %0 : vector<392x160xf32> to vector<392x160xbf16>
    %c0_1 = arith.constant 0 : index
    %c0_2 = arith.constant 0 : index
    %2 = vector.load %arg2[%c0_1, %c0_2] : memref<160x64xbf16, #tpu.memory_space<vmem>>, vector<160x64xbf16>
    %cst = arith.constant dense<0.000000e+00> : vector<392x64xf32>
    %3 = tpu.matmul %1, %2, %cst {dimension_numbers = #tpu.dot_dimension_numbers<[1], [0], [0], [1], [0, 0, 1, 1], [], []>} : vector<392x160xbf16>, vector<160x64xbf16>, vector<392x64xf32> -> vector<392x64xf32>
    %c0_3 = arith.constant 0 : index
    %c0_4 = arith.constant 0 : index
    %4 = vector.load %arg3[%c0_3, %c0_4] : memref<1x64xf32, #tpu.memory_space<vmem>>, vector<1x64xf32>
    %5 = vector.broadcast %4 : vector<1x64xf32> to vector<392x64xf32>
    %6 = arith.addf %3, %5 : vector<392x64xf32>
    %cst_5 = arith.constant 0.000000e+00 : f32
    %7 = vector.broadcast %cst_5 : f32 to vector<392x64xf32>
    %8 = arith.maximumf %6, %7 : vector<392x64xf32>
    %c0_6 = arith.constant 0 : index
    %c0_7 = arith.constant 0 : index
    %9 = vector.load %arg4[%c0_6, %c0_7] : memref<392x64xf32, #tpu.memory_space<vmem>>, vector<392x64xf32>
    tpu.vector_store %arg4[%c0_6, %c0_7], %8 {strides = array<i32>} : memref<392x64xf32, #tpu.memory_space<vmem>>, vector<392x64xf32>,
    return
  }
  func.func @transform_0(%arg0: i32) -> (i32, i32) {
    %c0_i32 = arith.constant 0 : i32
    %c0_i32_0 = arith.constant 0 : i32
    %c0_i32_1 = arith.constant 0 : i32
    return %c0_i32, %c0_i32_0 : i32, i32
  }
  func.func @transform_1(%arg0: i32) -> (i32, i32) {
    %c0_i32 = arith.constant 0 : i32
    %c0_i32_0 = arith.constant 0 : i32
    %c0_i32_1 = arith.constant 0 : i32
    return %c0_i32, %c0_i32_0 : i32, i32
  }
  func.func @transform_2(%arg0: i32) -> (i32, i32) {
    %c0_i32 = arith.constant 0 : i32
    %c0_i32_0 = arith.constant 0 : i32
    %c0_i32_1 = arith.constant 0 : i32
    return %c0_i32, %c0_i32_0 : i32, i32
  }
  func.func @transform_3(%arg0: i32) -> (i32, i32) {
    %c0_i32 = arith.constant 0 : i32
    %c0_i32_0 = arith.constant 0 : i32
    %c0_i32_1 = arith.constant 0 : i32
    return %c0_i32, %c0_i32_0 : i32, i32
  }
}

module attributes {stable_mosaic.version = 11 : i64} {
  func.func @_mm_relu_kernel(%arg0: i32, %arg1: memref<98x576xf32, #tpu.memory_space<vmem>>, %arg2: memref<576x64xbf16, #tpu.memory_space<vmem>>, %arg3: memref<1x64xf32, #tpu.memory_space<vmem>>, %arg4: memref<98x64xf32, #tpu.memory_space<vmem>>) attributes {dimension_semantics = [#tpu.dimension_semantics<arbitrary>], iteration_bounds = array<i64: 1>, scalar_prefetch = 0 : i64, scratch_operands = 0 : i64, tpu.core_type = #tpu.core_type<tc>, window_params = [{pipeline_mode = #tpu.pipeline_mode<synchronous>, transform_indices = @transform_0, window_bounds = array<i64: 98, 576>}, {pipeline_mode = #tpu.pipeline_mode<synchronous>, transform_indices = @transform_1, window_bounds = array<i64: 576, 64>}, {pipeline_mode = #tpu.pipeline_mode<synchronous>, transform_indices = @transform_2, window_bounds = array<i64: 1, 64>}, {pipeline_mode = #tpu.pipeline_mode<synchronous>, transform_indices = @transform_3, window_bounds = array<i64: 98, 64>}]} {
    %c0 = arith.constant 0 : index
    %c0_0 = arith.constant 0 : index
    %0 = vector.load %arg1[%c0, %c0_0] : memref<98x576xf32, #tpu.memory_space<vmem>>, vector<98x576xf32>
    %1 = arith.truncf %0 : vector<98x576xf32> to vector<98x576xbf16>
    %c0_1 = arith.constant 0 : index
    %c0_2 = arith.constant 0 : index
    %2 = vector.load %arg2[%c0_1, %c0_2] : memref<576x64xbf16, #tpu.memory_space<vmem>>, vector<576x64xbf16>
    %cst = arith.constant dense<0.000000e+00> : vector<98x64xf32>
    %3 = tpu.matmul %1, %2, %cst {dimension_numbers = #tpu.dot_dimension_numbers<[1], [0], [0], [1], [0, 0, 1, 1], [], []>} : vector<98x576xbf16>, vector<576x64xbf16>, vector<98x64xf32> -> vector<98x64xf32>
    %c0_3 = arith.constant 0 : index
    %c0_4 = arith.constant 0 : index
    %4 = vector.load %arg3[%c0_3, %c0_4] : memref<1x64xf32, #tpu.memory_space<vmem>>, vector<1x64xf32>
    %5 = vector.broadcast %4 : vector<1x64xf32> to vector<98x64xf32>
    %6 = arith.addf %3, %5 : vector<98x64xf32>
    %cst_5 = arith.constant 0.000000e+00 : f32
    %7 = vector.broadcast %cst_5 : f32 to vector<98x64xf32>
    %8 = arith.maximumf %6, %7 : vector<98x64xf32>
    %c0_6 = arith.constant 0 : index
    %c0_7 = arith.constant 0 : index
    %9 = vector.load %arg4[%c0_6, %c0_7] : memref<98x64xf32, #tpu.memory_space<vmem>>, vector<98x64xf32>
    tpu.vector_store %arg4[%c0_6, %c0_7], %8 {strides = array<i32>} : memref<98x64xf32, #tpu.memory_space<vmem>>, vector<98x64xf32>,
    return
  }
  func.func @transform_0(%arg0: i32) -> (i32, i32) {
    %c0_i32 = arith.constant 0 : i32
    %c0_i32_0 = arith.constant 0 : i32
    %c0_i32_1 = arith.constant 0 : i32
    return %c0_i32, %c0_i32_0 : i32, i32
  }
  func.func @transform_1(%arg0: i32) -> (i32, i32) {
    %c0_i32 = arith.constant 0 : i32
    %c0_i32_0 = arith.constant 0 : i32
    %c0_i32_1 = arith.constant 0 : i32
    return %c0_i32, %c0_i32_0 : i32, i32
  }
  func.func @transform_2(%arg0: i32) -> (i32, i32) {
    %c0_i32 = arith.constant 0 : i32
    %c0_i32_0 = arith.constant 0 : i32
    %c0_i32_1 = arith.constant 0 : i32
    return %c0_i32, %c0_i32_0 : i32, i32
  }
  func.func @transform_3(%arg0: i32) -> (i32, i32) {
    %c0_i32 = arith.constant 0 : i32
    %c0_i32_0 = arith.constant 0 : i32
    %c0_i32_1 = arith.constant 0 : i32
    return %c0_i32, %c0_i32_0 : i32, i32
  }
}

module attributes {stable_mosaic.version = 11 : i64} {
  func.func @_fext_head_kernel(%arg0: i32, %arg1: memref<2x16x576xf32, #tpu.memory_space<vmem>>, %arg2: memref<576x64xbf16, #tpu.memory_space<vmem>>, %arg3: memref<1x64xf32, #tpu.memory_space<vmem>>, %arg4: memref<64x1152xbf16, #tpu.memory_space<vmem>>, %arg5: memref<1x1152xf32, #tpu.memory_space<vmem>>, %arg6: memref<64x1152xbf16, #tpu.memory_space<vmem>>, %arg7: memref<1x1152xf32, #tpu.memory_space<vmem>>, %arg8: memref<2x1152xf32, #tpu.memory_space<vmem>>, %arg9: memref<2x1152xf32, #tpu.memory_space<vmem>>) attributes {dimension_semantics = [#tpu.dimension_semantics<arbitrary>], iteration_bounds = array<i64: 1>, scalar_prefetch = 0 : i64, scratch_operands = 0 : i64, tpu.core_type = #tpu.core_type<tc>, window_params = [{pipeline_mode = #tpu.pipeline_mode<synchronous>, transform_indices = @transform_0, window_bounds = array<i64: 2, 16, 576>}, {pipeline_mode = #tpu.pipeline_mode<synchronous>, transform_indices = @transform_1, window_bounds = array<i64: 576, 64>}, {pipeline_mode = #tpu.pipeline_mode<synchronous>, transform_indices = @transform_2, window_bounds = array<i64: 1, 64>}, {pipeline_mode = #tpu.pipeline_mode<synchronous>, transform_indices = @transform_3, window_bounds = array<i64: 64, 1152>}, {pipeline_mode = #tpu.pipeline_mode<synchronous>, transform_indices = @transform_4, window_bounds = array<i64: 1, 1152>}, {pipeline_mode = #tpu.pipeline_mode<synchronous>, transform_indices = @transform_5, window_bounds = array<i64: 64, 1152>}, {pipeline_mode = #tpu.pipeline_mode<synchronous>, transform_indices = @transform_6, window_bounds = array<i64: 1, 1152>}, {pipeline_mode = #tpu.pipeline_mode<synchronous>, transform_indices = @transform_7, window_bounds = array<i64: 2, 1152>}, {pipeline_mode = #tpu.pipeline_mode<synchronous>, transform_indices = @transform_8, window_bounds = array<i64: 2, 1152>}]} {
    %c0 = arith.constant 0 : index
    %c0_0 = arith.constant 0 : index
    %c0_1 = arith.constant 0 : index
    %0 = vector.load %arg1[%c0, %c0_0, %c0_1] : memref<2x16x576xf32, #tpu.memory_space<vmem>>, vector<2x16x576xf32>
    %1 = vector.shape_cast %0 : vector<2x16x576xf32> to vector<32x576xf32>
    %2 = arith.truncf %1 : vector<32x576xf32> to vector<32x576xbf16>
    %c0_2 = arith.constant 0 : index
    %c0_3 = arith.constant 0 : index
    %3 = vector.load %arg2[%c0_2, %c0_3] : memref<576x64xbf16, #tpu.memory_space<vmem>>, vector<576x64xbf16>
    %cst = arith.constant dense<0.000000e+00> : vector<32x64xf32>
    %4 = tpu.matmul %2, %3, %cst {dimension_numbers = #tpu.dot_dimension_numbers<[1], [0], [0], [1], [0, 0, 1, 1], [], []>} : vector<32x576xbf16>, vector<576x64xbf16>, vector<32x64xf32> -> vector<32x64xf32>
    %c0_4 = arith.constant 0 : index
    %c0_5 = arith.constant 0 : index
    %5 = vector.load %arg3[%c0_4, %c0_5] : memref<1x64xf32, #tpu.memory_space<vmem>>, vector<1x64xf32>
    %6 = vector.broadcast %5 : vector<1x64xf32> to vector<32x64xf32>
    %7 = arith.addf %4, %6 : vector<32x64xf32>
    %cst_6 = arith.constant 0.000000e+00 : f32
    %8 = vector.broadcast %cst_6 : f32 to vector<32x64xf32>
    %9 = arith.maximumf %7, %8 : vector<32x64xf32>
    %10 = vector.shape_cast %9 : vector<32x64xf32> to vector<2x16x64xf32>
    %cst_7 = arith.constant dense<0.000000e+00> : vector<2x64xf32>
    %11 = vector.multi_reduction <add>, %10, %cst_7 [1] : vector<2x16x64xf32> to vector<2x64xf32>
    %cst_8 = arith.constant 1.600000e+01 : f32
    %12 = vector.broadcast %cst_8 : f32 to vector<2x64xf32>
    %13 = arith.divf %11, %12 : vector<2x64xf32>
    %14 = arith.truncf %13 : vector<2x64xf32> to vector<2x64xbf16>
    %c0_9 = arith.constant 0 : index
    %c0_10 = arith.constant 0 : index
    %15 = vector.load %arg4[%c0_9, %c0_10] : memref<64x1152xbf16, #tpu.memory_space<vmem>>, vector<64x1152xbf16>
    %cst_11 = arith.constant dense<0.000000e+00> : vector<2x1152xf32>
    %16 = tpu.matmul %14, %15, %cst_11 {dimension_numbers = #tpu.dot_dimension_numbers<[1], [0], [0], [1], [0, 0, 1, 1], [], []>} : vector<2x64xbf16>, vector<64x1152xbf16>, vector<2x1152xf32> -> vector<2x1152xf32>
    %c0_12 = arith.constant 0 : index
    %c0_13 = arith.constant 0 : index
    %17 = vector.load %arg5[%c0_12, %c0_13] : memref<1x1152xf32, #tpu.memory_space<vmem>>, vector<1x1152xf32>
    %18 = vector.broadcast %17 : vector<1x1152xf32> to vector<2x1152xf32>
    %19 = arith.addf %16, %18 : vector<2x1152xf32>
    %c0_14 = arith.constant 0 : index
    %c0_15 = arith.constant 0 : index
    %20 = vector.load %arg8[%c0_14, %c0_15] : memref<2x1152xf32, #tpu.memory_space<vmem>>, vector<2x1152xf32>
    tpu.vector_store %arg8[%c0_14, %c0_15], %19 {strides = array<i32>} : memref<2x1152xf32, #tpu.memory_space<vmem>>, vector<2x1152xf32>,
    %c0_16 = arith.constant 0 : index
    %c0_17 = arith.constant 0 : index
    %21 = vector.load %arg6[%c0_16, %c0_17] : memref<64x1152xbf16, #tpu.memory_space<vmem>>, vector<64x1152xbf16>
    %cst_18 = arith.constant dense<0.000000e+00> : vector<2x1152xf32>
    %22 = tpu.matmul %14, %21, %cst_18 {dimension_numbers = #tpu.dot_dimension_numbers<[1], [0], [0], [1], [0, 0, 1, 1], [], []>} : vector<2x64xbf16>, vector<64x1152xbf16>, vector<2x1152xf32> -> vector<2x1152xf32>
    %c0_19 = arith.constant 0 : index
    %c0_20 = arith.constant 0 : index
    %23 = vector.load %arg7[%c0_19, %c0_20] : memref<1x1152xf32, #tpu.memory_space<vmem>>, vector<1x1152xf32>
    %24 = vector.broadcast %23 : vector<1x1152xf32> to vector<2x1152xf32>
    %25 = arith.addf %22, %24 : vector<2x1152xf32>
    %c0_21 = arith.constant 0 : index
    %c0_22 = arith.constant 0 : index
    %26 = vector.load %arg9[%c0_21, %c0_22] : memref<2x1152xf32, #tpu.memory_space<vmem>>, vector<2x1152xf32>
    tpu.vector_store %arg9[%c0_21, %c0_22], %25 {strides = array<i32>} : memref<2x1152xf32, #tpu.memory_space<vmem>>, vector<2x1152xf32>,
    return
  }
  func.func @transform_0(%arg0: i32) -> (i32, i32, i32) {
    %c0_i32 = arith.constant 0 : i32
    %c0_i32_0 = arith.constant 0 : i32
    %c0_i32_1 = arith.constant 0 : i32
    %c0_i32_2 = arith.constant 0 : i32
    return %c0_i32, %c0_i32_0, %c0_i32_1 : i32, i32, i32
  }
  func.func @transform_1(%arg0: i32) -> (i32, i32) {
    %c0_i32 = arith.constant 0 : i32
    %c0_i32_0 = arith.constant 0 : i32
    %c0_i32_1 = arith.constant 0 : i32
    return %c0_i32, %c0_i32_0 : i32, i32
  }
  func.func @transform_2(%arg0: i32) -> (i32, i32) {
    %c0_i32 = arith.constant 0 : i32
    %c0_i32_0 = arith.constant 0 : i32
    %c0_i32_1 = arith.constant 0 : i32
    return %c0_i32, %c0_i32_0 : i32, i32
  }
  func.func @transform_3(%arg0: i32) -> (i32, i32) {
    %c0_i32 = arith.constant 0 : i32
    %c0_i32_0 = arith.constant 0 : i32
    %c0_i32_1 = arith.constant 0 : i32
    return %c0_i32, %c0_i32_0 : i32, i32
  }
  func.func @transform_4(%arg0: i32) -> (i32, i32) {
    %c0_i32 = arith.constant 0 : i32
    %c0_i32_0 = arith.constant 0 : i32
    %c0_i32_1 = arith.constant 0 : i32
    return %c0_i32, %c0_i32_0 : i32, i32
  }
  func.func @transform_5(%arg0: i32) -> (i32, i32) {
    %c0_i32 = arith.constant 0 : i32
    %c0_i32_0 = arith.constant 0 : i32
    %c0_i32_1 = arith.constant 0 : i32
    return %c0_i32, %c0_i32_0 : i32, i32
  }
  func.func @transform_6(%arg0: i32) -> (i32, i32) {
    %c0_i32 = arith.constant 0 : i32
    %c0_i32_0 = arith.constant 0 : i32
    %c0_i32_1 = arith.constant 0 : i32
    return %c0_i32, %c0_i32_0 : i32, i32
  }
  func.func @transform_7(%arg0: i32) -> (i32, i32) {
    %c0_i32 = arith.constant 0 : i32
    %c0_i32_0 = arith.constant 0 : i32
    %c0_i32_1 = arith.constant 0 : i32
    return %c0_i32, %c0_i32_0 : i32, i32
  }
  func.func @transform_8(%arg0: i32) -> (i32, i32) {
    %c0_i32 = arith.constant 0 : i32
    %c0_i32_0 = arith.constant 0 : i32
    %c0_i32_1 = arith.constant 0 : i32
    return %c0_i32, %c0_i32_0 : i32, i32
  }
}

module attributes {stable_mosaic.version = 11 : i64} {
  func.func @_trunk_kernel(%arg0: i32, %arg1: memref<1x18x18x64xf32, #tpu.memory_space<vmem>>, %arg2: memref<35x576x64xbf16, #tpu.memory_space<vmem>>, %arg3: memref<35x1x64xf32, #tpu.memory_space<vmem>>, %arg4: memref<1x18x1x64xf32, #tpu.memory_space<vmem>>, %arg5: memref<1x18x1x64xf32, #tpu.memory_space<vmem>>, %arg6: memref<1x16x16x64xf32, #tpu.memory_space<vmem>>) attributes {dimension_semantics = [#tpu.dimension_semantics<parallel>], iteration_bounds = array<i64: 2>, scalar_prefetch = 0 : i64, scratch_operands = 0 : i64, tpu.core_type = #tpu.core_type<tc>, window_params = [{transform_indices = @transform_0, window_bounds = array<i64: 1, 18, 18, 64>}, {pipeline_mode = #tpu.pipeline_mode<synchronous>, transform_indices = @transform_1, window_bounds = array<i64: 35, 576, 64>}, {pipeline_mode = #tpu.pipeline_mode<synchronous>, transform_indices = @transform_2, window_bounds = array<i64: 35, 1, 64>}, {transform_indices = @transform_3, window_bounds = array<i64: 1, 18, 1, 64>}, {transform_indices = @transform_4, window_bounds = array<i64: 1, 18, 1, 64>}, {transform_indices = @transform_5, window_bounds = array<i64: 1, 16, 16, 64>}]} {
    %c0 = arith.constant 0 : index
    %c0_0 = arith.constant 0 : index
    %c0_1 = arith.constant 0 : index
    %c0_2 = arith.constant 0 : index
    %0 = vector.load %arg1[%c0, %c0_0, %c0_1, %c0_2] : memref<1x18x18x64xf32, #tpu.memory_space<vmem>>, vector<1x18x18x64xf32>
    %1 = vector.shape_cast %0 : vector<1x18x18x64xf32> to vector<18x18x64xf32>
    %c0_3 = arith.constant 0 : index
    %c0_4 = arith.constant 0 : index
    %c0_5 = arith.constant 0 : index
    %2 = vector.load %arg2[%c0_3, %c0_4, %c0_5] : memref<35x576x64xbf16, #tpu.memory_space<vmem>>, vector<1x576x64xbf16>
    %3 = vector.shape_cast %2 : vector<1x576x64xbf16> to vector<576x64xbf16>
    %c0_6 = arith.constant 0 : index
    %c0_7 = arith.constant 0 : index
    %c0_8 = arith.constant 0 : index
    %4 = vector.load %arg3[%c0_6, %c0_7, %c0_8] : memref<35x1x64xf32, #tpu.memory_space<vmem>>, vector<1x1x64xf32>
    %5 = vector.shape_cast %4 : vector<1x1x64xf32> to vector<1x64xf32>
    %6 = vector.extract_strided_slice %1 {offsets = [0, 0, 0], sizes = [16, 16, 64], strides = [1, 1, 1]} : vector<18x18x64xf32> to vector<16x16x64xf32>
    %7 = vector.extract_strided_slice %1 {offsets = [0, 1, 0], sizes = [16, 16, 64], strides = [1, 1, 1]} : vector<18x18x64xf32> to vector<16x16x64xf32>
    %8 = vector.extract_strided_slice %1 {offsets = [0, 2, 0], sizes = [16, 16, 64], strides = [1, 1, 1]} : vector<18x18x64xf32> to vector<16x16x64xf32>
    %9 = vector.extract_strided_slice %1 {offsets = [1, 0, 0], sizes = [16, 16, 64], strides = [1, 1, 1]} : vector<18x18x64xf32> to vector<16x16x64xf32>
    %10 = vector.extract_strided_slice %1 {offsets = [1, 1, 0], sizes = [16, 16, 64], strides = [1, 1, 1]} : vector<18x18x64xf32> to vector<16x16x64xf32>
    %11 = vector.extract_strided_slice %1 {offsets = [1, 2, 0], sizes = [16, 16, 64], strides = [1, 1, 1]} : vector<18x18x64xf32> to vector<16x16x64xf32>
    %12 = vector.extract_strided_slice %1 {offsets = [2, 0, 0], sizes = [16, 16, 64], strides = [1, 1, 1]} : vector<18x18x64xf32> to vector<16x16x64xf32>
    %13 = vector.extract_strided_slice %1 {offsets = [2, 1, 0], sizes = [16, 16, 64], strides = [1, 1, 1]} : vector<18x18x64xf32> to vector<16x16x64xf32>
    %14 = vector.extract_strided_slice %1 {offsets = [2, 2, 0], sizes = [16, 16, 64], strides = [1, 1, 1]} : vector<18x18x64xf32> to vector<16x16x64xf32>
    %15 = tpu.concatenate %6, %7, %8, %9, %10, %11, %12, %13, %14 in 2 : vector<16x16x64xf32>, vector<16x16x64xf32>, vector<16x16x64xf32>, vector<16x16x64xf32>, vector<16x16x64xf32>, vector<16x16x64xf32>, vector<16x16x64xf32>, vector<16x16x64xf32>, vector<16x16x64xf32> -> vector<16x16x576xf32>
    %16 = vector.shape_cast %15 : vector<16x16x576xf32> to vector<256x576xf32>
    %17 = arith.truncf %16 : vector<256x576xf32> to vector<256x576xbf16>
    %cst = arith.constant dense<0.000000e+00> : vector<256x64xf32>
    %18 = tpu.matmul %17, %3, %cst {dimension_numbers = #tpu.dot_dimension_numbers<[1], [0], [0], [1], [0, 0, 1, 1], [], []>} : vector<256x576xbf16>, vector<576x64xbf16>, vector<256x64xf32> -> vector<256x64xf32>
    %19 = vector.broadcast %5 : vector<1x64xf32> to vector<256x64xf32>
    %20 = arith.addf %18, %19 : vector<256x64xf32>
    %cst_9 = arith.constant 0.000000e+00 : f32
    %21 = vector.broadcast %cst_9 : f32 to vector<256x64xf32>
    %22 = arith.cmpf oge, %20, %21 : vector<256x64xf32>
    %cst_10 = arith.constant 1.000000e-01 : f32
    %23 = vector.broadcast %cst_10 : f32 to vector<256x64xf32>
    %24 = arith.mulf %23, %20 : vector<256x64xf32>
    %25 = arith.select %22, %20, %24 : vector<256x64xi1>, vector<256x64xf32>
    %c0_i32 = arith.constant 0 : i32
    %c16_i32 = arith.constant 16 : i32
    %26 = arith.addi %c0_i32, %c16_i32 : i32
    %c1_i32 = arith.constant 1 : i32
    %27 = scf.for %arg7 = %c0_i32 to %26 step %c1_i32 iter_args(%arg8 = %25) -> (vector<256x64xf32>)  : i32 {
      %c2_i32 = arith.constant 2 : i32
      %103 = arith.muli %c2_i32, %arg7 : i32
      %c1_i32_50 = arith.constant 1 : i32
      %104 = arith.addi %c1_i32_50, %103 : i32
      %105 = vector.shape_cast %arg8 : vector<256x64xf32> to vector<16x16x64xf32>
      %cst_51 = arith.constant 0.000000e+00 : f32
      %106 = vector.broadcast %cst_51 : f32 to vector<16x1x64xf32>
      %107 = tpu.concatenate %106, %105, %106 in 1 : vector<16x1x64xf32>, vector<16x16x64xf32>, vector<16x1x64xf32> -> vector<16x18x64xf32>
      %cst_52 = arith.constant 0.000000e+00 : f32
      %108 = vector.broadcast %cst_52 : f32 to vector<1x18x64xf32>
      %109 = tpu.concatenate %108, %107, %108 in 0 : vector<1x18x64xf32>, vector<16x18x64xf32>, vector<1x18x64xf32> -> vector<18x18x64xf32>
      %110 = arith.index_cast %104 : i32 to index
      %c0_53 = arith.constant 0 : index
      %c0_54 = arith.constant 0 : index
      %111 = vector.load %arg2[%110, %c0_53, %c0_54] : memref<35x576x64xbf16, #tpu.memory_space<vmem>>, vector<1x576x64xbf16>
      %112 = vector.shape_cast %111 : vector<1x576x64xbf16> to vector<576x64xbf16>
      %113 = arith.index_cast %104 : i32 to index
      %c0_55 = arith.constant 0 : index
      %c0_56 = arith.constant 0 : index
      %114 = vector.load %arg3[%113, %c0_55, %c0_56] : memref<35x1x64xf32, #tpu.memory_space<vmem>>, vector<1x1x64xf32>
      %115 = vector.shape_cast %114 : vector<1x1x64xf32> to vector<1x64xf32>
      %116 = vector.extract_strided_slice %109 {offsets = [0, 0, 0], sizes = [16, 16, 64], strides = [1, 1, 1]} : vector<18x18x64xf32> to vector<16x16x64xf32>
      %117 = vector.extract_strided_slice %109 {offsets = [0, 1, 0], sizes = [16, 16, 64], strides = [1, 1, 1]} : vector<18x18x64xf32> to vector<16x16x64xf32>
      %118 = vector.extract_strided_slice %109 {offsets = [0, 2, 0], sizes = [16, 16, 64], strides = [1, 1, 1]} : vector<18x18x64xf32> to vector<16x16x64xf32>
      %119 = vector.extract_strided_slice %109 {offsets = [1, 0, 0], sizes = [16, 16, 64], strides = [1, 1, 1]} : vector<18x18x64xf32> to vector<16x16x64xf32>
      %120 = vector.extract_strided_slice %109 {offsets = [1, 1, 0], sizes = [16, 16, 64], strides = [1, 1, 1]} : vector<18x18x64xf32> to vector<16x16x64xf32>
      %121 = vector.extract_strided_slice %109 {offsets = [1, 2, 0], sizes = [16, 16, 64], strides = [1, 1, 1]} : vector<18x18x64xf32> to vector<16x16x64xf32>
      %122 = vector.extract_strided_slice %109 {offsets = [2, 0, 0], sizes = [16, 16, 64], strides = [1, 1, 1]} : vector<18x18x64xf32> to vector<16x16x64xf32>
      %123 = vector.extract_strided_slice %109 {offsets = [2, 1, 0], sizes = [16, 16, 64], strides = [1, 1, 1]} : vector<18x18x64xf32> to vector<16x16x64xf32>
      %124 = vector.extract_strided_slice %109 {offsets = [2, 2, 0], sizes = [16, 16, 64], strides = [1, 1, 1]} : vector<18x18x64xf32> to vector<16x16x64xf32>
      %125 = tpu.concatenate %116, %117, %118, %119, %120, %121, %122, %123, %124 in 2 : vector<16x16x64xf32>, vector<16x16x64xf32>, vector<16x16x64xf32>, vector<16x16x64xf32>, vector<16x16x64xf32>, vector<16x16x64xf32>, vector<16x16x64xf32>, vector<16x16x64xf32>, vector<16x16x64xf32> -> vector<16x16x576xf32>
      %126 = vector.shape_cast %125 : vector<16x16x576xf32> to vector<256x576xf32>
      %127 = arith.truncf %126 : vector<256x576xf32> to vector<256x576xbf16>
      %cst_57 = arith.constant dense<0.000000e+00> : vector<256x64xf32>
      %128 = tpu.matmul %127, %112, %cst_57 {dimension_numbers = #tpu.dot_dimension_numbers<[1], [0], [0], [1], [0, 0, 1, 1], [], []>} : vector<256x576xbf16>, vector<576x64xbf16>, vector<256x64xf32> -> vector<256x64xf32>
      %129 = vector.broadcast %115 : vector<1x64xf32> to vector<256x64xf32>
      %130 = arith.addf %128, %129 : vector<256x64xf32>
      %cst_58 = arith.constant 0.000000e+00 : f32
      %131 = vector.broadcast %cst_58 : f32 to vector<256x64xf32>
      %132 = arith.maximumf %130, %131 : vector<256x64xf32>
      %133 = vector.shape_cast %132 : vector<256x64xf32> to vector<16x16x64xf32>
      %cst_59 = arith.constant 0.000000e+00 : f32
      %134 = vector.broadcast %cst_59 : f32 to vector<16x1x64xf32>
      %135 = tpu.concatenate %134, %133, %134 in 1 : vector<16x1x64xf32>, vector<16x16x64xf32>, vector<16x1x64xf32> -> vector<16x18x64xf32>
      %cst_60 = arith.constant 0.000000e+00 : f32
      %136 = vector.broadcast %cst_60 : f32 to vector<1x18x64xf32>
      %137 = tpu.concatenate %136, %135, %136 in 0 : vector<1x18x64xf32>, vector<16x18x64xf32>, vector<1x18x64xf32> -> vector<18x18x64xf32>
      %c1_i32_61 = arith.constant 1 : i32
      %138 = arith.addi %104, %c1_i32_61 : i32
      %139 = arith.index_cast %138 : i32 to index
      %c0_62 = arith.constant 0 : index
      %c0_63 = arith.constant 0 : index
      %140 = vector.load %arg2[%139, %c0_62, %c0_63] : memref<35x576x64xbf16, #tpu.memory_space<vmem>>, vector<1x576x64xbf16>
      %141 = vector.shape_cast %140 : vector<1x576x64xbf16> to vector<576x64xbf16>
      %c1_i32_64 = arith.constant 1 : i32
      %142 = arith.addi %104, %c1_i32_64 : i32
      %143 = arith.index_cast %142 : i32 to index
      %c0_65 = arith.constant 0 : index
      %c0_66 = arith.constant 0 : index
      %144 = vector.load %arg3[%143, %c0_65, %c0_66] : memref<35x1x64xf32, #tpu.memory_space<vmem>>, vector<1x1x64xf32>
      %145 = vector.shape_cast %144 : vector<1x1x64xf32> to vector<1x64xf32>
      %146 = vector.extract_strided_slice %137 {offsets = [0, 0, 0], sizes = [16, 16, 64], strides = [1, 1, 1]} : vector<18x18x64xf32> to vector<16x16x64xf32>
      %147 = vector.extract_strided_slice %137 {offsets = [0, 1, 0], sizes = [16, 16, 64], strides = [1, 1, 1]} : vector<18x18x64xf32> to vector<16x16x64xf32>
      %148 = vector.extract_strided_slice %137 {offsets = [0, 2, 0], sizes = [16, 16, 64], strides = [1, 1, 1]} : vector<18x18x64xf32> to vector<16x16x64xf32>
      %149 = vector.extract_strided_slice %137 {offsets = [1, 0, 0], sizes = [16, 16, 64], strides = [1, 1, 1]} : vector<18x18x64xf32> to vector<16x16x64xf32>
      %150 = vector.extract_strided_slice %137 {offsets = [1, 1, 0], sizes = [16, 16, 64], strides = [1, 1, 1]} : vector<18x18x64xf32> to vector<16x16x64xf32>
      %151 = vector.extract_strided_slice %137 {offsets = [1, 2, 0], sizes = [16, 16, 64], strides = [1, 1, 1]} : vector<18x18x64xf32> to vector<16x16x64xf32>
      %152 = vector.extract_strided_slice %137 {offsets = [2, 0, 0], sizes = [16, 16, 64], strides = [1, 1, 1]} : vector<18x18x64xf32> to vector<16x16x64xf32>
      %153 = vector.extract_strided_slice %137 {offsets = [2, 1, 0], sizes = [16, 16, 64], strides = [1, 1, 1]} : vector<18x18x64xf32> to vector<16x16x64xf32>
      %154 = vector.extract_strided_slice %137 {offsets = [2, 2, 0], sizes = [16, 16, 64], strides = [1, 1, 1]} : vector<18x18x64xf32> to vector<16x16x64xf32>
      %155 = tpu.concatenate %146, %147, %148, %149, %150, %151, %152, %153, %154 in 2 : vector<16x16x64xf32>, vector<16x16x64xf32>, vector<16x16x64xf32>, vector<16x16x64xf32>, vector<16x16x64xf32>, vector<16x16x64xf32>, vector<16x16x64xf32>, vector<16x16x64xf32>, vector<16x16x64xf32> -> vector<16x16x576xf32>
      %156 = vector.shape_cast %155 : vector<16x16x576xf32> to vector<256x576xf32>
      %157 = arith.truncf %156 : vector<256x576xf32> to vector<256x576xbf16>
      %cst_67 = arith.constant dense<0.000000e+00> : vector<256x64xf32>
      %158 = tpu.matmul %157, %141, %cst_67 {dimension_numbers = #tpu.dot_dimension_numbers<[1], [0], [0], [1], [0, 0, 1, 1], [], []>} : vector<256x576xbf16>, vector<576x64xbf16>, vector<256x64xf32> -> vector<256x64xf32>
      %159 = vector.broadcast %145 : vector<1x64xf32> to vector<256x64xf32>
      %160 = arith.addf %158, %159 : vector<256x64xf32>
      %161 = arith.addf %arg8, %160 : vector<256x64xf32>
      %c0_68 = arith.constant 0 : index
      %162 = arith.index_cast %arg7 : i32 to index
      %c0_69 = arith.constant 0 : index
      %c0_70 = arith.constant 0 : index
      %163 = vector.load %arg4[%c0_68, %162, %c0_69, %c0_70] : memref<1x18x1x64xf32, #tpu.memory_space<vmem>>, vector<1x1x1x64xf32>
      %164 = vector.shape_cast %163 : vector<1x1x1x64xf32> to vector<1x64xf32>
      %cst_71 = arith.constant 1.000000e+00 : f32
      %165 = vector.broadcast %cst_71 : f32 to vector<1x64xf32>
      %166 = arith.addf %165, %164 : vector<1x64xf32>
      %167 = vector.broadcast %166 : vector<1x64xf32> to vector<256x64xf32>
      %168 = arith.mulf %161, %167 : vector<256x64xf32>
      %c0_72 = arith.constant 0 : index
      %169 = arith.index_cast %arg7 : i32 to index
      %c0_73 = arith.constant 0 : index
      %c0_74 = arith.constant 0 : index
      %170 = vector.load %arg5[%c0_72, %169, %c0_73, %c0_74] : memref<1x18x1x64xf32, #tpu.memory_space<vmem>>, vector<1x1x1x64xf32>
      %171 = vector.shape_cast %170 : vector<1x1x1x64xf32> to vector<1x64xf32>
      %172 = vector.broadcast %171 : vector<1x64xf32> to vector<256x64xf32>
      %173 = arith.addf %168, %172 : vector<256x64xf32>
      scf.yield %173 : vector<256x64xf32>
    }
    %c16_i32_11 = arith.constant 16 : i32
    %28 = vector.shape_cast %27 : vector<256x64xf32> to vector<16x16x64xf32>
    %cst_12 = arith.constant 0.000000e+00 : f32
    %29 = vector.broadcast %cst_12 : f32 to vector<16x1x64xf32>
    %30 = tpu.concatenate %29, %28, %29 in 1 : vector<16x1x64xf32>, vector<16x16x64xf32>, vector<16x1x64xf32> -> vector<16x18x64xf32>
    %cst_13 = arith.constant 0.000000e+00 : f32
    %31 = vector.broadcast %cst_13 : f32 to vector<1x18x64xf32>
    %32 = tpu.concatenate %31, %30, %31 in 0 : vector<1x18x64xf32>, vector<16x18x64xf32>, vector<1x18x64xf32> -> vector<18x18x64xf32>
    %c33 = arith.constant 33 : index
    %c0_14 = arith.constant 0 : index
    %c0_15 = arith.constant 0 : index
    %33 = vector.load %arg2[%c33, %c0_14, %c0_15] : memref<35x576x64xbf16, #tpu.memory_space<vmem>>, vector<1x576x64xbf16>
    %34 = vector.shape_cast %33 : vector<1x576x64xbf16> to vector<576x64xbf16>
    %c33_16 = arith.constant 33 : index
    %c0_17 = arith.constant 0 : index
    %c0_18 = arith.constant 0 : index
    %35 = vector.load %arg3[%c33_16, %c0_17, %c0_18] : memref<35x1x64xf32, #tpu.memory_space<vmem>>, vector<1x1x64xf32>
    %36 = vector.shape_cast %35 : vector<1x1x64xf32> to vector<1x64xf32>
    %37 = vector.extract_strided_slice %32 {offsets = [0, 0, 0], sizes = [16, 16, 64], strides = [1, 1, 1]} : vector<18x18x64xf32> to vector<16x16x64xf32>
    %38 = vector.extract_strided_slice %32 {offsets = [0, 1, 0], sizes = [16, 16, 64], strides = [1, 1, 1]} : vector<18x18x64xf32> to vector<16x16x64xf32>
    %39 = vector.extract_strided_slice %32 {offsets = [0, 2, 0], sizes = [16, 16, 64], strides = [1, 1, 1]} : vector<18x18x64xf32> to vector<16x16x64xf32>
    %40 = vector.extract_strided_slice %32 {offsets = [1, 0, 0], sizes = [16, 16, 64], strides = [1, 1, 1]} : vector<18x18x64xf32> to vector<16x16x64xf32>
    %41 = vector.extract_strided_slice %32 {offsets = [1, 1, 0], sizes = [16, 16, 64], strides = [1, 1, 1]} : vector<18x18x64xf32> to vector<16x16x64xf32>
    %42 = vector.extract_strided_slice %32 {offsets = [1, 2, 0], sizes = [16, 16, 64], strides = [1, 1, 1]} : vector<18x18x64xf32> to vector<16x16x64xf32>
    %43 = vector.extract_strided_slice %32 {offsets = [2, 0, 0], sizes = [16, 16, 64], strides = [1, 1, 1]} : vector<18x18x64xf32> to vector<16x16x64xf32>
    %44 = vector.extract_strided_slice %32 {offsets = [2, 1, 0], sizes = [16, 16, 64], strides = [1, 1, 1]} : vector<18x18x64xf32> to vector<16x16x64xf32>
    %45 = vector.extract_strided_slice %32 {offsets = [2, 2, 0], sizes = [16, 16, 64], strides = [1, 1, 1]} : vector<18x18x64xf32> to vector<16x16x64xf32>
    %46 = tpu.concatenate %37, %38, %39, %40, %41, %42, %43, %44, %45 in 2 : vector<16x16x64xf32>, vector<16x16x64xf32>, vector<16x16x64xf32>, vector<16x16x64xf32>, vector<16x16x64xf32>, vector<16x16x64xf32>, vector<16x16x64xf32>, vector<16x16x64xf32>, vector<16x16x64xf32> -> vector<16x16x576xf32>
    %47 = vector.shape_cast %46 : vector<16x16x576xf32> to vector<256x576xf32>
    %48 = arith.truncf %47 : vector<256x576xf32> to vector<256x576xbf16>
    %cst_19 = arith.constant dense<0.000000e+00> : vector<256x64xf32>
    %49 = tpu.matmul %48, %34, %cst_19 {dimension_numbers = #tpu.dot_dimension_numbers<[1], [0], [0], [1], [0, 0, 1, 1], [], []>} : vector<256x576xbf16>, vector<576x64xbf16>, vector<256x64xf32> -> vector<256x64xf32>
    %50 = vector.broadcast %36 : vector<1x64xf32> to vector<256x64xf32>
    %51 = arith.addf %49, %50 : vector<256x64xf32>
    %cst_20 = arith.constant 0.000000e+00 : f32
    %52 = vector.broadcast %cst_20 : f32 to vector<256x64xf32>
    %53 = arith.cmpf oge, %51, %52 : vector<256x64xf32>
    %cst_21 = arith.constant 1.000000e-01 : f32
    %54 = vector.broadcast %cst_21 : f32 to vector<256x64xf32>
    %55 = arith.mulf %54, %51 : vector<256x64xf32>
    %56 = arith.select %53, %51, %55 : vector<256x64xi1>, vector<256x64xf32>
    %c0_22 = arith.constant 0 : index
    %c16 = arith.constant 16 : index
    %c0_23 = arith.constant 0 : index
    %c0_24 = arith.constant 0 : index
    %57 = vector.load %arg4[%c0_22, %c16, %c0_23, %c0_24] : memref<1x18x1x64xf32, #tpu.memory_space<vmem>>, vector<1x1x1x64xf32>
    %58 = vector.shape_cast %57 : vector<1x1x1x64xf32> to vector<1x64xf32>
    %cst_25 = arith.constant 1.000000e+00 : f32
    %59 = vector.broadcast %cst_25 : f32 to vector<1x64xf32>
    %60 = arith.addf %59, %58 : vector<1x64xf32>
    %61 = vector.broadcast %60 : vector<1x64xf32> to vector<256x64xf32>
    %62 = arith.mulf %56, %61 : vector<256x64xf32>
    %c0_26 = arith.constant 0 : index
    %c16_27 = arith.constant 16 : index
    %c0_28 = arith.constant 0 : index
    %c0_29 = arith.constant 0 : index
    %63 = vector.load %arg5[%c0_26, %c16_27, %c0_28, %c0_29] : memref<1x18x1x64xf32, #tpu.memory_space<vmem>>, vector<1x1x1x64xf32>
    %64 = vector.shape_cast %63 : vector<1x1x1x64xf32> to vector<1x64xf32>
    %65 = vector.broadcast %64 : vector<1x64xf32> to vector<256x64xf32>
    %66 = arith.addf %62, %65 : vector<256x64xf32>
    %67 = vector.shape_cast %66 : vector<256x64xf32> to vector<16x16x64xf32>
    %cst_30 = arith.constant 0.000000e+00 : f32
    %68 = vector.broadcast %cst_30 : f32 to vector<16x1x64xf32>
    %69 = tpu.concatenate %68, %67, %68 in 1 : vector<16x1x64xf32>, vector<16x16x64xf32>, vector<16x1x64xf32> -> vector<16x18x64xf32>
    %cst_31 = arith.constant 0.000000e+00 : f32
    %70 = vector.broadcast %cst_31 : f32 to vector<1x18x64xf32>
    %71 = tpu.concatenate %70, %69, %70 in 0 : vector<1x18x64xf32>, vector<16x18x64xf32>, vector<1x18x64xf32> -> vector<18x18x64xf32>
    %c34 = arith.constant 34 : index
    %c0_32 = arith.constant 0 : index
    %c0_33 = arith.constant 0 : index
    %72 = vector.load %arg2[%c34, %c0_32, %c0_33] : memref<35x576x64xbf16, #tpu.memory_space<vmem>>, vector<1x576x64xbf16>
    %73 = vector.shape_cast %72 : vector<1x576x64xbf16> to vector<576x64xbf16>
    %c34_34 = arith.constant 34 : index
    %c0_35 = arith.constant 0 : index
    %c0_36 = arith.constant 0 : index
    %74 = vector.load %arg3[%c34_34, %c0_35, %c0_36] : memref<35x1x64xf32, #tpu.memory_space<vmem>>, vector<1x1x64xf32>
    %75 = vector.shape_cast %74 : vector<1x1x64xf32> to vector<1x64xf32>
    %76 = vector.extract_strided_slice %71 {offsets = [0, 0, 0], sizes = [16, 16, 64], strides = [1, 1, 1]} : vector<18x18x64xf32> to vector<16x16x64xf32>
    %77 = vector.extract_strided_slice %71 {offsets = [0, 1, 0], sizes = [16, 16, 64], strides = [1, 1, 1]} : vector<18x18x64xf32> to vector<16x16x64xf32>
    %78 = vector.extract_strided_slice %71 {offsets = [0, 2, 0], sizes = [16, 16, 64], strides = [1, 1, 1]} : vector<18x18x64xf32> to vector<16x16x64xf32>
    %79 = vector.extract_strided_slice %71 {offsets = [1, 0, 0], sizes = [16, 16, 64], strides = [1, 1, 1]} : vector<18x18x64xf32> to vector<16x16x64xf32>
    %80 = vector.extract_strided_slice %71 {offsets = [1, 1, 0], sizes = [16, 16, 64], strides = [1, 1, 1]} : vector<18x18x64xf32> to vector<16x16x64xf32>
    %81 = vector.extract_strided_slice %71 {offsets = [1, 2, 0], sizes = [16, 16, 64], strides = [1, 1, 1]} : vector<18x18x64xf32> to vector<16x16x64xf32>
    %82 = vector.extract_strided_slice %71 {offsets = [2, 0, 0], sizes = [16, 16, 64], strides = [1, 1, 1]} : vector<18x18x64xf32> to vector<16x16x64xf32>
    %83 = vector.extract_strided_slice %71 {offsets = [2, 1, 0], sizes = [16, 16, 64], strides = [1, 1, 1]} : vector<18x18x64xf32> to vector<16x16x64xf32>
    %84 = vector.extract_strided_slice %71 {offsets = [2, 2, 0], sizes = [16, 16, 64], strides = [1, 1, 1]} : vector<18x18x64xf32> to vector<16x16x64xf32>
    %85 = tpu.concatenate %76, %77, %78, %79, %80, %81, %82, %83, %84 in 2 : vector<16x16x64xf32>, vector<16x16x64xf32>, vector<16x16x64xf32>, vector<16x16x64xf32>, vector<16x16x64xf32>, vector<16x16x64xf32>, vector<16x16x64xf32>, vector<16x16x64xf32>, vector<16x16x64xf32> -> vector<16x16x576xf32>
    %86 = vector.shape_cast %85 : vector<16x16x576xf32> to vector<256x576xf32>
    %87 = arith.truncf %86 : vector<256x576xf32> to vector<256x576xbf16>
    %cst_37 = arith.constant dense<0.000000e+00> : vector<256x64xf32>
    %88 = tpu.matmul %87, %73, %cst_37 {dimension_numbers = #tpu.dot_dimension_numbers<[1], [0], [0], [1], [0, 0, 1, 1], [], []>} : vector<256x576xbf16>, vector<576x64xbf16>, vector<256x64xf32> -> vector<256x64xf32>
    %89 = vector.broadcast %75 : vector<1x64xf32> to vector<256x64xf32>
    %90 = arith.addf %88, %89 : vector<256x64xf32>
    %c0_38 = arith.constant 0 : index
    %c17 = arith.constant 17 : index
    %c0_39 = arith.constant 0 : index
    %c0_40 = arith.constant 0 : index
    %91 = vector.load %arg4[%c0_38, %c17, %c0_39, %c0_40] : memref<1x18x1x64xf32, #tpu.memory_space<vmem>>, vector<1x1x1x64xf32>
    %92 = vector.shape_cast %91 : vector<1x1x1x64xf32> to vector<1x64xf32>
    %cst_41 = arith.constant 1.000000e+00 : f32
    %93 = vector.broadcast %cst_41 : f32 to vector<1x64xf32>
    %94 = arith.addf %93, %92 : vector<1x64xf32>
    %95 = vector.broadcast %94 : vector<1x64xf32> to vector<256x64xf32>
    %96 = arith.mulf %90, %95 : vector<256x64xf32>
    %c0_42 = arith.constant 0 : index
    %c17_43 = arith.constant 17 : index
    %c0_44 = arith.constant 0 : index
    %c0_45 = arith.constant 0 : index
    %97 = vector.load %arg5[%c0_42, %c17_43, %c0_44, %c0_45] : memref<1x18x1x64xf32, #tpu.memory_space<vmem>>, vector<1x1x1x64xf32>
    %98 = vector.shape_cast %97 : vector<1x1x1x64xf32> to vector<1x64xf32>
    %99 = vector.broadcast %98 : vector<1x64xf32> to vector<256x64xf32>
    %100 = arith.addf %96, %99 : vector<256x64xf32>
    %101 = vector.shape_cast %100 : vector<256x64xf32> to vector<1x16x16x64xf32>
    %c0_46 = arith.constant 0 : index
    %c0_47 = arith.constant 0 : index
    %c0_48 = arith.constant 0 : index
    %c0_49 = arith.constant 0 : index
    %102 = vector.load %arg6[%c0_46, %c0_47, %c0_48, %c0_49] : memref<1x16x16x64xf32, #tpu.memory_space<vmem>>, vector<1x16x16x64xf32>
    tpu.vector_store %arg6[%c0_46, %c0_47, %c0_48, %c0_49], %101 {strides = array<i32>} : memref<1x16x16x64xf32, #tpu.memory_space<vmem>>, vector<1x16x16x64xf32>,
    return
  }
  func.func @transform_0(%arg0: i32) -> (i32, i32, i32, i32) {
    %c0_i32 = arith.constant 0 : i32
    %c0_i32_0 = arith.constant 0 : i32
    %c0_i32_1 = arith.constant 0 : i32
    %c0_i32_2 = arith.constant 0 : i32
    return %arg0, %c0_i32, %c0_i32_0, %c0_i32_1 : i32, i32, i32, i32
  }
  func.func @transform_1(%arg0: i32) -> (i32, i32, i32) {
    %c0_i32 = arith.constant 0 : i32
    %c0_i32_0 = arith.constant 0 : i32
    %c0_i32_1 = arith.constant 0 : i32
    %c0_i32_2 = arith.constant 0 : i32
    return %c0_i32, %c0_i32_0, %c0_i32_1 : i32, i32, i32
  }
  func.func @transform_2(%arg0: i32) -> (i32, i32, i32) {
    %c0_i32 = arith.constant 0 : i32
    %c0_i32_0 = arith.constant 0 : i32
    %c0_i32_1 = arith.constant 0 : i32
    %c0_i32_2 = arith.constant 0 : i32
    return %c0_i32, %c0_i32_0, %c0_i32_1 : i32, i32, i32
  }
  func.func @transform_3(%arg0: i32) -> (i32, i32, i32, i32) {
    %c0_i32 = arith.constant 0 : i32
    %c0_i32_0 = arith.constant 0 : i32
    %c0_i32_1 = arith.constant 0 : i32
    %c0_i32_2 = arith.constant 0 : i32
    return %arg0, %c0_i32, %c0_i32_0, %c0_i32_1 : i32, i32, i32, i32
  }
  func.func @transform_4(%arg0: i32) -> (i32, i32, i32, i32) {
    %c0_i32 = arith.constant 0 : i32
    %c0_i32_0 = arith.constant 0 : i32
    %c0_i32_1 = arith.constant 0 : i32
    %c0_i32_2 = arith.constant 0 : i32
    return %arg0, %c0_i32, %c0_i32_0, %c0_i32_1 : i32, i32, i32, i32
  }
  func.func @transform_5(%arg0: i32) -> (i32, i32, i32, i32) {
    %c0_i32 = arith.constant 0 : i32
    %c0_i32_0 = arith.constant 0 : i32
    %c0_i32_1 = arith.constant 0 : i32
    %c0_i32_2 = arith.constant 0 : i32
    return %arg0, %c0_i32, %c0_i32_0, %c0_i32_1 : i32, i32, i32, i32
  }
}

</mosaic_0001>

<llo_original>
// kernel: _lambda_.4
$region0: #{_lambda_.4}
  #allocation0 [shape = 'u32[]', space=smem, size = 0x4, offset = 0x4, fixed_abs, tag = 'smem constant byte address 0x4 - core index']
  #allocation1 [shape = 'u32[144,128]{1,0:T(1,128)}', space=vmem, size = 0x12000, scoped, tag = 'internal scratch']
  %s0 = inlined_call_operand.vmem [shape: f32[392,160], index: 0, kind: input, shape index: {}]
  %s1 = inlined_call_operand.vmem [shape: bf16[160,64], index: 1, kind: input, shape index: {}]
  %s2 = inlined_call_operand.vmem [shape: f32[1,64], index: 2, kind: input, shape index: {}]
  %s3 = inlined_call_operand.vmem [shape: f32[392,64], index: 3, kind: output, shape index: {}]
  %s4 = sld [smem:[#allocation0]]
  $region22: #{_lambda_.4} parent=0
    _
  %s6 = ssub.s32 1, %s4
  %s7 = scalar_select 0, %s6, %s4
  // Predicated region
  $region2: #{_lambda_.4} parent=0 // pred_check
    _
  $region3: #{_lambda_.4} parent=0 // pred_check_branch
    %9 = sbr.rel (0) target = $region5
  $region4: #{_lambda_.4} parent=0 // pred_region
    _
  $region5: #{_lambda_.4} parent=0 // pred_fallthru
    _
  // Predicated region
  $region6: #{_lambda_.4} parent=0 // pred_check
    _
  $region7: #{_lambda_.4} parent=0 // pred_check_branch
    %11 = sbr.rel (0) target = $region9
  $region8: #{_lambda_.4} parent=0 // pred_region
    _
  $region9: #{_lambda_.4} parent=0 // pred_fallthru
    _
  // Predicated region
  $region10: #{_lambda_.4} parent=0 // pred_check
    _
  $region11: #{_lambda_.4} parent=0 // pred_check_branch
    %13 = sbr.rel (0) target = $region13
  $region12: #{_lambda_.4} parent=0 // pred_region
    _
  $region13: #{_lambda_.4} parent=0 // pred_fallthru
    _
  %v15 = vld [vmem:[%s0] sm:$0xff]
  %v16 = vld [vmem:[%s0 + $0x8] sm:$0xff]
  %v17 = vld [vmem:[%s0 + $0x10] sm:$0xff]
  %v18 = vld [vmem:[%s0 + $0x18] sm:$0xff]
  %v19 = vld [vmem:[%s0 + $0x20] sm:$0xff]
  %v20 = vld [vmem:[%s0 + $0x28] sm:$0xff]
  %v21 = vld [vmem:[%s0 + $0x30] sm:$0xff]
  %v22 = vld [vmem:[%s0 + $0x38] sm:$0xff]
  %v23 = vld [vmem:[%s0 + $0x40] sm:$0xff]
  %v24 = vld [vmem:[%s0 + $0x48] sm:$0xff]
  %v25 = vld [vmem:[%s0 + $0x50] sm:$0xff]
  %v26 = vld [vmem:[%s0 + $0x58] sm:$0xff]
  %v27 = vld [vmem:[%s0 + $0x60] sm:$0xff]
  %v28 = vld [vmem:[%s0 + $0x68] sm:$0xff]
  %v29 = vld [vmem:[%s0 + $0x70] sm:$0xff]
  %v30 = vld [vmem:[%s0 + $0x78] sm:$0xff]
  %v31 = vld [vmem:[%s0 + $0x80] sm:$0xff]
  %v32 = vld [vmem:[%s0 + $0x88] sm:$0xff]
  %v33 = vld [vmem:[%s0 + $0x90] sm:$0xff]
  %v34 = vld [vmem:[%s0 + $0x98] sm:$0xff]
  %v35 = vld [vmem:[%s0 + $0xa0] sm:$0xff]
  %v36 = vld [vmem:[%s0 + $0xa8] sm:$0xff]
  %v37 = vld [vmem:[%s0 + $0xb0] sm:$0xff]
  %v38 = vld [vmem:[%s0 + $0xb8] sm:$0xff]
  %v39 = vld [vmem:[%s0 + $0xc0] sm:$0xff]
  %v40 = vld [vmem:[%s0 + $0xc8] sm:$0xff]
  %v41 = vld [vmem:[%s0 + $0xd0] sm:$0xff]
  %v42 = vld [vmem:[%s0 + $0xd8] sm:$0xff]
  %v43 = vld [vmem:[%s0 + $0xe0] sm:$0xff]
  %v44 = vld [vmem:[%s0 + $0xe8] sm:$0xff]
  %v45 = vld [vmem:[%s0 + $0xf0] sm:$0xff]
  %v46 = vld [vmem:[%s0 + $0xf8] sm:$0xff]
  %v47 = vld [vmem:[%s0 + $0x100] sm:$0xff]
  %v48 = vld [vmem:[%s0 + $0x108] sm:$0xff]
  %v49 = vld [vmem:[%s0 + $0x110] sm:$0xff]
  %v50 = vld [vmem:[%s0 + $0x118] sm:$0xff]
  %v51 = vld [vmem:[%s0 + $0x120] sm:$0xff]
  %v52 = vld [vmem:[%s0 + $0x128] sm:$0xff]
  %v53 = vld [vmem:[%s0 + $0x130] sm:$0xff]
  %v54 = vld [vmem:[%s0 + $0x138] sm:$0xff]
  %v55 = vld [vmem:[%s0 + $0x140] sm:$0xff]
  %v56 = vld [vmem:[%s0 + $0x148] sm:$0xff]
  %v57 = vld [vmem:[%s0 + $0x150] sm:$0xff]
  %v58 = vld [vmem:[%s0 + $0x158] sm:$0xff]
  %v59 = vld [vmem:[%s0 + $0x160] sm:$0xff]
  %v60 = vld [vmem:[%s0 + $0x168] sm:$0xff]
  %v61 = vld [vmem:[%s0 + $0x170] sm:$0xff]
  %v62 = vld [vmem:[%s0 + $0x178] sm:$0xff]
  %v63 = vld [vmem:[%s0 + $0x180] sm:$0xff]
  %v64 = vld [vmem:[%s0 + $0x188] sm:$0xff]
  %v65 = vld [vmem:[%s0 + $0x190] sm:$0xff]
  %v66 = vld [vmem:[%s0 + $0x198] sm:$0xff]
  %v67 = vld [vmem:[%s0 + $0x1a0] sm:$0xff]
  %v68 = vld [vmem:[%s0 + $0x1a8] sm:$0xff]
  %v69 = vld [vmem:[%s0 + $0x1b0] sm:$0xff]
  %v70 = vld [vmem:[%s0 + $0x1b8] sm:$0xff]
  %v71 = vld [vmem:[%s0 + $0x1c0] sm:$0xff]
  %v72 = vld [vmem:[%s0 + $0x1c8] sm:$0xff]
  %v73 = vld [vmem:[%s0 + $0x1d0] sm:$0xff]
  %v74 = vld [vmem:[%s0 + $0x1d8] sm:$0xff]
  %v75 = vld [vmem:[%s0 + $0x1e0] sm:$0xff]
  %v76 = vld [vmem:[%s0 + $0x1e8] sm:$0xff]
  %v77 = vld [vmem:[%s0 + $0x1f0] sm:$0xff]
  %v78 = vld [vmem:[%s0 + $0x1f8] sm:$0xff]
  %v79 = vld [vmem:[%s0 + $0x200] sm:$0xff]
  %v80 = vld [vmem:[%s0 + $0x208] sm:$0xff]
  %v81 = vld [vmem:[%s0 + $0x210] sm:$0xff]
  %v82 = vld [vmem:[%s0 + $0x218] sm:$0xff]
  %v83 = vld [vmem:[%s0 + $0x220] sm:$0xff]
  %v84 = vld [vmem:[%s0 + $0x228] sm:$0xff]
  %v85 = vld [vmem:[%s0 + $0x230] sm:$0xff]
  %v86 = vld [vmem:[%s0 + $0x238] sm:$0xff]
  %v87 = vld [vmem:[%s0 + $0x240] sm:$0xff]
  %v88 = vld [vmem:[%s0 + $0x248] sm:$0xff]
  %v89 = vld [vmem:[%s0 + $0x250] sm:$0xff]
  %v90 = vld [vmem:[%s0 + $0x258] sm:$0xff]
  %v91 = vld [vmem:[%s0 + $0x260] sm:$0xff]
  %v92 = vld [vmem:[%s0 + $0x268] sm:$0xff]
  %v93 = vld [vmem:[%s0 + $0x270] sm:$0xff]
  %v94 = vld [vmem:[%s0 + $0x278] sm:$0xff]
  %v95 = vld [vmem:[%s0 + $0x280] sm:$0xff]
  %v96 = vld [vmem:[%s0 + $0x288] sm:$0xff]
  %v97 = vld [vmem:[%s0 + $0x290] sm:$0xff]
  %v98 = vld [vmem:[%s0 + $0x298] sm:$0xff]
  %v99 = vld [vmem:[%s0 + $0x2a0] sm:$0xff]
  %v100 = vld [vmem:[%s0 + $0x2a8] sm:$0xff]
  %v101 = vld [vmem:[%s0 + $0x2b0] sm:$0xff]
  %v102 = vld [vmem:[%s0 + $0x2b8] sm:$0xff]
  %v103 = vld [vmem:[%s0 + $0x2c0] sm:$0xff]
  %v104 = vld [vmem:[%s0 + $0x2c8] sm:$0xff]
  %v105 = vld [vmem:[%s0 + $0x2d0] sm:$0xff]
  %v106 = vld [vmem:[%s0 + $0x2d8] sm:$0xff]
  %v107 = vld [vmem:[%s0 + $0x2e0] sm:$0xff]
  %v108 = vld [vmem:[%s0 + $0x2e8] sm:$0xff]
  %v109 = vld [vmem:[%s0 + $0x2f0] sm:$0xff]
  %v110 = vld [vmem:[%s0 + $0x2f8] sm:$0xff]
  %v111 = vld [vmem:[%s0 + $0x300] sm:$0xff]
  %v112 = vld [vmem:[%s0 + $0x308] sm:$0xff]
  %v113 = vpack.c.bf16 %v17, %v15
  %v114 = vpack.c.bf16 %v18, %v16
  %v115 = vpack.c.bf16 %v21, %v19
  %v116 = vpack.c.bf16 %v22, %v20
  %v117 = vpack.c.bf16 %v25, %v23
  %v118 = vpack.c.bf16 %v26, %v24
  %v119 = vpack.c.bf16 %v29, %v27
  %v120 = vpack.c.bf16 %v30, %v28
  %v121 = vpack.c.bf16 %v33, %v31
  %v122 = vpack.c.bf16 %v34, %v32
  %v123 = vpack.c.bf16 %v37, %v35
  %v124 = vpack.c.bf16 %v38, %v36
  %v125 = vpack.c.bf16 %v41, %v39
  %v126 = vpack.c.bf16 %v42, %v40
  %v127 = vpack.c.bf16 %v45, %v43
  %v128 = vpack.c.bf16 %v46, %v44
  %v129 = vpack.c.bf16 %v49, %v47
  %v130 = vpack.c.bf16 %v50, %v48
  %v131 = vpack.c.bf16 %v53, %v51
  %v132 = vpack.c.bf16 %v54, %v52
  %v133 = vpack.c.bf16 %v57, %v55
  %v134 = vpack.c.bf16 %v58, %v56
  %v135 = vpack.c.bf16 %v61, %v59
  %v136 = vpack.c.bf16 %v62, %v60
  %v137 = vpack.c.bf16 %v65, %v63
  %v138 = vpack.c.bf16 %v66, %v64
  %v139 = vpack.c.bf16 %v69, %v67
  %v140 = vpack.c.bf16 %v70, %v68
  %v141 = vpack.c.bf16 %v73, %v71
  %v142 = vpack.c.bf16 %v74, %v72
  %v143 = vpack.c.bf16 %v77, %v75
  %v144 = vpack.c.bf16 %v78, %v76
  %v145 = vpack.c.bf16 %v81, %v79
  %v146 = vpack.c.bf16 %v82, %v80
  %v147 = vpack.c.bf16 %v85, %v83
  %v148 = vpack.c.bf16 %v86, %v84
  %v149 = vpack.c.bf16 %v89, %v87
  %v150 = vpack.c.bf16 %v90, %v88
  %v151 = vpack.c.bf16 %v93, %v91
  %v152 = vpack.c.bf16 %v94, %v92
  %v153 = vpack.c.bf16 %v97, %v95
  %v154 = vpack.c.bf16 %v98, %v96
  %v155 = vpack.c.bf16 %v101, %v99
  %v156 = vpack.c.bf16 %v102, %v100
  %v157 = vpack.c.bf16 %v105, %v103
  %v158 = vpack.c.bf16 %v106, %v104
  %v159 = vpack.c.bf16 %v109, %v107
  %v160 = vpack.c.bf16 %v110, %v108
  %v161 = vpack.c.bf16 %v111, %v111
  %v162 = vpack.c.bf16 %v112, %v112
  %v163 = vld [vmem:[%s1] sm:$0xf]
  %v164 = vld [vmem:[%s1 + $0x4] sm:$0xf]
  %v165 = vld [vmem:[%s1 + $0x8] sm:$0xf]
  %v166 = vld [vmem:[%s1 + $0xc] sm:$0xf]
  %v167 = vld [vmem:[%s1 + $0x10] sm:$0xf]
  %v168 = vld [vmem:[%s1 + $0x14] sm:$0xf]
  %v169 = vld [vmem:[%s1 + $0x18] sm:$0xf]
  %v170 = vld [vmem:[%s1 + $0x1c] sm:$0xf]
  %v171 = vld [vmem:[%s1 + $0x20] sm:$0xf]
  %v172 = vld [vmem:[%s1 + $0x24] sm:$0xf]
  %v173 = vld [vmem:[%s1 + $0x28] sm:$0xf]
  %v174 = vld [vmem:[%s1 + $0x2c] sm:$0xf]
  %v175 = vld [vmem:[%s1 + $0x30] sm:$0xf]
  %v176 = vld [vmem:[%s1 + $0x34] sm:$0xf]
  %v177 = vld [vmem:[%s1 + $0x38] sm:$0xf]
  %v178 = vld [vmem:[%s1 + $0x3c] sm:$0xf]
  %v179 = vld [vmem:[%s1 + $0x40] sm:$0xf]
  %v180 = vld [vmem:[%s1 + $0x44] sm:$0xf]
  %v181 = vld [vmem:[%s1 + $0x48] sm:$0xf]
  %v182 = vld [vmem:[%s1 + $0x4c] sm:$0xf]
  %v183 = vld [vmem:[%s2] sm:$0x1]
  %v185 = vlaneseq
  %v186 = vshrl.u32 %v185, 7
  %v187 = vsub.s32 0, %v186
  %v188 = vrot.slane %v183, %v187
  %v210 = vunpack.c.l.b16 %v163
  %v211 = vunpack.c.l.b16 %v164
  %v212 = vunpack.c.l.b16 %v165
  %v213 = vunpack.c.l.b16 %v166
  %v214 = vunpack.c.l.b16 %v167
  %v215 = vunpack.c.l.b16 %v168
  %v216 = vunpack.c.l.b16 %v169
  %v217 = vunpack.c.l.b16 %v170
  %v218 = vunpack.c.l.b16 %v171
  %v219 = vunpack.c.l.b16 %v172
  %v220 = vunpack.c.l.b16 %v173
  %v221 = vunpack.c.l.b16 %v174
  %v222 = vunpack.c.l.b16 %v175
  %v223 = vunpack.c.l.b16 %v176
  %v224 = vunpack.c.l.b16 %v177
  %v225 = vunpack.c.l.b16 %v178
  %v226 = vunpack.c.l.b16 %v179
  %v227 = vunpack.c.l.b16 %v180
  %v228 = vunpack.c.l.b16 %v181
  %v229 = vunpack.c.l.b16 %v182
  %v230 = vpack.c.b16 %v211, %v210
  %v231 = vpack.c.b16 %v213, %v212
  %v232 = vpack.c.b16 %v215, %v214
  %v233 = vpack.c.b16 %v217, %v216
  %v234 = vpack.c.b16 %v219, %v218
  %v235 = vpack.c.b16 %v221, %v220
  %v236 = vpack.c.b16 %v223, %v222
  %v237 = vpack.c.b16 %v225, %v224
  %v238 = vpack.c.b16 %v227, %v226
  %v239 = vpack.c.b16 %v229, %v228
  %vm250 = vcmask 261120
  %v252 = vsel %vm250, %v114, 0
  %v255 = vsel %vm250, %v116, 0
  %v258 = vsel %vm250, %v118, 0
  %v261 = vsel %vm250, %v120, 0
  %v264 = vsel %vm250, %v122, 0
  %v267 = vsel %vm250, %v124, 0
  %v270 = vsel %vm250, %v126, 0
  %v273 = vsel %vm250, %v128, 0
  %v276 = vsel %vm250, %v130, 0
  %v279 = vsel %vm250, %v132, 0
  %v282 = vsel %vm250, %v134, 0
  %v285 = vsel %vm250, %v136, 0
  %v288 = vsel %vm250, %v138, 0
  %v291 = vsel %vm250, %v140, 0
  %v294 = vsel %vm250, %v142, 0
  %v297 = vsel %vm250, %v144, 0
  %v300 = vsel %vm250, %v146, 0
  %v303 = vsel %vm250, %v148, 0
  %v306 = vsel %vm250, %v150, 0
  %v309 = vsel %vm250, %v152, 0
  %v312 = vsel %vm250, %v154, 0
  %v315 = vsel %vm250, %v156, 0
  %v318 = vsel %vm250, %v158, 0
  %v321 = vsel %vm250, %v160, 0
  %v324 = vsel %vm250, %v162, 0
  %326 = vmatprep.subr.bf16.mxu0 0
  %327 = vmatpush1.bf16.msra.mxu0 %v230
  %328 = vmatprep.subr.bf16.mxu0 0
  %329 = vmatpush1.bf16.msra.mxu0 %v231
  %330 = vmatprep.subr.bf16.mxu0 0
  %331 = vmatpush1.bf16.msra.mxu0 %v232
  %332 = vmatprep.subr.bf16.mxu0 0
  %333 = vmatpush1.bf16.msra.mxu0 %v233
  %334 = vmatprep.subr.bf16.mxu0 0
  %335 = vmatpush1.bf16.msra.mxu0 %v234
  %336 = vmatprep.subr.bf16.mxu0 0
  %337 = vmatpush1.bf16.msra.mxu0 %v235
  %338 = vmatprep.subr.bf16.mxu0 0
  %339 = vmatpush1.bf16.msra.mxu0 %v236
  %340 = vmatprep.subr.bf16.mxu0 0
  %341 = vmatpush1.bf16.msra.mxu0 %v237
  %342 = vmatprep.subr.bf16.mxu0 0
  %343 = vmatpush1.bf16.msra.mxu0 %v238
  %344 = vmatprep.subr.bf16.mxu0 0
  %345 = vmatpush1.bf16.msra.mxu0 %v239
  %346 = vmatprep.subr.bf16.mxu0 0
  %347 = vmatpush1.bf16.msra.mxu0 0
  %348 = vmatprep.subr.bf16.mxu0 0
  %349 = vmatpush1.bf16.msra.mxu0 0
  %350 = vmatprep.subr.bf16.mxu0 0
  %351 = vmatpush1.bf16.msra.mxu0 0
  %352 = vmatprep.subr.bf16.mxu0 0
  %353 = vmatpush1.bf16.msra.mxu0 0
  %354 = vmatprep.subr.bf16.mxu0 0
  %355 = vmatpush1.bf16.msra.mxu0 0
  %356 = vmatprep.subr.bf16.mxu0 0
  %357 = vmatpush1.bf16.msra.mxu0 0
  %358 = vmatprep.mubr.bf16.mxu0 %v252
  %359 = vmatmul.mubr.bf16.gmra.mrb[0].mxu0 %v113
  %v360 = vpop.f32.mrb[0].mxu0
  %v361 = vadd.f32 %v188, %v360
  %v362 = vpop.f32.mrb[0].mxu0
  %v363 = vpop.f32.mrb[0].mxu0
  %v364 = vadd.f32 %v188, %v363
  %v365 = vpop.f32.mrb[0].mxu0
  %366 = vmatprep.mubr.bf16.mxu0 %v255
  %367 = vmatmul.mubr.bf16.gmra.mrb[0].mxu0 %v115
  %v368 = vpop.f32.mrb[0].mxu0
  %v369 = vadd.f32 %v188, %v368
  %v370 = vpop.f32.mrb[0].mxu0
  %v371 = vpop.f32.mrb[0].mxu0
  %v372 = vadd.f32 %v188, %v371
  %v373 = vpop.f32.mrb[0].mxu0
  %374 = vmatprep.mubr.bf16.mxu0 %v258
  %375 = vmatmul.mubr.bf16.gmra.mrb[0].mxu0 %v117
  %v376 = vpop.f32.mrb[0].mxu0
  %v377 = vadd.f32 %v188, %v376
  %v378 = vpop.f32.mrb[0].mxu0
  %v379 = vpop.f32.mrb[0].mxu0
  %v380 = vadd.f32 %v188, %v379
  %v381 = vpop.f32.mrb[0].mxu0
  %382 = vmatprep.mubr.bf16.mxu0 %v261
  %383 = vmatmul.mubr.bf16.gmra.mrb[0].mxu0 %v119
  %v384 = vpop.f32.mrb[0].mxu0
  %v385 = vadd.f32 %v188, %v384
  %v386 = vpop.f32.mrb[0].mxu0
  %v387 = vpop.f32.mrb[0].mxu0
  %v388 = vadd.f32 %v188, %v387
  %v389 = vpop.f32.mrb[0].mxu0
  %390 = vmatprep.mubr.bf16.mxu0 %v264
  %391 = vmatmul.mubr.bf16.gmra.mrb[0].mxu0 %v121
  %v392 = vpop.f32.mrb[0].mxu0
  %v393 = vadd.f32 %v188, %v392
  %v394 = vpop.f32.mrb[0].mxu0
  %v395 = vpop.f32.mrb[0].mxu0
  %v396 = vadd.f32 %v188, %v395
  %v397 = vpop.f32.mrb[0].mxu0
  %398 = vmatprep.mubr.bf16.mxu0 %v267
  %399 = vmatmul.mubr.bf16.gmra.mrb[0].mxu0 %v123
  %v400 = vpop.f32.mrb[0].mxu0
  %v401 = vadd.f32 %v188, %v400
  %v402 = vpop.f32.mrb[0].mxu0
  %v403 = vpop.f32.mrb[0].mxu0
  %v404 = vadd.f32 %v188, %v403
  %v405 = vpop.f32.mrb[0].mxu0
  %406 = vmatprep.mubr.bf16.mxu0 %v270
  %407 = vmatmul.mubr.bf16.gmra.mrb[0].mxu0 %v125
  %v408 = vpop.f32.mrb[0].mxu0
  %v409 = vadd.f32 %v188, %v408
  %v410 = vpop.f32.mrb[0].mxu0
  %v411 = vpop.f32.mrb[0].mxu0
  %v412 = vadd.f32 %v188, %v411
  %v413 = vpop.f32.mrb[0].mxu0
  %414 = vmatprep.mubr.bf16.mxu0 %v273
  %415 = vmatmul.mubr.bf16.gmra.mrb[0].mxu0 %v127
  %v416 = vpop.f32.mrb[0].mxu0
  %v417 = vadd.f32 %v188, %v416
  %v418 = vpop.f32.mrb[0].mxu0
  %v419 = vpop.f32.mrb[0].mxu0
  %v420 = vadd.f32 %v188, %v419
  %v421 = vpop.f32.mrb[0].mxu0
  %422 = vmatprep.mubr.bf16.mxu0 %v276
  %423 = vmatmul.mubr.bf16.gmra.mrb[0].mxu0 %v129
  %v424 = vpop.f32.mrb[0].mxu0
  %v425 = vadd.f32 %v188, %v424
  %v426 = vpop.f32.mrb[0].mxu0
  %v427 = vpop.f32.mrb[0].mxu0
  %v428 = vadd.f32 %v188, %v427
  %v429 = vpop.f32.mrb[0].mxu0
  %430 = vmatprep.mubr.bf16.mxu0 %v279
  %431 = vmatmul.mubr.bf16.gmra.mrb[0].mxu0 %v131
  %v432 = vpop.f32.mrb[0].mxu0
  %v433 = vadd.f32 %v188, %v432
  %v434 = vpop.f32.mrb[0].mxu0
  %v435 = vpop.f32.mrb[0].mxu0
  %v436 = vadd.f32 %v188, %v435
  %v437 = vpop.f32.mrb[0].mxu0
  %438 = vmatprep.mubr.bf16.mxu0 %v282
  %439 = vmatmul.mubr.bf16.gmra.mrb[0].mxu0 %v133
  %v440 = vpop.f32.mrb[0].mxu0
  %v441 = vadd.f32 %v188, %v440
  %v442 = vpop.f32.mrb[0].mxu0
  %v443 = vpop.f32.mrb[0].mxu0
  %v444 = vadd.f32 %v188, %v443
  %v445 = vpop.f32.mrb[0].mxu0
  %446 = vmatprep.mubr.bf16.mxu0 %v285
  %447 = vmatmul.mubr.bf16.gmra.mrb[0].mxu0 %v135
  %v448 = vpop.f32.mrb[0].mxu0
  %v449 = vadd.f32 %v188, %v448
  %v450 = vpop.f32.mrb[0].mxu0
  %v451 = vpop.f32.mrb[0].mxu0
  %v452 = vadd.f32 %v188, %v451
  %v453 = vpop.f32.mrb[0].mxu0
  %454 = vmatprep.mubr.bf16.mxu0 %v288
  %455 = vmatmul.mubr.bf16.gmra.mrb[0].mxu0 %v137
  %v456 = vpop.f32.mrb[0].mxu0
  %v457 = vadd.f32 %v188, %v456
  %v458 = vpop.f32.mrb[0].mxu0
  %v459 = vpop.f32.mrb[0].mxu0
  %v460 = vadd.f32 %v188, %v459
  %v461 = vpop.f32.mrb[0].mxu0
  %462 = vmatprep.mubr.bf16.mxu0 %v291
  %463 = vmatmul.mubr.bf16.gmra.mrb[0].mxu0 %v139
  %v464 = vpop.f32.mrb[0].mxu0
  %v465 = vadd.f32 %v188, %v464
  %v466 = vpop.f32.mrb[0].mxu0
  %v467 = vpop.f32.mrb[0].mxu0
  %v468 = vadd.f32 %v188, %v467
  %v469 = vpop.f32.mrb[0].mxu0
  %470 = vmatprep.mubr.bf16.mxu0 %v294
  %471 = vmatmul.mubr.bf16.gmra.mrb[0].mxu0 %v141
  %v472 = vpop.f32.mrb[0].mxu0
  %v473 = vadd.f32 %v188, %v472
  %v474 = vpop.f32.mrb[0].mxu0
  %v475 = vpop.f32.mrb[0].mxu0
  %v476 = vadd.f32 %v188, %v475
  %v477 = vpop.f32.mrb[0].mxu0
  %478 = vmatprep.mubr.bf16.mxu0 %v297
  %479 = vmatmul.mubr.bf16.gmra.mrb[0].mxu0 %v143
  %v480 = vpop.f32.mrb[0].mxu0
  %v481 = vadd.f32 %v188, %v480
  %v482 = vpop.f32.mrb[0].mxu0
  %v483 = vpop.f32.mrb[0].mxu0
  %v484 = vadd.f32 %v188, %v483
  %v485 = vpop.f32.mrb[0].mxu0
  %486 = vmatprep.mubr.bf16.mxu0 %v300
  %487 = vmatmul.mubr.bf16.gmra.mrb[0].mxu0 %v145
  %v488 = vpop.f32.mrb[0].mxu0
  %v489 = vadd.f32 %v188, %v488
  %v490 = vpop.f32.mrb[0].mxu0
  %v491 = vpop.f32.mrb[0].mxu0
  %v492 = vadd.f32 %v188, %v491
  %v493 = vpop.f32.mrb[0].mxu0
  %494 = vmatprep.mubr.bf16.mxu0 %v303
  %495 = vmatmul.mubr.bf16.gmra.mrb[0].mxu0 %v147
  %v496 = vpop.f32.mrb[0].mxu0
  %v497 = vadd.f32 %v188, %v496
  %v498 = vpop.f32.mrb[0].mxu0
  %v499 = vpop.f32.mrb[0].mxu0
  %v500 = vadd.f32 %v188, %v499
  %v501 = vpop.f32.mrb[0].mxu0
  %502 = vmatprep.mubr.bf16.mxu0 %v306
  %503 = vmatmul.mubr.bf16.gmra.mrb[0].mxu0 %v149
  %v504 = vpop.f32.mrb[0].mxu0
  %v505 = vadd.f32 %v188, %v504
  %v506 = vpop.f32.mrb[0].mxu0
  %v507 = vpop.f32.mrb[0].mxu0
  %v508 = vadd.f32 %v188, %v507
  %v509 = vpop.f32.mrb[0].mxu0
  %510 = vmatprep.mubr.bf16.mxu0 %v309
  %511 = vmatmul.mubr.bf16.gmra.mrb[0].mxu0 %v151
  %v512 = vpop.f32.mrb[0].mxu0
  %v513 = vadd.f32 %v188, %v512
  %v514 = vpop.f32.mrb[0].mxu0
  %v515 = vpop.f32.mrb[0].mxu0
  %v516 = vadd.f32 %v188, %v515
  %v517 = vpop.f32.mrb[0].mxu0
  %518 = vmatprep.mubr.bf16.mxu0 %v312
  %519 = vmatmul.mubr.bf16.gmra.mrb[0].mxu0 %v153
  %v520 = vpop.f32.mrb[0].mxu0
  %v521 = vadd.f32 %v188, %v520
  %v522 = vpop.f32.mrb[0].mxu0
  %v523 = vpop.f32.mrb[0].mxu0
  %v524 = vadd.f32 %v188, %v523
  %v525 = vpop.f32.mrb[0].mxu0
  %526 = vmatprep.mubr.bf16.mxu0 %v315
  %527 = vmatmul.mubr.bf16.gmra.mrb[0].mxu0 %v155
  %v528 = vpop.f32.mrb[0].mxu0
  %v529 = vadd.f32 %v188, %v528
  %v530 = vpop.f32.mrb[0].mxu0
  %v531 = vpop.f32.mrb[0].mxu0
  %v532 = vadd.f32 %v188, %v531
  %v533 = vpop.f32.mrb[0].mxu0
  %534 = vmatprep.mubr.bf16.mxu0 %v318
  %535 = vmatmul.mubr.bf16.gmra.mrb[0].mxu0 %v157
  %v536 = vpop.f32.mrb[0].mxu0
  %v537 = vadd.f32 %v188, %v536
  %v538 = vpop.f32.mrb[0].mxu0
  %v539 = vpop.f32.mrb[0].mxu0
  %v540 = vadd.f32 %v188, %v539
  %v541 = vpop.f32.mrb[0].mxu0
  %542 = vmatprep.mubr.bf16.mxu0 %v321
  %543 = vmatmul.mubr.bf16.gmra.mrb[0].mxu0 %v159
  %v544 = vpop.f32.mrb[0].mxu0
  %v545 = vadd.f32 %v188, %v544
  %v546 = vpop.f32.mrb[0].mxu0
  %v547 = vpop.f32.mrb[0].mxu0
  %v548 = vadd.f32 %v188, %v547
  %v549 = vpop.f32.mrb[0].mxu0
  %550 = vmatprep.mubr.bf16.mxu0 %v324
  %551 = vmatmul.mubr.bf16.gmra.mrb[0].mxu0 %v161
  %v552 = vpop.f32.mrb[0].mxu0
  %v553 = vadd.f32 %v188, %v552
  %v554 = vpop.f32.mrb[0].mxu0
  %v555 = vpop.f32.mrb[0].mxu0
  %v556 = vpop.f32.mrb[0].mxu0
  %557 = vdwg.mxu0
  %v558 = vmax.f32 %v361, 0.0
  %v559 = vmax.f32 %v364, 0.0
  %v560 = vmax.f32 %v369, 0.0
  %v561 = vmax.f32 %v372, 0.0
  %v562 = vmax.f32 %v377, 0.0
  %v563 = vmax.f32 %v380, 0.0
  %v564 = vmax.f32 %v385, 0.0
  %v565 = vmax.f32 %v388, 0.0
  %v566 = vmax.f32 %v393, 0.0
  %v567 = vmax.f32 %v396, 0.0
  %v568 = vmax.f32 %v401, 0.0
  %v569 = vmax.f32 %v404, 0.0
  %v570 = vmax.f32 %v409, 0.0
  %v571 = vmax.f32 %v412, 0.0
  %v572 = vmax.f32 %v417, 0.0
  %v573 = vmax.f32 %v420, 0.0
  %v574 = vmax.f32 %v425, 0.0
  %v575 = vmax.f32 %v428, 0.0
  %v576 = vmax.f32 %v433, 0.0
  %v577 = vmax.f32 %v436, 0.0
  %v578 = vmax.f32 %v441, 0.0
  %v579 = vmax.f32 %v444, 0.0
  %v580 = vmax.f32 %v449, 0.0
  %v581 = vmax.f32 %v452, 0.0
  %v582 = vmax.f32 %v457, 0.0
  %v583 = vmax.f32 %v460, 0.0
  %v584 = vmax.f32 %v465, 0.0
  %v585 = vmax.f32 %v468, 0.0
  %v586 = vmax.f32 %v473, 0.0
  %v587 = vmax.f32 %v476, 0.0
  %v588 = vmax.f32 %v481, 0.0
  %v589 = vmax.f32 %v484, 0.0
  %v590 = vmax.f32 %v489, 0.0
  %v591 = vmax.f32 %v492, 0.0
  %v592 = vmax.f32 %v497, 0.0
  %v593 = vmax.f32 %v500, 0.0
  %v594 = vmax.f32 %v505, 0.0
  %v595 = vmax.f32 %v508, 0.0
  %v596 = vmax.f32 %v513, 0.0
  %v597 = vmax.f32 %v516, 0.0
  %v598 = vmax.f32 %v521, 0.0
  %v599 = vmax.f32 %v524, 0.0
  %v600 = vmax.f32 %v529, 0.0
  %v601 = vmax.f32 %v532, 0.0
  %v602 = vmax.f32 %v537, 0.0
  %v603 = vmax.f32 %v540, 0.0
  %v604 = vmax.f32 %v545, 0.0
  %v605 = vmax.f32 %v548, 0.0
  %v606 = vmax.f32 %v553, 0.0
  %vm607 = vcmask 523264
  %608 = vst.msk [vmem:[%s3] sm:$0xff] %vm607, %v558
  %609 = vst.msk [vmem:[%s3 + $0x8] sm:$0xff] %vm607, %v559
  %610 = vst.msk [vmem:[%s3 + $0x10] sm:$0xff] %vm607, %v560
  %611 = vst.msk [vmem:[%s3 + $0x18] sm:$0xff] %vm607, %v561
  %612 = vst.msk [vmem:[%s3 + $0x20] sm:$0xff] %vm607, %v562
  %613 = vst.msk [vmem:[%s3 + $0x28] sm:$0xff] %vm607, %v563
  %614 = vst.msk [vmem:[%s3 + $0x30] sm:$0xff] %vm607, %v564
  %615 = vst.msk [vmem:[%s3 + $0x38] sm:$0xff] %vm607, %v565
  %616 = vst.msk [vmem:[%s3 + $0x40] sm:$0xff] %vm607, %v566
  %617 = vst.msk [vmem:[%s3 + $0x48] sm:$0xff] %vm607, %v567
  %618 = vst.msk [vmem:[%s3 + $0x50] sm:$0xff] %vm607, %v568
  %619 = vst.msk [vmem:[%s3 + $0x58] sm:$0xff] %vm607, %v569
  %620 = vst.msk [vmem:[%s3 + $0x60] sm:$0xff] %vm607, %v570
  %621 = vst.msk [vmem:[%s3 + $0x68] sm:$0xff] %vm607, %v571
  %622 = vst.msk [vmem:[%s3 + $0x70] sm:$0xff] %vm607, %v572
  %623 = vst.msk [vmem:[%s3 + $0x78] sm:$0xff] %vm607, %v573
  %624 = vst.msk [vmem:[%s3 + $0x80] sm:$0xff] %vm607, %v574
  %625 = vst.msk [vmem:[%s3 + $0x88] sm:$0xff] %vm607, %v575
  %626 = vst.msk [vmem:[%s3 + $0x90] sm:$0xff] %vm607, %v576
  %627 = vst.msk [vmem:[%s3 + $0x98] sm:$0xff] %vm607, %v577
  %628 = vst.msk [vmem:[%s3 + $0xa0] sm:$0xff] %vm607, %v578
  %629 = vst.msk [vmem:[%s3 + $0xa8] sm:$0xff] %vm607, %v579
  %630 = vst.msk [vmem:[%s3 + $0xb0] sm:$0xff] %vm607, %v580
  %631 = vst.msk [vmem:[%s3 + $0xb8] sm:$0xff] %vm607, %v581
  %632 = vst.msk [vmem:[%s3 + $0xc0] sm:$0xff] %vm607, %v582
  %633 = vst.msk [vmem:[%s3 + $0xc8] sm:$0xff] %vm607, %v583
  %634 = vst.msk [vmem:[%s3 + $0xd0] sm:$0xff] %vm607, %v584
  %635 = vst.msk [vmem:[%s3 + $0xd8] sm:$0xff] %vm607, %v585
  %636 = vst.msk [vmem:[%s3 + $0xe0] sm:$0xff] %vm607, %v586
  %637 = vst.msk [vmem:[%s3 + $0xe8] sm:$0xff] %vm607, %v587
  %638 = vst.msk [vmem:[%s3 + $0xf0] sm:$0xff] %vm607, %v588
  %639 = vst.msk [vmem:[%s3 + $0xf8] sm:$0xff] %vm607, %v589
  %640 = vst.msk [vmem:[%s3 + $0x100] sm:$0xff] %vm607, %v590
  %641 = vst.msk [vmem:[%s3 + $0x108] sm:$0xff] %vm607, %v591
  %642 = vst.msk [vmem:[%s3 + $0x110] sm:$0xff] %vm607, %v592
  %643 = vst.msk [vmem:[%s3 + $0x118] sm:$0xff] %vm607, %v593
  %644 = vst.msk [vmem:[%s3 + $0x120] sm:$0xff] %vm607, %v594
  %645 = vst.msk [vmem:[%s3 + $0x128] sm:$0xff] %vm607, %v595
  %646 = vst.msk [vmem:[%s3 + $0x130] sm:$0xff] %vm607, %v596
  %647 = vst.msk [vmem:[%s3 + $0x138] sm:$0xff] %vm607, %v597
  %648 = vst.msk [vmem:[%s3 + $0x140] sm:$0xff] %vm607, %v598
  %649 = vst.msk [vmem:[%s3 + $0x148] sm:$0xff] %vm607, %v599
  %650 = vst.msk [vmem:[%s3 + $0x150] sm:$0xff] %vm607, %v600
  %651 = vst.msk [vmem:[%s3 + $0x158] sm:$0xff] %vm607, %v601
  %652 = vst.msk [vmem:[%s3 + $0x160] sm:$0xff] %vm607, %v602
  %653 = vst.msk [vmem:[%s3 + $0x168] sm:$0xff] %vm607, %v603
  %654 = vst.msk [vmem:[%s3 + $0x170] sm:$0xff] %vm607, %v604
  %655 = vst.msk [vmem:[%s3 + $0x178] sm:$0xff] %vm607, %v605
  %656 = vst.msk [vmem:[%s3 + $0x180] sm:$0xff] %vm607, %v606
  // Predicated region
  $region14: #{_lambda_.4} parent=0 // pred_check
    _
  $region15: #{_lambda_.4} parent=0 // pred_check_branch
    %658 = sbr.rel (0) target = $region17
  $region16: #{_lambda_.4} parent=0 // pred_region
    _
  $region17: #{_lambda_.4} parent=0 // pred_fallthru
    _
  // Predicated region
  $region18: #{_lambda_.4} parent=0 // pred_check
    _
  $region19: #{_lambda_.4} parent=0 // pred_check_branch
    %660 = sbr.rel (0) target = $region21
  $region20: #{_lambda_.4} parent=0 // pred_region
    _
  $region21: #{_lambda_.4} parent=0 // pred_fallthru
    _

// kernel: _lambda_.5
$region0: #{_lambda_.5}
  #allocation0 [shape = 'u32[]', space=smem, size = 0x4, offset = 0x4, fixed_abs, tag = 'smem constant byte address 0x4 - core index']
  #allocation1 [shape = 'u32[144,128]{1,0:T(1,128)}', space=vmem, size = 0x12000, scoped, tag = 'internal scratch']
  %s0 = inlined_call_operand.vmem [shape: f32[98,576], index: 0, kind: input, shape index: {}]
  %s1 = inlined_call_operand.vmem [shape: bf16[576,64], index: 1, kind: input, shape index: {}]
  %s2 = inlined_call_operand.vmem [shape: f32[1,64], index: 2, kind: input, shape index: {}]
  %s3 = inlined_call_operand.vmem [shape: f32[98,64], index: 3, kind: output, shape index: {}]
  %s4 = sld [smem:[#allocation0]]
  $region22: #{_lambda_.5} parent=0
    _
  %s6 = ssub.s32 1, %s4
  %s7 = scalar_select 0, %s6, %s4
  // Predicated region
  $region2: #{_lambda_.5} parent=0 // pred_check
    _
  $region3: #{_lambda_.5} parent=0 // pred_check_branch
    %9 = sbr.rel (0) target = $region5
  $region4: #{_lambda_.5} parent=0 // pred_region
    _
  $region5: #{_lambda_.5} parent=0 // pred_fallthru
    _
  // Predicated region
  $region6: #{_lambda_.5} parent=0 // pred_check
    _
  $region7: #{_lambda_.5} parent=0 // pred_check_branch
    %11 = sbr.rel (0) target = $region9
  $region8: #{_lambda_.5} parent=0 // pred_region
    _
  $region9: #{_lambda_.5} parent=0 // pred_fallthru
    _
  // Predicated region
  $region10: #{_lambda_.5} parent=0 // pred_check
    _
  $region11: #{_lambda_.5} parent=0 // pred_check_branch
    %13 = sbr.rel (0) target = $region13
  $region12: #{_lambda_.5} parent=0 // pred_region
    _
  $region13: #{_lambda_.5} parent=0 // pred_fallthru
    _
  %v15 = vld [vmem:[%s0] sm:$0xff]
  %v16 = vld [vmem:[%s0 + $0x8] sm:$0xff]
  %v17 = vld [vmem:[%s0 + $0x10] sm:$0xff]
  %v18 = vld [vmem:[%s0 + $0x18] sm:$0xff]
  %v19 = vld [vmem:[%s0 + $0x20] sm:$0xff]
  %v20 = vld [vmem:[%s0 + $0x28] sm:$0xff]
  %v21 = vld [vmem:[%s0 + $0x30] sm:$0xff]
  %v22 = vld [vmem:[%s0 + $0x38] sm:$0xff]
  %v23 = vld [vmem:[%s0 + $0x40] sm:$0xff]
  %v24 = vld [vmem:[%s0 + $0x48] sm:$0xff]
  %v25 = vld [vmem:[%s0 + $0x50] sm:$0xff]
  %v26 = vld [vmem:[%s0 + $0x58] sm:$0xff]
  %v27 = vld [vmem:[%s0 + $0x60] sm:$0xff]
  %v28 = vld [vmem:[%s0 + $0x68] sm:$0xff]
  %v29 = vld [vmem:[%s0 + $0x70] sm:$0xff]
  %v30 = vld [vmem:[%s0 + $0x78] sm:$0xff]
  %v31 = vld [vmem:[%s0 + $0x80] sm:$0xff]
  %v32 = vld [vmem:[%s0 + $0x88] sm:$0xff]
  %v33 = vld [vmem:[%s0 + $0x90] sm:$0xff]
  %v34 = vld [vmem:[%s0 + $0x98] sm:$0xff]
  %v35 = vld [vmem:[%s0 + $0xa0] sm:$0xff]
  %v36 = vld [vmem:[%s0 + $0xa8] sm:$0xff]
  %v37 = vld [vmem:[%s0 + $0xb0] sm:$0xff]
  %v38 = vld [vmem:[%s0 + $0xb8] sm:$0xff]
  %v39 = vld [vmem:[%s0 + $0xc0] sm:$0xff]
  %v40 = vld [vmem:[%s0 + $0xc8] sm:$0xff]
  %v41 = vld [vmem:[%s0 + $0xd0] sm:$0xff]
  %v42 = vld [vmem:[%s0 + $0xd8] sm:$0xff]
  %v43 = vld [vmem:[%s0 + $0xe0] sm:$0xff]
  %v44 = vld [vmem:[%s0 + $0xe8] sm:$0xff]
  %v45 = vld [vmem:[%s0 + $0xf0] sm:$0xff]
  %v46 = vld [vmem:[%s0 + $0xf8] sm:$0xff]
  %v47 = vld [vmem:[%s0 + $0x100] sm:$0xff]
  %v48 = vld [vmem:[%s0 + $0x108] sm:$0xff]
  %v49 = vld [vmem:[%s0 + $0x110] sm:$0xff]
  %v50 = vld [vmem:[%s0 + $0x118] sm:$0xff]
  %v51 = vld [vmem:[%s0 + $0x120] sm:$0xff]
  %v52 = vld [vmem:[%s0 + $0x128] sm:$0xff]
  %v53 = vld [vmem:[%s0 + $0x130] sm:$0xff]
  %v54 = vld [vmem:[%s0 + $0x138] sm:$0xff]
  %v55 = vld [vmem:[%s0 + $0x140] sm:$0xff]
  %v56 = vld [vmem:[%s0 + $0x148] sm:$0xff]
  %v57 = vld [vmem:[%s0 + $0x150] sm:$0xff]
  %v58 = vld [vmem:[%s0 + $0x158] sm:$0xff]
  %v59 = vld [vmem:[%s0 + $0x160] sm:$0xff]
  %v60 = vld [vmem:[%s0 + $0x168] sm:$0xff]
  %v61 = vld [vmem:[%s0 + $0x170] sm:$0xff]
  %v62 = vld [vmem:[%s0 + $0x178] sm:$0xff]
  %v63 = vld [vmem:[%s0 + $0x180] sm:$0xff]
  %v64 = vld [vmem:[%s0 + $0x188] sm:$0xff]
  %v65 = vld [vmem:[%s0 + $0x190] sm:$0xff]
  %v66 = vld [vmem:[%s0 + $0x198] sm:$0xff]
  %v67 = vld [vmem:[%s0 + $0x1a0] sm:$0xff]
  %v68 = vld [vmem:[%s0 + $0x1a8] sm:$0xff]
  %v69 = vld [vmem:[%s0 + $0x1b0] sm:$0xff]
  %v70 = vld [vmem:[%s0 + $0x1b8] sm:$0xff]
  %v71 = vld [vmem:[%s0 + $0x1c0] sm:$0xff]
  %v72 = vld [vmem:[%s0 + $0x1c8] sm:$0xff]
  %v73 = vld [vmem:[%s0 + $0x1d0] sm:$0xff]
  %v74 = vld [vmem:[%s0 + $0x1d8] sm:$0xff]
  %v75 = vld [vmem:[%s0 + $0x1e0] sm:$0x3]
  %v76 = vld [vmem:[%s0 + $0x1e8] sm:$0x3]
  %v77 = vld [vmem:[%s0 + $0x1f0] sm:$0x3]
  %v78 = vld [vmem:[%s0 + $0x1f8] sm:$0x3]
  %v79 = vld [vmem:[%s0 + $0x200] sm:$0x3]
  %v80 = vpack.c.bf16 %v20, %v15
  %v81 = vpack.c.bf16 %v21, %v16
  %v82 = vpack.c.bf16 %v22, %v17
  %v83 = vpack.c.bf16 %v23, %v18
  %v84 = vpack.c.bf16 %v24, %v19
  %v85 = vpack.c.bf16 %v30, %v25
  %v86 = vpack.c.bf16 %v31, %v26
  %v87 = vpack.c.bf16 %v32, %v27
  %v88 = vpack.c.bf16 %v33, %v28
  %v89 = vpack.c.bf16 %v34, %v29
  %v90 = vpack.c.bf16 %v40, %v35
  %v91 = vpack.c.bf16 %v41, %v36
  %v92 = vpack.c.bf16 %v42, %v37
  %v93 = vpack.c.bf16 %v43, %v38
  %v94 = vpack.c.bf16 %v44, %v39
  %v95 = vpack.c.bf16 %v50, %v45
  %v96 = vpack.c.bf16 %v51, %v46
  %v97 = vpack.c.bf16 %v52, %v47
  %v98 = vpack.c.bf16 %v53, %v48
  %v99 = vpack.c.bf16 %v54, %v49
  %v100 = vpack.c.bf16 %v60, %v55
  %v101 = vpack.c.bf16 %v61, %v56
  %v102 = vpack.c.bf16 %v62, %v57
  %v103 = vpack.c.bf16 %v63, %v58
  %v104 = vpack.c.bf16 %v64, %v59
  %v105 = vpack.c.bf16 %v70, %v65
  %v106 = vpack.c.bf16 %v71, %v66
  %v107 = vpack.c.bf16 %v72, %v67
  %v108 = vpack.c.bf16 %v73, %v68
  %v109 = vpack.c.bf16 %v74, %v69
  %v110 = vpack.c.bf16 %v75, %v75
  %v111 = vpack.c.bf16 %v76, %v76
  %v112 = vpack.c.bf16 %v77, %v77
  %v113 = vpack.c.bf16 %v78, %v78
  %v114 = vpack.c.bf16 %v79, %v79
  %v115 = vld [vmem:[%s1] sm:$0xf]
  %v116 = vld [vmem:[%s1 + $0x4] sm:$0xf]
  %v117 = vld [vmem:[%s1 + $0x8] sm:$0xf]
  %v118 = vld [vmem:[%s1 + $0xc] sm:$0xf]
  %v119 = vld [vmem:[%s1 + $0x10] sm:$0xf]
  %v120 = vld [vmem:[%s1 + $0x14] sm:$0xf]
  %v121 = vld [vmem:[%s1 + $0x18] sm:$0xf]
  %v122 = vld [vmem:[%s1 + $0x1c] sm:$0xf]
  %v123 = vld [vmem:[%s1 + $0x20] sm:$0xf]
  %v124 = vld [vmem:[%s1 + $0x24] sm:$0xf]
  %v125 = vld [vmem:[%s1 + $0x28] sm:$0xf]
  %v126 = vld [vmem:[%s1 + $0x2c] sm:$0xf]
  %v127 = vld [vmem:[%s1 + $0x30] sm:$0xf]
  %v128 = vld [vmem:[%s1 + $0x34] sm:$0xf]
  %v129 = vld [vmem:[%s1 + $0x38] sm:$0xf]
  %v130 = vld [vmem:[%s1 + $0x3c] sm:$0xf]
  %v131 = vld [vmem:[%s1 + $0x40] sm:$0xf]
  %v132 = vld [vmem:[%s1 + $0x44] sm:$0xf]
  %v133 = vld [vmem:[%s1 + $0x48] sm:$0xf]
  %v134 = vld [vmem:[%s1 + $0x4c] sm:$0xf]
  %v135 = vld [vmem:[%s1 + $0x50] sm:$0xf]
  %v136 = vld [vmem:[%s1 + $0x54] sm:$0xf]
  %v137 = vld [vmem:[%s1 + $0x58] sm:$0xf]
  %v138 = vld [vmem:[%s1 + $0x5c] sm:$0xf]
  %v139 = vld [vmem:[%s1 + $0x60] sm:$0xf]
  %v140 = vld [vmem:[%s1 + $0x64] sm:$0xf]
  %v141 = vld [vmem:[%s1 + $0x68] sm:$0xf]
  %v142 = vld [vmem:[%s1 + $0x6c] sm:$0xf]
  %v143 = vld [vmem:[%s1 + $0x70] sm:$0xf]
  %v144 = vld [vmem:[%s1 + $0x74] sm:$0xf]
  %v145 = vld [vmem:[%s1 + $0x78] sm:$0xf]
  %v146 = vld [vmem:[%s1 + $0x7c] sm:$0xf]
  %v147 = vld [vmem:[%s1 + $0x80] sm:$0xf]
  %v148 = vld [vmem:[%s1 + $0x84] sm:$0xf]
  %v149 = vld [vmem:[%s1 + $0x88] sm:$0xf]
  %v150 = vld [vmem:[%s1 + $0x8c] sm:$0xf]
  %v151 = vld [vmem:[%s1 + $0x90] sm:$0xf]
  %v152 = vld [vmem:[%s1 + $0x94] sm:$0xf]
  %v153 = vld [vmem:[%s1 + $0x98] sm:$0xf]
  %v154 = vld [vmem:[%s1 + $0x9c] sm:$0xf]
  %v155 = vld [vmem:[%s1 + $0xa0] sm:$0xf]
  %v156 = vld [vmem:[%s1 + $0xa4] sm:$0xf]
  %v157 = vld [vmem:[%s1 + $0xa8] sm:$0xf]
  %v158 = vld [vmem:[%s1 + $0xac] sm:$0xf]
  %v159 = vld [vmem:[%s1 + $0xb0] sm:$0xf]
  %v160 = vld [vmem:[%s1 + $0xb4] sm:$0xf]
  %v161 = vld [vmem:[%s1 + $0xb8] sm:$0xf]
  %v162 = vld [vmem:[%s1 + $0xbc] sm:$0xf]
  %v163 = vld [vmem:[%s1 + $0xc0] sm:$0xf]
  %v164 = vld [vmem:[%s1 + $0xc4] sm:$0xf]
  %v165 = vld [vmem:[%s1 + $0xc8] sm:$0xf]
  %v166 = vld [vmem:[%s1 + $0xcc] sm:$0xf]
  %v167 = vld [vmem:[%s1 + $0xd0] sm:$0xf]
  %v168 = vld [vmem:[%s1 + $0xd4] sm:$0xf]
  %v169 = vld [vmem:[%s1 + $0xd8] sm:$0xf]
  %v170 = vld [vmem:[%s1 + $0xdc] sm:$0xf]
  %v171 = vld [vmem:[%s1 + $0xe0] sm:$0xf]
  %v172 = vld [vmem:[%s1 + $0xe4] sm:$0xf]
  %v173 = vld [vmem:[%s1 + $0xe8] sm:$0xf]
  %v174 = vld [vmem:[%s1 + $0xec] sm:$0xf]
  %v175 = vld [vmem:[%s1 + $0xf0] sm:$0xf]
  %v176 = vld [vmem:[%s1 + $0xf4] sm:$0xf]
  %v177 = vld [vmem:[%s1 + $0xf8] sm:$0xf]
  %v178 = vld [vmem:[%s1 + $0xfc] sm:$0xf]
  %v179 = vld [vmem:[%s1 + $0x100] sm:$0xf]
  %v180 = vld [vmem:[%s1 + $0x104] sm:$0xf]
  %v181 = vld [vmem:[%s1 + $0x108] sm:$0xf]
  %v182 = vld [vmem:[%s1 + $0x10c] sm:$0xf]
  %v183 = vld [vmem:[%s1 + $0x110] sm:$0xf]
  %v184 = vld [vmem:[%s1 + $0x114] sm:$0xf]
  %v185 = vld [vmem:[%s1 + $0x118] sm:$0xf]
  %v186 = vld [vmem:[%s1 + $0x11c] sm:$0xf]
  %v187 = vld [vmem:[%s2] sm:$0x1]
  %v189 = vlaneseq
  %v190 = vshrl.u32 %v189, 7
  %v191 = vsub.s32 0, %v190
  %v192 = vrot.slane %v187, %v191
  %v266 = vunpack.c.l.b16 %v115
  %v267 = vunpack.c.l.b16 %v116
  %v268 = vunpack.c.l.b16 %v117
  %v269 = vunpack.c.l.b16 %v118
  %v270 = vunpack.c.l.b16 %v119
  %v271 = vunpack.c.l.b16 %v120
  %v272 = vunpack.c.l.b16 %v121
  %v273 = vunpack.c.l.b16 %v122
  %v274 = vunpack.c.l.b16 %v123
  %v275 = vunpack.c.l.b16 %v124
  %v276 = vunpack.c.l.b16 %v125
  %v277 = vunpack.c.l.b16 %v126
  %v278 = vunpack.c.l.b16 %v127
  %v279 = vunpack.c.l.b16 %v128
  %v280 = vunpack.c.l.b16 %v129
  %v281 = vunpack.c.l.b16 %v130
  %v282 = vunpack.c.l.b16 %v131
  %v283 = vunpack.c.l.b16 %v132
  %v284 = vunpack.c.l.b16 %v133
  %v285 = vunpack.c.l.b16 %v134
  %v286 = vunpack.c.l.b16 %v135
  %v287 = vunpack.c.l.b16 %v136
  %v288 = vunpack.c.l.b16 %v137
  %v289 = vunpack.c.l.b16 %v138
  %v290 = vunpack.c.l.b16 %v139
  %v291 = vunpack.c.l.b16 %v140
  %v292 = vunpack.c.l.b16 %v141
  %v293 = vunpack.c.l.b16 %v142
  %v294 = vunpack.c.l.b16 %v143
  %v295 = vunpack.c.l.b16 %v144
  %v296 = vunpack.c.l.b16 %v145
  %v297 = vunpack.c.l.b16 %v146
  %v298 = vunpack.c.l.b16 %v147
  %v299 = vunpack.c.l.b16 %v148
  %v300 = vunpack.c.l.b16 %v149
  %v301 = vunpack.c.l.b16 %v150
  %v302 = vunpack.c.l.b16 %v151
  %v303 = vunpack.c.l.b16 %v152
  %v304 = vunpack.c.l.b16 %v153
  %v305 = vunpack.c.l.b16 %v154
  %v306 = vunpack.c.l.b16 %v155
  %v307 = vunpack.c.l.b16 %v156
  %v308 = vunpack.c.l.b16 %v157
  %v309 = vunpack.c.l.b16 %v158
  %v310 = vunpack.c.l.b16 %v159
  %v311 = vunpack.c.l.b16 %v160
  %v312 = vunpack.c.l.b16 %v161
  %v313 = vunpack.c.l.b16 %v162
  %v314 = vunpack.c.l.b16 %v163
  %v315 = vunpack.c.l.b16 %v164
  %v316 = vunpack.c.l.b16 %v165
  %v317 = vunpack.c.l.b16 %v166
  %v318 = vunpack.c.l.b16 %v167
  %v319 = vunpack.c.l.b16 %v168
  %v320 = vunpack.c.l.b16 %v169
  %v321 = vunpack.c.l.b16 %v170
  %v322 = vunpack.c.l.b16 %v171
  %v323 = vunpack.c.l.b16 %v172
  %v324 = vunpack.c.l.b16 %v173
  %v325 = vunpack.c.l.b16 %v174
  %v326 = vunpack.c.l.b16 %v175
  %v327 = vunpack.c.l.b16 %v176
  %v328 = vunpack.c.l.b16 %v177
  %v329 = vunpack.c.l.b16 %v178
  %v330 = vunpack.c.l.b16 %v179
  %v331 = vunpack.c.l.b16 %v180
  %v332 = vunpack.c.l.b16 %v181
  %v333 = vunpack.c.l.b16 %v182
  %v334 = vunpack.c.l.b16 %v183
  %v335 = vunpack.c.l.b16 %v184
  %v336 = vunpack.c.l.b16 %v185
  %v337 = vunpack.c.l.b16 %v186
  %v338 = vpack.c.b16 %v267, %v266
  %v339 = vpack.c.b16 %v269, %v268
  %v340 = vpack.c.b16 %v271, %v270
  %v341 = vpack.c.b16 %v273, %v272
  %v342 = vpack.c.b16 %v275, %v274
  %v343 = vpack.c.b16 %v277, %v276
  %v344 = vpack.c.b16 %v279, %v278
  %v345 = vpack.c.b16 %v281, %v280
  %v346 = vpack.c.b16 %v283, %v282
  %v347 = vpack.c.b16 %v285, %v284
  %v348 = vpack.c.b16 %v287, %v286
  %v349 = vpack.c.b16 %v289, %v288
  %v350 = vpack.c.b16 %v291, %v290
  %v351 = vpack.c.b16 %v293, %v292
  %v352 = vpack.c.b16 %v295, %v294
  %v353 = vpack.c.b16 %v297, %v296
  %v354 = vpack.c.b16 %v299, %v298
  %v355 = vpack.c.b16 %v301, %v300
  %v356 = vpack.c.b16 %v303, %v302
  %v357 = vpack.c.b16 %v305, %v304
  %v358 = vpack.c.b16 %v307, %v306
  %v359 = vpack.c.b16 %v309, %v308
  %v360 = vpack.c.b16 %v311, %v310
  %v361 = vpack.c.b16 %v313, %v312
  %v362 = vpack.c.b16 %v315, %v314
  %v363 = vpack.c.b16 %v317, %v316
  %v364 = vpack.c.b16 %v319, %v318
  %v365 = vpack.c.b16 %v321, %v320
  %v366 = vpack.c.b16 %v323, %v322
  %v367 = vpack.c.b16 %v325, %v324
  %v368 = vpack.c.b16 %v327, %v326
  %v369 = vpack.c.b16 %v329, %v328
  %v370 = vpack.c.b16 %v331, %v330
  %v371 = vpack.c.b16 %v333, %v332
  %v372 = vpack.c.b16 %v335, %v334
  %v373 = vpack.c.b16 %v337, %v336
  %vm410 = vcmask 523264
  %v412 = vsel %vm410, %v84, 0
  %v415 = vsel %vm410, %v89, 0
  %v418 = vsel %vm410, %v94, 0
  %v421 = vsel %vm410, %v99, 0
  %v424 = vsel %vm410, %v104, 0
  %v427 = vsel %vm410, %v109, 0
  %v430 = vsel %vm410, %v114, 0
  %432 = vmatprep.subr.bf16.mxu0 0
  %433 = vmatpush1.bf16.msra.mxu0 %v338
  %434 = vmatprep.subr.bf16.mxu0 0
  %435 = vmatpush1.bf16.msra.mxu0 %v339
  %436 = vmatprep.subr.bf16.mxu0 0
  %437 = vmatpush1.bf16.msra.mxu0 %v340
  %438 = vmatprep.subr.bf16.mxu0 0
  %439 = vmatpush1.bf16.msra.mxu0 %v341
  %440 = vmatprep.subr.bf16.mxu0 0
  %441 = vmatpush1.bf16.msra.mxu0 %v342
  %442 = vmatprep.subr.bf16.mxu0 0
  %443 = vmatpush1.bf16.msra.mxu0 %v343
  %444 = vmatprep.subr.bf16.mxu0 0
  %445 = vmatpush1.bf16.msra.mxu0 %v344
  %446 = vmatprep.subr.bf16.mxu0 0
  %447 = vmatpush1.bf16.msra.mxu0 %v345
  %448 = vmatprep.subr.bf16.mxu0 0
  %449 = vmatpush1.bf16.msra.mxu0 %v346
  %450 = vmatprep.subr.bf16.mxu0 0
  %451 = vmatpush1.bf16.msra.mxu0 %v347
  %452 = vmatprep.subr.bf16.mxu0 0
  %453 = vmatpush1.bf16.msra.mxu0 %v348
  %454 = vmatprep.subr.bf16.mxu0 0
  %455 = vmatpush1.bf16.msra.mxu0 %v349
  %456 = vmatprep.subr.bf16.mxu0 0
  %457 = vmatpush1.bf16.msra.mxu0 %v350
  %458 = vmatprep.subr.bf16.mxu0 0
  %459 = vmatpush1.bf16.msra.mxu0 %v351
  %460 = vmatprep.subr.bf16.mxu0 0
  %461 = vmatpush1.bf16.msra.mxu0 %v352
  %462 = vmatprep.subr.bf16.mxu0 0
  %463 = vmatpush1.bf16.msra.mxu0 %v353
  %464 = vmatprep.mubr.bf16.mxu0 %v81
  %465 = vmatmul.mubr.bf16.gmra.mrb[0].mxu0 %v80
  %v466 = vpop.f32.mrb[0].mxu0
  %v467 = vadd.f32 %v192, %v466
  %v468 = vpop.f32.mrb[0].mxu0
  %v469 = vpop.f32.mrb[0].mxu0
  %v470 = vadd.f32 %v192, %v469
  %v471 = vpop.f32.mrb[0].mxu0
  %472 = vmatprep.mubr.bf16.mxu0 %v86
  %473 = vmatmul.mubr.bf16.gmra.mrb[0].mxu0 %v85
  %v474 = vpop.f32.mrb[0].mxu0
  %v475 = vadd.f32 %v192, %v474
  %v476 = vpop.f32.mrb[0].mxu0
  %v477 = vpop.f32.mrb[0].mxu0
  %v478 = vadd.f32 %v192, %v477
  %v479 = vpop.f32.mrb[0].mxu0
  %480 = vmatprep.mubr.bf16.mxu0 %v91
  %481 = vmatmul.mubr.bf16.gmra.mrb[0].mxu0 %v90
  %v482 = vpop.f32.mrb[0].mxu0
  %v483 = vadd.f32 %v192, %v482
  %v484 = vpop.f32.mrb[0].mxu0
  %v485 = vpop.f32.mrb[0].mxu0
  %v486 = vadd.f32 %v192, %v485
  %v487 = vpop.f32.mrb[0].mxu0
  %488 = vmatprep.mubr.bf16.mxu0 %v96
  %489 = vmatmul.mubr.bf16.gmra.mrb[0].mxu0 %v95
  %v490 = vpop.f32.mrb[0].mxu0
  %v491 = vadd.f32 %v192, %v490
  %v492 = vpop.f32.mrb[0].mxu0
  %v493 = vpop.f32.mrb[0].mxu0
  %v494 = vadd.f32 %v192, %v493
  %v495 = vpop.f32.mrb[0].mxu0
  %496 = vmatprep.mubr.bf16.mxu0 %v101
  %497 = vmatmul.mubr.bf16.gmra.mrb[0].mxu0 %v100
  %v498 = vpop.f32.mrb[0].mxu0
  %v499 = vadd.f32 %v192, %v498
  %v500 = vpop.f32.mrb[0].mxu0
  %v501 = vpop.f32.mrb[0].mxu0
  %v502 = vadd.f32 %v192, %v501
  %v503 = vpop.f32.mrb[0].mxu0
  %504 = vmatprep.mubr.bf16.mxu0 %v106
  %505 = vmatmul.mubr.bf16.gmra.mrb[0].mxu0 %v105
  %v506 = vpop.f32.mrb[0].mxu0
  %v507 = vadd.f32 %v192, %v506
  %v508 = vpop.f32.mrb[0].mxu0
  %v509 = vpop.f32.mrb[0].mxu0
  %v510 = vadd.f32 %v192, %v509
  %v511 = vpop.f32.mrb[0].mxu0
  %512 = vmatprep.mubr.bf16.mxu0 %v111
  %513 = vmatmul.mubr.bf16.gmra.mrb[0].mxu0 %v110
  %v514 = vpop.f32.mrb[0].mxu0
  %v515 = vadd.f32 %v192, %v514
  %v516 = vpop.f32.mrb[0].mxu0
  %v517 = vpop.f32.mrb[0].mxu0
  %v518 = vpop.f32.mrb[0].mxu0
  %519 = vdwg.mxu0
  %520 = vmatprep.subr.bf16.mxu0 0
  %521 = vmatpush1.bf16.msra.mxu0 %v354
  %522 = vmatprep.subr.bf16.mxu0 0
  %523 = vmatpush1.bf16.msra.mxu0 %v355
  %524 = vmatprep.subr.bf16.mxu0 0
  %525 = vmatpush1.bf16.msra.mxu0 %v356
  %526 = vmatprep.subr.bf16.mxu0 0
  %527 = vmatpush1.bf16.msra.mxu0 %v357
  %528 = vmatprep.subr.bf16.mxu0 0
  %529 = vmatpush1.bf16.msra.mxu0 %v358
  %530 = vmatprep.subr.bf16.mxu0 0
  %531 = vmatpush1.bf16.msra.mxu0 %v359
  %532 = vmatprep.subr.bf16.mxu0 0
  %533 = vmatpush1.bf16.msra.mxu0 %v360
  %534 = vmatprep.subr.bf16.mxu0 0
  %535 = vmatpush1.bf16.msra.mxu0 %v361
  %536 = vmatprep.subr.bf16.mxu0 0
  %537 = vmatpush1.bf16.msra.mxu0 %v362
  %538 = vmatprep.subr.bf16.mxu0 0
  %539 = vmatpush1.bf16.msra.mxu0 %v363
  %540 = vmatprep.subr.bf16.mxu0 0
  %541 = vmatpush1.bf16.msra.mxu0 %v364
  %542 = vmatprep.subr.bf16.mxu0 0
  %543 = vmatpush1.bf16.msra.mxu0 %v365
  %544 = vmatprep.subr.bf16.mxu0 0
  %545 = vmatpush1.bf16.msra.mxu0 %v366
  %546 = vmatprep.subr.bf16.mxu0 0
  %547 = vmatpush1.bf16.msra.mxu0 %v367
  %548 = vmatprep.subr.bf16.mxu0 0
  %549 = vmatpush1.bf16.msra.mxu0 %v368
  %550 = vmatprep.subr.bf16.mxu0 0
  %551 = vmatpush1.bf16.msra.mxu0 %v369
  %552 = vmatprep.mubr.bf16.mxu0 %v83
  %553 = vmatmul.mubr.bf16.gmra.mrb[0].mxu0 %v82
  %v554 = vpop.f32.mrb[0].mxu0
  %v555 = vadd.f32 %v467, %v554
  %v556 = vpop.f32.mrb[0].mxu0
  %v557 = vpop.f32.mrb[0].mxu0
  %v558 = vadd.f32 %v470, %v557
  %v559 = vpop.f32.mrb[0].mxu0
  %560 = vmatprep.mubr.bf16.mxu0 %v88
  %561 = vmatmul.mubr.bf16.gmra.mrb[0].mxu0 %v87
  %v562 = vpop.f32.mrb[0].mxu0
  %v563 = vadd.f32 %v475, %v562
  %v564 = vpop.f32.mrb[0].mxu0
  %v565 = vpop.f32.mrb[0].mxu0
  %v566 = vadd.f32 %v478, %v565
  %v567 = vpop.f32.mrb[0].mxu0
  %568 = vmatprep.mubr.bf16.mxu0 %v93
  %569 = vmatmul.mubr.bf16.gmra.mrb[0].mxu0 %v92
  %v570 = vpop.f32.mrb[0].mxu0
  %v571 = vadd.f32 %v483, %v570
  %v572 = vpop.f32.mrb[0].mxu0
  %v573 = vpop.f32.mrb[0].mxu0
  %v574 = vadd.f32 %v486, %v573
  %v575 = vpop.f32.mrb[0].mxu0
  %576 = vmatprep.mubr.bf16.mxu0 %v98
  %577 = vmatmul.mubr.bf16.gmra.mrb[0].mxu0 %v97
  %v578 = vpop.f32.mrb[0].mxu0
  %v579 = vadd.f32 %v491, %v578
  %v580 = vpop.f32.mrb[0].mxu0
  %v581 = vpop.f32.mrb[0].mxu0
  %v582 = vadd.f32 %v494, %v581
  %v583 = vpop.f32.mrb[0].mxu0
  %584 = vmatprep.mubr.bf16.mxu0 %v103
  %585 = vmatmul.mubr.bf16.gmra.mrb[0].mxu0 %v102
  %v586 = vpop.f32.mrb[0].mxu0
  %v587 = vadd.f32 %v499, %v586
  %v588 = vpop.f32.mrb[0].mxu0
  %v589 = vpop.f32.mrb[0].mxu0
  %v590 = vadd.f32 %v502, %v589
  %v591 = vpop.f32.mrb[0].mxu0
  %592 = vmatprep.mubr.bf16.mxu0 %v108
  %593 = vmatmul.mubr.bf16.gmra.mrb[0].mxu0 %v107
  %v594 = vpop.f32.mrb[0].mxu0
  %v595 = vadd.f32 %v507, %v594
  %v596 = vpop.f32.mrb[0].mxu0
  %v597 = vpop.f32.mrb[0].mxu0
  %v598 = vadd.f32 %v510, %v597
  %v599 = vpop.f32.mrb[0].mxu0
  %600 = vmatprep.mubr.bf16.mxu0 %v113
  %601 = vmatmul.mubr.bf16.gmra.mrb[0].mxu0 %v112
  %v602 = vpop.f32.mrb[0].mxu0
  %v603 = vadd.f32 %v515, %v602
  %v604 = vpop.f32.mrb[0].mxu0
  %v605 = vpop.f32.mrb[0].mxu0
  %v606 = vpop.f32.mrb[0].mxu0
  %607 = vdwg.mxu0
  %608 = vmatprep.subr.bf16.mxu0 0
  %609 = vmatpush1.bf16.msra.mxu0 %v370
  %610 = vmatprep.subr.bf16.mxu0 0
  %611 = vmatpush1.bf16.msra.mxu0 %v371
  %612 = vmatprep.subr.bf16.mxu0 0
  %613 = vmatpush1.bf16.msra.mxu0 %v372
  %614 = vmatprep.subr.bf16.mxu0 0
  %615 = vmatpush1.bf16.msra.mxu0 %v373
  %616 = vmatprep.subr.bf16.mxu0 0
  %617 = vmatpush1.bf16.msra.mxu0 0
  %618 = vmatprep.subr.bf16.mxu0 0
  %619 = vmatpush1.bf16.msra.mxu0 0
  %620 = vmatprep.subr.bf16.mxu0 0
  %621 = vmatpush1.bf16.msra.mxu0 0
  %622 = vmatprep.subr.bf16.mxu0 0
  %623 = vmatpush1.bf16.msra.mxu0 0
  %624 = vmatprep.subr.bf16.mxu0 0
  %625 = vmatpush1.bf16.msra.mxu0 0
  %626 = vmatprep.subr.bf16.mxu0 0
  %627 = vmatpush1.bf16.msra.mxu0 0
  %628 = vmatprep.subr.bf16.mxu0 0
  %629 = vmatpush1.bf16.msra.mxu0 0
  %630 = vmatprep.subr.bf16.mxu0 0
  %631 = vmatpush1.bf16.msra.mxu0 0
  %632 = vmatprep.subr.bf16.mxu0 0
  %633 = vmatpush1.bf16.msra.mxu0 0
  %634 = vmatprep.subr.bf16.mxu0 0
  %635 = vmatpush1.bf16.msra.mxu0 0
  %636 = vmatprep.subr.bf16.mxu0 0
  %637 = vmatpush1.bf16.msra.mxu0 0
  %638 = vmatprep.subr.bf16.mxu0 0
  %639 = vmatpush1.bf16.msra.mxu0 0
  %640 = vmatprep.mubr.bf16.mxu0 0
  %641 = vmatmul.mubr.bf16.gmra.mrb[0].mxu0 %v412
  %v642 = vpop.f32.mrb[0].mxu0
  %v643 = vadd.f32 %v555, %v642
  %v644 = vpop.f32.mrb[0].mxu0
  %v645 = vpop.f32.mrb[0].mxu0
  %v646 = vadd.f32 %v558, %v645
  %v647 = vpop.f32.mrb[0].mxu0
  %648 = vmatprep.mubr.bf16.mxu0 0
  %649 = vmatmul.mubr.bf16.gmra.mrb[0].mxu0 %v415
  %v650 = vpop.f32.mrb[0].mxu0
  %v651 = vadd.f32 %v563, %v650
  %v652 = vpop.f32.mrb[0].mxu0
  %v653 = vpop.f32.mrb[0].mxu0
  %v654 = vadd.f32 %v566, %v653
  %v655 = vpop.f32.mrb[0].mxu0
  %656 = vmatprep.mubr.bf16.mxu0 0
  %657 = vmatmul.mubr.bf16.gmra.mrb[0].mxu0 %v418
  %v658 = vpop.f32.mrb[0].mxu0
  %v659 = vadd.f32 %v571, %v658
  %v660 = vpop.f32.mrb[0].mxu0
  %v661 = vpop.f32.mrb[0].mxu0
  %v662 = vadd.f32 %v574, %v661
  %v663 = vpop.f32.mrb[0].mxu0
  %664 = vmatprep.mubr.bf16.mxu0 0
  %665 = vmatmul.mubr.bf16.gmra.mrb[0].mxu0 %v421
  %v666 = vpop.f32.mrb[0].mxu0
  %v667 = vadd.f32 %v579, %v666
  %v668 = vpop.f32.mrb[0].mxu0
  %v669 = vpop.f32.mrb[0].mxu0
  %v670 = vadd.f32 %v582, %v669
  %v671 = vpop.f32.mrb[0].mxu0
  %672 = vmatprep.mubr.bf16.mxu0 0
  %673 = vmatmul.mubr.bf16.gmra.mrb[0].mxu0 %v424
  %v674 = vpop.f32.mrb[0].mxu0
  %v675 = vadd.f32 %v587, %v674
  %v676 = vpop.f32.mrb[0].mxu0
  %v677 = vpop.f32.mrb[0].mxu0
  %v678 = vadd.f32 %v590, %v677
  %v679 = vpop.f32.mrb[0].mxu0
  %680 = vmatprep.mubr.bf16.mxu0 0
  %681 = vmatmul.mubr.bf16.gmra.mrb[0].mxu0 %v427
  %v682 = vpop.f32.mrb[0].mxu0
  %v683 = vadd.f32 %v595, %v682
  %v684 = vpop.f32.mrb[0].mxu0
  %v685 = vpop.f32.mrb[0].mxu0
  %v686 = vadd.f32 %v598, %v685
  %v687 = vpop.f32.mrb[0].mxu0
  %688 = vmatprep.mubr.bf16.mxu0 0
  %689 = vmatmul.mubr.bf16.gmra.mrb[0].mxu0 %v430
  %v690 = vpop.f32.mrb[0].mxu0
  %v691 = vadd.f32 %v603, %v690
  %v692 = vpop.f32.mrb[0].mxu0
  %v693 = vpop.f32.mrb[0].mxu0
  %v694 = vpop.f32.mrb[0].mxu0
  %695 = vdwg.mxu0
  %v696 = vmax.f32 %v643, 0.0
  %v697 = vmax.f32 %v646, 0.0
  %v698 = vmax.f32 %v651, 0.0
  %v699 = vmax.f32 %v654, 0.0
  %v700 = vmax.f32 %v659, 0.0
  %v701 = vmax.f32 %v662, 0.0
  %v702 = vmax.f32 %v667, 0.0
  %v703 = vmax.f32 %v670, 0.0
  %v704 = vmax.f32 %v675, 0.0
  %v705 = vmax.f32 %v678, 0.0
  %v706 = vmax.f32 %v683, 0.0
  %v707 = vmax.f32 %v686, 0.0
  %v708 = vmax.f32 %v691, 0.0
  %709 = vst.msk [vmem:[%s3] sm:$0xff] %vm410, %v696
  %710 = vst.msk [vmem:[%s3 + $0x8] sm:$0xff] %vm410, %v697
  %711 = vst.msk [vmem:[%s3 + $0x10] sm:$0xff] %vm410, %v698
  %712 = vst.msk [vmem:[%s3 + $0x18] sm:$0xff] %vm410, %v699
  %713 = vst.msk [vmem:[%s3 + $0x20] sm:$0xff] %vm410, %v700
  %714 = vst.msk [vmem:[%s3 + $0x28] sm:$0xff] %vm410, %v701
  %715 = vst.msk [vmem:[%s3 + $0x30] sm:$0xff] %vm410, %v702
  %716 = vst.msk [vmem:[%s3 + $0x38] sm:$0xff] %vm410, %v703
  %717 = vst.msk [vmem:[%s3 + $0x40] sm:$0xff] %vm410, %v704
  %718 = vst.msk [vmem:[%s3 + $0x48] sm:$0xff] %vm410, %v705
  %719 = vst.msk [vmem:[%s3 + $0x50] sm:$0xff] %vm410, %v706
  %720 = vst.msk [vmem:[%s3 + $0x58] sm:$0xff] %vm410, %v707
  %vm721 = vcmask 517120
  %722 = vst.msk [vmem:[%s3 + $0x60] sm:$0x3] %vm721, %v708
  // Predicated region
  $region14: #{_lambda_.5} parent=0 // pred_check
    _
  $region15: #{_lambda_.5} parent=0 // pred_check_branch
    %724 = sbr.rel (0) target = $region17
  $region16: #{_lambda_.5} parent=0 // pred_region
    _
  $region17: #{_lambda_.5} parent=0 // pred_fallthru
    _
  // Predicated region
  $region18: #{_lambda_.5} parent=0 // pred_check
    _
  $region19: #{_lambda_.5} parent=0 // pred_check_branch
    %726 = sbr.rel (0) target = $region21
  $region20: #{_lambda_.5} parent=0 // pred_region
    _
  $region21: #{_lambda_.5} parent=0 // pred_fallthru
    _

// kernel: _lambda_.6
$region0: #{_lambda_.6}
  #allocation0 [shape = 'u32[]', space=smem, size = 0x4, offset = 0x4, fixed_abs, tag = 'smem constant byte address 0x4 - core index']
  #allocation1 [shape = 'u32[144,128]{1,0:T(1,128)}', space=vmem, size = 0x12000, scoped, tag = 'internal scratch']
  %s0 = inlined_call_operand.vmem [shape: f32[2,16,576], index: 0, kind: input, shape index: {}]
  %s1 = inlined_call_operand.vmem [shape: bf16[576,64], index: 1, kind: input, shape index: {}]
  %s2 = inlined_call_operand.vmem [shape: f32[1,64], index: 2, kind: input, shape index: {}]
  %s3 = inlined_call_operand.vmem [shape: bf16[64,1152], index: 3, kind: input, shape index: {}]
  %s4 = inlined_call_operand.vmem [shape: f32[1,1152], index: 4, kind: input, shape index: {}]
  %s5 = inlined_call_operand.vmem [shape: bf16[64,1152], index: 5, kind: input, shape index: {}]
  %s6 = inlined_call_operand.vmem [shape: f32[1,1152], index: 6, kind: input, shape index: {}]
  %s7 = inlined_call_operand.vmem [shape: f32[2,1152], index: 7, kind: output, shape index: {0}]
  %s8 = inlined_call_operand.vmem [shape: f32[2,1152], index: 8, kind: output, shape index: {1}]
  %9 = xla_tuple %s7, %s8
  %s10 = sld [smem:[#allocation0]]
  $region46: #{_lambda_.6} parent=0
    _
  %s12 = ssub.s32 1, %s10
  %s13 = scalar_select 0, %s12, %s10
  // Predicated region
  $region2: #{_lambda_.6} parent=0 // pred_check
    _
  $region3: #{_lambda_.6} parent=0 // pred_check_branch
    %15 = sbr.rel (0) target = $region5
  $region4: #{_lambda_.6} parent=0 // pred_region
    _
  $region5: #{_lambda_.6} parent=0 // pred_fallthru
    _
  // Predicated region
  $region6: #{_lambda_.6} parent=0 // pred_check
    _
  $region7: #{_lambda_.6} parent=0 // pred_check_branch
    %17 = sbr.rel (0) target = $region9
  $region8: #{_lambda_.6} parent=0 // pred_region
    _
  $region9: #{_lambda_.6} parent=0 // pred_fallthru
    _
  // Predicated region
  $region10: #{_lambda_.6} parent=0 // pred_check
    _
  $region11: #{_lambda_.6} parent=0 // pred_check_branch
    %19 = sbr.rel (0) target = $region13
  $region12: #{_lambda_.6} parent=0 // pred_region
    _
  $region13: #{_lambda_.6} parent=0 // pred_fallthru
    _
  // Predicated region
  $region14: #{_lambda_.6} parent=0 // pred_check
    _
  $region15: #{_lambda_.6} parent=0 // pred_check_branch
    %21 = sbr.rel (0) target = $region17
  $region16: #{_lambda_.6} parent=0 // pred_region
    _
  $region17: #{_lambda_.6} parent=0 // pred_fallthru
    _
  // Predicated region
  $region18: #{_lambda_.6} parent=0 // pred_check
    _
  $region19: #{_lambda_.6} parent=0 // pred_check_branch
    %23 = sbr.rel (0) target = $region21
  $region20: #{_lambda_.6} parent=0 // pred_region
    _
  $region21: #{_lambda_.6} parent=0 // pred_fallthru
    _
  // Predicated region
  $region22: #{_lambda_.6} parent=0 // pred_check
    _
  $region23: #{_lambda_.6} parent=0 // pred_check_branch
    %25 = sbr.rel (0) target = $region25
  $region24: #{_lambda_.6} parent=0 // pred_region
    _
  $region25: #{_lambda_.6} parent=0 // pred_fallthru
    _
  // Predicated region
  $region26: #{_lambda_.6} parent=0 // pred_check
    _
  $region27: #{_lambda_.6} parent=0 // pred_check_branch
    %27 = sbr.rel (0) target = $region29
  $region28: #{_lambda_.6} parent=0 // pred_region
    _
  $region29: #{_lambda_.6} parent=0 // pred_fallthru
    _
  %v29 = vld [vmem:[%s0] sm:$0xff]
  %v30 = vld [vmem:[%s0 + $0x8] sm:$0xff]
  %v31 = vld [vmem:[%s0 + $0x10] sm:$0xff]
  %v32 = vld [vmem:[%s0 + $0x18] sm:$0xff]
  %v33 = vld [vmem:[%s0 + $0x20] sm:$0xff]
  %v34 = vld [vmem:[%s0 + $0x28] sm:$0xff]
  %v35 = vld [vmem:[%s0 + $0x30] sm:$0xff]
  %v36 = vld [vmem:[%s0 + $0x38] sm:$0xff]
  %v37 = vld [vmem:[%s0 + $0x40] sm:$0xff]
  %v38 = vld [vmem:[%s0 + $0x48] sm:$0xff]
  %v39 = vld [vmem:[%s0 + $0x50] sm:$0xff]
  %v40 = vld [vmem:[%s0 + $0x58] sm:$0xff]
  %v41 = vld [vmem:[%s0 + $0x60] sm:$0xff]
  %v42 = vld [vmem:[%s0 + $0x68] sm:$0xff]
  %v43 = vld [vmem:[%s0 + $0x70] sm:$0xff]
  %v44 = vld [vmem:[%s0 + $0x78] sm:$0xff]
  %v45 = vld [vmem:[%s0 + $0x80] sm:$0xff]
  %v46 = vld [vmem:[%s0 + $0x88] sm:$0xff]
  %v47 = vld [vmem:[%s0 + $0x90] sm:$0xff]
  %v48 = vld [vmem:[%s0 + $0x98] sm:$0xff]
  %v49 = vpack.c.bf16 %v34, %v29
  %v50 = vpack.c.bf16 %v35, %v30
  %v51 = vpack.c.bf16 %v36, %v31
  %v52 = vpack.c.bf16 %v37, %v32
  %v53 = vpack.c.bf16 %v38, %v33
  %v54 = vpack.c.bf16 %v44, %v39
  %v55 = vpack.c.bf16 %v45, %v40
  %v56 = vpack.c.bf16 %v46, %v41
  %v57 = vpack.c.bf16 %v47, %v42
  %v58 = vpack.c.bf16 %v48, %v43
  %v59 = vld [vmem:[%s1] sm:$0xf]
  %v60 = vld [vmem:[%s1 + $0x4] sm:$0xf]
  %v61 = vld [vmem:[%s1 + $0x8] sm:$0xf]
  %v62 = vld [vmem:[%s1 + $0xc] sm:$0xf]
  %v63 = vld [vmem:[%s1 + $0x10] sm:$0xf]
  %v64 = vld [vmem:[%s1 + $0x14] sm:$0xf]
  %v65 = vld [vmem:[%s1 + $0x18] sm:$0xf]
  %v66 = vld [vmem:[%s1 + $0x1c] sm:$0xf]
  %v67 = vld [vmem:[%s1 + $0x20] sm:$0xf]
  %v68 = vld [vmem:[%s1 + $0x24] sm:$0xf]
  %v69 = vld [vmem:[%s1 + $0x28] sm:$0xf]
  %v70 = vld [vmem:[%s1 + $0x2c] sm:$0xf]
  %v71 = vld [vmem:[%s1 + $0x30] sm:$0xf]
  %v72 = vld [vmem:[%s1 + $0x34] sm:$0xf]
  %v73 = vld [vmem:[%s1 + $0x38] sm:$0xf]
  %v74 = vld [vmem:[%s1 + $0x3c] sm:$0xf]
  %v75 = vld [vmem:[%s1 + $0x40] sm:$0xf]
  %v76 = vld [vmem:[%s1 + $0x44] sm:$0xf]
  %v77 = vld [vmem:[%s1 + $0x48] sm:$0xf]
  %v78 = vld [vmem:[%s1 + $0x4c] sm:$0xf]
  %v79 = vld [vmem:[%s1 + $0x50] sm:$0xf]
  %v80 = vld [vmem:[%s1 + $0x54] sm:$0xf]
  %v81 = vld [vmem:[%s1 + $0x58] sm:$0xf]
  %v82 = vld [vmem:[%s1 + $0x5c] sm:$0xf]
  %v83 = vld [vmem:[%s1 + $0x60] sm:$0xf]
  %v84 = vld [vmem:[%s1 + $0x64] sm:$0xf]
  %v85 = vld [vmem:[%s1 + $0x68] sm:$0xf]
  %v86 = vld [vmem:[%s1 + $0x6c] sm:$0xf]
  %v87 = vld [vmem:[%s1 + $0x70] sm:$0xf]
  %v88 = vld [vmem:[%s1 + $0x74] sm:$0xf]
  %v89 = vld [vmem:[%s1 + $0x78] sm:$0xf]
  %v90 = vld [vmem:[%s1 + $0x7c] sm:$0xf]
  %v91 = vld [vmem:[%s1 + $0x80] sm:$0xf]
  %v92 = vld [vmem:[%s1 + $0x84] sm:$0xf]
  %v93 = vld [vmem:[%s1 + $0x88] sm:$0xf]
  %v94 = vld [vmem:[%s1 + $0x8c] sm:$0xf]
  %v95 = vld [vmem:[%s1 + $0x90] sm:$0xf]
  %v96 = vld [vmem:[%s1 + $0x94] sm:$0xf]
  %v97 = vld [vmem:[%s1 + $0x98] sm:$0xf]
  %v98 = vld [vmem:[%s1 + $0x9c] sm:$0xf]
  %v99 = vld [vmem:[%s1 + $0xa0] sm:$0xf]
  %v100 = vld [vmem:[%s1 + $0xa4] sm:$0xf]
  %v101 = vld [vmem:[%s1 + $0xa8] sm:$0xf]
  %v102 = vld [vmem:[%s1 + $0xac] sm:$0xf]
  %v103 = vld [vmem:[%s1 + $0xb0] sm:$0xf]
  %v104 = vld [vmem:[%s1 + $0xb4] sm:$0xf]
  %v105 = vld [vmem:[%s1 + $0xb8] sm:$0xf]
  %v106 = vld [vmem:[%s1 + $0xbc] sm:$0xf]
  %v107 = vld [vmem:[%s1 + $0xc0] sm:$0xf]
  %v108 = vld [vmem:[%s1 + $0xc4] sm:$0xf]
  %v109 = vld [vmem:[%s1 + $0xc8] sm:$0xf]
  %v110 = vld [vmem:[%s1 + $0xcc] sm:$0xf]
  %v111 = vld [vmem:[%s1 + $0xd0] sm:$0xf]
  %v112 = vld [vmem:[%s1 + $0xd4] sm:$0xf]
  %v113 = vld [vmem:[%s1 + $0xd8] sm:$0xf]
  %v114 = vld [vmem:[%s1 + $0xdc] sm:$0xf]
  %v115 = vld [vmem:[%s1 + $0xe0] sm:$0xf]
  %v116 = vld [vmem:[%s1 + $0xe4] sm:$0xf]
  %v117 = vld [vmem:[%s1 + $0xe8] sm:$0xf]
  %v118 = vld [vmem:[%s1 + $0xec] sm:$0xf]
  %v119 = vld [vmem:[%s1 + $0xf0] sm:$0xf]
  %v120 = vld [vmem:[%s1 + $0xf4] sm:$0xf]
  %v121 = vld [vmem:[%s1 + $0xf8] sm:$0xf]
  %v122 = vld [vmem:[%s1 + $0xfc] sm:$0xf]
  %v123 = vld [vmem:[%s1 + $0x100] sm:$0xf]
  %v124 = vld [vmem:[%s1 + $0x104] sm:$0xf]
  %v125 = vld [vmem:[%s1 + $0x108] sm:$0xf]
  %v126 = vld [vmem:[%s1 + $0x10c] sm:$0xf]
  %v127 = vld [vmem:[%s1 + $0x110] sm:$0xf]
  %v128 = vld [vmem:[%s1 + $0x114] sm:$0xf]
  %v129 = vld [vmem:[%s1 + $0x118] sm:$0xf]
  %v130 = vld [vmem:[%s1 + $0x11c] sm:$0xf]
  %v131 = vld [vmem:[%s2] sm:$0x1]
  %v133 = vlaneseq
  %v134 = vshrl.u32 %v133, 7
  %v135 = vsub.s32 0, %v134
  %v136 = vrot.slane %v131, %v135
  %v210 = vunpack.c.l.b16 %v59
  %v211 = vunpack.c.l.b16 %v60
  %v212 = vunpack.c.l.b16 %v61
  %v213 = vunpack.c.l.b16 %v62
  %v214 = vunpack.c.l.b16 %v63
  %v215 = vunpack.c.l.b16 %v64
  %v216 = vunpack.c.l.b16 %v65
  %v217 = vunpack.c.l.b16 %v66
  %v218 = vunpack.c.l.b16 %v67
  %v219 = vunpack.c.l.b16 %v68
  %v220 = vunpack.c.l.b16 %v69
  %v221 = vunpack.c.l.b16 %v70
  %v222 = vunpack.c.l.b16 %v71
  %v223 = vunpack.c.l.b16 %v72
  %v224 = vunpack.c.l.b16 %v73
  %v225 = vunpack.c.l.b16 %v74
  %v226 = vunpack.c.l.b16 %v75
  %v227 = vunpack.c.l.b16 %v76
  %v228 = vunpack.c.l.b16 %v77
  %v229 = vunpack.c.l.b16 %v78
  %v230 = vunpack.c.l.b16 %v79
  %v231 = vunpack.c.l.b16 %v80
  %v232 = vunpack.c.l.b16 %v81
  %v233 = vunpack.c.l.b16 %v82
  %v234 = vunpack.c.l.b16 %v83
  %v235 = vunpack.c.l.b16 %v84
  %v236 = vunpack.c.l.b16 %v85
  %v237 = vunpack.c.l.b16 %v86
  %v238 = vunpack.c.l.b16 %v87
  %v239 = vunpack.c.l.b16 %v88
  %v240 = vunpack.c.l.b16 %v89
  %v241 = vunpack.c.l.b16 %v90
  %v242 = vunpack.c.l.b16 %v91
  %v243 = vunpack.c.l.b16 %v92
  %v244 = vunpack.c.l.b16 %v93
  %v245 = vunpack.c.l.b16 %v94
  %v246 = vunpack.c.l.b16 %v95
  %v247 = vunpack.c.l.b16 %v96
  %v248 = vunpack.c.l.b16 %v97
  %v249 = vunpack.c.l.b16 %v98
  %v250 = vunpack.c.l.b16 %v99
  %v251 = vunpack.c.l.b16 %v100
  %v252 = vunpack.c.l.b16 %v101
  %v253 = vunpack.c.l.b16 %v102
  %v254 = vunpack.c.l.b16 %v103
  %v255 = vunpack.c.l.b16 %v104
  %v256 = vunpack.c.l.b16 %v105
  %v257 = vunpack.c.l.b16 %v106
  %v258 = vunpack.c.l.b16 %v107
  %v259 = vunpack.c.l.b16 %v108
  %v260 = vunpack.c.l.b16 %v109
  %v261 = vunpack.c.l.b16 %v110
  %v262 = vunpack.c.l.b16 %v111
  %v263 = vunpack.c.l.b16 %v112
  %v264 = vunpack.c.l.b16 %v113
  %v265 = vunpack.c.l.b16 %v114
  %v266 = vunpack.c.l.b16 %v115
  %v267 = vunpack.c.l.b16 %v116
  %v268 = vunpack.c.l.b16 %v117
  %v269 = vunpack.c.l.b16 %v118
  %v270 = vunpack.c.l.b16 %v119
  %v271 = vunpack.c.l.b16 %v120
  %v272 = vunpack.c.l.b16 %v121
  %v273 = vunpack.c.l.b16 %v122
  %v274 = vunpack.c.l.b16 %v123
  %v275 = vunpack.c.l.b16 %v124
  %v276 = vunpack.c.l.b16 %v125
  %v277 = vunpack.c.l.b16 %v126
  %v278 = vunpack.c.l.b16 %v127
  %v279 = vunpack.c.l.b16 %v128
  %v280 = vunpack.c.l.b16 %v129
  %v281 = vunpack.c.l.b16 %v130
  %v282 = vpack.c.b16 %v211, %v210
  %v283 = vpack.c.b16 %v213, %v212
  %v284 = vpack.c.b16 %v215, %v214
  %v285 = vpack.c.b16 %v217, %v216
  %v286 = vpack.c.b16 %v219, %v218
  %v287 = vpack.c.b16 %v221, %v220
  %v288 = vpack.c.b16 %v223, %v222
  %v289 = vpack.c.b16 %v225, %v224
  %v290 = vpack.c.b16 %v227, %v226
  %v291 = vpack.c.b16 %v229, %v228
  %v292 = vpack.c.b16 %v231, %v230
  %v293 = vpack.c.b16 %v233, %v232
  %v294 = vpack.c.b16 %v235, %v234
  %v295 = vpack.c.b16 %v237, %v236
  %v296 = vpack.c.b16 %v239, %v238
  %v297 = vpack.c.b16 %v241, %v240
  %v298 = vpack.c.b16 %v243, %v242
  %v299 = vpack.c.b16 %v245, %v244
  %v300 = vpack.c.b16 %v247, %v246
  %v301 = vpack.c.b16 %v249, %v248
  %v302 = vpack.c.b16 %v251, %v250
  %v303 = vpack.c.b16 %v253, %v252
  %v304 = vpack.c.b16 %v255, %v254
  %v305 = vpack.c.b16 %v257, %v256
  %v306 = vpack.c.b16 %v259, %v258
  %v307 = vpack.c.b16 %v261, %v260
  %v308 = vpack.c.b16 %v263, %v262
  %v309 = vpack.c.b16 %v265, %v264
  %v310 = vpack.c.b16 %v267, %v266
  %v311 = vpack.c.b16 %v269, %v268
  %v312 = vpack.c.b16 %v271, %v270
  %v313 = vpack.c.b16 %v273, %v272
  %v314 = vpack.c.b16 %v275, %v274
  %v315 = vpack.c.b16 %v277, %v276
  %v316 = vpack.c.b16 %v279, %v278
  %v317 = vpack.c.b16 %v281, %v280
  %vm354 = vcmask 523264
  %v356 = vsel %vm354, %v53, 0
  %v359 = vsel %vm354, %v58, 0
  %361 = vmatprep.subr.bf16.mxu0 0
  %362 = vmatpush1.bf16.msra.mxu0 %v282
  %363 = vmatprep.subr.bf16.mxu0 0
  %364 = vmatpush1.bf16.msra.mxu0 %v283
  %365 = vmatprep.subr.bf16.mxu0 0
  %366 = vmatpush1.bf16.msra.mxu0 %v284
  %367 = vmatprep.subr.bf16.mxu0 0
  %368 = vmatpush1.bf16.msra.mxu0 %v285
  %369 = vmatprep.subr.bf16.mxu0 0
  %370 = vmatpush1.bf16.msra.mxu0 %v286
  %371 = vmatprep.subr.bf16.mxu0 0
  %372 = vmatpush1.bf16.msra.mxu0 %v287
  %373 = vmatprep.subr.bf16.mxu0 0
  %374 = vmatpush1.bf16.msra.mxu0 %v288
  %375 = vmatprep.subr.bf16.mxu0 0
  %376 = vmatpush1.bf16.msra.mxu0 %v289
  %377 = vmatprep.subr.bf16.mxu0 0
  %378 = vmatpush1.bf16.msra.mxu0 %v290
  %379 = vmatprep.subr.bf16.mxu0 0
  %380 = vmatpush1.bf16.msra.mxu0 %v291
  %381 = vmatprep.subr.bf16.mxu0 0
  %382 = vmatpush1.bf16.msra.mxu0 %v292
  %383 = vmatprep.subr.bf16.mxu0 0
  %384 = vmatpush1.bf16.msra.mxu0 %v293
  %385 = vmatprep.subr.bf16.mxu0 0
  %386 = vmatpush1.bf16.msra.mxu0 %v294
  %387 = vmatprep.subr.bf16.mxu0 0
  %388 = vmatpush1.bf16.msra.mxu0 %v295
  %389 = vmatprep.subr.bf16.mxu0 0
  %390 = vmatpush1.bf16.msra.mxu0 %v296
  %391 = vmatprep.subr.bf16.mxu0 0
  %392 = vmatpush1.bf16.msra.mxu0 %v297
  %393 = vmatprep.mubr.bf16.mxu0 %v50
  %394 = vmatmul.mubr.bf16.gmra.mrb[0].mxu0 %v49
  %v395 = vpop.f32.mrb[0].mxu0
  %v396 = vadd.f32 %v136, %v395
  %v397 = vpop.f32.mrb[0].mxu0
  %v398 = vpop.f32.mrb[0].mxu0
  %v399 = vadd.f32 %v136, %v398
  %v400 = vpop.f32.mrb[0].mxu0
  %401 = vmatprep.mubr.bf16.mxu0 %v55
  %402 = vmatmul.mubr.bf16.gmra.mrb[0].mxu0 %v54
  %v403 = vpop.f32.mrb[0].mxu0
  %v404 = vadd.f32 %v136, %v403
  %v405 = vpop.f32.mrb[0].mxu0
  %v406 = vpop.f32.mrb[0].mxu0
  %v407 = vadd.f32 %v136, %v406
  %v408 = vpop.f32.mrb[0].mxu0
  %409 = vdwg.mxu0
  %410 = vmatprep.subr.bf16.mxu0 0
  %411 = vmatpush1.bf16.msra.mxu0 %v298
  %412 = vmatprep.subr.bf16.mxu0 0
  %413 = vmatpush1.bf16.msra.mxu0 %v299
  %414 = vmatprep.subr.bf16.mxu0 0
  %415 = vmatpush1.bf16.msra.mxu0 %v300
  %416 = vmatprep.subr.bf16.mxu0 0
  %417 = vmatpush1.bf16.msra.mxu0 %v301
  %418 = vmatprep.subr.bf16.mxu0 0
  %419 = vmatpush1.bf16.msra.mxu0 %v302
  %420 = vmatprep.subr.bf16.mxu0 0
  %421 = vmatpush1.bf16.msra.mxu0 %v303
  %422 = vmatprep.subr.bf16.mxu0 0
  %423 = vmatpush1.bf16.msra.mxu0 %v304
  %424 = vmatprep.subr.bf16.mxu0 0
  %425 = vmatpush1.bf16.msra.mxu0 %v305
  %426 = vmatprep.subr.bf16.mxu0 0
  %427 = vmatpush1.bf16.msra.mxu0 %v306
  %428 = vmatprep.subr.bf16.mxu0 0
  %429 = vmatpush1.bf16.msra.mxu0 %v307
  %430 = vmatprep.subr.bf16.mxu0 0
  %431 = vmatpush1.bf16.msra.mxu0 %v308
  %432 = vmatprep.subr.bf16.mxu0 0
  %433 = vmatpush1.bf16.msra.mxu0 %v309
  %434 = vmatprep.subr.bf16.mxu0 0
  %435 = vmatpush1.bf16.msra.mxu0 %v310
  %436 = vmatprep.subr.bf16.mxu0 0
  %437 = vmatpush1.bf16.msra.mxu0 %v311
  %438 = vmatprep.subr.bf16.mxu0 0
  %439 = vmatpush1.bf16.msra.mxu0 %v312
  %440 = vmatprep.subr.bf16.mxu0 0
  %441 = vmatpush1.bf16.msra.mxu0 %v313
  %442 = vmatprep.mubr.bf16.mxu0 %v52
  %443 = vmatmul.mubr.bf16.gmra.mrb[0].mxu0 %v51
  %v444 = vpop.f32.mrb[0].mxu0
  %v445 = vadd.f32 %v396, %v444
  %v446 = vpop.f32.mrb[0].mxu0
  %v447 = vpop.f32.mrb[0].mxu0
  %v448 = vadd.f32 %v399, %v447
  %v449 = vpop.f32.mrb[0].mxu0
  %450 = vmatprep.mubr.bf16.mxu0 %v57
  %451 = vmatmul.mubr.bf16.gmra.mrb[0].mxu0 %v56
  %v452 = vpop.f32.mrb[0].mxu0
  %v453 = vadd.f32 %v404, %v452
  %v454 = vpop.f32.mrb[0].mxu0
  %v455 = vpop.f32.mrb[0].mxu0
  %v456 = vadd.f32 %v407, %v455
  %v457 = vpop.f32.mrb[0].mxu0
  %458 = vdwg.mxu0
  %459 = vmatprep.subr.bf16.mxu0 0
  %460 = vmatpush1.bf16.msra.mxu0 %v314
  %461 = vmatprep.subr.bf16.mxu0 0
  %462 = vmatpush1.bf16.msra.mxu0 %v315
  %463 = vmatprep.subr.bf16.mxu0 0
  %464 = vmatpush1.bf16.msra.mxu0 %v316
  %465 = vmatprep.subr.bf16.mxu0 0
  %466 = vmatpush1.bf16.msra.mxu0 %v317
  %467 = vmatprep.subr.bf16.mxu0 0
  %468 = vmatpush1.bf16.msra.mxu0 0
  %469 = vmatprep.subr.bf16.mxu0 0
  %470 = vmatpush1.bf16.msra.mxu0 0
  %471 = vmatprep.subr.bf16.mxu0 0
  %472 = vmatpush1.bf16.msra.mxu0 0
  %473 = vmatprep.subr.bf16.mxu0 0
  %474 = vmatpush1.bf16.msra.mxu0 0
  %475 = vmatprep.subr.bf16.mxu0 0
  %476 = vmatpush1.bf16.msra.mxu0 0
  %477 = vmatprep.subr.bf16.mxu0 0
  %478 = vmatpush1.bf16.msra.mxu0 0
  %479 = vmatprep.subr.bf16.mxu0 0
  %480 = vmatpush1.bf16.msra.mxu0 0
  %481 = vmatprep.subr.bf16.mxu0 0
  %482 = vmatpush1.bf16.msra.mxu0 0
  %483 = vmatprep.subr.bf16.mxu0 0
  %484 = vmatpush1.bf16.msra.mxu0 0
  %485 = vmatprep.subr.bf16.mxu0 0
  %486 = vmatpush1.bf16.msra.mxu0 0
  %487 = vmatprep.subr.bf16.mxu0 0
  %488 = vmatpush1.bf16.msra.mxu0 0
  %489 = vmatprep.subr.bf16.mxu0 0
  %490 = vmatpush1.bf16.msra.mxu0 0
  %491 = vmatprep.mubr.bf16.mxu0 0
  %492 = vmatmul.mubr.bf16.gmra.mrb[0].mxu0 %v356
  %v493 = vpop.f32.mrb[0].mxu0
  %v494 = vadd.f32 %v445, %v493
  %v495 = vpop.f32.mrb[0].mxu0
  %v496 = vpop.f32.mrb[0].mxu0
  %v497 = vadd.f32 %v448, %v496
  %v498 = vpop.f32.mrb[0].mxu0
  %499 = vmatprep.mubr.bf16.mxu0 0
  %500 = vmatmul.mubr.bf16.gmra.mrb[0].mxu0 %v359
  %v501 = vpop.f32.mrb[0].mxu0
  %v502 = vadd.f32 %v453, %v501
  %v503 = vpop.f32.mrb[0].mxu0
  %v504 = vpop.f32.mrb[0].mxu0
  %v505 = vadd.f32 %v456, %v504
  %v506 = vpop.f32.mrb[0].mxu0
  %507 = vdwg.mxu0
  %v508 = vmax.f32 %v494, 0.0
  %v509 = vmax.f32 %v497, 0.0
  %v510 = vmax.f32 %v502, 0.0
  %v511 = vmax.f32 %v505, 0.0
  %v512 = vsel %vm354, %v508, 0.0
  %v513 = vsel %vm354, %v509, 0.0
  %v514 = vadd.f32 %v512, %v513
  %v515 = vrot.slane %v514, 4
  %v516 = vadd.f32 %v514, %v515
  %v517 = vrot.slane %v516, 2
  %v518 = vadd.f32 %v516, %v517
  %v519 = vrot.slane %v518, 1
  %v520 = vadd.f32 %v518, %v519
  %v521 = vsel %vm354, %v510, 0.0
  %v522 = vsel %vm354, %v511, 0.0
  %v523 = vadd.f32 %v521, %v522
  %v524 = vrot.slane %v523, 4
  %v525 = vadd.f32 %v523, %v524
  %v526 = vrot.slane %v525, 2
  %v527 = vadd.f32 %v525, %v526
  %v528 = vrot.slane %v527, 1
  %v529 = vadd.f32 %v527, %v528
  %v530 = vrcp.pop 16.0
  %v531 = vmul.f32 %v520, %v530
  %v532 = vmul.f32 %v529, %v530
  %v533 = vpack.c.bf16 %v531, %v531
  %v534 = vpack.c.bf16 %v532, %v532
  %v535 = vld [vmem:[%s3] sm:$0xff]
  %v536 = vld [vmem:[%s3 + $0x8] sm:$0xff]
  %v537 = vld [vmem:[%s3 + $0x10] sm:$0xff]
  %v538 = vld [vmem:[%s3 + $0x18] sm:$0xff]
  %v539 = vld [vmem:[%s3 + $0x20] sm:$0xf]
  %v540 = vld [vmem:[%s3 + $0x24] sm:$0xff]
  %v541 = vld [vmem:[%s3 + $0x2c] sm:$0xff]
  %v542 = vld [vmem:[%s3 + $0x34] sm:$0xff]
  %v543 = vld [vmem:[%s3 + $0x3c] sm:$0xff]
  %v544 = vld [vmem:[%s3 + $0x44] sm:$0xf]
  %v545 = vld [vmem:[%s3 + $0x48] sm:$0xff]
  %v546 = vld [vmem:[%s3 + $0x50] sm:$0xff]
  %v547 = vld [vmem:[%s3 + $0x58] sm:$0xff]
  %v548 = vld [vmem:[%s3 + $0x60] sm:$0xff]
  %v549 = vld [vmem:[%s3 + $0x68] sm:$0xf]
  %v550 = vld [vmem:[%s3 + $0x6c] sm:$0xff]
  %v551 = vld [vmem:[%s3 + $0x74] sm:$0xff]
  %v552 = vld [vmem:[%s3 + $0x7c] sm:$0xff]
  %v553 = vld [vmem:[%s3 + $0x84] sm:$0xff]
  %v554 = vld [vmem:[%s3 + $0x8c] sm:$0xf]
  %v555 = vld [vmem:[%s3 + $0x90] sm:$0xff]
  %v556 = vld [vmem:[%s3 + $0x98] sm:$0xff]
  %v557 = vld [vmem:[%s3 + $0xa0] sm:$0xff]
  %v558 = vld [vmem:[%s3 + $0xa8] sm:$0xff]
  %v559 = vld [vmem:[%s3 + $0xb0] sm:$0xf]
  %v560 = vld [vmem:[%s3 + $0xb4] sm:$0xff]
  %v561 = vld [vmem:[%s3 + $0xbc] sm:$0xff]
  %v562 = vld [vmem:[%s3 + $0xc4] sm:$0xff]
  %v563 = vld [vmem:[%s3 + $0xcc] sm:$0xff]
  %v564 = vld [vmem:[%s3 + $0xd4] sm:$0xf]
  %v565 = vld [vmem:[%s3 + $0xd8] sm:$0xff]
  %v566 = vld [vmem:[%s3 + $0xe0] sm:$0xff]
  %v567 = vld [vmem:[%s3 + $0xe8] sm:$0xff]
  %v568 = vld [vmem:[%s3 + $0xf0] sm:$0xff]
  %v569 = vld [vmem:[%s3 + $0xf8] sm:$0xf]
  %v570 = vld [vmem:[%s3 + $0xfc] sm:$0xff]
  %v571 = vld [vmem:[%s3 + $0x104] sm:$0xff]
  %v572 = vld [vmem:[%s3 + $0x10c] sm:$0xff]
  %v573 = vld [vmem:[%s3 + $0x114] sm:$0xff]
  %v574 = vld [vmem:[%s3 + $0x11c] sm:$0xf]
  %v575 = vld [vmem:[%s4] sm:$0xff]
  %v576 = vld [vmem:[%s4 + $0x8] sm:$0x1]
  %v579 = vlaneseq
  %v580 = vshrl.u32 %v579, 7
  %v581 = vsub.s32 0, %v580
  %v582 = vrot.slane %v575, %v581
  %v583 = vlaneseq
  %v584 = vshrl.u32 %v583, 7
  %v585 = vsub.s32 1, %v584
  %v586 = vrot.slane %v575, %v585
  %v587 = vlaneseq
  %v588 = vshrl.u32 %v587, 7
  %v589 = vsub.s32 2, %v588
  %v590 = vrot.slane %v575, %v589
  %v591 = vlaneseq
  %v592 = vshrl.u32 %v591, 7
  %v593 = vsub.s32 3, %v592
  %v594 = vrot.slane %v575, %v593
  %v595 = vlaneseq
  %v596 = vshrl.u32 %v595, 7
  %v597 = vsub.s32 4, %v596
  %v598 = vrot.slane %v575, %v597
  %v599 = vlaneseq
  %v600 = vshrl.u32 %v599, 7
  %v601 = vsub.s32 5, %v600
  %v602 = vrot.slane %v575, %v601
  %v603 = vlaneseq
  %v604 = vshrl.u32 %v603, 7
  %v605 = vsub.s32 6, %v604
  %v606 = vrot.slane %v575, %v605
  %v607 = vlaneseq
  %v608 = vshrl.u32 %v607, 7
  %v609 = vsub.s32 7, %v608
  %v610 = vrot.slane %v575, %v609
  %v611 = vlaneseq
  %v612 = vshrl.u32 %v611, 7
  %v613 = vsub.s32 0, %v612
  %v614 = vrot.slane %v576, %v613
  %v626 = vunpack.c.l.b16 %v533
  %v627 = vunpack.c.l.b16 %v534
  %vm628 = vcmask 1041409
  %v629 = vsel %vm628, %v627, %v626
  %v630 = vpack.c.b16 %v629, %v629
  %v671 = vunpack.c.l.b16 %v535
  %v672 = vunpack.c.h.b16 %v535
  %v673 = vunpack.c.l.b16 %v536
  %v674 = vunpack.c.h.b16 %v536
  %v675 = vunpack.c.l.b16 %v537
  %v676 = vunpack.c.h.b16 %v537
  %v677 = vunpack.c.l.b16 %v538
  %v678 = vunpack.c.h.b16 %v538
  %v679 = vunpack.c.l.b16 %v539
  %v680 = vunpack.c.l.b16 %v540
  %v681 = vunpack.c.h.b16 %v540
  %v682 = vunpack.c.l.b16 %v541
  %v683 = vunpack.c.h.b16 %v541
  %v684 = vunpack.c.l.b16 %v542
  %v685 = vunpack.c.h.b16 %v542
  %v686 = vunpack.c.l.b16 %v543
  %v687 = vunpack.c.h.b16 %v543
  %v688 = vunpack.c.l.b16 %v544
  %v689 = vunpack.c.l.b16 %v545
  %v690 = vunpack.c.h.b16 %v545
  %v691 = vunpack.c.l.b16 %v546
  %v692 = vunpack.c.h.b16 %v546
  %v693 = vunpack.c.l.b16 %v547
  %v694 = vunpack.c.h.b16 %v547
  %v695 = vunpack.c.l.b16 %v548
  %v696 = vunpack.c.h.b16 %v548
  %v697 = vunpack.c.l.b16 %v549
  %v698 = vunpack.c.l.b16 %v550
  %v699 = vunpack.c.h.b16 %v550
  %v700 = vunpack.c.l.b16 %v551
  %v701 = vunpack.c.h.b16 %v551
  %v702 = vunpack.c.l.b16 %v552
  %v703 = vunpack.c.h.b16 %v552
  %v704 = vunpack.c.l.b16 %v553
  %v705 = vunpack.c.h.b16 %v553
  %v706 = vunpack.c.l.b16 %v554
  %v707 = vunpack.c.l.b16 %v555
  %v708 = vunpack.c.h.b16 %v555
  %v709 = vunpack.c.l.b16 %v556
  %v710 = vunpack.c.h.b16 %v556
  %v711 = vunpack.c.l.b16 %v557
  %v712 = vunpack.c.h.b16 %v557
  %v713 = vunpack.c.l.b16 %v558
  %v714 = vunpack.c.h.b16 %v558
  %v715 = vunpack.c.l.b16 %v559
  %v716 = vunpack.c.l.b16 %v560
  %v717 = vunpack.c.h.b16 %v560
  %v718 = vunpack.c.l.b16 %v561
  %v719 = vunpack.c.h.b16 %v561
  %v720 = vunpack.c.l.b16 %v562
  %v721 = vunpack.c.h.b16 %v562
  %v722 = vunpack.c.l.b16 %v563
  %v723 = vunpack.c.h.b16 %v563
  %v724 = vunpack.c.l.b16 %v564
  %v725 = vunpack.c.l.b16 %v565
  %v726 = vunpack.c.h.b16 %v565
  %v727 = vunpack.c.l.b16 %v566
  %v728 = vunpack.c.h.b16 %v566
  %v729 = vunpack.c.l.b16 %v567
  %v730 = vunpack.c.h.b16 %v567
  %v731 = vunpack.c.l.b16 %v568
  %v732 = vunpack.c.h.b16 %v568
  %v733 = vunpack.c.l.b16 %v569
  %v734 = vunpack.c.l.b16 %v570
  %v735 = vunpack.c.h.b16 %v570
  %v736 = vunpack.c.l.b16 %v571
  %v737 = vunpack.c.h.b16 %v571
  %v738 = vunpack.c.l.b16 %v572
  %v739 = vunpack.c.h.b16 %v572
  %v740 = vunpack.c.l.b16 %v573
  %v741 = vunpack.c.h.b16 %v573
  %v742 = vunpack.c.l.b16 %v574
  %v743 = vpack.c.b16 %v680, %v671
  %v744 = vpack.c.b16 %v681, %v672
  %v745 = vpack.c.b16 %v682, %v673
  %v746 = vpack.c.b16 %v683, %v674
  %v747 = vpack.c.b16 %v684, %v675
  %v748 = vpack.c.b16 %v685, %v676
  %v749 = vpack.c.b16 %v686, %v677
  %v750 = vpack.c.b16 %v687, %v678
  %v751 = vpack.c.b16 %v688, %v679
  %v752 = vpack.c.b16 %v698, %v689
  %v753 = vpack.c.b16 %v699, %v690
  %v754 = vpack.c.b16 %v700, %v691
  %v755 = vpack.c.b16 %v701, %v692
  %v756 = vpack.c.b16 %v702, %v693
  %v757 = vpack.c.b16 %v703, %v694
  %v758 = vpack.c.b16 %v704, %v695
  %v759 = vpack.c.b16 %v705, %v696
  %v760 = vpack.c.b16 %v706, %v697
  %v761 = vpack.c.b16 %v716, %v707
  %v762 = vpack.c.b16 %v717, %v708
  %v763 = vpack.c.b16 %v718, %v709
  %v764 = vpack.c.b16 %v719, %v710
  %v765 = vpack.c.b16 %v720, %v711
  %v766 = vpack.c.b16 %v721, %v712
  %v767 = vpack.c.b16 %v722, %v713
  %v768 = vpack.c.b16 %v723, %v714
  %v769 = vpack.c.b16 %v724, %v715
  %v770 = vpack.c.b16 %v734, %v725
  %v771 = vpack.c.b16 %v735, %v726
  %v772 = vpack.c.b16 %v736, %v727
  %v773 = vpack.c.b16 %v737, %v728
  %v774 = vpack.c.b16 %v738, %v729
  %v775 = vpack.c.b16 %v739, %v730
  %v776 = vpack.c.b16 %v740, %v731
  %v777 = vpack.c.b16 %v741, %v732
  %v778 = vpack.c.b16 %v742, %v733
  %v816 = vsel %vm354, %v630, 0
  %818 = vmatprep.subr.bf16.mxu0 %v744
  %819 = vmatpush1.bf16.msra.mxu0 %v743
  %820 = vmatprep.subr.bf16.mxu0 %v753
  %821 = vmatpush1.bf16.msra.mxu0 %v752
  %822 = vmatprep.subr.bf16.mxu0 %v762
  %823 = vmatpush1.bf16.msra.mxu0 %v761
  %824 = vmatprep.subr.bf16.mxu0 %v771
  %825 = vmatpush1.bf16.msra.mxu0 %v770
  %826 = vmatprep.subr.bf16.mxu0 0
  %827 = vmatpush1.bf16.msra.mxu0 0
  %828 = vmatprep.subr.bf16.mxu0 0
  %829 = vmatpush1.bf16.msra.mxu0 0
  %830 = vmatprep.subr.bf16.mxu0 0
  %831 = vmatpush1.bf16.msra.mxu0 0
  %832 = vmatprep.subr.bf16.mxu0 0
  %833 = vmatpush1.bf16.msra.mxu0 0
  %834 = vmatprep.subr.bf16.mxu0 0
  %835 = vmatpush1.bf16.msra.mxu0 0
  %836 = vmatprep.subr.bf16.mxu0 0
  %837 = vmatpush1.bf16.msra.mxu0 0
  %838 = vmatprep.subr.bf16.mxu0 0
  %839 = vmatpush1.bf16.msra.mxu0 0
  %840 = vmatprep.subr.bf16.mxu0 0
  %841 = vmatpush1.bf16.msra.mxu0 0
  %842 = vmatprep.subr.bf16.mxu0 0
  %843 = vmatpush1.bf16.msra.mxu0 0
  %844 = vmatprep.subr.bf16.mxu0 0
  %845 = vmatpush1.bf16.msra.mxu0 0
  %846 = vmatprep.subr.bf16.mxu0 0
  %847 = vmatpush1.bf16.msra.mxu0 0
  %848 = vmatprep.subr.bf16.mxu0 0
  %849 = vmatpush1.bf16.msra.mxu0 0
  %850 = vmatprep.mubr.bf16.mxu0 0
  %851 = vmatmul.mubr.bf16.gmra.mrb[0].mxu0 %v816
  %v852 = vpop.f32.mrb[0].mxu0
  %v853 = vadd.f32 %v582, %v852
  %v854 = vpop.f32.mrb[0].mxu0
  %v855 = vadd.f32 %v586, %v854
  %v856 = vpop.f32.mrb[0].mxu0
  %v857 = vpop.f32.mrb[0].mxu0
  %858 = vdwg.mxu0
  %859 = vmatprep.subr.bf16.mxu0 %v746
  %860 = vmatpush1.bf16.msra.mxu0 %v745
  %861 = vmatprep.subr.bf16.mxu0 %v755
  %862 = vmatpush1.bf16.msra.mxu0 %v754
  %863 = vmatprep.subr.bf16.mxu0 %v764
  %864 = vmatpush1.bf16.msra.mxu0 %v763
  %865 = vmatprep.subr.bf16.mxu0 %v773
  %866 = vmatpush1.bf16.msra.mxu0 %v772
  %867 = vmatprep.subr.bf16.mxu0 0
  %868 = vmatpush1.bf16.msra.mxu0 0
  %869 = vmatprep.subr.bf16.mxu0 0
  %870 = vmatpush1.bf16.msra.mxu0 0
  %871 = vmatprep.subr.bf16.mxu0 0
  %872 = vmatpush1.bf16.msra.mxu0 0
  %873 = vmatprep.subr.bf16.mxu0 0
  %874 = vmatpush1.bf16.msra.mxu0 0
  %875 = vmatprep.subr.bf16.mxu0 0
  %876 = vmatpush1.bf16.msra.mxu0 0
  %877 = vmatprep.subr.bf16.mxu0 0
  %878 = vmatpush1.bf16.msra.mxu0 0
  %879 = vmatprep.subr.bf16.mxu0 0
  %880 = vmatpush1.bf16.msra.mxu0 0
  %881 = vmatprep.subr.bf16.mxu0 0
  %882 = vmatpush1.bf16.msra.mxu0 0
  %883 = vmatprep.subr.bf16.mxu0 0
  %884 = vmatpush1.bf16.msra.mxu0 0
  %885 = vmatprep.subr.bf16.mxu0 0
  %886 = vmatpush1.bf16.msra.mxu0 0
  %887 = vmatprep.subr.bf16.mxu0 0
  %888 = vmatpush1.bf16.msra.mxu0 0
  %889 = vmatprep.subr.bf16.mxu0 0
  %890 = vmatpush1.bf16.msra.mxu0 0
  %891 = vmatprep.mubr.bf16.mxu0 0
  %892 = vmatmul.mubr.bf16.gmra.mrb[0].mxu0 %v816
  %v893 = vpop.f32.mrb[0].mxu0
  %v894 = vadd.f32 %v590, %v893
  %v895 = vpop.f32.mrb[0].mxu0
  %v896 = vadd.f32 %v594, %v895
  %v897 = vpop.f32.mrb[0].mxu0
  %v898 = vpop.f32.mrb[0].mxu0
  %899 = vdwg.mxu0
  %900 = vmatprep.subr.bf16.mxu0 %v748
  %901 = vmatpush1.bf16.msra.mxu0 %v747
  %902 = vmatprep.subr.bf16.mxu0 %v757
  %903 = vmatpush1.bf16.msra.mxu0 %v756
  %904 = vmatprep.subr.bf16.mxu0 %v766
  %905 = vmatpush1.bf16.msra.mxu0 %v765
  %906 = vmatprep.subr.bf16.mxu0 %v775
  %907 = vmatpush1.bf16.msra.mxu0 %v774
  %908 = vmatprep.subr.bf16.mxu0 0
  %909 = vmatpush1.bf16.msra.mxu0 0
  %910 = vmatprep.subr.bf16.mxu0 0
  %911 = vmatpush1.bf16.msra.mxu0 0
  %912 = vmatprep.subr.bf16.mxu0 0
  %913 = vmatpush1.bf16.msra.mxu0 0
  %914 = vmatprep.subr.bf16.mxu0 0
  %915 = vmatpush1.bf16.msra.mxu0 0
  %916 = vmatprep.subr.bf16.mxu0 0
  %917 = vmatpush1.bf16.msra.mxu0 0
  %918 = vmatprep.subr.bf16.mxu0 0
  %919 = vmatpush1.bf16.msra.mxu0 0
  %920 = vmatprep.subr.bf16.mxu0 0
  %921 = vmatpush1.bf16.msra.mxu0 0
  %922 = vmatprep.subr.bf16.mxu0 0
  %923 = vmatpush1.bf16.msra.mxu0 0
  %924 = vmatprep.subr.bf16.mxu0 0
  %925 = vmatpush1.bf16.msra.mxu0 0
  %926 = vmatprep.subr.bf16.mxu0 0
  %927 = vmatpush1.bf16.msra.mxu0 0
  %928 = vmatprep.subr.bf16.mxu0 0
  %929 = vmatpush1.bf16.msra.mxu0 0
  %930 = vmatprep.subr.bf16.mxu0 0
  %931 = vmatpush1.bf16.msra.mxu0 0
  %932 = vmatprep.mubr.bf16.mxu0 0
  %933 = vmatmul.mubr.bf16.gmra.mrb[0].mxu0 %v816
  %v934 = vpop.f32.mrb[0].mxu0
  %v935 = vadd.f32 %v598, %v934
  %v936 = vpop.f32.mrb[0].mxu0
  %v937 = vadd.f32 %v602, %v936
  %v938 = vpop.f32.mrb[0].mxu0
  %v939 = vpop.f32.mrb[0].mxu0
  %940 = vdwg.mxu0
  %941 = vmatprep.subr.bf16.mxu0 %v750
  %942 = vmatpush1.bf16.msra.mxu0 %v749
  %943 = vmatprep.subr.bf16.mxu0 %v759
  %944 = vmatpush1.bf16.msra.mxu0 %v758
  %945 = vmatprep.subr.bf16.mxu0 %v768
  %946 = vmatpush1.bf16.msra.mxu0 %v767
  %947 = vmatprep.subr.bf16.mxu0 %v777
  %948 = vmatpush1.bf16.msra.mxu0 %v776
  %949 = vmatprep.subr.bf16.mxu0 0
  %950 = vmatpush1.bf16.msra.mxu0 0
  %951 = vmatprep.subr.bf16.mxu0 0
  %952 = vmatpush1.bf16.msra.mxu0 0
  %953 = vmatprep.subr.bf16.mxu0 0
  %954 = vmatpush1.bf16.msra.mxu0 0
  %955 = vmatprep.subr.bf16.mxu0 0
  %956 = vmatpush1.bf16.msra.mxu0 0
  %957 = vmatprep.subr.bf16.mxu0 0
  %958 = vmatpush1.bf16.msra.mxu0 0
  %959 = vmatprep.subr.bf16.mxu0 0
  %960 = vmatpush1.bf16.msra.mxu0 0
  %961 = vmatprep.subr.bf16.mxu0 0
  %962 = vmatpush1.bf16.msra.mxu0 0
  %963 = vmatprep.subr.bf16.mxu0 0
  %964 = vmatpush1.bf16.msra.mxu0 0
  %965 = vmatprep.subr.bf16.mxu0 0
  %966 = vmatpush1.bf16.msra.mxu0 0
  %967 = vmatprep.subr.bf16.mxu0 0
  %968 = vmatpush1.bf16.msra.mxu0 0
  %969 = vmatprep.subr.bf16.mxu0 0
  %970 = vmatpush1.bf16.msra.mxu0 0
  %971 = vmatprep.subr.bf16.mxu0 0
  %972 = vmatpush1.bf16.msra.mxu0 0
  %973 = vmatprep.mubr.bf16.mxu0 0
  %974 = vmatmul.mubr.bf16.gmra.mrb[0].mxu0 %v816
  %v975 = vpop.f32.mrb[0].mxu0
  %v976 = vadd.f32 %v606, %v975
  %v977 = vpop.f32.mrb[0].mxu0
  %v978 = vadd.f32 %v610, %v977
  %v979 = vpop.f32.mrb[0].mxu0
  %v980 = vpop.f32.mrb[0].mxu0
  %981 = vdwg.mxu0
  %982 = vmatprep.subr.bf16.mxu0 0
  %983 = vmatpush1.bf16.msra.mxu0 %v751
  %984 = vmatprep.subr.bf16.mxu0 0
  %985 = vmatpush1.bf16.msra.mxu0 %v760
  %986 = vmatprep.subr.bf16.mxu0 0
  %987 = vmatpush1.bf16.msra.mxu0 %v769
  %988 = vmatprep.subr.bf16.mxu0 0
  %989 = vmatpush1.bf16.msra.mxu0 %v778
  %990 = vmatprep.subr.bf16.mxu0 0
  %991 = vmatpush1.bf16.msra.mxu0 0
  %992 = vmatprep.subr.bf16.mxu0 0
  %993 = vmatpush1.bf16.msra.mxu0 0
  %994 = vmatprep.subr.bf16.mxu0 0
  %995 = vmatpush1.bf16.msra.mxu0 0
  %996 = vmatprep.subr.bf16.mxu0 0
  %997 = vmatpush1.bf16.msra.mxu0 0
  %998 = vmatprep.subr.bf16.mxu0 0
  %999 = vmatpush1.bf16.msra.mxu0 0
  %1000 = vmatprep.subr.bf16.mxu0 0
  %1001 = vmatpush1.bf16.msra.mxu0 0
  %1002 = vmatprep.subr.bf16.mxu0 0
  %1003 = vmatpush1.bf16.msra.mxu0 0
  %1004 = vmatprep.subr.bf16.mxu0 0
  %1005 = vmatpush1.bf16.msra.mxu0 0
  %1006 = vmatprep.subr.bf16.mxu0 0
  %1007 = vmatpush1.bf16.msra.mxu0 0
  %1008 = vmatprep.subr.bf16.mxu0 0
  %1009 = vmatpush1.bf16.msra.mxu0 0
  %1010 = vmatprep.subr.bf16.mxu0 0
  %1011 = vmatpush1.bf16.msra.mxu0 0
  %1012 = vmatprep.subr.bf16.mxu0 0
  %1013 = vmatpush1.bf16.msra.mxu0 0
  %1014 = vmatprep.mubr.bf16.mxu0 0
  %1015 = vmatmul.mubr.bf16.gmra.mrb[0].mxu0 %v816
  %v1016 = vpop.f32.mrb[0].mxu0
  %v1017 = vadd.f32 %v614, %v1016
  %v1018 = vpop.f32.mrb[0].mxu0
  %v1019 = vpop.f32.mrb[0].mxu0
  %v1020 = vpop.f32.mrb[0].mxu0
  %1021 = vdwg.mxu0
  %v1031 = vcombine.low %v853, %v855
  %v1032 = vcombine.low %v894, %v896
  %v1034 = vunpack.c.l.s4 1983009808
  %v1035 = vunpack.c.0.s8 %v1034
  %v1036 = vlaneseq
  %v1037 = vshrl.u32 %v1036, 7
  %v1038 = vsub.s32 %v1035, %v1037
  %v1039 = vrot.slane %v1031, %v1038
  %v1041 = vunpack.c.l.s4 1983009808
  %v1042 = vunpack.c.0.s8 %v1041
  %v1043 = vlaneseq
  %v1044 = vshrl.u32 %v1043, 7
  %v1045 = vsub.s32 %v1042, %v1044
  %v1046 = vrot.slane %v1032, %v1045
  %v1047 = vcombine.low %v1039, %v1046
  %v1048 = vcombine.low %v935, %v937
  %v1049 = vcombine.low %v976, %v978
  %v1051 = vunpack.c.l.s4 1983009808
  %v1052 = vunpack.c.0.s8 %v1051
  %v1053 = vlaneseq
  %v1054 = vshrl.u32 %v1053, 7
  %v1055 = vsub.s32 %v1052, %v1054
  %v1056 = vrot.slane %v1048, %v1055
  %v1058 = vunpack.c.l.s4 1983009808
  %v1059 = vunpack.c.0.s8 %v1058
  %v1060 = vlaneseq
  %v1061 = vshrl.u32 %v1060, 7
  %v1062 = vsub.s32 %v1059, %v1061
  %v1063 = vrot.slane %v1049, %v1062
  %v1064 = vcombine.low %v1056, %v1063
  %v1066 = vunpack.c.l.s4 1983009808
  %v1067 = vunpack.c.0.s8 %v1066
  %v1068 = vlaneseq
  %v1069 = vshrl.u32 %v1068, 7
  %v1070 = vsub.s32 %v1067, %v1069
  %v1071 = vrot.slane %v1017, %v1070
  %1075 = vst [vmem:[%s7] sm:$0xff] %v1047
  %1076 = vst [vmem:[%s7 + $0x8] sm:$0xff] %v1064
  %1077 = vst [vmem:[%s7 + $0x10] sm:$0x3] %v1071
  %v1078 = vld [vmem:[%s5] sm:$0xff]
  %v1079 = vld [vmem:[%s5 + $0x8] sm:$0xff]
  %v1080 = vld [vmem:[%s5 + $0x10] sm:$0xff]
  %v1081 = vld [vmem:[%s5 + $0x18] sm:$0xff]
  %v1082 = vld [vmem:[%s5 + $0x20] sm:$0xf]
  %v1083 = vld [vmem:[%s5 + $0x24] sm:$0xff]
  %v1084 = vld [vmem:[%s5 + $0x2c] sm:$0xff]
  %v1085 = vld [vmem:[%s5 + $0x34] sm:$0xff]
  %v1086 = vld [vmem:[%s5 + $0x3c] sm:$0xff]
  %v1087 = vld [vmem:[%s5 + $0x44] sm:$0xf]
  %v1088 = vld [vmem:[%s5 + $0x48] sm:$0xff]
  %v1089 = vld [vmem:[%s5 + $0x50] sm:$0xff]
  %v1090 = vld [vmem:[%s5 + $0x58] sm:$0xff]
  %v1091 = vld [vmem:[%s5 + $0x60] sm:$0xff]
  %v1092 = vld [vmem:[%s5 + $0x68] sm:$0xf]
  %v1093 = vld [vmem:[%s5 + $0x6c] sm:$0xff]
  %v1094 = vld [vmem:[%s5 + $0x74] sm:$0xff]
  %v1095 = vld [vmem:[%s5 + $0x7c] sm:$0xff]
  %v1096 = vld [vmem:[%s5 + $0x84] sm:$0xff]
  %v1097 = vld [vmem:[%s5 + $0x8c] sm:$0xf]
  %v1098 = vld [vmem:[%s5 + $0x90] sm:$0xff]
  %v1099 = vld [vmem:[%s5 + $0x98] sm:$0xff]
  %v1100 = vld [vmem:[%s5 + $0xa0] sm:$0xff]
  %v1101 = vld [vmem:[%s5 + $0xa8] sm:$0xff]
  %v1102 = vld [vmem:[%s5 + $0xb0] sm:$0xf]
  %v1103 = vld [vmem:[%s5 + $0xb4] sm:$0xff]
  %v1104 = vld [vmem:[%s5 + $0xbc] sm:$0xff]
  %v1105 = vld [vmem:[%s5 + $0xc4] sm:$0xff]
  %v1106 = vld [vmem:[%s5 + $0xcc] sm:$0xff]
  %v1107 = vld [vmem:[%s5 + $0xd4] sm:$0xf]
  %v1108 = vld [vmem:[%s5 + $0xd8] sm:$0xff]
  %v1109 = vld [vmem:[%s5 + $0xe0] sm:$0xff]
  %v1110 = vld [vmem:[%s5 + $0xe8] sm:$0xff]
  %v1111 = vld [vmem:[%s5 + $0xf0] sm:$0xff]
  %v1112 = vld [vmem:[%s5 + $0xf8] sm:$0xf]
  %v1113 = vld [vmem:[%s5 + $0xfc] sm:$0xff]
  %v1114 = vld [vmem:[%s5 + $0x104] sm:$0xff]
  %v1115 = vld [vmem:[%s5 + $0x10c] sm:$0xff]
  %v1116 = vld [vmem:[%s5 + $0x114] sm:$0xff]
  %v1117 = vld [vmem:[%s5 + $0x11c] sm:$0xf]
  %v1118 = vld [vmem:[%s6] sm:$0xff]
  %v1119 = vld [vmem:[%s6 + $0x8] sm:$0x1]
  %v1122 = vlaneseq
  %v1123 = vshrl.u32 %v1122, 7
  %v1124 = vsub.s32 0, %v1123
  %v1125 = vrot.slane %v1118, %v1124
  %v1126 = vlaneseq
  %v1127 = vshrl.u32 %v1126, 7
  %v1128 = vsub.s32 1, %v1127
  %v1129 = vrot.slane %v1118, %v1128
  %v1130 = vlaneseq
  %v1131 = vshrl.u32 %v1130, 7
  %v1132 = vsub.s32 2, %v1131
  %v1133 = vrot.slane %v1118, %v1132
  %v1134 = vlaneseq
  %v1135 = vshrl.u32 %v1134, 7
  %v1136 = vsub.s32 3, %v1135
  %v1137 = vrot.slane %v1118, %v1136
  %v1138 = vlaneseq
  %v1139 = vshrl.u32 %v1138, 7
  %v1140 = vsub.s32 4, %v1139
  %v1141 = vrot.slane %v1118, %v1140
  %v1142 = vlaneseq
  %v1143 = vshrl.u32 %v1142, 7
  %v1144 = vsub.s32 5, %v1143
  %v1145 = vrot.slane %v1118, %v1144
  %v1146 = vlaneseq
  %v1147 = vshrl.u32 %v1146, 7
  %v1148 = vsub.s32 6, %v1147
  %v1149 = vrot.slane %v1118, %v1148
  %v1150 = vlaneseq
  %v1151 = vshrl.u32 %v1150, 7
  %v1152 = vsub.s32 7, %v1151
  %v1153 = vrot.slane %v1118, %v1152
  %v1154 = vlaneseq
  %v1155 = vshrl.u32 %v1154, 7
  %v1156 = vsub.s32 0, %v1155
  %v1157 = vrot.slane %v1119, %v1156
  %v1207 = vunpack.c.l.b16 %v1078
  %v1208 = vunpack.c.h.b16 %v1078
  %v1209 = vunpack.c.l.b16 %v1079
  %v1210 = vunpack.c.h.b16 %v1079
  %v1211 = vunpack.c.l.b16 %v1080
  %v1212 = vunpack.c.h.b16 %v1080
  %v1213 = vunpack.c.l.b16 %v1081
  %v1214 = vunpack.c.h.b16 %v1081
  %v1215 = vunpack.c.l.b16 %v1082
  %v1216 = vunpack.c.l.b16 %v1083
  %v1217 = vunpack.c.h.b16 %v1083
  %v1218 = vunpack.c.l.b16 %v1084
  %v1219 = vunpack.c.h.b16 %v1084
  %v1220 = vunpack.c.l.b16 %v1085
  %v1221 = vunpack.c.h.b16 %v1085
  %v1222 = vunpack.c.l.b16 %v1086
  %v1223 = vunpack.c.h.b16 %v1086
  %v1224 = vunpack.c.l.b16 %v1087
  %v1225 = vunpack.c.l.b16 %v1088
  %v1226 = vunpack.c.h.b16 %v1088
  %v1227 = vunpack.c.l.b16 %v1089
  %v1228 = vunpack.c.h.b16 %v1089
  %v1229 = vunpack.c.l.b16 %v1090
  %v1230 = vunpack.c.h.b16 %v1090
  %v1231 = vunpack.c.l.b16 %v1091
  %v1232 = vunpack.c.h.b16 %v1091
  %v1233 = vunpack.c.l.b16 %v1092
  %v1234 = vunpack.c.l.b16 %v1093
  %v1235 = vunpack.c.h.b16 %v1093
  %v1236 = vunpack.c.l.b16 %v1094
  %v1237 = vunpack.c.h.b16 %v1094
  %v1238 = vunpack.c.l.b16 %v1095
  %v1239 = vunpack.c.h.b16 %v1095
  %v1240 = vunpack.c.l.b16 %v1096
  %v1241 = vunpack.c.h.b16 %v1096
  %v1242 = vunpack.c.l.b16 %v1097
  %v1243 = vunpack.c.l.b16 %v1098
  %v1244 = vunpack.c.h.b16 %v1098
  %v1245 = vunpack.c.l.b16 %v1099
  %v1246 = vunpack.c.h.b16 %v1099
  %v1247 = vunpack.c.l.b16 %v1100
  %v1248 = vunpack.c.h.b16 %v1100
  %v1249 = vunpack.c.l.b16 %v1101
  %v1250 = vunpack.c.h.b16 %v1101
  %v1251 = vunpack.c.l.b16 %v1102
  %v1252 = vunpack.c.l.b16 %v1103
  %v1253 = vunpack.c.h.b16 %v1103
  %v1254 = vunpack.c.l.b16 %v1104
  %v1255 = vunpack.c.h.b16 %v1104
  %v1256 = vunpack.c.l.b16 %v1105
  %v1257 = vunpack.c.h.b16 %v1105
  %v1258 = vunpack.c.l.b16 %v1106
  %v1259 = vunpack.c.h.b16 %v1106
  %v1260 = vunpack.c.l.b16 %v1107
  %v1261 = vunpack.c.l.b16 %v1108
  %v1262 = vunpack.c.h.b16 %v1108
  %v1263 = vunpack.c.l.b16 %v1109
  %v1264 = vunpack.c.h.b16 %v1109
  %v1265 = vunpack.c.l.b16 %v1110
  %v1266 = vunpack.c.h.b16 %v1110
  %v1267 = vunpack.c.l.b16 %v1111
  %v1268 = vunpack.c.h.b16 %v1111
  %v1269 = vunpack.c.l.b16 %v1112
  %v1270 = vunpack.c.l.b16 %v1113
  %v1271 = vunpack.c.h.b16 %v1113
  %v1272 = vunpack.c.l.b16 %v1114
  %v1273 = vunpack.c.h.b16 %v1114
  %v1274 = vunpack.c.l.b16 %v1115
  %v1275 = vunpack.c.h.b16 %v1115
  %v1276 = vunpack.c.l.b16 %v1116
  %v1277 = vunpack.c.h.b16 %v1116
  %v1278 = vunpack.c.l.b16 %v1117
  %v1279 = vpack.c.b16 %v1216, %v1207
  %v1280 = vpack.c.b16 %v1217, %v1208
  %v1281 = vpack.c.b16 %v1218, %v1209
  %v1282 = vpack.c.b16 %v1219, %v1210
  %v1283 = vpack.c.b16 %v1220, %v1211
  %v1284 = vpack.c.b16 %v1221, %v1212
  %v1285 = vpack.c.b16 %v1222, %v1213
  %v1286 = vpack.c.b16 %v1223, %v1214
  %v1287 = vpack.c.b16 %v1224, %v1215
  %v1288 = vpack.c.b16 %v1234, %v1225
  %v1289 = vpack.c.b16 %v1235, %v1226
  %v1290 = vpack.c.b16 %v1236, %v1227
  %v1291 = vpack.c.b16 %v1237, %v1228
  %v1292 = vpack.c.b16 %v1238, %v1229
  %v1293 = vpack.c.b16 %v1239, %v1230
  %v1294 = vpack.c.b16 %v1240, %v1231
  %v1295 = vpack.c.b16 %v1241, %v1232
  %v1296 = vpack.c.b16 %v1242, %v1233
  %v1297 = vpack.c.b16 %v1252, %v1243
  %v1298 = vpack.c.b16 %v1253, %v1244
  %v1299 = vpack.c.b16 %v1254, %v1245
  %v1300 = vpack.c.b16 %v1255, %v1246
  %v1301 = vpack.c.b16 %v1256, %v1247
  %v1302 = vpack.c.b16 %v1257, %v1248
  %v1303 = vpack.c.b16 %v1258, %v1249
  %v1304 = vpack.c.b16 %v1259, %v1250
  %v1305 = vpack.c.b16 %v1260, %v1251
  %v1306 = vpack.c.b16 %v1270, %v1261
  %v1307 = vpack.c.b16 %v1271, %v1262
  %v1308 = vpack.c.b16 %v1272, %v1263
  %v1309 = vpack.c.b16 %v1273, %v1264
  %v1310 = vpack.c.b16 %v1274, %v1265
  %v1311 = vpack.c.b16 %v1275, %v1266
  %v1312 = vpack.c.b16 %v1276, %v1267
  %v1313 = vpack.c.b16 %v1277, %v1268
  %v1314 = vpack.c.b16 %v1278, %v1269
  %1351 = vmatprep.subr.bf16.mxu0 %v1280
  %1352 = vmatpush1.bf16.msra.mxu0 %v1279
  %1353 = vmatprep.subr.bf16.mxu0 %v1289
  %1354 = vmatpush1.bf16.msra.mxu0 %v1288
  %1355 = vmatprep.subr.bf16.mxu0 %v1298
  %1356 = vmatpush1.bf16.msra.mxu0 %v1297
  %1357 = vmatprep.subr.bf16.mxu0 %v1307
  %1358 = vmatpush1.bf16.msra.mxu0 %v1306
  %1359 = vmatprep.subr.bf16.mxu0 0
  %1360 = vmatpush1.bf16.msra.mxu0 0
  %1361 = vmatprep.subr.bf16.mxu0 0
  %1362 = vmatpush1.bf16.msra.mxu0 0
  %1363 = vmatprep.subr.bf16.mxu0 0
  %1364 = vmatpush1.bf16.msra.mxu0 0
  %1365 = vmatprep.subr.bf16.mxu0 0
  %1366 = vmatpush1.bf16.msra.mxu0 0
  %1367 = vmatprep.subr.bf16.mxu0 0
  %1368 = vmatpush1.bf16.msra.mxu0 0
  %1369 = vmatprep.subr.bf16.mxu0 0
  %1370 = vmatpush1.bf16.msra.mxu0 0
  %1371 = vmatprep.subr.bf16.mxu0 0
  %1372 = vmatpush1.bf16.msra.mxu0 0
  %1373 = vmatprep.subr.bf16.mxu0 0
  %1374 = vmatpush1.bf16.msra.mxu0 0
  %1375 = vmatprep.subr.bf16.mxu0 0
  %1376 = vmatpush1.bf16.msra.mxu0 0
  %1377 = vmatprep.subr.bf16.mxu0 0
  %1378 = vmatpush1.bf16.msra.mxu0 0
  %1379 = vmatprep.subr.bf16.mxu0 0
  %1380 = vmatpush1.bf16.msra.mxu0 0
  %1381 = vmatprep.subr.bf16.mxu0 0
  %1382 = vmatpush1.bf16.msra.mxu0 0
  %1383 = vmatprep.mubr.bf16.mxu0 0
  %1384 = vmatmul.mubr.bf16.gmra.mrb[0].mxu0 %v816
  %v1385 = vpop.f32.mrb[0].mxu0
  %v1386 = vadd.f32 %v1125, %v1385
  %v1387 = vpop.f32.mrb[0].mxu0
  %v1388 = vadd.f32 %v1129, %v1387
  %v1389 = vpop.f32.mrb[0].mxu0
  %v1390 = vpop.f32.mrb[0].mxu0
  %1391 = vdwg.mxu0
  %1392 = vmatprep.subr.bf16.mxu0 %v1282
  %1393 = vmatpush1.bf16.msra.mxu0 %v1281
  %1394 = vmatprep.subr.bf16.mxu0 %v1291
  %1395 = vmatpush1.bf16.msra.mxu0 %v1290
  %1396 = vmatprep.subr.bf16.mxu0 %v1300
  %1397 = vmatpush1.bf16.msra.mxu0 %v1299
  %1398 = vmatprep.subr.bf16.mxu0 %v1309
  %1399 = vmatpush1.bf16.msra.mxu0 %v1308
  %1400 = vmatprep.subr.bf16.mxu0 0
  %1401 = vmatpush1.bf16.msra.mxu0 0
  %1402 = vmatprep.subr.bf16.mxu0 0
  %1403 = vmatpush1.bf16.msra.mxu0 0
  %1404 = vmatprep.subr.bf16.mxu0 0
  %1405 = vmatpush1.bf16.msra.mxu0 0
  %1406 = vmatprep.subr.bf16.mxu0 0
  %1407 = vmatpush1.bf16.msra.mxu0 0
  %1408 = vmatprep.subr.bf16.mxu0 0
  %1409 = vmatpush1.bf16.msra.mxu0 0
  %1410 = vmatprep.subr.bf16.mxu0 0
  %1411 = vmatpush1.bf16.msra.mxu0 0
  %1412 = vmatprep.subr.bf16.mxu0 0
  %1413 = vmatpush1.bf16.msra.mxu0 0
  %1414 = vmatprep.subr.bf16.mxu0 0
  %1415 = vmatpush1.bf16.msra.mxu0 0
  %1416 = vmatprep.subr.bf16.mxu0 0
  %1417 = vmatpush1.bf16.msra.mxu0 0
  %1418 = vmatprep.subr.bf16.mxu0 0
  %1419 = vmatpush1.bf16.msra.mxu0 0
  %1420 = vmatprep.subr.bf16.mxu0 0
  %1421 = vmatpush1.bf16.msra.mxu0 0
  %1422 = vmatprep.subr.bf16.mxu0 0
  %1423 = vmatpush1.bf16.msra.mxu0 0
  %1424 = vmatprep.mubr.bf16.mxu0 0
  %1425 = vmatmul.mubr.bf16.gmra.mrb[0].mxu0 %v816
  %v1426 = vpop.f32.mrb[0].mxu0
  %v1427 = vadd.f32 %v1133, %v1426
  %v1428 = vpop.f32.mrb[0].mxu0
  %v1429 = vadd.f32 %v1137, %v1428
  %v1430 = vpop.f32.mrb[0].mxu0
  %v1431 = vpop.f32.mrb[0].mxu0
  %1432 = vdwg.mxu0
  %1433 = vmatprep.subr.bf16.mxu0 %v1284
  %1434 = vmatpush1.bf16.msra.mxu0 %v1283
  %1435 = vmatprep.subr.bf16.mxu0 %v1293
  %1436 = vmatpush1.bf16.msra.mxu0 %v1292
  %1437 = vmatprep.subr.bf16.mxu0 %v1302
  %1438 = vmatpush1.bf16.msra.mxu0 %v1301
  %1439 = vmatprep.subr.bf16.mxu0 %v1311
  %1440 = vmatpush1.bf16.msra.mxu0 %v1310
  %1441 = vmatprep.subr.bf16.mxu0 0
  %1442 = vmatpush1.bf16.msra.mxu0 0
  %1443 = vmatprep.subr.bf16.mxu0 0
  %1444 = vmatpush1.bf16.msra.mxu0 0
  %1445 = vmatprep.subr.bf16.mxu0 0
  %1446 = vmatpush1.bf16.msra.mxu0 0
  %1447 = vmatprep.subr.bf16.mxu0 0
  %1448 = vmatpush1.bf16.msra.mxu0 0
  %1449 = vmatprep.subr.bf16.mxu0 0
  %1450 = vmatpush1.bf16.msra.mxu0 0
  %1451 = vmatprep.subr.bf16.mxu0 0
  %1452 = vmatpush1.bf16.msra.mxu0 0
  %1453 = vmatprep.subr.bf16.mxu0 0
  %1454 = vmatpush1.bf16.msra.mxu0 0
  %1455 = vmatprep.subr.bf16.mxu0 0
  %1456 = vmatpush1.bf16.msra.mxu0 0
  %1457 = vmatprep.subr.bf16.mxu0 0
  %1458 = vmatpush1.bf16.msra.mxu0 0
  %1459 = vmatprep.subr.bf16.mxu0 0
  %1460 = vmatpush1.bf16.msra.mxu0 0
  %1461 = vmatprep.subr.bf16.mxu0 0
  %1462 = vmatpush1.bf16.msra.mxu0 0
  %1463 = vmatprep.subr.bf16.mxu0 0
  %1464 = vmatpush1.bf16.msra.mxu0 0
  %1465 = vmatprep.mubr.bf16.mxu0 0
  %1466 = vmatmul.mubr.bf16.gmra.mrb[0].mxu0 %v816
  %v1467 = vpop.f32.mrb[0].mxu0
  %v1468 = vadd.f32 %v1141, %v1467
  %v1469 = vpop.f32.mrb[0].mxu0
  %v1470 = vadd.f32 %v1145, %v1469
  %v1471 = vpop.f32.mrb[0].mxu0
  %v1472 = vpop.f32.mrb[0].mxu0
  %1473 = vdwg.mxu0
  %1474 = vmatprep.subr.bf16.mxu0 %v1286
  %1475 = vmatpush1.bf16.msra.mxu0 %v1285
  %1476 = vmatprep.subr.bf16.mxu0 %v1295
  %1477 = vmatpush1.bf16.msra.mxu0 %v1294
  %1478 = vmatprep.subr.bf16.mxu0 %v1304
  %1479 = vmatpush1.bf16.msra.mxu0 %v1303
  %1480 = vmatprep.subr.bf16.mxu0 %v1313
  %1481 = vmatpush1.bf16.msra.mxu0 %v1312
  %1482 = vmatprep.subr.bf16.mxu0 0
  %1483 = vmatpush1.bf16.msra.mxu0 0
  %1484 = vmatprep.subr.bf16.mxu0 0
  %1485 = vmatpush1.bf16.msra.mxu0 0
  %1486 = vmatprep.subr.bf16.mxu0 0
  %1487 = vmatpush1.bf16.msra.mxu0 0
  %1488 = vmatprep.subr.bf16.mxu0 0
  %1489 = vmatpush1.bf16.msra.mxu0 0
  %1490 = vmatprep.subr.bf16.mxu0 0
  %1491 = vmatpush1.bf16.msra.mxu0 0
  %1492 = vmatprep.subr.bf16.mxu0 0
  %1493 = vmatpush1.bf16.msra.mxu0 0
  %1494 = vmatprep.subr.bf16.mxu0 0
  %1495 = vmatpush1.bf16.msra.mxu0 0
  %1496 = vmatprep.subr.bf16.mxu0 0
  %1497 = vmatpush1.bf16.msra.mxu0 0
  %1498 = vmatprep.subr.bf16.mxu0 0
  %1499 = vmatpush1.bf16.msra.mxu0 0
  %1500 = vmatprep.subr.bf16.mxu0 0
  %1501 = vmatpush1.bf16.msra.mxu0 0
  %1502 = vmatprep.subr.bf16.mxu0 0
  %1503 = vmatpush1.bf16.msra.mxu0 0
  %1504 = vmatprep.subr.bf16.mxu0 0
  %1505 = vmatpush1.bf16.msra.mxu0 0
  %1506 = vmatprep.mubr.bf16.mxu0 0
  %1507 = vmatmul.mubr.bf16.gmra.mrb[0].mxu0 %v816
  %v1508 = vpop.f32.mrb[0].mxu0
  %v1509 = vadd.f32 %v1149, %v1508
  %v1510 = vpop.f32.mrb[0].mxu0
  %v1511 = vadd.f32 %v1153, %v1510
  %v1512 = vpop.f32.mrb[0].mxu0
  %v1513 = vpop.f32.mrb[0].mxu0
  %1514 = vdwg.mxu0
  %1515 = vmatprep.subr.bf16.mxu0 0
  %1516 = vmatpush1.bf16.msra.mxu0 %v1287
  %1517 = vmatprep.subr.bf16.mxu0 0
  %1518 = vmatpush1.bf16.msra.mxu0 %v1296
  %1519 = vmatprep.subr.bf16.mxu0 0
  %1520 = vmatpush1.bf16.msra.mxu0 %v1305
  %1521 = vmatprep.subr.bf16.mxu0 0
  %1522 = vmatpush1.bf16.msra.mxu0 %v1314
  %1523 = vmatprep.subr.bf16.mxu0 0
  %1524 = vmatpush1.bf16.msra.mxu0 0
  %1525 = vmatprep.subr.bf16.mxu0 0
  %1526 = vmatpush1.bf16.msra.mxu0 0
  %1527 = vmatprep.subr.bf16.mxu0 0
  %1528 = vmatpush1.bf16.msra.mxu0 0
  %1529 = vmatprep.subr.bf16.mxu0 0
  %1530 = vmatpush1.bf16.msra.mxu0 0
  %1531 = vmatprep.subr.bf16.mxu0 0
  %1532 = vmatpush1.bf16.msra.mxu0 0
  %1533 = vmatprep.subr.bf16.mxu0 0
  %1534 = vmatpush1.bf16.msra.mxu0 0
  %1535 = vmatprep.subr.bf16.mxu0 0
  %1536 = vmatpush1.bf16.msra.mxu0 0
  %1537 = vmatprep.subr.bf16.mxu0 0
  %1538 = vmatpush1.bf16.msra.mxu0 0
  %1539 = vmatprep.subr.bf16.mxu0 0
  %1540 = vmatpush1.bf16.msra.mxu0 0
  %1541 = vmatprep.subr.bf16.mxu0 0
  %1542 = vmatpush1.bf16.msra.mxu0 0
  %1543 = vmatprep.subr.bf16.mxu0 0
  %1544 = vmatpush1.bf16.msra.mxu0 0
  %1545 = vmatprep.subr.bf16.mxu0 0
  %1546 = vmatpush1.bf16.msra.mxu0 0
  %1547 = vmatprep.mubr.bf16.mxu0 0
  %1548 = vmatmul.mubr.bf16.gmra.mrb[0].mxu0 %v816
  %v1549 = vpop.f32.mrb[0].mxu0
  %v1550 = vadd.f32 %v1157, %v1549
  %v1551 = vpop.f32.mrb[0].mxu0
  %v1552 = vpop.f32.mrb[0].mxu0
  %v1553 = vpop.f32.mrb[0].mxu0
  %1554 = vdwg.mxu0
  %v1564 = vcombine.low %v1386, %v1388
  %v1565 = vcombine.low %v1427, %v1429
  %v1567 = vunpack.c.l.s4 1983009808
  %v1568 = vunpack.c.0.s8 %v1567
  %v1569 = vlaneseq
  %v1570 = vshrl.u32 %v1569, 7
  %v1571 = vsub.s32 %v1568, %v1570
  %v1572 = vrot.slane %v1564, %v1571
  %v1574 = vunpack.c.l.s4 1983009808
  %v1575 = vunpack.c.0.s8 %v1574
  %v1576 = vlaneseq
  %v1577 = vshrl.u32 %v1576, 7
  %v1578 = vsub.s32 %v1575, %v1577
  %v1579 = vrot.slane %v1565, %v1578
  %v1580 = vcombine.low %v1572, %v1579
  %v1581 = vcombine.low %v1468, %v1470
  %v1582 = vcombine.low %v1509, %v1511
  %v1584 = vunpack.c.l.s4 1983009808
  %v1585 = vunpack.c.0.s8 %v1584
  %v1586 = vlaneseq
  %v1587 = vshrl.u32 %v1586, 7
  %v1588 = vsub.s32 %v1585, %v1587
  %v1589 = vrot.slane %v1581, %v1588
  %v1591 = vunpack.c.l.s4 1983009808
  %v1592 = vunpack.c.0.s8 %v1591
  %v1593 = vlaneseq
  %v1594 = vshrl.u32 %v1593, 7
  %v1595 = vsub.s32 %v1592, %v1594
  %v1596 = vrot.slane %v1582, %v1595
  %v1597 = vcombine.low %v1589, %v1596
  %v1599 = vunpack.c.l.s4 1983009808
  %v1600 = vunpack.c.0.s8 %v1599
  %v1601 = vlaneseq
  %v1602 = vshrl.u32 %v1601, 7
  %v1603 = vsub.s32 %v1600, %v1602
  %v1604 = vrot.slane %v1550, %v1603
  %1608 = vst [vmem:[%s8] sm:$0xff] %v1580
  %1609 = vst [vmem:[%s8 + $0x8] sm:$0xff] %v1597
  %1610 = vst [vmem:[%s8 + $0x10] sm:$0x3] %v1604
  // Predicated region
  $region30: #{_lambda_.6} parent=0 // pred_check
    _
  $region31: #{_lambda_.6} parent=0 // pred_check_branch
    %1612 = sbr.rel (0) target = $region33
  $region32: #{_lambda_.6} parent=0 // pred_region
    _
  $region33: #{_lambda_.6} parent=0 // pred_fallthru
    _
  // Predicated region
  $region34: #{_lambda_.6} parent=0 // pred_check
    _
  $region35: #{_lambda_.6} parent=0 // pred_check_branch
    %1614 = sbr.rel (0) target = $region37
  $region36: #{_lambda_.6} parent=0 // pred_region
    _
  $region37: #{_lambda_.6} parent=0 // pred_fallthru
    _
  // Predicated region
  $region38: #{_lambda_.6} parent=0 // pred_check
    _
  $region39: #{_lambda_.6} parent=0 // pred_check_branch
    %1616 = sbr.rel (0) target = $region41
  $region40: #{_lambda_.6} parent=0 // pred_region
    _
  $region41: #{_lambda_.6} parent=0 // pred_fallthru
    _
  // Predicated region
  $region42: #{_lambda_.6} parent=0 // pred_check
    _
  $region43: #{_lambda_.6} parent=0 // pred_check_branch
    %1618 = sbr.rel (0) target = $region45
  $region44: #{_lambda_.6} parent=0 // pred_region
    _
  $region45: #{_lambda_.6} parent=0 // pred_fallthru
    _

// kernel: _lambda_.7
$region0: #{_lambda_.7}
  #allocation0 [shape = 'u32[]', space=smem, size = 0x4, offset = 0x4, fixed_abs, tag = 'smem constant byte address 0x4 - core index']
  #allocation1 [shape = 'u32[144,128]{1,0:T(1,128)}', space=vmem, size = 0x12000, scoped, tag = 'internal scratch']
  %s0 = inlined_call_operand.vmem [shape: f32[2,18,18,64], index: 0, kind: input, shape index: {}]
  %s1 = inlined_call_operand.vmem [shape: bf16[35,576,64], index: 1, kind: input, shape index: {}]
  %s2 = inlined_call_operand.vmem [shape: f32[35,1,64], index: 2, kind: input, shape index: {}]
  %s3 = inlined_call_operand.vmem [shape: f32[2,18,1,64], index: 3, kind: input, shape index: {}]
  %s4 = inlined_call_operand.vmem [shape: f32[2,18,1,64], index: 4, kind: input, shape index: {}]
  %s5 = inlined_call_operand.vmem [shape: f32[2,16,16,64], index: 5, kind: output, shape index: {}]
  %s6 = sld [smem:[#allocation0]]
  $region60: #{_lambda_.7} parent=0
    _
  %s8 = ssub.s32 1, %s6
  %s9 = scalar_select 0, %s8, %s6
  loop: start=0, step=1, limit=4
  $region2: #{_lambda_.7} parent=0 // loop_pre_header
    _
  $region3: #{_lambda_.7} parent=0 // loop_header
    %s11 = sphi 0, %s15
    %p12 = scmp.ge.s32.totalorder %s11, 4
    %s21 = sphi 0, %s23
    %s24 = sphi 0, %s21
    %s25 = sphi 0, %s24
    %s41 = sphi 0, %s25
    %s45 = sphi 0, %s45
    %s47 = sphi 0, %s45
    %s48 = sphi 0, %s47
    %s62 = sphi 0, %s48
    %s66 = sphi 0, %s66
    %s68 = sphi 0, %s66
    %s69 = sphi 0, %s68
    %s83 = sphi 0, %s69
    %s89 = sphi 0, %s91
    %s92 = sphi 0, %s89
    %s93 = sphi 0, %s92
    %s109 = sphi 0, %s93
    %s115 = sphi 0, %s117
    %s118 = sphi 0, %s115
    %s119 = sphi 0, %s118
    %s135 = sphi 0, %s119
    %s141 = sphi 0, %s143
    %s144 = sphi 0, %s141
    %s145 = sphi 0, %s144
    %s161 = sphi 0, %s145
  $region4: #{_lambda_.7} parent=0 // loop_header_branch
    %14 = sbr.rel (%p12) target = $region8
  $region5: #{_lambda_.7} parent=0 // loop_body
    %s16 = ssub.s32 %s11, 1
    %s17 = ssub.s32 %s11, 2
    %s18 = sadd.s32 %s11, 1
    %s19 = ssub.s32 %s11, %s18
    %p20 = scmp.eq.s32.totalorder %s19, 0
    %s22 = sadd.s32 %s21, 1
    %s23 = scalar_select %p20, %s21, %s22
    %p26 = pneg %p20
    %p27 = scmp.eq.s32.totalorder %s11, 1
    %p28 = por %p26, %p27
    %p29 = scmp.ne.s32.totalorder %s21, %s24
    %p30 = scmp.eq.s32.totalorder %s11, 0
    %p31 = por %p29, %p30
    %p32 = scmp.ne.s32.totalorder %s21, %s24
    %p33 = scmp.eq.s32.totalorder %s16, 1
    %p34 = por %p32, %p33
    %p35 = scmp.ne.s32.totalorder %s24, %s25
    %p36 = scmp.eq.s32.totalorder %s16, 0
    %p37 = por %p35, %p36
    %p38 = scmp.ne.s32.totalorder %s24, %s25
    %p39 = scmp.eq.s32.totalorder %s17, 1
    %p40 = por %p38, %p39
    %p42 = scmp.ne.s32.totalorder %s25, %s41
    %p43 = scmp.eq.s32.totalorder %s17, 0
    %p44 = por %p42, %p43
    %s46 = sadd.s32 %s45, 1
    %p49 = scmp.eq.s32.totalorder %s11, 1
    %p50 = scmp.ne.s32.totalorder %s45, %s47
    %p51 = scmp.eq.s32.totalorder %s11, 0
    %p52 = por %p50, %p51
    %p53 = scmp.ne.s32.totalorder %s45, %s47
    %p54 = scmp.eq.s32.totalorder %s16, 1
    %p55 = por %p53, %p54
    %p56 = scmp.ne.s32.totalorder %s47, %s48
    %p57 = scmp.eq.s32.totalorder %s16, 0
    %p58 = por %p56, %p57
    %p59 = scmp.ne.s32.totalorder %s47, %s48
    %p60 = scmp.eq.s32.totalorder %s17, 1
    %p61 = por %p59, %p60
    %p63 = scmp.ne.s32.totalorder %s48, %s62
    %p64 = scmp.eq.s32.totalorder %s17, 0
    %p65 = por %p63, %p64
    %s67 = sadd.s32 %s66, 1
    %p70 = scmp.eq.s32.totalorder %s11, 1
    %p71 = scmp.ne.s32.totalorder %s66, %s68
    %p72 = scmp.eq.s32.totalorder %s11, 0
    %p73 = por %p71, %p72
    %p74 = scmp.ne.s32.totalorder %s66, %s68
    %p75 = scmp.eq.s32.totalorder %s16, 1
    %p76 = por %p74, %p75
    %p77 = scmp.ne.s32.totalorder %s68, %s69
    %p78 = scmp.eq.s32.totalorder %s16, 0
    %p79 = por %p77, %p78
    %p80 = scmp.ne.s32.totalorder %s68, %s69
    %p81 = scmp.eq.s32.totalorder %s17, 1
    %p82 = por %p80, %p81
    %p84 = scmp.ne.s32.totalorder %s69, %s83
    %p85 = scmp.eq.s32.totalorder %s17, 0
    %p86 = por %p84, %p85
    %s87 = ssub.s32 %s11, %s18
    %p88 = scmp.eq.s32.totalorder %s87, 0
    %s90 = sadd.s32 %s89, 1
    %s91 = scalar_select %p88, %s89, %s90
    %p94 = pneg %p88
    %p95 = scmp.eq.s32.totalorder %s11, 1
    %p96 = por %p94, %p95
    %p97 = scmp.ne.s32.totalorder %s89, %s92
    %p98 = scmp.eq.s32.totalorder %s11, 0
    %p99 = por %p97, %p98
    %p100 = scmp.ne.s32.totalorder %s89, %s92
    %p101 = scmp.eq.s32.totalorder %s16, 1
    %p102 = por %p100, %p101
    %p103 = scmp.ne.s32.totalorder %s92, %s93
    %p104 = scmp.eq.s32.totalorder %s16, 0
    %p105 = por %p103, %p104
    %p106 = scmp.ne.s32.totalorder %s92, %s93
    %p107 = scmp.eq.s32.totalorder %s17, 1
    %p108 = por %p106, %p107
    %p110 = scmp.ne.s32.totalorder %s93, %s109
    %p111 = scmp.eq.s32.totalorder %s17, 0
    %p112 = por %p110, %p111
    %s113 = ssub.s32 %s11, %s18
    %p114 = scmp.eq.s32.totalorder %s113, 0
    %s116 = sadd.s32 %s115, 1
    %s117 = scalar_select %p114, %s115, %s116
    %p120 = pneg %p114
    %p121 = scmp.eq.s32.totalorder %s11, 1
    %p122 = por %p120, %p121
    %p123 = scmp.ne.s32.totalorder %s115, %s118
    %p124 = scmp.eq.s32.totalorder %s11, 0
    %p125 = por %p123, %p124
    %p126 = scmp.ne.s32.totalorder %s115, %s118
    %p127 = scmp.eq.s32.totalorder %s16, 1
    %p128 = por %p126, %p127
    %p129 = scmp.ne.s32.totalorder %s118, %s119
    %p130 = scmp.eq.s32.totalorder %s16, 0
    %p131 = por %p129, %p130
    %p132 = scmp.ne.s32.totalorder %s118, %s119
    %p133 = scmp.eq.s32.totalorder %s17, 1
    %p134 = por %p132, %p133
    %p136 = scmp.ne.s32.totalorder %s119, %s135
    %p137 = scmp.eq.s32.totalorder %s17, 0
    %p138 = por %p136, %p137
    %s139 = ssub.s32 %s11, %s18
    %p140 = scmp.eq.s32.totalorder %s139, 0
    %s142 = sadd.s32 %s141, 1
    %s143 = scalar_select %p140, %s141, %s142
    %p146 = pneg %p140
    %p147 = scmp.eq.s32.totalorder %s11, 1
    %p148 = por %p146, %p147
    %p149 = scmp.ne.s32.totalorder %s141, %s144
    %p150 = scmp.eq.s32.totalorder %s11, 0
    %p151 = por %p149, %p150
    %p152 = scmp.ne.s32.totalorder %s141, %s144
    %p153 = scmp.eq.s32.totalorder %s16, 1
    %p154 = por %p152, %p153
    %p155 = scmp.ne.s32.totalorder %s144, %s145
    %p156 = scmp.eq.s32.totalorder %s16, 0
    %p157 = por %p155, %p156
    %p158 = scmp.ne.s32.totalorder %s144, %s145
    %p159 = scmp.eq.s32.totalorder %s17, 1
    %p160 = por %p158, %p159
    %p162 = scmp.ne.s32.totalorder %s145, %s161
    %p163 = scmp.eq.s32.totalorder %s17, 0
    %p164 = por %p162, %p163
    %p165 = scmp.le.s32.totalorder 1, %s11
    %p166 = scmp.lt.s32.totalorder %s11, 3
    %p167 = pnand %p165, %p166
    %p168 = pneg %p167
    // Predicated region
    $region9: #{_lambda_.7} parent=5 // pred_check
      _
    $region10: #{_lambda_.7} parent=5 // pred_check_branch
      %170 = sbr.rel (%p167) target = $region12
    $region11: #{_lambda_.7} parent=5 // pred_region
      %s171 = ssub.s32 %s11, 1
      // Predicated region
      $region13: #{_lambda_.7} parent=11 // pred_check
        %p172 = pneg %p58
      $region14: #{_lambda_.7} parent=11 // pred_check_branch
        %174 = sbr.rel (%p172) target = $region16
      $region15: #{_lambda_.7} parent=11 // pred_region
        _
      $region16: #{_lambda_.7} parent=11 // pred_fallthru
        _
      // Predicated region
      $region17: #{_lambda_.7} parent=11 // pred_check
        %p175 = pneg %p79
      $region18: #{_lambda_.7} parent=11 // pred_check_branch
        %177 = sbr.rel (%p175) target = $region20
      $region19: #{_lambda_.7} parent=11 // pred_region
        _
      $region20: #{_lambda_.7} parent=11 // pred_fallthru
        _
    $region12: #{_lambda_.7} parent=5 // pred_fallthru
      _
    %p178 = scmp.lt.s32.totalorder %s11, 2
    // Predicated region
    $region21: #{_lambda_.7} parent=5 // pred_check
      %p179 = pneg %p178
    $region22: #{_lambda_.7} parent=5 // pred_check_branch
      %181 = sbr.rel (%p179) target = $region24
    $region23: #{_lambda_.7} parent=5 // pred_region
      // Predicated region
      $region25: #{_lambda_.7} parent=23 // pred_check
        %p182 = pneg %p31
      $region26: #{_lambda_.7} parent=23 // pred_check_branch
        %184 = sbr.rel (%p182) target = $region28
      $region27: #{_lambda_.7} parent=23 // pred_region
        %p185 = scmp.lt.s32.totalorder %s11, 1
        %s186 = scalar_select %p185, %s11, 1
        %s187 = smul.addr %s186, 54
        %s188 = smul.addr %s187, 8
        %s189 = scalar_lea.vmem %s0, %s188
      $region28: #{_lambda_.7} parent=23 // pred_fallthru
        _
      // Predicated region
      $region29: #{_lambda_.7} parent=23 // pred_check
        %p190 = pneg %p99
      $region30: #{_lambda_.7} parent=23 // pred_check_branch
        %192 = sbr.rel (%p190) target = $region32
      $region31: #{_lambda_.7} parent=23 // pred_region
        %p193 = scmp.lt.s32.totalorder %s11, 1
        %s194 = scalar_select %p193, %s11, 1
        %s195 = smul.addr %s194, 18
        %s196 = scalar_lea.vmem %s3, %s195
      $region32: #{_lambda_.7} parent=23 // pred_fallthru
        _
      // Predicated region
      $region33: #{_lambda_.7} parent=23 // pred_check
        %p197 = pneg %p125
      $region34: #{_lambda_.7} parent=23 // pred_check_branch
        %199 = sbr.rel (%p197) target = $region36
      $region35: #{_lambda_.7} parent=23 // pred_region
        %p200 = scmp.lt.s32.totalorder %s11, 1
        %s201 = scalar_select %p200, %s11, 1
        %s202 = smul.addr %s201, 18
        %s203 = scalar_lea.vmem %s4, %s202
      $region36: #{_lambda_.7} parent=23 // pred_fallthru
        _
    $region24: #{_lambda_.7} parent=5 // pred_fallthru
      _
    %p204 = scmp.le.s32.totalorder 1, %s11
    %p205 = scmp.lt.s32.totalorder %s11, 3
    %p206 = pnand %p204, %p205
    %p207 = pneg %p206
    // Predicated region
    $region37: #{_lambda_.7} parent=5 // pred_check
      _
    $region38: #{_lambda_.7} parent=5 // pred_check_branch
      %209 = sbr.rel (%p206) target = $region40
    $region39: #{_lambda_.7} parent=5 // pred_region
      %s210 = ssub.s32 %s11, 1
      %p211 = scmp.lt.s32.totalorder %s16, 1
      %s212 = scalar_select %p211, %s16, 1
      %s213 = smul.addr %s212, 54
      %s214 = smul.addr %s213, 8
      %s215 = scalar_lea.vmem %s0, %s214
      %p216 = pneg %p37
      %p217 = pneg %p34
      %p218 = pneg %p58
      %p219 = pneg %p55
      %p220 = pneg %p79
      %p221 = pneg %p76
      %p222 = scmp.lt.s32.totalorder %s16, 1
      %s223 = scalar_select %p222, %s16, 1
      %s224 = smul.addr %s223, 18
      %s225 = scalar_lea.vmem %s3, %s224
      %p226 = pneg %p105
      %p227 = pneg %p102
      %p228 = scmp.lt.s32.totalorder %s16, 1
      %s229 = scalar_select %p228, %s16, 1
      %s230 = smul.addr %s229, 18
      %s231 = scalar_lea.vmem %s4, %s230
      %p232 = pneg %p131
      %p233 = pneg %p128
      %p234 = pneg %p157
      %p235 = pneg %p154
      %p236 = scmp.lt.s32.totalorder %s16, 1
      %s237 = scalar_select %p236, %s16, 1
      %s238 = smul.addr %s237, 32
      %s239 = smul.addr %s238, 8
      %s240 = scalar_lea.vmem %s5, %s239
      %p241 = scmp.lt.s32.totalorder %s16, 1
      %s242 = scalar_select %p241, %s16, 1
      %s243 = smul.addr %s242, 54
      %s244 = smul.addr %s243, 8
      %s245 = scalar_lea.vmem %s0, %s244
      %p246 = scmp.lt.s32.totalorder %s16, 1
      %s247 = scalar_select %p246, %s16, 1
      %s248 = smul.addr %s247, 18
      %s249 = scalar_lea.vmem %s3, %s248
      %p250 = scmp.lt.s32.totalorder %s16, 1
      %s251 = scalar_select %p250, %s16, 1
      %s252 = smul.addr %s251, 18
      %s253 = scalar_lea.vmem %s4, %s252
      %p254 = scmp.lt.s32.totalorder %s16, 1
      %s255 = scalar_select %p254, %s16, 1
      %s256 = smul.addr %s255, 32
      %s257 = smul.addr %s256, 8
      %s258 = scalar_lea.vmem %s5, %s257
      %v260 = vld [vmem:[%s245] sm:$0xff]
      %v261 = vld [vmem:[%s245 + $0x8] sm:$0xff]
      %v262 = vld [vmem:[%s245 + $0x10] sm:$0x3]
      %v263 = vld [vmem:[%s245 + $0x18] sm:$0xff]
      %v264 = vld [vmem:[%s245 + $0x20] sm:$0xff]
      %v265 = vld [vmem:[%s245 + $0x28] sm:$0x3]
      %v266 = vld [vmem:[%s245 + $0x30] sm:$0xff]
      %v267 = vld [vmem:[%s245 + $0x38] sm:$0xff]
      %v268 = vld [vmem:[%s245 + $0x40] sm:$0x3]
      %v269 = vld [vmem:[%s245 + $0x48] sm:$0xff]
      %v270 = vld [vmem:[%s245 + $0x50] sm:$0xff]
      %v271 = vld [vmem:[%s245 + $0x58] sm:$0x3]
      %v272 = vld [vmem:[%s245 + $0x60] sm:$0xff]
      %v273 = vld [vmem:[%s245 + $0x68] sm:$0xff]
      %v274 = vld [vmem:[%s245 + $0x70] sm:$0x3]
      %v275 = vld [vmem:[%s245 + $0x78] sm:$0xff]
      %v276 = vld [vmem:[%s245 + $0x80] sm:$0xff]
      %v277 = vld [vmem:[%s245 + $0x88] sm:$0x3]
      %v278 = vld [vmem:[%s245 + $0x90] sm:$0xff]
      %v279 = vld [vmem:[%s245 + $0x98] sm:$0xff]
      %v280 = vld [vmem:[%s245 + $0xa0] sm:$0x3]
      %v281 = vld [vmem:[%s245 + $0xa8] sm:$0xff]
      %v282 = vld [vmem:[%s245 + $0xb0] sm:$0xff]
      %v283 = vld [vmem:[%s245 + $0xb8] sm:$0x3]
      %v284 = vld [vmem:[%s245 + $0xc0] sm:$0xff]
      %v285 = vld [vmem:[%s245 + $0xc8] sm:$0xff]
      %v286 = vld [vmem:[%s245 + $0xd0] sm:$0x3]
      %v287 = vld [vmem:[%s245 + $0xd8] sm:$0xff]
      %v288 = vld [vmem:[%s245 + $0xe0] sm:$0xff]
      %v289 = vld [vmem:[%s245 + $0xe8] sm:$0x3]
      %v290 = vld [vmem:[%s245 + $0xf0] sm:$0xff]
      %v291 = vld [vmem:[%s245 + $0xf8] sm:$0xff]
      %v292 = vld [vmem:[%s245 + $0x100] sm:$0x3]
      %v293 = vld [vmem:[%s245 + $0x108] sm:$0xff]
      %v294 = vld [vmem:[%s245 + $0x110] sm:$0xff]
      %v295 = vld [vmem:[%s245 + $0x118] sm:$0x3]
      %v296 = vld [vmem:[%s245 + $0x120] sm:$0xff]
      %v297 = vld [vmem:[%s245 + $0x128] sm:$0xff]
      %v298 = vld [vmem:[%s245 + $0x130] sm:$0x3]
      %v299 = vld [vmem:[%s245 + $0x138] sm:$0xff]
      %v300 = vld [vmem:[%s245 + $0x140] sm:$0xff]
      %v301 = vld [vmem:[%s245 + $0x148] sm:$0x3]
      %v302 = vld [vmem:[%s245 + $0x150] sm:$0xff]
      %v303 = vld [vmem:[%s245 + $0x158] sm:$0xff]
      %v304 = vld [vmem:[%s245 + $0x160] sm:$0x3]
      %v305 = vld [vmem:[%s245 + $0x168] sm:$0xff]
      %v306 = vld [vmem:[%s245 + $0x170] sm:$0xff]
      %v307 = vld [vmem:[%s245 + $0x178] sm:$0x3]
      %v308 = vld [vmem:[%s245 + $0x180] sm:$0xff]
      %v309 = vld [vmem:[%s245 + $0x188] sm:$0xff]
      %v310 = vld [vmem:[%s245 + $0x190] sm:$0x3]
      %v311 = vld [vmem:[%s245 + $0x198] sm:$0xff]
      %v312 = vld [vmem:[%s245 + $0x1a0] sm:$0xff]
      %v313 = vld [vmem:[%s245 + $0x1a8] sm:$0x3]
      %v314 = vld [vmem:[%s1] sm:$0xf]
      %v315 = vld [vmem:[%s1 + $0x4] sm:$0xf]
      %v316 = vld [vmem:[%s1 + $0x8] sm:$0xf]
      %v317 = vld [vmem:[%s1 + $0xc] sm:$0xf]
      %v318 = vld [vmem:[%s1 + $0x10] sm:$0xf]
      %v319 = vld [vmem:[%s1 + $0x14] sm:$0xf]
      %v320 = vld [vmem:[%s1 + $0x18] sm:$0xf]
      %v321 = vld [vmem:[%s1 + $0x1c] sm:$0xf]
      %v322 = vld [vmem:[%s1 + $0x20] sm:$0xf]
      %v323 = vld [vmem:[%s1 + $0x24] sm:$0xf]
      %v324 = vld [vmem:[%s1 + $0x28] sm:$0xf]
      %v325 = vld [vmem:[%s1 + $0x2c] sm:$0xf]
      %v326 = vld [vmem:[%s1 + $0x30] sm:$0xf]
      %v327 = vld [vmem:[%s1 + $0x34] sm:$0xf]
      %v328 = vld [vmem:[%s1 + $0x38] sm:$0xf]
      %v329 = vld [vmem:[%s1 + $0x3c] sm:$0xf]
      %v330 = vld [vmem:[%s1 + $0x40] sm:$0xf]
      %v331 = vld [vmem:[%s1 + $0x44] sm:$0xf]
      %v332 = vld [vmem:[%s1 + $0x48] sm:$0xf]
      %v333 = vld [vmem:[%s1 + $0x4c] sm:$0xf]
      %v334 = vld [vmem:[%s1 + $0x50] sm:$0xf]
      %v335 = vld [vmem:[%s1 + $0x54] sm:$0xf]
      %v336 = vld [vmem:[%s1 + $0x58] sm:$0xf]
      %v337 = vld [vmem:[%s1 + $0x5c] sm:$0xf]
      %v338 = vld [vmem:[%s1 + $0x60] sm:$0xf]
      %v339 = vld [vmem:[%s1 + $0x64] sm:$0xf]
      %v340 = vld [vmem:[%s1 + $0x68] sm:$0xf]
      %v341 = vld [vmem:[%s1 + $0x6c] sm:$0xf]
      %v342 = vld [vmem:[%s1 + $0x70] sm:$0xf]
      %v343 = vld [vmem:[%s1 + $0x74] sm:$0xf]
      %v344 = vld [vmem:[%s1 + $0x78] sm:$0xf]
      %v345 = vld [vmem:[%s1 + $0x7c] sm:$0xf]
      %v346 = vld [vmem:[%s1 + $0x80] sm:$0xf]
      %v347 = vld [vmem:[%s1 + $0x84] sm:$0xf]
      %v348 = vld [vmem:[%s1 + $0x88] sm:$0xf]
      %v349 = vld [vmem:[%s1 + $0x8c] sm:$0xf]
      %v350 = vld [vmem:[%s1 + $0x90] sm:$0xf]
      %v351 = vld [vmem:[%s1 + $0x94] sm:$0xf]
      %v352 = vld [vmem:[%s1 + $0x98] sm:$0xf]
      %v353 = vld [vmem:[%s1 + $0x9c] sm:$0xf]
      %v354 = vld [vmem:[%s1 + $0xa0] sm:$0xf]
      %v355 = vld [vmem:[%s1 + $0xa4] sm:$0xf]
      %v356 = vld [vmem:[%s1 + $0xa8] sm:$0xf]
      %v357 = vld [vmem:[%s1 + $0xac] sm:$0xf]
      %v358 = vld [vmem:[%s1 + $0xb0] sm:$0xf]
      %v359 = vld [vmem:[%s1 + $0xb4] sm:$0xf]
      %v360 = vld [vmem:[%s1 + $0xb8] sm:$0xf]
      %v361 = vld [vmem:[%s1 + $0xbc] sm:$0xf]
      %v362 = vld [vmem:[%s1 + $0xc0] sm:$0xf]
      %v363 = vld [vmem:[%s1 + $0xc4] sm:$0xf]
      %v364 = vld [vmem:[%s1 + $0xc8] sm:$0xf]
      %v365 = vld [vmem:[%s1 + $0xcc] sm:$0xf]
      %v366 = vld [vmem:[%s1 + $0xd0] sm:$0xf]
      %v367 = vld [vmem:[%s1 + $0xd4] sm:$0xf]
      %v368 = vld [vmem:[%s1 + $0xd8] sm:$0xf]
      %v369 = vld [vmem:[%s1 + $0xdc] sm:$0xf]
      %v370 = vld [vmem:[%s1 + $0xe0] sm:$0xf]
      %v371 = vld [vmem:[%s1 + $0xe4] sm:$0xf]
      %v372 = vld [vmem:[%s1 + $0xe8] sm:$0xf]
      %v373 = vld [vmem:[%s1 + $0xec] sm:$0xf]
      %v374 = vld [vmem:[%s1 + $0xf0] sm:$0xf]
      %v375 = vld [vmem:[%s1 + $0xf4] sm:$0xf]
      %v376 = vld [vmem:[%s1 + $0xf8] sm:$0xf]
      %v377 = vld [vmem:[%s1 + $0xfc] sm:$0xf]
      %v378 = vld [vmem:[%s1 + $0x100] sm:$0xf]
      %v379 = vld [vmem:[%s1 + $0x104] sm:$0xf]
      %v380 = vld [vmem:[%s1 + $0x108] sm:$0xf]
      %v381 = vld [vmem:[%s1 + $0x10c] sm:$0xf]
      %v382 = vld [vmem:[%s1 + $0x110] sm:$0xf]
      %v383 = vld [vmem:[%s1 + $0x114] sm:$0xf]
      %v384 = vld [vmem:[%s1 + $0x118] sm:$0xf]
      %v385 = vld [vmem:[%s1 + $0x11c] sm:$0xf]
      %v386 = vld [vmem:[%s2] sm:$0x1]
      %vm435 = vcmask 1046528
      %v436 = vrot.slane %v260, 1
      %v437 = vrot.slane %v261, 1
      %v438 = vsel %vm435, %v436, %v437
      %v439 = vrot.slane %v262, 1
      %v440 = vsel %vm435, %v437, %v439
      %v441 = vrot.slane %v263, 1
      %v442 = vrot.slane %v264, 1
      %v443 = vsel %vm435, %v441, %v442
      %v444 = vrot.slane %v265, 1
      %v445 = vsel %vm435, %v442, %v444
      %v446 = vrot.slane %v266, 1
      %v447 = vrot.slane %v267, 1
      %v448 = vsel %vm435, %v446, %v447
      %v449 = vrot.slane %v268, 1
      %v450 = vsel %vm435, %v447, %v449
      %v451 = vrot.slane %v269, 1
      %v452 = vrot.slane %v270, 1
      %v453 = vsel %vm435, %v451, %v452
      %v454 = vrot.slane %v271, 1
      %v455 = vsel %vm435, %v452, %v454
      %v456 = vrot.slane %v272, 1
      %v457 = vrot.slane %v273, 1
      %v458 = vsel %vm435, %v456, %v457
      %v459 = vrot.slane %v274, 1
      %v460 = vsel %vm435, %v457, %v459
      %v461 = vrot.slane %v275, 1
      %v462 = vrot.slane %v276, 1
      %v463 = vsel %vm435, %v461, %v462
      %v464 = vrot.slane %v277, 1
      %v465 = vsel %vm435, %v462, %v464
      %v466 = vrot.slane %v278, 1
      %v467 = vrot.slane %v279, 1
      %v468 = vsel %vm435, %v466, %v467
      %v469 = vrot.slane %v280, 1
      %v470 = vsel %vm435, %v467, %v469
      %v471 = vrot.slane %v281, 1
      %v472 = vrot.slane %v282, 1
      %v473 = vsel %vm435, %v471, %v472
      %v474 = vrot.slane %v283, 1
      %v475 = vsel %vm435, %v472, %v474
      %v476 = vrot.slane %v284, 1
      %v477 = vrot.slane %v285, 1
      %v478 = vsel %vm435, %v476, %v477
      %v479 = vrot.slane %v286, 1
      %v480 = vsel %vm435, %v477, %v479
      %v481 = vrot.slane %v287, 1
      %v482 = vrot.slane %v288, 1
      %v483 = vsel %vm435, %v481, %v482
      %v484 = vrot.slane %v289, 1
      %v485 = vsel %vm435, %v482, %v484
      %v486 = vrot.slane %v290, 1
      %v487 = vrot.slane %v291, 1
      %v488 = vsel %vm435, %v486, %v487
      %v489 = vrot.slane %v292, 1
      %v490 = vsel %vm435, %v487, %v489
      %v491 = vrot.slane %v293, 1
      %v492 = vrot.slane %v294, 1
      %v493 = vsel %vm435, %v491, %v492
      %v494 = vrot.slane %v295, 1
      %v495 = vsel %vm435, %v492, %v494
      %v496 = vrot.slane %v296, 1
      %v497 = vrot.slane %v297, 1
      %v498 = vsel %vm435, %v496, %v497
      %v499 = vrot.slane %v298, 1
      %v500 = vsel %vm435, %v497, %v499
      %v501 = vrot.slane %v299, 1
      %v502 = vrot.slane %v300, 1
      %v503 = vsel %vm435, %v501, %v502
      %v504 = vrot.slane %v301, 1
      %v505 = vsel %vm435, %v502, %v504
      %v506 = vrot.slane %v302, 1
      %v507 = vrot.slane %v303, 1
      %v508 = vsel %vm435, %v506, %v507
      %v509 = vrot.slane %v304, 1
      %v510 = vsel %vm435, %v507, %v509
      %v511 = vrot.slane %v305, 1
      %v512 = vrot.slane %v306, 1
      %v513 = vsel %vm435, %v511, %v512
      %v514 = vrot.slane %v307, 1
      %v515 = vsel %vm435, %v512, %v514
      %516 = vrot.lane.b32.xlu0 %v438, 64
      %v517 = vpop.permute.xlu0 %516
      %518 = vrot.lane.b32.xlu0 %v440, 64
      %v519 = vpop.permute.xlu0 %518
      %520 = vrot.lane.b32.xlu0 %v443, 64
      %v521 = vpop.permute.xlu0 %520
      %522 = vrot.lane.b32.xlu0 %v445, 64
      %v523 = vpop.permute.xlu0 %522
      %524 = vrot.lane.b32.xlu0 %v448, 64
      %v525 = vpop.permute.xlu0 %524
      %526 = vrot.lane.b32.xlu0 %v450, 64
      %v527 = vpop.permute.xlu0 %526
      %528 = vrot.lane.b32.xlu0 %v453, 64
      %v529 = vpop.permute.xlu0 %528
      %530 = vrot.lane.b32.xlu0 %v455, 64
      %v531 = vpop.permute.xlu0 %530
      %532 = vrot.lane.b32.xlu0 %v458, 64
      %v533 = vpop.permute.xlu0 %532
      %534 = vrot.lane.b32.xlu0 %v460, 64
      %v535 = vpop.permute.xlu0 %534
      %536 = vrot.lane.b32.xlu0 %v463, 64
      %v537 = vpop.permute.xlu0 %536
      %538 = vrot.lane.b32.xlu0 %v465, 64
      %v539 = vpop.permute.xlu0 %538
      %540 = vrot.lane.b32.xlu0 %v468, 64
      %v541 = vpop.permute.xlu0 %540
      %542 = vrot.lane.b32.xlu0 %v470, 64
      %v543 = vpop.permute.xlu0 %542
      %544 = vrot.lane.b32.xlu0 %v473, 64
      %v545 = vpop.permute.xlu0 %544
      %546 = vrot.lane.b32.xlu0 %v475, 64
      %v547 = vpop.permute.xlu0 %546
      %548 = vrot.lane.b32.xlu0 %v478, 64
      %v549 = vpop.permute.xlu0 %548
      %550 = vrot.lane.b32.xlu0 %v480, 64
      %v551 = vpop.permute.xlu0 %550
      %552 = vrot.lane.b32.xlu0 %v483, 64
      %v553 = vpop.permute.xlu0 %552
      %554 = vrot.lane.b32.xlu0 %v485, 64
      %v555 = vpop.permute.xlu0 %554
      %556 = vrot.lane.b32.xlu0 %v488, 64
      %v557 = vpop.permute.xlu0 %556
      %558 = vrot.lane.b32.xlu0 %v490, 64
      %v559 = vpop.permute.xlu0 %558
      %560 = vrot.lane.b32.xlu0 %v493, 64
      %v561 = vpop.permute.xlu0 %560
      %562 = vrot.lane.b32.xlu0 %v495, 64
      %v563 = vpop.permute.xlu0 %562
      %564 = vrot.lane.b32.xlu0 %v498, 64
      %v565 = vpop.permute.xlu0 %564
      %566 = vrot.lane.b32.xlu0 %v500, 64
      %v567 = vpop.permute.xlu0 %566
      %568 = vrot.lane.b32.xlu0 %v503, 64
      %v569 = vpop.permute.xlu0 %568
      %570 = vrot.lane.b32.xlu0 %v505, 64
      %v571 = vpop.permute.xlu0 %570
      %572 = vrot.lane.b32.xlu0 %v508, 64
      %v573 = vpop.permute.xlu0 %572
      %574 = vrot.lane.b32.xlu0 %v510, 64
      %v575 = vpop.permute.xlu0 %574
      %576 = vrot.lane.b32.xlu0 %v513, 64
      %v577 = vpop.permute.xlu0 %576
      %578 = vrot.lane.b32.xlu0 %v515, 64
      %v579 = vpop.permute.xlu0 %578
      %vm612 = vcmask 1045504
      %v613 = vrot.slane %v260, 2
      %v614 = vrot.slane %v261, 2
      %v615 = vsel %vm612, %v613, %v614
      %v616 = vrot.slane %v262, 2
      %v617 = vsel %vm612, %v614, %v616
      %v618 = vrot.slane %v263, 2
      %v619 = vrot.slane %v264, 2
      %v620 = vsel %vm612, %v618, %v619
      %v621 = vrot.slane %v265, 2
      %v622 = vsel %vm612, %v619, %v621
      %v623 = vrot.slane %v266, 2
      %v624 = vrot.slane %v267, 2
      %v625 = vsel %vm612, %v623, %v624
      %v626 = vrot.slane %v268, 2
      %v627 = vsel %vm612, %v624, %v626
      %v628 = vrot.slane %v269, 2
      %v629 = vrot.slane %v270, 2
      %v630 = vsel %vm612, %v628, %v629
      %v631 = vrot.slane %v271, 2
      %v632 = vsel %vm612, %v629, %v631
      %v633 = vrot.slane %v272, 2
      %v634 = vrot.slane %v273, 2
      %v635 = vsel %vm612, %v633, %v634
      %v636 = vrot.slane %v274, 2
      %v637 = vsel %vm612, %v634, %v636
      %v638 = vrot.slane %v275, 2
      %v639 = vrot.slane %v276, 2
      %v640 = vsel %vm612, %v638, %v639
      %v641 = vrot.slane %v277, 2
      %v642 = vsel %vm612, %v639, %v641
      %v643 = vrot.slane %v278, 2
      %v644 = vrot.slane %v279, 2
      %v645 = vsel %vm612, %v643, %v644
      %v646 = vrot.slane %v280, 2
      %v647 = vsel %vm612, %v644, %v646
      %v648 = vrot.slane %v281, 2
      %v649 = vrot.slane %v282, 2
      %v650 = vsel %vm612, %v648, %v649
      %v651 = vrot.slane %v283, 2
      %v652 = vsel %vm612, %v649, %v651
      %v653 = vrot.slane %v284, 2
      %v654 = vrot.slane %v285, 2
      %v655 = vsel %vm612, %v653, %v654
      %v656 = vrot.slane %v286, 2
      %v657 = vsel %vm612, %v654, %v656
      %v658 = vrot.slane %v287, 2
      %v659 = vrot.slane %v288, 2
      %v660 = vsel %vm612, %v658, %v659
      %v661 = vrot.slane %v289, 2
      %v662 = vsel %vm612, %v659, %v661
      %v663 = vrot.slane %v290, 2
      %v664 = vrot.slane %v291, 2
      %v665 = vsel %vm612, %v663, %v664
      %v666 = vrot.slane %v292, 2
      %v667 = vsel %vm612, %v664, %v666
      %v668 = vrot.slane %v293, 2
      %v669 = vrot.slane %v294, 2
      %v670 = vsel %vm612, %v668, %v669
      %v671 = vrot.slane %v295, 2
      %v672 = vsel %vm612, %v669, %v671
      %v673 = vrot.slane %v296, 2
      %v674 = vrot.slane %v297, 2
      %v675 = vsel %vm612, %v673, %v674
      %v676 = vrot.slane %v298, 2
      %v677 = vsel %vm612, %v674, %v676
      %v678 = vrot.slane %v299, 2
      %v679 = vrot.slane %v300, 2
      %v680 = vsel %vm612, %v678, %v679
      %v681 = vrot.slane %v301, 2
      %v682 = vsel %vm612, %v679, %v681
      %v683 = vrot.slane %v302, 2
      %v684 = vrot.slane %v303, 2
      %v685 = vsel %vm612, %v683, %v684
      %v686 = vrot.slane %v304, 2
      %v687 = vsel %vm612, %v684, %v686
      %v688 = vrot.slane %v305, 2
      %v689 = vrot.slane %v306, 2
      %v690 = vsel %vm612, %v688, %v689
      %v691 = vrot.slane %v307, 2
      %v692 = vsel %vm612, %v689, %v691
      %727 = vrot.lane.b32.xlu0 %v263, 64
      %v728 = vpop.permute.xlu0 %727
      %729 = vrot.lane.b32.xlu0 %v264, 64
      %v730 = vpop.permute.xlu0 %729
      %731 = vrot.lane.b32.xlu0 %v266, 64
      %v732 = vpop.permute.xlu0 %731
      %733 = vrot.lane.b32.xlu0 %v267, 64
      %v734 = vpop.permute.xlu0 %733
      %735 = vrot.lane.b32.xlu0 %v269, 64
      %v736 = vpop.permute.xlu0 %735
      %737 = vrot.lane.b32.xlu0 %v270, 64
      %v738 = vpop.permute.xlu0 %737
      %739 = vrot.lane.b32.xlu0 %v272, 64
      %v740 = vpop.permute.xlu0 %739
      %741 = vrot.lane.b32.xlu0 %v273, 64
      %v742 = vpop.permute.xlu0 %741
      %743 = vrot.lane.b32.xlu0 %v275, 64
      %v744 = vpop.permute.xlu0 %743
      %745 = vrot.lane.b32.xlu0 %v276, 64
      %v746 = vpop.permute.xlu0 %745
      %747 = vrot.lane.b32.xlu0 %v278, 64
      %v748 = vpop.permute.xlu0 %747
      %749 = vrot.lane.b32.xlu0 %v279, 64
      %v750 = vpop.permute.xlu0 %749
      %751 = vrot.lane.b32.xlu0 %v281, 64
      %v752 = vpop.permute.xlu0 %751
      %753 = vrot.lane.b32.xlu0 %v282, 64
      %v754 = vpop.permute.xlu0 %753
      %755 = vrot.lane.b32.xlu0 %v284, 64
      %v756 = vpop.permute.xlu0 %755
      %757 = vrot.lane.b32.xlu0 %v285, 64
      %v758 = vpop.permute.xlu0 %757
      %759 = vrot.lane.b32.xlu0 %v287, 64
      %v760 = vpop.permute.xlu0 %759
      %761 = vrot.lane.b32.xlu0 %v288, 64
      %v762 = vpop.permute.xlu0 %761
      %763 = vrot.lane.b32.xlu0 %v290, 64
      %v764 = vpop.permute.xlu0 %763
      %765 = vrot.lane.b32.xlu0 %v291, 64
      %v766 = vpop.permute.xlu0 %765
      %767 = vrot.lane.b32.xlu0 %v293, 64
      %v768 = vpop.permute.xlu0 %767
      %769 = vrot.lane.b32.xlu0 %v294, 64
      %v770 = vpop.permute.xlu0 %769
      %771 = vrot.lane.b32.xlu0 %v296, 64
      %v772 = vpop.permute.xlu0 %771
      %773 = vrot.lane.b32.xlu0 %v297, 64
      %v774 = vpop.permute.xlu0 %773
      %775 = vrot.lane.b32.xlu0 %v299, 64
      %v776 = vpop.permute.xlu0 %775
      %777 = vrot.lane.b32.xlu0 %v300, 64
      %v778 = vpop.permute.xlu0 %777
      %779 = vrot.lane.b32.xlu0 %v302, 64
      %v780 = vpop.permute.xlu0 %779
      %781 = vrot.lane.b32.xlu0 %v303, 64
      %v782 = vpop.permute.xlu0 %781
      %783 = vrot.lane.b32.xlu0 %v305, 64
      %v784 = vpop.permute.xlu0 %783
      %785 = vrot.lane.b32.xlu0 %v306, 64
      %v786 = vpop.permute.xlu0 %785
      %787 = vrot.lane.b32.xlu0 %v308, 64
      %v788 = vpop.permute.xlu0 %787
      %789 = vrot.lane.b32.xlu0 %v309, 64
      %v790 = vpop.permute.xlu0 %789
      %v824 = vrot.slane %v308, 1
      %v825 = vrot.slane %v309, 1
      %v826 = vsel %vm435, %v824, %v825
      %v827 = vrot.slane %v310, 1
      %v828 = vsel %vm435, %v825, %v827
      %v861 = vrot.slane %v308, 2
      %v862 = vrot.slane %v309, 2
      %v863 = vsel %vm612, %v861, %v862
      %v864 = vrot.slane %v310, 2
      %v865 = vsel %vm612, %v862, %v864
      %866 = vrot.lane.b32.xlu0 %v620, 64
      %v867 = vpop.permute.xlu0 %866
      %868 = vrot.lane.b32.xlu0 %v622, 64
      %v869 = vpop.permute.xlu0 %868
      %870 = vrot.lane.b32.xlu0 %v625, 64
      %v871 = vpop.permute.xlu0 %870
      %872 = vrot.lane.b32.xlu0 %v627, 64
      %v873 = vpop.permute.xlu0 %872
      %874 = vrot.lane.b32.xlu0 %v630, 64
      %v875 = vpop.permute.xlu0 %874
      %876 = vrot.lane.b32.xlu0 %v632, 64
      %v877 = vpop.permute.xlu0 %876
      %878 = vrot.lane.b32.xlu0 %v635, 64
      %v879 = vpop.permute.xlu0 %878
      %880 = vrot.lane.b32.xlu0 %v637, 64
      %v881 = vpop.permute.xlu0 %880
      %882 = vrot.lane.b32.xlu0 %v640, 64
      %v883 = vpop.permute.xlu0 %882
      %884 = vrot.lane.b32.xlu0 %v642, 64
      %v885 = vpop.permute.xlu0 %884
      %886 = vrot.lane.b32.xlu0 %v645, 64
      %v887 = vpop.permute.xlu0 %886
      %888 = vrot.lane.b32.xlu0 %v647, 64
      %v889 = vpop.permute.xlu0 %888
      %890 = vrot.lane.b32.xlu0 %v650, 64
      %v891 = vpop.permute.xlu0 %890
      %892 = vrot.lane.b32.xlu0 %v652, 64
      %v893 = vpop.permute.xlu0 %892
      %894 = vrot.lane.b32.xlu0 %v655, 64
      %v895 = vpop.permute.xlu0 %894
      %896 = vrot.lane.b32.xlu0 %v657, 64
      %v897 = vpop.permute.xlu0 %896
      %898 = vrot.lane.b32.xlu0 %v660, 64
      %v899 = vpop.permute.xlu0 %898
      %900 = vrot.lane.b32.xlu0 %v662, 64
      %v901 = vpop.permute.xlu0 %900
      %902 = vrot.lane.b32.xlu0 %v665, 64
      %v903 = vpop.permute.xlu0 %902
      %904 = vrot.lane.b32.xlu0 %v667, 64
      %v905 = vpop.permute.xlu0 %904
      %906 = vrot.lane.b32.xlu0 %v670, 64
      %v907 = vpop.permute.xlu0 %906
      %908 = vrot.lane.b32.xlu0 %v672, 64
      %v909 = vpop.permute.xlu0 %908
      %910 = vrot.lane.b32.xlu0 %v675, 64
      %v911 = vpop.permute.xlu0 %910
      %912 = vrot.lane.b32.xlu0 %v677, 64
      %v913 = vpop.permute.xlu0 %912
      %914 = vrot.lane.b32.xlu0 %v680, 64
      %v915 = vpop.permute.xlu0 %914
      %916 = vrot.lane.b32.xlu0 %v682, 64
      %v917 = vpop.permute.xlu0 %916
      %918 = vrot.lane.b32.xlu0 %v685, 64
      %v919 = vpop.permute.xlu0 %918
      %920 = vrot.lane.b32.xlu0 %v687, 64
      %v921 = vpop.permute.xlu0 %920
      %922 = vrot.lane.b32.xlu0 %v690, 64
      %v923 = vpop.permute.xlu0 %922
      %924 = vrot.lane.b32.xlu0 %v692, 64
      %v925 = vpop.permute.xlu0 %924
      %926 = vrot.lane.b32.xlu0 %v863, 64
      %v927 = vpop.permute.xlu0 %926
      %928 = vrot.lane.b32.xlu0 %v865, 64
      %v929 = vpop.permute.xlu0 %928
      %v965 = vrot.slane %v311, 1
      %v966 = vrot.slane %v312, 1
      %v967 = vsel %vm435, %v965, %v966
      %v968 = vrot.slane %v313, 1
      %v969 = vsel %vm435, %v966, %v968
      %970 = vrot.lane.b32.xlu0 %v826, 64
      %v971 = vpop.permute.xlu0 %970
      %972 = vrot.lane.b32.xlu0 %v828, 64
      %v973 = vpop.permute.xlu0 %972
      %974 = vrot.lane.b32.xlu0 %v967, 64
      %v975 = vpop.permute.xlu0 %974
      %976 = vrot.lane.b32.xlu0 %v969, 64
      %v977 = vpop.permute.xlu0 %976
      %v982 = vrot.slane %v311, 2
      %v983 = vrot.slane %v312, 2
      %v984 = vsel %vm612, %v982, %v983
      %v985 = vrot.slane %v313, 2
      %v986 = vsel %vm612, %v983, %v985
      %vm991 = vcmask 523264
      %v992 = vsel %vm991, %v260, %v517
      %v993 = vsel %vm991, %v261, %v519
      %v994 = vsel %vm991, %v263, %v521
      %v995 = vsel %vm991, %v264, %v523
      %v996 = vsel %vm991, %v266, %v525
      %v997 = vsel %vm991, %v267, %v527
      %v998 = vsel %vm991, %v269, %v529
      %v999 = vsel %vm991, %v270, %v531
      %v1000 = vsel %vm991, %v272, %v533
      %v1001 = vsel %vm991, %v273, %v535
      %v1002 = vsel %vm991, %v275, %v537
      %v1003 = vsel %vm991, %v276, %v539
      %v1004 = vsel %vm991, %v278, %v541
      %v1005 = vsel %vm991, %v279, %v543
      %v1006 = vsel %vm991, %v281, %v545
      %v1007 = vsel %vm991, %v282, %v547
      %v1008 = vsel %vm991, %v284, %v549
      %v1009 = vsel %vm991, %v285, %v551
      %v1010 = vsel %vm991, %v287, %v553
      %v1011 = vsel %vm991, %v288, %v555
      %v1012 = vsel %vm991, %v290, %v557
      %v1013 = vsel %vm991, %v291, %v559
      %v1014 = vsel %vm991, %v293, %v561
      %v1015 = vsel %vm991, %v294, %v563
      %v1016 = vsel %vm991, %v296, %v565
      %v1017 = vsel %vm991, %v297, %v567
      %v1018 = vsel %vm991, %v299, %v569
      %v1019 = vsel %vm991, %v300, %v571
      %v1020 = vsel %vm991, %v302, %v573
      %v1021 = vsel %vm991, %v303, %v575
      %v1022 = vsel %vm991, %v305, %v577
      %v1023 = vsel %vm991, %v306, %v579
      %v1024 = vsel %vm991, %v615, %v728
      %v1025 = vsel %vm991, %v617, %v730
      %v1026 = vsel %vm991, %v620, %v732
      %v1027 = vsel %vm991, %v622, %v734
      %v1028 = vsel %vm991, %v625, %v736
      %v1029 = vsel %vm991, %v627, %v738
      %v1030 = vsel %vm991, %v630, %v740
      %v1031 = vsel %vm991, %v632, %v742
      %v1032 = vsel %vm991, %v635, %v744
      %v1033 = vsel %vm991, %v637, %v746
      %v1034 = vsel %vm991, %v640, %v748
      %v1035 = vsel %vm991, %v642, %v750
      %v1036 = vsel %vm991, %v645, %v752
      %v1037 = vsel %vm991, %v647, %v754
      %v1038 = vsel %vm991, %v650, %v756
      %v1039 = vsel %vm991, %v652, %v758
      %v1040 = vsel %vm991, %v655, %v760
      %v1041 = vsel %vm991, %v657, %v762
      %v1042 = vsel %vm991, %v660, %v764
      %v1043 = vsel %vm991, %v662, %v766
      %v1044 = vsel %vm991, %v665, %v768
      %v1045 = vsel %vm991, %v667, %v770
      %v1046 = vsel %vm991, %v670, %v772
      %v1047 = vsel %vm991, %v672, %v774
      %v1048 = vsel %vm991, %v675, %v776
      %v1049 = vsel %vm991, %v677, %v778
      %v1050 = vsel %vm991, %v680, %v780
      %v1051 = vsel %vm991, %v682, %v782
      %v1052 = vsel %vm991, %v685, %v784
      %v1053 = vsel %vm991, %v687, %v786
      %v1054 = vsel %vm991, %v690, %v788
      %v1055 = vsel %vm991, %v692, %v790
      %v1056 = vsel %vm991, %v443, %v867
      %v1057 = vsel %vm991, %v445, %v869
      %v1058 = vsel %vm991, %v448, %v871
      %v1059 = vsel %vm991, %v450, %v873
      %v1060 = vsel %vm991, %v453, %v875
      %v1061 = vsel %vm991, %v455, %v877
      %v1062 = vsel %vm991, %v458, %v879
      %v1063 = vsel %vm991, %v460, %v881
      %v1064 = vsel %vm991, %v463, %v883
      %v1065 = vsel %vm991, %v465, %v885
      %v1066 = vsel %vm991, %v468, %v887
      %v1067 = vsel %vm991, %v470, %v889
      %v1068 = vsel %vm991, %v473, %v891
      %v1069 = vsel %vm991, %v475, %v893
      %v1070 = vsel %vm991, %v478, %v895
      %v1071 = vsel %vm991, %v480, %v897
      %v1072 = vsel %vm991, %v483, %v899
      %v1073 = vsel %vm991, %v485, %v901
      %v1074 = vsel %vm991, %v488, %v903
      %v1075 = vsel %vm991, %v490, %v905
      %v1076 = vsel %vm991, %v493, %v907
      %v1077 = vsel %vm991, %v495, %v909
      %v1078 = vsel %vm991, %v498, %v911
      %v1079 = vsel %vm991, %v500, %v913
      %v1080 = vsel %vm991, %v503, %v915
      %v1081 = vsel %vm991, %v505, %v917
      %v1082 = vsel %vm991, %v508, %v919
      %v1083 = vsel %vm991, %v510, %v921
      %v1084 = vsel %vm991, %v513, %v923
      %v1085 = vsel %vm991, %v515, %v925
      %v1086 = vsel %vm991, %v826, %v927
      %v1087 = vsel %vm991, %v828, %v929
      %v1088 = vsel %vm991, %v308, %v971
      %v1089 = vsel %vm991, %v309, %v973
      %v1090 = vsel %vm991, %v311, %v975
      %v1091 = vsel %vm991, %v312, %v977
      %v1092 = vpack.c.bf16 %v993, %v992
      %v1093 = vpack.c.bf16 %v1025, %v1024
      %v1094 = vpack.c.bf16 %v1057, %v1056
      %v1095 = vpack.c.bf16 %v997, %v996
      %v1096 = vpack.c.bf16 %v627, %v625
      %v1097 = vpack.c.bf16 %v995, %v994
      %v1098 = vpack.c.bf16 %v1027, %v1026
      %v1099 = vpack.c.bf16 %v1059, %v1058
      %v1100 = vpack.c.bf16 %v999, %v998
      %v1101 = vpack.c.bf16 %v632, %v630
      %v1102 = vpack.c.bf16 %v1029, %v1028
      %v1103 = vpack.c.bf16 %v1061, %v1060
      %v1104 = vpack.c.bf16 %v1001, %v1000
      %v1105 = vpack.c.bf16 %v637, %v635
      %v1106 = vpack.c.bf16 %v1031, %v1030
      %v1107 = vpack.c.bf16 %v1063, %v1062
      %v1108 = vpack.c.bf16 %v1003, %v1002
      %v1109 = vpack.c.bf16 %v642, %v640
      %v1110 = vpack.c.bf16 %v1033, %v1032
      %v1111 = vpack.c.bf16 %v1065, %v1064
      %v1112 = vpack.c.bf16 %v1005, %v1004
      %v1113 = vpack.c.bf16 %v647, %v645
      %v1114 = vpack.c.bf16 %v1035, %v1034
      %v1115 = vpack.c.bf16 %v1067, %v1066
      %v1116 = vpack.c.bf16 %v1007, %v1006
      %v1117 = vpack.c.bf16 %v652, %v650
      %v1118 = vpack.c.bf16 %v1037, %v1036
      %v1119 = vpack.c.bf16 %v1069, %v1068
      %v1120 = vpack.c.bf16 %v1009, %v1008
      %v1121 = vpack.c.bf16 %v657, %v655
      %v1122 = vpack.c.bf16 %v1039, %v1038
      %v1123 = vpack.c.bf16 %v1071, %v1070
      %v1124 = vpack.c.bf16 %v1011, %v1010
      %v1125 = vpack.c.bf16 %v662, %v660
      %v1126 = vpack.c.bf16 %v1041, %v1040
      %v1127 = vpack.c.bf16 %v1073, %v1072
      %v1128 = vpack.c.bf16 %v1013, %v1012
      %v1129 = vpack.c.bf16 %v667, %v665
      %v1130 = vpack.c.bf16 %v1043, %v1042
      %v1131 = vpack.c.bf16 %v1075, %v1074
      %v1132 = vpack.c.bf16 %v1015, %v1014
      %v1133 = vpack.c.bf16 %v672, %v670
      %v1134 = vpack.c.bf16 %v1045, %v1044
      %v1135 = vpack.c.bf16 %v1077, %v1076
      %v1136 = vpack.c.bf16 %v1017, %v1016
      %v1137 = vpack.c.bf16 %v677, %v675
      %v1138 = vpack.c.bf16 %v1047, %v1046
      %v1139 = vpack.c.bf16 %v1079, %v1078
      %v1140 = vpack.c.bf16 %v1019, %v1018
      %v1141 = vpack.c.bf16 %v682, %v680
      %v1142 = vpack.c.bf16 %v1049, %v1048
      %v1143 = vpack.c.bf16 %v1081, %v1080
      %v1144 = vpack.c.bf16 %v1021, %v1020
      %v1145 = vpack.c.bf16 %v687, %v685
      %v1146 = vpack.c.bf16 %v1051, %v1050
      %v1147 = vpack.c.bf16 %v1083, %v1082
      %v1148 = vpack.c.bf16 %v1023, %v1022
      %v1149 = vpack.c.bf16 %v692, %v690
      %v1150 = vpack.c.bf16 %v1053, %v1052
      %v1151 = vpack.c.bf16 %v1085, %v1084
      %v1152 = vpack.c.bf16 %v1089, %v1088
      %v1153 = vpack.c.bf16 %v865, %v863
      %v1154 = vpack.c.bf16 %v1055, %v1054
      %v1155 = vpack.c.bf16 %v1087, %v1086
      %v1156 = vpack.c.bf16 %v1091, %v1090
      %v1157 = vpack.c.bf16 %v986, %v984
      %v1159 = vlaneseq
      %v1160 = vshrl.u32 %v1159, 7
      %v1161 = vsub.s32 0, %v1160
      %v1162 = vrot.slane %v386, %v1161
      %v1236 = vunpack.c.l.b16 %v314
      %v1237 = vunpack.c.l.b16 %v315
      %v1238 = vunpack.c.l.b16 %v316
      %v1239 = vunpack.c.l.b16 %v317
      %v1240 = vunpack.c.l.b16 %v318
      %v1241 = vunpack.c.l.b16 %v319
      %v1242 = vunpack.c.l.b16 %v320
      %v1243 = vunpack.c.l.b16 %v321
      %v1244 = vunpack.c.l.b16 %v322
      %v1245 = vunpack.c.l.b16 %v323
      %v1246 = vunpack.c.l.b16 %v324
      %v1247 = vunpack.c.l.b16 %v325
      %v1248 = vunpack.c.l.b16 %v326
      %v1249 = vunpack.c.l.b16 %v327
      %v1250 = vunpack.c.l.b16 %v328
      %v1251 = vunpack.c.l.b16 %v329
      %v1252 = vunpack.c.l.b16 %v330
      %v1253 = vunpack.c.l.b16 %v331
      %v1254 = vunpack.c.l.b16 %v332
      %v1255 = vunpack.c.l.b16 %v333
      %v1256 = vunpack.c.l.b16 %v334
      %v1257 = vunpack.c.l.b16 %v335
      %v1258 = vunpack.c.l.b16 %v336
      %v1259 = vunpack.c.l.b16 %v337
      %v1260 = vunpack.c.l.b16 %v338
      %v1261 = vunpack.c.l.b16 %v339
      %v1262 = vunpack.c.l.b16 %v340
      %v1263 = vunpack.c.l.b16 %v341
      %v1264 = vunpack.c.l.b16 %v342
      %v1265 = vunpack.c.l.b16 %v343
      %v1266 = vunpack.c.l.b16 %v344
      %v1267 = vunpack.c.l.b16 %v345
      %v1268 = vunpack.c.l.b16 %v346
      %v1269 = vunpack.c.l.b16 %v347
      %v1270 = vunpack.c.l.b16 %v348
      %v1271 = vunpack.c.l.b16 %v349
      %v1272 = vunpack.c.l.b16 %v350
      %v1273 = vunpack.c.l.b16 %v351
      %v1274 = vunpack.c.l.b16 %v352
      %v1275 = vunpack.c.l.b16 %v353
      %v1276 = vunpack.c.l.b16 %v354
      %v1277 = vunpack.c.l.b16 %v355
      %v1278 = vunpack.c.l.b16 %v356
      %v1279 = vunpack.c.l.b16 %v357
      %v1280 = vunpack.c.l.b16 %v358
      %v1281 = vunpack.c.l.b16 %v359
      %v1282 = vunpack.c.l.b16 %v360
      %v1283 = vunpack.c.l.b16 %v361
      %v1284 = vunpack.c.l.b16 %v362
      %v1285 = vunpack.c.l.b16 %v363
      %v1286 = vunpack.c.l.b16 %v364
      %v1287 = vunpack.c.l.b16 %v365
      %v1288 = vunpack.c.l.b16 %v366
      %v1289 = vunpack.c.l.b16 %v367
      %v1290 = vunpack.c.l.b16 %v368
      %v1291 = vunpack.c.l.b16 %v369
      %v1292 = vunpack.c.l.b16 %v370
      %v1293 = vunpack.c.l.b16 %v371
      %v1294 = vunpack.c.l.b16 %v372
      %v1295 = vunpack.c.l.b16 %v373
      %v1296 = vunpack.c.l.b16 %v374
      %v1297 = vunpack.c.l.b16 %v375
      %v1298 = vunpack.c.l.b16 %v376
      %v1299 = vunpack.c.l.b16 %v377
      %v1300 = vunpack.c.l.b16 %v378
      %v1301 = vunpack.c.l.b16 %v379
      %v1302 = vunpack.c.l.b16 %v380
      %v1303 = vunpack.c.l.b16 %v381
      %v1304 = vunpack.c.l.b16 %v382
      %v1305 = vunpack.c.l.b16 %v383
      %v1306 = vunpack.c.l.b16 %v384
      %v1307 = vunpack.c.l.b16 %v385
      %v1308 = vpack.c.b16 %v1237, %v1236
      %v1309 = vpack.c.b16 %v1239, %v1238
      %v1310 = vpack.c.b16 %v1241, %v1240
      %v1311 = vpack.c.b16 %v1243, %v1242
      %v1312 = vpack.c.b16 %v1245, %v1244
      %v1313 = vpack.c.b16 %v1247, %v1246
      %v1314 = vpack.c.b16 %v1249, %v1248
      %v1315 = vpack.c.b16 %v1251, %v1250
      %v1316 = vpack.c.b16 %v1253, %v1252
      %v1317 = vpack.c.b16 %v1255, %v1254
      %v1318 = vpack.c.b16 %v1257, %v1256
      %v1319 = vpack.c.b16 %v1259, %v1258
      %v1320 = vpack.c.b16 %v1261, %v1260
      %v1321 = vpack.c.b16 %v1263, %v1262
      %v1322 = vpack.c.b16 %v1265, %v1264
      %v1323 = vpack.c.b16 %v1267, %v1266
      %v1324 = vpack.c.b16 %v1269, %v1268
      %v1325 = vpack.c.b16 %v1271, %v1270
      %v1326 = vpack.c.b16 %v1273, %v1272
      %v1327 = vpack.c.b16 %v1275, %v1274
      %v1328 = vpack.c.b16 %v1277, %v1276
      %v1329 = vpack.c.b16 %v1279, %v1278
      %v1330 = vpack.c.b16 %v1281, %v1280
      %v1331 = vpack.c.b16 %v1283, %v1282
      %v1332 = vpack.c.b16 %v1285, %v1284
      %v1333 = vpack.c.b16 %v1287, %v1286
      %v1334 = vpack.c.b16 %v1289, %v1288
      %v1335 = vpack.c.b16 %v1291, %v1290
      %v1336 = vpack.c.b16 %v1293, %v1292
      %v1337 = vpack.c.b16 %v1295, %v1294
      %v1338 = vpack.c.b16 %v1297, %v1296
      %v1339 = vpack.c.b16 %v1299, %v1298
      %v1340 = vpack.c.b16 %v1301, %v1300
      %v1341 = vpack.c.b16 %v1303, %v1302
      %v1342 = vpack.c.b16 %v1305, %v1304
      %v1343 = vpack.c.b16 %v1307, %v1306
      %v1381 = vsel %vm991, %v1096, 0
      %v1384 = vsel %vm991, %v1101, 0
      %v1387 = vsel %vm991, %v1105, 0
      %v1390 = vsel %vm991, %v1109, 0
      %v1393 = vsel %vm991, %v1113, 0
      %v1396 = vsel %vm991, %v1117, 0
      %v1399 = vsel %vm991, %v1121, 0
      %v1402 = vsel %vm991, %v1125, 0
      %v1405 = vsel %vm991, %v1129, 0
      %v1408 = vsel %vm991, %v1133, 0
      %v1411 = vsel %vm991, %v1137, 0
      %v1414 = vsel %vm991, %v1141, 0
      %v1417 = vsel %vm991, %v1145, 0
      %v1420 = vsel %vm991, %v1149, 0
      %v1423 = vsel %vm991, %v1153, 0
      %v1426 = vsel %vm991, %v1157, 0
      %1428 = vmatprep.subr.bf16.mxu0 0
      %1429 = vmatpush1.bf16.msra.mxu0 %v1308
      %1430 = vmatprep.subr.bf16.mxu0 0
      %1431 = vmatpush1.bf16.msra.mxu0 %v1309
      %1432 = vmatprep.subr.bf16.mxu0 0
      %1433 = vmatpush1.bf16.msra.mxu0 %v1310
      %1434 = vmatprep.subr.bf16.mxu0 0
      %1435 = vmatpush1.bf16.msra.mxu0 %v1311
      %1436 = vmatprep.subr.bf16.mxu0 0
      %1437 = vmatpush1.bf16.msra.mxu0 %v1312
      %1438 = vmatprep.subr.bf16.mxu0 0
      %1439 = vmatpush1.bf16.msra.mxu0 %v1313
      %1440 = vmatprep.subr.bf16.mxu0 0
      %1441 = vmatpush1.bf16.msra.mxu0 %v1314
      %1442 = vmatprep.subr.bf16.mxu0 0
      %1443 = vmatpush1.bf16.msra.mxu0 %v1315
      %1444 = vmatprep.subr.bf16.mxu0 0
      %1445 = vmatpush1.bf16.msra.mxu0 %v1316
      %1446 = vmatprep.subr.bf16.mxu0 0
      %1447 = vmatpush1.bf16.msra.mxu0 %v1317
      %1448 = vmatprep.subr.bf16.mxu0 0
      %1449 = vmatpush1.bf16.msra.mxu0 %v1318
      %1450 = vmatprep.subr.bf16.mxu0 0
      %1451 = vmatpush1.bf16.msra.mxu0 %v1319
      %1452 = vmatprep.subr.bf16.mxu0 0
      %1453 = vmatpush1.bf16.msra.mxu0 %v1320
      %1454 = vmatprep.subr.bf16.mxu0 0
      %1455 = vmatpush1.bf16.msra.mxu0 %v1321
      %1456 = vmatprep.subr.bf16.mxu0 0
      %1457 = vmatpush1.bf16.msra.mxu0 %v1322
      %1458 = vmatprep.subr.bf16.mxu0 0
      %1459 = vmatpush1.bf16.msra.mxu0 %v1323
      %1460 = vmatprep.mubr.bf16.mxu0 %v1093
      %1461 = vmatmul.mubr.bf16.gmra.mrb[0].mxu0 %v1092
      %v1462 = vpop.f32.mrb[0].mxu0
      %v1463 = vadd.f32 %v1162, %v1462
      %v1464 = vpop.f32.mrb[0].mxu0
      %v1465 = vpop.f32.mrb[0].mxu0
      %v1466 = vadd.f32 %v1162, %v1465
      %v1467 = vpop.f32.mrb[0].mxu0
      %1468 = vmatprep.mubr.bf16.mxu0 %v1098
      %1469 = vmatmul.mubr.bf16.gmra.mrb[0].mxu0 %v1097
      %v1470 = vpop.f32.mrb[0].mxu0
      %v1471 = vadd.f32 %v1162, %v1470
      %v1472 = vpop.f32.mrb[0].mxu0
      %v1473 = vpop.f32.mrb[0].mxu0
      %v1474 = vadd.f32 %v1162, %v1473
      %v1475 = vpop.f32.mrb[0].mxu0
      %1476 = vmatprep.mubr.bf16.mxu0 %v1102
      %1477 = vmatmul.mubr.bf16.gmra.mrb[0].mxu0 %v1095
      %v1478 = vpop.f32.mrb[0].mxu0
      %v1479 = vadd.f32 %v1162, %v1478
      %v1480 = vpop.f32.mrb[0].mxu0
      %v1481 = vpop.f32.mrb[0].mxu0
      %v1482 = vadd.f32 %v1162, %v1481
      %v1483 = vpop.f32.mrb[0].mxu0
      %1484 = vmatprep.mubr.bf16.mxu0 %v1106
      %1485 = vmatmul.mubr.bf16.gmra.mrb[0].mxu0 %v1100
      %v1486 = vpop.f32.mrb[0].mxu0
      %v1487 = vadd.f32 %v1162, %v1486
      %v1488 = vpop.f32.mrb[0].mxu0
      %v1489 = vpop.f32.mrb[0].mxu0
      %v1490 = vadd.f32 %v1162, %v1489
      %v1491 = vpop.f32.mrb[0].mxu0
      %1492 = vmatprep.mubr.bf16.mxu0 %v1110
      %1493 = vmatmul.mubr.bf16.gmra.mrb[0].mxu0 %v1104
      %v1494 = vpop.f32.mrb[0].mxu0
      %v1495 = vadd.f32 %v1162, %v1494
      %v1496 = vpop.f32.mrb[0].mxu0
      %v1497 = vpop.f32.mrb[0].mxu0
      %v1498 = vadd.f32 %v1162, %v1497
      %v1499 = vpop.f32.mrb[0].mxu0
      %1500 = vmatprep.mubr.bf16.mxu0 %v1114
      %1501 = vmatmul.mubr.bf16.gmra.mrb[0].mxu0 %v1108
      %v1502 = vpop.f32.mrb[0].mxu0
      %v1503 = vadd.f32 %v1162, %v1502
      %v1504 = vpop.f32.mrb[0].mxu0
      %v1505 = vpop.f32.mrb[0].mxu0
      %v1506 = vadd.f32 %v1162, %v1505
      %v1507 = vpop.f32.mrb[0].mxu0
      %1508 = vmatprep.mubr.bf16.mxu0 %v1118
      %1509 = vmatmul.mubr.bf16.gmra.mrb[0].mxu0 %v1112
      %v1510 = vpop.f32.mrb[0].mxu0
      %v1511 = vadd.f32 %v1162, %v1510
      %v1512 = vpop.f32.mrb[0].mxu0
      %v1513 = vpop.f32.mrb[0].mxu0
      %v1514 = vadd.f32 %v1162, %v1513
      %v1515 = vpop.f32.mrb[0].mxu0
      %1516 = vmatprep.mubr.bf16.mxu0 %v1122
      %1517 = vmatmul.mubr.bf16.gmra.mrb[0].mxu0 %v1116
      %v1518 = vpop.f32.mrb[0].mxu0
      %v1519 = vadd.f32 %v1162, %v1518
      %v1520 = vpop.f32.mrb[0].mxu0
      %v1521 = vpop.f32.mrb[0].mxu0
      %v1522 = vadd.f32 %v1162, %v1521
      %v1523 = vpop.f32.mrb[0].mxu0
      %1524 = vmatprep.mubr.bf16.mxu0 %v1126
      %1525 = vmatmul.mubr.bf16.gmra.mrb[0].mxu0 %v1120
      %v1526 = vpop.f32.mrb[0].mxu0
      %v1527 = vadd.f32 %v1162, %v1526
      %v1528 = vpop.f32.mrb[0].mxu0
      %v1529 = vpop.f32.mrb[0].mxu0
      %v1530 = vadd.f32 %v1162, %v1529
      %v1531 = vpop.f32.mrb[0].mxu0
      %1532 = vmatprep.mubr.bf16.mxu0 %v1130
      %1533 = vmatmul.mubr.bf16.gmra.mrb[0].mxu0 %v1124
      %v1534 = vpop.f32.mrb[0].mxu0
      %v1535 = vadd.f32 %v1162, %v1534
      %v1536 = vpop.f32.mrb[0].mxu0
      %v1537 = vpop.f32.mrb[0].mxu0
      %v1538 = vadd.f32 %v1162, %v1537
      %v1539 = vpop.f32.mrb[0].mxu0
      %1540 = vmatprep.mubr.bf16.mxu0 %v1134
      %1541 = vmatmul.mubr.bf16.gmra.mrb[0].mxu0 %v1128
      %v1542 = vpop.f32.mrb[0].mxu0
      %v1543 = vadd.f32 %v1162, %v1542
      %v1544 = vpop.f32.mrb[0].mxu0
      %v1545 = vpop.f32.mrb[0].mxu0
      %v1546 = vadd.f32 %v1162, %v1545
      %v1547 = vpop.f32.mrb[0].mxu0
      %1548 = vmatprep.mubr.bf16.mxu0 %v1138
      %1549 = vmatmul.mubr.bf16.gmra.mrb[0].mxu0 %v1132
      %v1550 = vpop.f32.mrb[0].mxu0
      %v1551 = vadd.f32 %v1162, %v1550
      %v1552 = vpop.f32.mrb[0].mxu0
      %v1553 = vpop.f32.mrb[0].mxu0
      %v1554 = vadd.f32 %v1162, %v1553
      %v1555 = vpop.f32.mrb[0].mxu0
      %1556 = vmatprep.mubr.bf16.mxu0 %v1142
      %1557 = vmatmul.mubr.bf16.gmra.mrb[0].mxu0 %v1136
      %v1558 = vpop.f32.mrb[0].mxu0
      %v1559 = vadd.f32 %v1162, %v1558
      %v1560 = vpop.f32.mrb[0].mxu0
      %v1561 = vpop.f32.mrb[0].mxu0
      %v1562 = vadd.f32 %v1162, %v1561
      %v1563 = vpop.f32.mrb[0].mxu0
      %1564 = vmatprep.mubr.bf16.mxu0 %v1146
      %1565 = vmatmul.mubr.bf16.gmra.mrb[0].mxu0 %v1140
      %v1566 = vpop.f32.mrb[0].mxu0
      %v1567 = vadd.f32 %v1162, %v1566
      %v1568 = vpop.f32.mrb[0].mxu0
      %v1569 = vpop.f32.mrb[0].mxu0
      %v1570 = vadd.f32 %v1162, %v1569
      %v1571 = vpop.f32.mrb[0].mxu0
      %1572 = vmatprep.mubr.bf16.mxu0 %v1150
      %1573 = vmatmul.mubr.bf16.gmra.mrb[0].mxu0 %v1144
      %v1574 = vpop.f32.mrb[0].mxu0
      %v1575 = vadd.f32 %v1162, %v1574
      %v1576 = vpop.f32.mrb[0].mxu0
      %v1577 = vpop.f32.mrb[0].mxu0
      %v1578 = vadd.f32 %v1162, %v1577
      %v1579 = vpop.f32.mrb[0].mxu0
      %1580 = vmatprep.mubr.bf16.mxu0 %v1154
      %1581 = vmatmul.mubr.bf16.gmra.mrb[0].mxu0 %v1148
      %v1582 = vpop.f32.mrb[0].mxu0
      %v1583 = vadd.f32 %v1162, %v1582
      %v1584 = vpop.f32.mrb[0].mxu0
      %v1585 = vpop.f32.mrb[0].mxu0
      %v1586 = vadd.f32 %v1162, %v1585
      %v1587 = vpop.f32.mrb[0].mxu0
      %1588 = vdwg.mxu0
      %1589 = vmatprep.subr.bf16.mxu0 0
      %1590 = vmatpush1.bf16.msra.mxu0 %v1324
      %1591 = vmatprep.subr.bf16.mxu0 0
      %1592 = vmatpush1.bf16.msra.mxu0 %v1325
      %1593 = vmatprep.subr.bf16.mxu0 0
      %1594 = vmatpush1.bf16.msra.mxu0 %v1326
      %1595 = vmatprep.subr.bf16.mxu0 0
      %1596 = vmatpush1.bf16.msra.mxu0 %v1327
      %1597 = vmatprep.subr.bf16.mxu0 0
      %1598 = vmatpush1.bf16.msra.mxu0 %v1328
      %1599 = vmatprep.subr.bf16.mxu0 0
      %1600 = vmatpush1.bf16.msra.mxu0 %v1329
      %1601 = vmatprep.subr.bf16.mxu0 0
      %1602 = vmatpush1.bf16.msra.mxu0 %v1330
      %1603 = vmatprep.subr.bf16.mxu0 0
      %1604 = vmatpush1.bf16.msra.mxu0 %v1331
      %1605 = vmatprep.subr.bf16.mxu0 0
      %1606 = vmatpush1.bf16.msra.mxu0 %v1332
      %1607 = vmatprep.subr.bf16.mxu0 0
      %1608 = vmatpush1.bf16.msra.mxu0 %v1333
      %1609 = vmatprep.subr.bf16.mxu0 0
      %1610 = vmatpush1.bf16.msra.mxu0 %v1334
      %1611 = vmatprep.subr.bf16.mxu0 0
      %1612 = vmatpush1.bf16.msra.mxu0 %v1335
      %1613 = vmatprep.subr.bf16.mxu0 0
      %1614 = vmatpush1.bf16.msra.mxu0 %v1336
      %1615 = vmatprep.subr.bf16.mxu0 0
      %1616 = vmatpush1.bf16.msra.mxu0 %v1337
      %1617 = vmatprep.subr.bf16.mxu0 0
      %1618 = vmatpush1.bf16.msra.mxu0 %v1338
      %1619 = vmatprep.subr.bf16.mxu0 0
      %1620 = vmatpush1.bf16.msra.mxu0 %v1339
      %1621 = vmatprep.mubr.bf16.mxu0 %v1095
      %1622 = vmatmul.mubr.bf16.gmra.mrb[0].mxu0 %v1094
      %v1623 = vpop.f32.mrb[0].mxu0
      %v1624 = vadd.f32 %v1463, %v1623
      %v1625 = vpop.f32.mrb[0].mxu0
      %v1626 = vpop.f32.mrb[0].mxu0
      %v1627 = vadd.f32 %v1466, %v1626
      %v1628 = vpop.f32.mrb[0].mxu0
      %1629 = vmatprep.mubr.bf16.mxu0 %v1100
      %1630 = vmatmul.mubr.bf16.gmra.mrb[0].mxu0 %v1099
      %v1631 = vpop.f32.mrb[0].mxu0
      %v1632 = vadd.f32 %v1471, %v1631
      %v1633 = vpop.f32.mrb[0].mxu0
      %v1634 = vpop.f32.mrb[0].mxu0
      %v1635 = vadd.f32 %v1474, %v1634
      %v1636 = vpop.f32.mrb[0].mxu0
      %1637 = vmatprep.mubr.bf16.mxu0 %v1104
      %1638 = vmatmul.mubr.bf16.gmra.mrb[0].mxu0 %v1103
      %v1639 = vpop.f32.mrb[0].mxu0
      %v1640 = vadd.f32 %v1479, %v1639
      %v1641 = vpop.f32.mrb[0].mxu0
      %v1642 = vpop.f32.mrb[0].mxu0
      %v1643 = vadd.f32 %v1482, %v1642
      %v1644 = vpop.f32.mrb[0].mxu0
      %1645 = vmatprep.mubr.bf16.mxu0 %v1108
      %1646 = vmatmul.mubr.bf16.gmra.mrb[0].mxu0 %v1107
      %v1647 = vpop.f32.mrb[0].mxu0
      %v1648 = vadd.f32 %v1487, %v1647
      %v1649 = vpop.f32.mrb[0].mxu0
      %v1650 = vpop.f32.mrb[0].mxu0
      %v1651 = vadd.f32 %v1490, %v1650
      %v1652 = vpop.f32.mrb[0].mxu0
      %1653 = vmatprep.mubr.bf16.mxu0 %v1112
      %1654 = vmatmul.mubr.bf16.gmra.mrb[0].mxu0 %v1111
      %v1655 = vpop.f32.mrb[0].mxu0
      %v1656 = vadd.f32 %v1495, %v1655
      %v1657 = vpop.f32.mrb[0].mxu0
      %v1658 = vpop.f32.mrb[0].mxu0
      %v1659 = vadd.f32 %v1498, %v1658
      %v1660 = vpop.f32.mrb[0].mxu0
      %1661 = vmatprep.mubr.bf16.mxu0 %v1116
      %1662 = vmatmul.mubr.bf16.gmra.mrb[0].mxu0 %v1115
      %v1663 = vpop.f32.mrb[0].mxu0
      %v1664 = vadd.f32 %v1503, %v1663
      %v1665 = vpop.f32.mrb[0].mxu0
      %v1666 = vpop.f32.mrb[0].mxu0
      %v1667 = vadd.f32 %v1506, %v1666
      %v1668 = vpop.f32.mrb[0].mxu0
      %1669 = vmatprep.mubr.bf16.mxu0 %v1120
      %1670 = vmatmul.mubr.bf16.gmra.mrb[0].mxu0 %v1119
      %v1671 = vpop.f32.mrb[0].mxu0
      %v1672 = vadd.f32 %v1511, %v1671
      %v1673 = vpop.f32.mrb[0].mxu0
      %v1674 = vpop.f32.mrb[0].mxu0
      %v1675 = vadd.f32 %v1514, %v1674
      %v1676 = vpop.f32.mrb[0].mxu0
      %1677 = vmatprep.mubr.bf16.mxu0 %v1124
      %1678 = vmatmul.mubr.bf16.gmra.mrb[0].mxu0 %v1123
      %v1679 = vpop.f32.mrb[0].mxu0
      %v1680 = vadd.f32 %v1519, %v1679
      %v1681 = vpop.f32.mrb[0].mxu0
      %v1682 = vpop.f32.mrb[0].mxu0
      %v1683 = vadd.f32 %v1522, %v1682
      %v1684 = vpop.f32.mrb[0].mxu0
      %1685 = vmatprep.mubr.bf16.mxu0 %v1128
      %1686 = vmatmul.mubr.bf16.gmra.mrb[0].mxu0 %v1127
      %v1687 = vpop.f32.mrb[0].mxu0
      %v1688 = vadd.f32 %v1527, %v1687
      %v1689 = vpop.f32.mrb[0].mxu0
      %v1690 = vpop.f32.mrb[0].mxu0
      %v1691 = vadd.f32 %v1530, %v1690
      %v1692 = vpop.f32.mrb[0].mxu0
      %1693 = vmatprep.mubr.bf16.mxu0 %v1132
      %1694 = vmatmul.mubr.bf16.gmra.mrb[0].mxu0 %v1131
      %v1695 = vpop.f32.mrb[0].mxu0
      %v1696 = vadd.f32 %v1535, %v1695
      %v1697 = vpop.f32.mrb[0].mxu0
      %v1698 = vpop.f32.mrb[0].mxu0
      %v1699 = vadd.f32 %v1538, %v1698
      %v1700 = vpop.f32.mrb[0].mxu0
      %1701 = vmatprep.mubr.bf16.mxu0 %v1136
      %1702 = vmatmul.mubr.bf16.gmra.mrb[0].mxu0 %v1135
      %v1703 = vpop.f32.mrb[0].mxu0
      %v1704 = vadd.f32 %v1543, %v1703
      %v1705 = vpop.f32.mrb[0].mxu0
      %v1706 = vpop.f32.mrb[0].mxu0
      %v1707 = vadd.f32 %v1546, %v1706
      %v1708 = vpop.f32.mrb[0].mxu0
      %1709 = vmatprep.mubr.bf16.mxu0 %v1140
      %1710 = vmatmul.mubr.bf16.gmra.mrb[0].mxu0 %v1139
      %v1711 = vpop.f32.mrb[0].mxu0
      %v1712 = vadd.f32 %v1551, %v1711
      %v1713 = vpop.f32.mrb[0].mxu0
      %v1714 = vpop.f32.mrb[0].mxu0
      %v1715 = vadd.f32 %v1554, %v1714
      %v1716 = vpop.f32.mrb[0].mxu0
      %1717 = vmatprep.mubr.bf16.mxu0 %v1144
      %1718 = vmatmul.mubr.bf16.gmra.mrb[0].mxu0 %v1143
      %v1719 = vpop.f32.mrb[0].mxu0
      %v1720 = vadd.f32 %v1559, %v1719
      %v1721 = vpop.f32.mrb[0].mxu0
      %v1722 = vpop.f32.mrb[0].mxu0
      %v1723 = vadd.f32 %v1562, %v1722
      %v1724 = vpop.f32.mrb[0].mxu0
      %1725 = vmatprep.mubr.bf16.mxu0 %v1148
      %1726 = vmatmul.mubr.bf16.gmra.mrb[0].mxu0 %v1147
      %v1727 = vpop.f32.mrb[0].mxu0
      %v1728 = vadd.f32 %v1567, %v1727
      %v1729 = vpop.f32.mrb[0].mxu0
      %v1730 = vpop.f32.mrb[0].mxu0
      %v1731 = vadd.f32 %v1570, %v1730
      %v1732 = vpop.f32.mrb[0].mxu0
      %1733 = vmatprep.mubr.bf16.mxu0 %v1152
      %1734 = vmatmul.mubr.bf16.gmra.mrb[0].mxu0 %v1151
      %v1735 = vpop.f32.mrb[0].mxu0
      %v1736 = vadd.f32 %v1575, %v1735
      %v1737 = vpop.f32.mrb[0].mxu0
      %v1738 = vpop.f32.mrb[0].mxu0
      %v1739 = vadd.f32 %v1578, %v1738
      %v1740 = vpop.f32.mrb[0].mxu0
      %1741 = vmatprep.mubr.bf16.mxu0 %v1156
      %1742 = vmatmul.mubr.bf16.gmra.mrb[0].mxu0 %v1155
      %v1743 = vpop.f32.mrb[0].mxu0
      %v1744 = vadd.f32 %v1583, %v1743
      %v1745 = vpop.f32.mrb[0].mxu0
      %v1746 = vpop.f32.mrb[0].mxu0
      %v1747 = vadd.f32 %v1586, %v1746
      %v1748 = vpop.f32.mrb[0].mxu0
      %1749 = vdwg.mxu0
      %1750 = vmatprep.subr.bf16.mxu0 0
      %1751 = vmatpush1.bf16.msra.mxu0 %v1340
      %1752 = vmatprep.subr.bf16.mxu0 0
      %1753 = vmatpush1.bf16.msra.mxu0 %v1341
      %1754 = vmatprep.subr.bf16.mxu0 0
      %1755 = vmatpush1.bf16.msra.mxu0 %v1342
      %1756 = vmatprep.subr.bf16.mxu0 0
      %1757 = vmatpush1.bf16.msra.mxu0 %v1343
      %1758 = vmatprep.subr.bf16.mxu0 0
      %1759 = vmatpush1.bf16.msra.mxu0 0
      %1760 = vmatprep.subr.bf16.mxu0 0
      %1761 = vmatpush1.bf16.msra.mxu0 0
      %1762 = vmatprep.subr.bf16.mxu0 0
      %1763 = vmatpush1.bf16.msra.mxu0 0
      %1764 = vmatprep.subr.bf16.mxu0 0
      %1765 = vmatpush1.bf16.msra.mxu0 0
      %1766 = vmatprep.subr.bf16.mxu0 0
      %1767 = vmatpush1.bf16.msra.mxu0 0
      %1768 = vmatprep.subr.bf16.mxu0 0
      %1769 = vmatpush1.bf16.msra.mxu0 0
      %1770 = vmatprep.subr.bf16.mxu0 0
      %1771 = vmatpush1.bf16.msra.mxu0 0
      %1772 = vmatprep.subr.bf16.mxu0 0
      %1773 = vmatpush1.bf16.msra.mxu0 0
      %1774 = vmatprep.subr.bf16.mxu0 0
      %1775 = vmatpush1.bf16.msra.mxu0 0
      %1776 = vmatprep.subr.bf16.mxu0 0
      %1777 = vmatpush1.bf16.msra.mxu0 0
      %1778 = vmatprep.subr.bf16.mxu0 0
      %1779 = vmatpush1.bf16.msra.mxu0 0
      %1780 = vmatprep.subr.bf16.mxu0 0
      %1781 = vmatpush1.bf16.msra.mxu0 0
      %1782 = vmatprep.mubr.bf16.mxu0 0
      %1783 = vmatmul.mubr.bf16.gmra.mrb[0].mxu0 %v1381
      %v1784 = vpop.f32.mrb[0].mxu0
      %v1785 = vadd.f32 %v1624, %v1784
      %v1786 = vpop.f32.mrb[0].mxu0
      %v1787 = vpop.f32.mrb[0].mxu0
      %v1788 = vadd.f32 %v1627, %v1787
      %v1789 = vpop.f32.mrb[0].mxu0
      %1790 = vmatprep.mubr.bf16.mxu0 0
      %1791 = vmatmul.mubr.bf16.gmra.mrb[0].mxu0 %v1384
      %v1792 = vpop.f32.mrb[0].mxu0
      %v1793 = vadd.f32 %v1632, %v1792
      %v1794 = vpop.f32.mrb[0].mxu0
      %v1795 = vpop.f32.mrb[0].mxu0
      %v1796 = vadd.f32 %v1635, %v1795
      %v1797 = vpop.f32.mrb[0].mxu0
      %1798 = vmatprep.mubr.bf16.mxu0 0
      %1799 = vmatmul.mubr.bf16.gmra.mrb[0].mxu0 %v1387
      %v1800 = vpop.f32.mrb[0].mxu0
      %v1801 = vadd.f32 %v1640, %v1800
      %v1802 = vpop.f32.mrb[0].mxu0
      %v1803 = vpop.f32.mrb[0].mxu0
      %v1804 = vadd.f32 %v1643, %v1803
      %v1805 = vpop.f32.mrb[0].mxu0
      %1806 = vmatprep.mubr.bf16.mxu0 0
      %1807 = vmatmul.mubr.bf16.gmra.mrb[0].mxu0 %v1390
      %v1808 = vpop.f32.mrb[0].mxu0
      %v1809 = vadd.f32 %v1648, %v1808
      %v1810 = vpop.f32.mrb[0].mxu0
      %v1811 = vpop.f32.mrb[0].mxu0
      %v1812 = vadd.f32 %v1651, %v1811
      %v1813 = vpop.f32.mrb[0].mxu0
      %1814 = vmatprep.mubr.bf16.mxu0 0
      %1815 = vmatmul.mubr.bf16.gmra.mrb[0].mxu0 %v1393
      %v1816 = vpop.f32.mrb[0].mxu0
      %v1817 = vadd.f32 %v1656, %v1816
      %v1818 = vpop.f32.mrb[0].mxu0
      %v1819 = vpop.f32.mrb[0].mxu0
      %v1820 = vadd.f32 %v1659, %v1819
      %v1821 = vpop.f32.mrb[0].mxu0
      %1822 = vmatprep.mubr.bf16.mxu0 0
      %1823 = vmatmul.mubr.bf16.gmra.mrb[0].mxu0 %v1396
      %v1824 = vpop.f32.mrb[0].mxu0
      %v1825 = vadd.f32 %v1664, %v1824
      %v1826 = vpop.f32.mrb[0].mxu0
      %v1827 = vpop.f32.mrb[0].mxu0
      %v1828 = vadd.f32 %v1667, %v1827
      %v1829 = vpop.f32.mrb[0].mxu0
      %1830 = vmatprep.mubr.bf16.mxu0 0
      %1831 = vmatmul.mubr.bf16.gmra.mrb[0].mxu0 %v1399
      %v1832 = vpop.f32.mrb[0].mxu0
      %v1833 = vadd.f32 %v1672, %v1832
      %v1834 = vpop.f32.mrb[0].mxu0
      %v1835 = vpop.f32.mrb[0].mxu0
      %v1836 = vadd.f32 %v1675, %v1835
      %v1837 = vpop.f32.mrb[0].mxu0
      %1838 = vmatprep.mubr.bf16.mxu0 0
      %1839 = vmatmul.mubr.bf16.gmra.mrb[0].mxu0 %v1402
      %v1840 = vpop.f32.mrb[0].mxu0
      %v1841 = vadd.f32 %v1680, %v1840
      %v1842 = vpop.f32.mrb[0].mxu0
      %v1843 = vpop.f32.mrb[0].mxu0
      %v1844 = vadd.f32 %v1683, %v1843
      %v1845 = vpop.f32.mrb[0].mxu0
      %1846 = vmatprep.mubr.bf16.mxu0 0
      %1847 = vmatmul.mubr.bf16.gmra.mrb[0].mxu0 %v1405
      %v1848 = vpop.f32.mrb[0].mxu0
      %v1849 = vadd.f32 %v1688, %v1848
      %v1850 = vpop.f32.mrb[0].mxu0
      %v1851 = vpop.f32.mrb[0].mxu0
      %v1852 = vadd.f32 %v1691, %v1851
      %v1853 = vpop.f32.mrb[0].mxu0
      %1854 = vmatprep.mubr.bf16.mxu0 0
      %1855 = vmatmul.mubr.bf16.gmra.mrb[0].mxu0 %v1408
      %v1856 = vpop.f32.mrb[0].mxu0
      %v1857 = vadd.f32 %v1696, %v1856
      %v1858 = vpop.f32.mrb[0].mxu0
      %v1859 = vpop.f32.mrb[0].mxu0
      %v1860 = vadd.f32 %v1699, %v1859
      %v1861 = vpop.f32.mrb[0].mxu0
      %1862 = vmatprep.mubr.bf16.mxu0 0
      %1863 = vmatmul.mubr.bf16.gmra.mrb[0].mxu0 %v1411
      %v1864 = vpop.f32.mrb[0].mxu0
      %v1865 = vadd.f32 %v1704, %v1864
      %v1866 = vpop.f32.mrb[0].mxu0
      %v1867 = vpop.f32.mrb[0].mxu0
      %v1868 = vadd.f32 %v1707, %v1867
      %v1869 = vpop.f32.mrb[0].mxu0
      %1870 = vmatprep.mubr.bf16.mxu0 0
      %1871 = vmatmul.mubr.bf16.gmra.mrb[0].mxu0 %v1414
      %v1872 = vpop.f32.mrb[0].mxu0
      %v1873 = vadd.f32 %v1712, %v1872
      %v1874 = vpop.f32.mrb[0].mxu0
      %v1875 = vpop.f32.mrb[0].mxu0
      %v1876 = vadd.f32 %v1715, %v1875
      %v1877 = vpop.f32.mrb[0].mxu0
      %1878 = vmatprep.mubr.bf16.mxu0 0
      %1879 = vmatmul.mubr.bf16.gmra.mrb[0].mxu0 %v1417
      %v1880 = vpop.f32.mrb[0].mxu0
      %v1881 = vadd.f32 %v1720, %v1880
      %v1882 = vpop.f32.mrb[0].mxu0
      %v1883 = vpop.f32.mrb[0].mxu0
      %v1884 = vadd.f32 %v1723, %v1883
      %v1885 = vpop.f32.mrb[0].mxu0
      %1886 = vmatprep.mubr.bf16.mxu0 0
      %1887 = vmatmul.mubr.bf16.gmra.mrb[0].mxu0 %v1420
      %v1888 = vpop.f32.mrb[0].mxu0
      %v1889 = vadd.f32 %v1728, %v1888
      %v1890 = vpop.f32.mrb[0].mxu0
      %v1891 = vpop.f32.mrb[0].mxu0
      %v1892 = vadd.f32 %v1731, %v1891
      %v1893 = vpop.f32.mrb[0].mxu0
      %1894 = vmatprep.mubr.bf16.mxu0 0
      %1895 = vmatmul.mubr.bf16.gmra.mrb[0].mxu0 %v1423
      %v1896 = vpop.f32.mrb[0].mxu0
      %v1897 = vadd.f32 %v1736, %v1896
      %v1898 = vpop.f32.mrb[0].mxu0
      %v1899 = vpop.f32.mrb[0].mxu0
      %v1900 = vadd.f32 %v1739, %v1899
      %v1901 = vpop.f32.mrb[0].mxu0
      %1902 = vmatprep.mubr.bf16.mxu0 0
      %1903 = vmatmul.mubr.bf16.gmra.mrb[0].mxu0 %v1426
      %v1904 = vpop.f32.mrb[0].mxu0
      %v1905 = vadd.f32 %v1744, %v1904
      %v1906 = vpop.f32.mrb[0].mxu0
      %v1907 = vpop.f32.mrb[0].mxu0
      %v1908 = vadd.f32 %v1747, %v1907
      %v1909 = vpop.f32.mrb[0].mxu0
      %1910 = vdwg.mxu0
      %vm1911 = vcmp.ge.f32.partialorder %v1785, 0.0
      %vm1912 = vcmp.ge.f32.partialorder %v1788, 0.0
      %vm1913 = vcmp.ge.f32.partialorder %v1793, 0.0
      %vm1914 = vcmp.ge.f32.partialorder %v1796, 0.0
      %vm1915 = vcmp.ge.f32.partialorder %v1801, 0.0
      %vm1916 = vcmp.ge.f32.partialorder %v1804, 0.0
      %vm1917 = vcmp.ge.f32.partialorder %v1809, 0.0
      %vm1918 = vcmp.ge.f32.partialorder %v1812, 0.0
      %vm1919 = vcmp.ge.f32.partialorder %v1817, 0.0
      %vm1920 = vcmp.ge.f32.partialorder %v1820, 0.0
      %vm1921 = vcmp.ge.f32.partialorder %v1825, 0.0
      %vm1922 = vcmp.ge.f32.partialorder %v1828, 0.0
      %vm1923 = vcmp.ge.f32.partialorder %v1833, 0.0
      %vm1924 = vcmp.ge.f32.partialorder %v1836, 0.0
      %vm1925 = vcmp.ge.f32.partialorder %v1841, 0.0
      %vm1926 = vcmp.ge.f32.partialorder %v1844, 0.0
      %vm1927 = vcmp.ge.f32.partialorder %v1849, 0.0
      %vm1928 = vcmp.ge.f32.partialorder %v1852, 0.0
      %vm1929 = vcmp.ge.f32.partialorder %v1857, 0.0
      %vm1930 = vcmp.ge.f32.partialorder %v1860, 0.0
      %vm1931 = vcmp.ge.f32.partialorder %v1865, 0.0
      %vm1932 = vcmp.ge.f32.partialorder %v1868, 0.0
      %vm1933 = vcmp.ge.f32.partialorder %v1873, 0.0
      %vm1934 = vcmp.ge.f32.partialorder %v1876, 0.0
      %vm1935 = vcmp.ge.f32.partialorder %v1881, 0.0
      %vm1936 = vcmp.ge.f32.partialorder %v1884, 0.0
      %vm1937 = vcmp.ge.f32.partialorder %v1889, 0.0
      %vm1938 = vcmp.ge.f32.partialorder %v1892, 0.0
      %vm1939 = vcmp.ge.f32.partialorder %v1897, 0.0
      %vm1940 = vcmp.ge.f32.partialorder %v1900, 0.0
      %vm1941 = vcmp.ge.f32.partialorder %v1905, 0.0
      %vm1942 = vcmp.ge.f32.partialorder %v1908, 0.0
      %v1943 = vmul.f32 %v1785, 0.1
      %v1944 = vmul.f32 %v1788, 0.1
      %v1945 = vmul.f32 %v1793, 0.1
      %v1946 = vmul.f32 %v1796, 0.1
      %v1947 = vmul.f32 %v1801, 0.1
      %v1948 = vmul.f32 %v1804, 0.1
      %v1949 = vmul.f32 %v1809, 0.1
      %v1950 = vmul.f32 %v1812, 0.1
      %v1951 = vmul.f32 %v1817, 0.1
      %v1952 = vmul.f32 %v1820, 0.1
      %v1953 = vmul.f32 %v1825, 0.1
      %v1954 = vmul.f32 %v1828, 0.1
      %v1955 = vmul.f32 %v1833, 0.1
      %v1956 = vmul.f32 %v1836, 0.1
      %v1957 = vmul.f32 %v1841, 0.1
      %v1958 = vmul.f32 %v1844, 0.1
      %v1959 = vmul.f32 %v1849, 0.1
      %v1960 = vmul.f32 %v1852, 0.1
      %v1961 = vmul.f32 %v1857, 0.1
      %v1962 = vmul.f32 %v1860, 0.1
      %v1963 = vmul.f32 %v1865, 0.1
      %v1964 = vmul.f32 %v1868, 0.1
      %v1965 = vmul.f32 %v1873, 0.1
      %v1966 = vmul.f32 %v1876, 0.1
      %v1967 = vmul.f32 %v1881, 0.1
      %v1968 = vmul.f32 %v1884, 0.1
      %v1969 = vmul.f32 %v1889, 0.1
      %v1970 = vmul.f32 %v1892, 0.1
      %v1971 = vmul.f32 %v1897, 0.1
      %v1972 = vmul.f32 %v1900, 0.1
      %v1973 = vmul.f32 %v1905, 0.1
      %v1974 = vmul.f32 %v1908, 0.1
      %v1975 = vsel %vm1911, %v1785, %v1943
      %v1976 = vsel %vm1912, %v1788, %v1944
      %v1977 = vsel %vm1913, %v1793, %v1945
      %v1978 = vsel %vm1914, %v1796, %v1946
      %v1979 = vsel %vm1915, %v1801, %v1947
      %v1980 = vsel %vm1916, %v1804, %v1948
      %v1981 = vsel %vm1917, %v1809, %v1949
      %v1982 = vsel %vm1918, %v1812, %v1950
      %v1983 = vsel %vm1919, %v1817, %v1951
      %v1984 = vsel %vm1920, %v1820, %v1952
      %v1985 = vsel %vm1921, %v1825, %v1953
      %v1986 = vsel %vm1922, %v1828, %v1954
      %v1987 = vsel %vm1923, %v1833, %v1955
      %v1988 = vsel %vm1924, %v1836, %v1956
      %v1989 = vsel %vm1925, %v1841, %v1957
      %v1990 = vsel %vm1926, %v1844, %v1958
      %v1991 = vsel %vm1927, %v1849, %v1959
      %v1992 = vsel %vm1928, %v1852, %v1960
      %v1993 = vsel %vm1929, %v1857, %v1961
      %v1994 = vsel %vm1930, %v1860, %v1962
      %v1995 = vsel %vm1931, %v1865, %v1963
      %v1996 = vsel %vm1932, %v1868, %v1964
      %v1997 = vsel %vm1933, %v1873, %v1965
      %v1998 = vsel %vm1934, %v1876, %v1966
      %v1999 = vsel %vm1935, %v1881, %v1967
      %v2000 = vsel %vm1936, %v1884, %v1968
      %v2001 = vsel %vm1937, %v1889, %v1969
      %v2002 = vsel %vm1938, %v1892, %v1970
      %v2003 = vsel %vm1939, %v1897, %v1971
      %v2004 = vsel %vm1940, %v1900, %v1972
      %v2005 = vsel %vm1941, %v1905, %v1973
      %v2006 = vsel %vm1942, %v1908, %v1974
      loop: start=0, step=1, limit=16
      $region41: #{_lambda_.7} parent=39 // loop_pre_header
        _
      $region42: #{_lambda_.7} parent=39 // loop_header
        %s2008 = sphi 0, %s2012
        %p2009 = scmp.ge.s32.totalorder %s2008, 16
        %v2013 = vphi %v1975, %v5557
        %v2014 = vphi %v1976, %v5558
        %v2015 = vphi %v1977, %v5559
        %v2016 = vphi %v1978, %v5560
        %v2017 = vphi %v1979, %v5561
        %v2018 = vphi %v1980, %v5562
        %v2019 = vphi %v1981, %v5563
        %v2020 = vphi %v1982, %v5564
        %v2021 = vphi %v1983, %v5565
        %v2022 = vphi %v1984, %v5566
        %v2023 = vphi %v1985, %v5567
        %v2024 = vphi %v1986, %v5568
        %v2025 = vphi %v1987, %v5569
        %v2026 = vphi %v1988, %v5570
        %v2027 = vphi %v1989, %v5571
        %v2028 = vphi %v1990, %v5572
        %v2029 = vphi %v1991, %v5573
        %v2030 = vphi %v1992, %v5574
        %v2031 = vphi %v1993, %v5575
        %v2032 = vphi %v1994, %v5576
        %v2033 = vphi %v1995, %v5577
        %v2034 = vphi %v1996, %v5578
        %v2035 = vphi %v1997, %v5579
        %v2036 = vphi %v1998, %v5580
        %v2037 = vphi %v1999, %v5581
        %v2038 = vphi %v2000, %v5582
        %v2039 = vphi %v2001, %v5583
        %v2040 = vphi %v2002, %v5584
        %v2041 = vphi %v2003, %v5585
        %v2042 = vphi %v2004, %v5586
        %v2043 = vphi %v2005, %v5587
        %v2044 = vphi %v2006, %v5588
      $region43: #{_lambda_.7} parent=39 // loop_header_branch
        %2011 = sbr.rel (%p2009) target = $region47
      $region44: #{_lambda_.7} parent=39 // loop_body
        %s2045 = smul.u32 %s2008, 2
        %s2046 = sadd.s32 %s2045, 1
        %vm2079 = vcmask 1040384
        %v2080 = vrot.slane %v2013, 7
        %v2081 = vrot.slane %v2014, 7
        %v2082 = vsel %vm2079, %v2080, %v2081
        %v2083 = vrot.slane %v2015, 7
        %v2084 = vrot.slane %v2016, 7
        %v2085 = vsel %vm2079, %v2083, %v2084
        %v2086 = vrot.slane %v2017, 7
        %v2087 = vrot.slane %v2018, 7
        %v2088 = vsel %vm2079, %v2086, %v2087
        %v2089 = vrot.slane %v2019, 7
        %v2090 = vrot.slane %v2020, 7
        %v2091 = vsel %vm2079, %v2089, %v2090
        %v2092 = vrot.slane %v2021, 7
        %v2093 = vrot.slane %v2022, 7
        %v2094 = vsel %vm2079, %v2092, %v2093
        %v2095 = vrot.slane %v2023, 7
        %v2096 = vrot.slane %v2024, 7
        %v2097 = vsel %vm2079, %v2095, %v2096
        %v2098 = vrot.slane %v2025, 7
        %v2099 = vrot.slane %v2026, 7
        %v2100 = vsel %vm2079, %v2098, %v2099
        %v2101 = vrot.slane %v2027, 7
        %v2102 = vrot.slane %v2028, 7
        %v2103 = vsel %vm2079, %v2101, %v2102
        %v2104 = vrot.slane %v2029, 7
        %v2105 = vrot.slane %v2030, 7
        %v2106 = vsel %vm2079, %v2104, %v2105
        %v2107 = vrot.slane %v2031, 7
        %v2108 = vrot.slane %v2032, 7
        %v2109 = vsel %vm2079, %v2107, %v2108
        %v2110 = vrot.slane %v2033, 7
        %v2111 = vrot.slane %v2034, 7
        %v2112 = vsel %vm2079, %v2110, %v2111
        %v2113 = vrot.slane %v2035, 7
        %v2114 = vrot.slane %v2036, 7
        %v2115 = vsel %vm2079, %v2113, %v2114
        %v2116 = vrot.slane %v2037, 7
        %v2117 = vrot.slane %v2038, 7
        %v2118 = vsel %vm2079, %v2116, %v2117
        %v2119 = vrot.slane %v2039, 7
        %v2120 = vrot.slane %v2040, 7
        %v2121 = vsel %vm2079, %v2119, %v2120
        %v2122 = vrot.slane %v2041, 7
        %v2123 = vrot.slane %v2042, 7
        %v2124 = vsel %vm2079, %v2122, %v2123
        %v2125 = vrot.slane %v2043, 7
        %v2126 = vrot.slane %v2044, 7
        %v2127 = vsel %vm2079, %v2125, %v2126
        %v2176 = vsel %vm2079, 0.0, %v2080
        %v2177 = vsel %vm2079, 0.0, %v2083
        %v2178 = vsel %vm2079, 0.0, %v2086
        %v2179 = vsel %vm2079, 0.0, %v2089
        %v2180 = vsel %vm2079, 0.0, %v2092
        %v2181 = vsel %vm2079, 0.0, %v2095
        %v2182 = vsel %vm2079, 0.0, %v2098
        %v2183 = vsel %vm2079, 0.0, %v2101
        %v2184 = vsel %vm2079, 0.0, %v2104
        %v2185 = vsel %vm2079, 0.0, %v2107
        %v2186 = vsel %vm2079, 0.0, %v2110
        %v2187 = vsel %vm2079, 0.0, %v2113
        %v2188 = vsel %vm2079, 0.0, %v2116
        %v2189 = vsel %vm2079, 0.0, %v2119
        %v2190 = vsel %vm2079, 0.0, %v2122
        %v2191 = vsel %vm2079, 0.0, %v2125
        %v2192 = vsel %vm2079, %v2081, 0.0
        %v2193 = vsel %vm2079, %v2084, 0.0
        %v2194 = vsel %vm2079, %v2087, 0.0
        %v2195 = vsel %vm2079, %v2090, 0.0
        %v2196 = vsel %vm2079, %v2093, 0.0
        %v2197 = vsel %vm2079, %v2096, 0.0
        %v2198 = vsel %vm2079, %v2099, 0.0
        %v2199 = vsel %vm2079, %v2102, 0.0
        %v2200 = vsel %vm2079, %v2105, 0.0
        %v2201 = vsel %vm2079, %v2108, 0.0
        %v2202 = vsel %vm2079, %v2111, 0.0
        %v2203 = vsel %vm2079, %v2114, 0.0
        %v2204 = vsel %vm2079, %v2117, 0.0
        %v2205 = vsel %vm2079, %v2120, 0.0
        %v2206 = vsel %vm2079, %v2123, 0.0
        %v2207 = vsel %vm2079, %v2126, 0.0
        %s2208 = smul.u32 %s2046, 72
        %s2209 = smul.addr %s2208, 4
        %s2210 = scalar_lea.vmem %s1, %s2209
        %v2211 = vld [vmem:[%s2210] sm:$0xf]
        %v2212 = vld [vmem:[%s2210 + $0x4] sm:$0xf]
        %v2213 = vld [vmem:[%s2210 + $0x8] sm:$0xf]
        %v2214 = vld [vmem:[%s2210 + $0xc] sm:$0xf]
        %v2215 = vld [vmem:[%s2210 + $0x10] sm:$0xf]
        %v2216 = vld [vmem:[%s2210 + $0x14] sm:$0xf]
        %v2217 = vld [vmem:[%s2210 + $0x18] sm:$0xf]
        %v2218 = vld [vmem:[%s2210 + $0x1c] sm:$0xf]
        %v2219 = vld [vmem:[%s2210 + $0x20] sm:$0xf]
        %v2220 = vld [vmem:[%s2210 + $0x24] sm:$0xf]
        %v2221 = vld [vmem:[%s2210 + $0x28] sm:$0xf]
        %v2222 = vld [vmem:[%s2210 + $0x2c] sm:$0xf]
        %v2223 = vld [vmem:[%s2210 + $0x30] sm:$0xf]
        %v2224 = vld [vmem:[%s2210 + $0x34] sm:$0xf]
        %v2225 = vld [vmem:[%s2210 + $0x38] sm:$0xf]
        %v2226 = vld [vmem:[%s2210 + $0x3c] sm:$0xf]
        %v2227 = vld [vmem:[%s2210 + $0x40] sm:$0xf]
        %v2228 = vld [vmem:[%s2210 + $0x44] sm:$0xf]
        %v2229 = vld [vmem:[%s2210 + $0x48] sm:$0xf]
        %v2230 = vld [vmem:[%s2210 + $0x4c] sm:$0xf]
        %v2231 = vld [vmem:[%s2210 + $0x50] sm:$0xf]
        %v2232 = vld [vmem:[%s2210 + $0x54] sm:$0xf]
        %v2233 = vld [vmem:[%s2210 + $0x58] sm:$0xf]
        %v2234 = vld [vmem:[%s2210 + $0x5c] sm:$0xf]
        %v2235 = vld [vmem:[%s2210 + $0x60] sm:$0xf]
        %v2236 = vld [vmem:[%s2210 + $0x64] sm:$0xf]
        %v2237 = vld [vmem:[%s2210 + $0x68] sm:$0xf]
        %v2238 = vld [vmem:[%s2210 + $0x6c] sm:$0xf]
        %v2239 = vld [vmem:[%s2210 + $0x70] sm:$0xf]
        %v2240 = vld [vmem:[%s2210 + $0x74] sm:$0xf]
        %v2241 = vld [vmem:[%s2210 + $0x78] sm:$0xf]
        %v2242 = vld [vmem:[%s2210 + $0x7c] sm:$0xf]
        %v2243 = vld [vmem:[%s2210 + $0x80] sm:$0xf]
        %v2244 = vld [vmem:[%s2210 + $0x84] sm:$0xf]
        %v2245 = vld [vmem:[%s2210 + $0x88] sm:$0xf]
        %v2246 = vld [vmem:[%s2210 + $0x8c] sm:$0xf]
        %v2247 = vld [vmem:[%s2210 + $0x90] sm:$0xf]
        %v2248 = vld [vmem:[%s2210 + $0x94] sm:$0xf]
        %v2249 = vld [vmem:[%s2210 + $0x98] sm:$0xf]
        %v2250 = vld [vmem:[%s2210 + $0x9c] sm:$0xf]
        %v2251 = vld [vmem:[%s2210 + $0xa0] sm:$0xf]
        %v2252 = vld [vmem:[%s2210 + $0xa4] sm:$0xf]
        %v2253 = vld [vmem:[%s2210 + $0xa8] sm:$0xf]
        %v2254 = vld [vmem:[%s2210 + $0xac] sm:$0xf]
        %v2255 = vld [vmem:[%s2210 + $0xb0] sm:$0xf]
        %v2256 = vld [vmem:[%s2210 + $0xb4] sm:$0xf]
        %v2257 = vld [vmem:[%s2210 + $0xb8] sm:$0xf]
        %v2258 = vld [vmem:[%s2210 + $0xbc] sm:$0xf]
        %v2259 = vld [vmem:[%s2210 + $0xc0] sm:$0xf]
        %v2260 = vld [vmem:[%s2210 + $0xc4] sm:$0xf]
        %v2261 = vld [vmem:[%s2210 + $0xc8] sm:$0xf]
        %v2262 = vld [vmem:[%s2210 + $0xcc] sm:$0xf]
        %v2263 = vld [vmem:[%s2210 + $0xd0] sm:$0xf]
        %v2264 = vld [vmem:[%s2210 + $0xd4] sm:$0xf]
        %v2265 = vld [vmem:[%s2210 + $0xd8] sm:$0xf]
        %v2266 = vld [vmem:[%s2210 + $0xdc] sm:$0xf]
        %v2267 = vld [vmem:[%s2210 + $0xe0] sm:$0xf]
        %v2268 = vld [vmem:[%s2210 + $0xe4] sm:$0xf]
        %v2269 = vld [vmem:[%s2210 + $0xe8] sm:$0xf]
        %v2270 = vld [vmem:[%s2210 + $0xec] sm:$0xf]
        %v2271 = vld [vmem:[%s2210 + $0xf0] sm:$0xf]
        %v2272 = vld [vmem:[%s2210 + $0xf4] sm:$0xf]
        %v2273 = vld [vmem:[%s2210 + $0xf8] sm:$0xf]
        %v2274 = vld [vmem:[%s2210 + $0xfc] sm:$0xf]
        %v2275 = vld [vmem:[%s2210 + $0x100] sm:$0xf]
        %v2276 = vld [vmem:[%s2210 + $0x104] sm:$0xf]
        %v2277 = vld [vmem:[%s2210 + $0x108] sm:$0xf]
        %v2278 = vld [vmem:[%s2210 + $0x10c] sm:$0xf]
        %v2279 = vld [vmem:[%s2210 + $0x110] sm:$0xf]
        %v2280 = vld [vmem:[%s2210 + $0x114] sm:$0xf]
        %v2281 = vld [vmem:[%s2210 + $0x118] sm:$0xf]
        %v2282 = vld [vmem:[%s2210 + $0x11c] sm:$0xf]
        %s2283 = scalar_lea.vmem %s2, %s2046
        %v2284 = vld [vmem:[%s2283] sm:$0x1]
        %v2316 = vrot.slane 0.0, 1
        %v2317 = vsel %vm435, %v2316, %v2316
        %v2318 = vrot.slane %v2176, 1
        %v2319 = vrot.slane %v2082, 1
        %v2320 = vsel %vm435, %v2318, %v2319
        %v2321 = vrot.slane %v2192, 1
        %v2322 = vsel %vm435, %v2319, %v2321
        %v2323 = vrot.slane %v2177, 1
        %v2324 = vrot.slane %v2085, 1
        %v2325 = vsel %vm435, %v2323, %v2324
        %v2326 = vrot.slane %v2193, 1
        %v2327 = vsel %vm435, %v2324, %v2326
        %v2328 = vrot.slane %v2178, 1
        %v2329 = vrot.slane %v2088, 1
        %v2330 = vsel %vm435, %v2328, %v2329
        %v2331 = vrot.slane %v2194, 1
        %v2332 = vsel %vm435, %v2329, %v2331
        %v2333 = vrot.slane %v2179, 1
        %v2334 = vrot.slane %v2091, 1
        %v2335 = vsel %vm435, %v2333, %v2334
        %v2336 = vrot.slane %v2195, 1
        %v2337 = vsel %vm435, %v2334, %v2336
        %v2338 = vrot.slane %v2180, 1
        %v2339 = vrot.slane %v2094, 1
        %v2340 = vsel %vm435, %v2338, %v2339
        %v2341 = vrot.slane %v2196, 1
        %v2342 = vsel %vm435, %v2339, %v2341
        %v2343 = vrot.slane %v2181, 1
        %v2344 = vrot.slane %v2097, 1
        %v2345 = vsel %vm435, %v2343, %v2344
        %v2346 = vrot.slane %v2197, 1
        %v2347 = vsel %vm435, %v2344, %v2346
        %v2348 = vrot.slane %v2182, 1
        %v2349 = vrot.slane %v2100, 1
        %v2350 = vsel %vm435, %v2348, %v2349
        %v2351 = vrot.slane %v2198, 1
        %v2352 = vsel %vm435, %v2349, %v2351
        %v2353 = vrot.slane %v2183, 1
        %v2354 = vrot.slane %v2103, 1
        %v2355 = vsel %vm435, %v2353, %v2354
        %v2356 = vrot.slane %v2199, 1
        %v2357 = vsel %vm435, %v2354, %v2356
        %v2358 = vrot.slane %v2184, 1
        %v2359 = vrot.slane %v2106, 1
        %v2360 = vsel %vm435, %v2358, %v2359
        %v2361 = vrot.slane %v2200, 1
        %v2362 = vsel %vm435, %v2359, %v2361
        %v2363 = vrot.slane %v2185, 1
        %v2364 = vrot.slane %v2109, 1
        %v2365 = vsel %vm435, %v2363, %v2364
        %v2366 = vrot.slane %v2201, 1
        %v2367 = vsel %vm435, %v2364, %v2366
        %v2368 = vrot.slane %v2186, 1
        %v2369 = vrot.slane %v2112, 1
        %v2370 = vsel %vm435, %v2368, %v2369
        %v2371 = vrot.slane %v2202, 1
        %v2372 = vsel %vm435, %v2369, %v2371
        %v2373 = vrot.slane %v2187, 1
        %v2374 = vrot.slane %v2115, 1
        %v2375 = vsel %vm435, %v2373, %v2374
        %v2376 = vrot.slane %v2203, 1
        %v2377 = vsel %vm435, %v2374, %v2376
        %v2378 = vrot.slane %v2188, 1
        %v2379 = vrot.slane %v2118, 1
        %v2380 = vsel %vm435, %v2378, %v2379
        %v2381 = vrot.slane %v2204, 1
        %v2382 = vsel %vm435, %v2379, %v2381
        %v2383 = vrot.slane %v2189, 1
        %v2384 = vrot.slane %v2121, 1
        %v2385 = vsel %vm435, %v2383, %v2384
        %v2386 = vrot.slane %v2205, 1
        %v2387 = vsel %vm435, %v2384, %v2386
        %v2388 = vrot.slane %v2190, 1
        %v2389 = vrot.slane %v2124, 1
        %v2390 = vsel %vm435, %v2388, %v2389
        %v2391 = vrot.slane %v2206, 1
        %v2392 = vsel %vm435, %v2389, %v2391
        %2393 = vrot.lane.b32.xlu0 %v2317, 64
        %v2394 = vpop.permute.xlu0 %2393
        %2395 = vrot.lane.b32.xlu0 %v2320, 64
        %v2396 = vpop.permute.xlu0 %2395
        %2397 = vrot.lane.b32.xlu0 %v2322, 64
        %v2398 = vpop.permute.xlu0 %2397
        %2399 = vrot.lane.b32.xlu0 %v2325, 64
        %v2400 = vpop.permute.xlu0 %2399
        %2401 = vrot.lane.b32.xlu0 %v2327, 64
        %v2402 = vpop.permute.xlu0 %2401
        %2403 = vrot.lane.b32.xlu0 %v2330, 64
        %v2404 = vpop.permute.xlu0 %2403
        %2405 = vrot.lane.b32.xlu0 %v2332, 64
        %v2406 = vpop.permute.xlu0 %2405
        %2407 = vrot.lane.b32.xlu0 %v2335, 64
        %v2408 = vpop.permute.xlu0 %2407
        %2409 = vrot.lane.b32.xlu0 %v2337, 64
        %v2410 = vpop.permute.xlu0 %2409
        %2411 = vrot.lane.b32.xlu0 %v2340, 64
        %v2412 = vpop.permute.xlu0 %2411
        %2413 = vrot.lane.b32.xlu0 %v2342, 64
        %v2414 = vpop.permute.xlu0 %2413
        %2415 = vrot.lane.b32.xlu0 %v2345, 64
        %v2416 = vpop.permute.xlu0 %2415
        %2417 = vrot.lane.b32.xlu0 %v2347, 64
        %v2418 = vpop.permute.xlu0 %2417
        %2419 = vrot.lane.b32.xlu0 %v2350, 64
        %v2420 = vpop.permute.xlu0 %2419
        %2421 = vrot.lane.b32.xlu0 %v2352, 64
        %v2422 = vpop.permute.xlu0 %2421
        %2423 = vrot.lane.b32.xlu0 %v2355, 64
        %v2424 = vpop.permute.xlu0 %2423
        %2425 = vrot.lane.b32.xlu0 %v2357, 64
        %v2426 = vpop.permute.xlu0 %2425
        %2427 = vrot.lane.b32.xlu0 %v2360, 64
        %v2428 = vpop.permute.xlu0 %2427
        %2429 = vrot.lane.b32.xlu0 %v2362, 64
        %v2430 = vpop.permute.xlu0 %2429
        %2431 = vrot.lane.b32.xlu0 %v2365, 64
        %v2432 = vpop.permute.xlu0 %2431
        %2433 = vrot.lane.b32.xlu0 %v2367, 64
        %v2434 = vpop.permute.xlu0 %2433
        %2435 = vrot.lane.b32.xlu0 %v2370, 64
        %v2436 = vpop.permute.xlu0 %2435
        %2437 = vrot.lane.b32.xlu0 %v2372, 64
        %v2438 = vpop.permute.xlu0 %2437
        %2439 = vrot.lane.b32.xlu0 %v2375, 64
        %v2440 = vpop.permute.xlu0 %2439
        %2441 = vrot.lane.b32.xlu0 %v2377, 64
        %v2442 = vpop.permute.xlu0 %2441
        %2443 = vrot.lane.b32.xlu0 %v2380, 64
        %v2444 = vpop.permute.xlu0 %2443
        %2445 = vrot.lane.b32.xlu0 %v2382, 64
        %v2446 = vpop.permute.xlu0 %2445
        %2447 = vrot.lane.b32.xlu0 %v2385, 64
        %v2448 = vpop.permute.xlu0 %2447
        %2449 = vrot.lane.b32.xlu0 %v2387, 64
        %v2450 = vpop.permute.xlu0 %2449
        %2451 = vrot.lane.b32.xlu0 %v2390, 64
        %v2452 = vpop.permute.xlu0 %2451
        %2453 = vrot.lane.b32.xlu0 %v2392, 64
        %v2454 = vpop.permute.xlu0 %2453
        %v2486 = vrot.slane 0.0, 2
        %v2487 = vsel %vm612, %v2486, %v2486
        %v2488 = vrot.slane %v2176, 2
        %v2489 = vrot.slane %v2082, 2
        %v2490 = vsel %vm612, %v2488, %v2489
        %v2491 = vrot.slane %v2192, 2
        %v2492 = vsel %vm612, %v2489, %v2491
        %v2493 = vrot.slane %v2177, 2
        %v2494 = vrot.slane %v2085, 2
        %v2495 = vsel %vm612, %v2493, %v2494
        %v2496 = vrot.slane %v2193, 2
        %v2497 = vsel %vm612, %v2494, %v2496
        %v2498 = vrot.slane %v2178, 2
        %v2499 = vrot.slane %v2088, 2
        %v2500 = vsel %vm612, %v2498, %v2499
        %v2501 = vrot.slane %v2194, 2
        %v2502 = vsel %vm612, %v2499, %v2501
        %v2503 = vrot.slane %v2179, 2
        %v2504 = vrot.slane %v2091, 2
        %v2505 = vsel %vm612, %v2503, %v2504
        %v2506 = vrot.slane %v2195, 2
        %v2507 = vsel %vm612, %v2504, %v2506
        %v2508 = vrot.slane %v2180, 2
        %v2509 = vrot.slane %v2094, 2
        %v2510 = vsel %vm612, %v2508, %v2509
        %v2511 = vrot.slane %v2196, 2
        %v2512 = vsel %vm612, %v2509, %v2511
        %v2513 = vrot.slane %v2181, 2
        %v2514 = vrot.slane %v2097, 2
        %v2515 = vsel %vm612, %v2513, %v2514
        %v2516 = vrot.slane %v2197, 2
        %v2517 = vsel %vm612, %v2514, %v2516
        %v2518 = vrot.slane %v2182, 2
        %v2519 = vrot.slane %v2100, 2
        %v2520 = vsel %vm612, %v2518, %v2519
        %v2521 = vrot.slane %v2198, 2
        %v2522 = vsel %vm612, %v2519, %v2521
        %v2523 = vrot.slane %v2183, 2
        %v2524 = vrot.slane %v2103, 2
        %v2525 = vsel %vm612, %v2523, %v2524
        %v2526 = vrot.slane %v2199, 2
        %v2527 = vsel %vm612, %v2524, %v2526
        %v2528 = vrot.slane %v2184, 2
        %v2529 = vrot.slane %v2106, 2
        %v2530 = vsel %vm612, %v2528, %v2529
        %v2531 = vrot.slane %v2200, 2
        %v2532 = vsel %vm612, %v2529, %v2531
        %v2533 = vrot.slane %v2185, 2
        %v2534 = vrot.slane %v2109, 2
        %v2535 = vsel %vm612, %v2533, %v2534
        %v2536 = vrot.slane %v2201, 2
        %v2537 = vsel %vm612, %v2534, %v2536
        %v2538 = vrot.slane %v2186, 2
        %v2539 = vrot.slane %v2112, 2
        %v2540 = vsel %vm612, %v2538, %v2539
        %v2541 = vrot.slane %v2202, 2
        %v2542 = vsel %vm612, %v2539, %v2541
        %v2543 = vrot.slane %v2187, 2
        %v2544 = vrot.slane %v2115, 2
        %v2545 = vsel %vm612, %v2543, %v2544
        %v2546 = vrot.slane %v2203, 2
        %v2547 = vsel %vm612, %v2544, %v2546
        %v2548 = vrot.slane %v2188, 2
        %v2549 = vrot.slane %v2118, 2
        %v2550 = vsel %vm612, %v2548, %v2549
        %v2551 = vrot.slane %v2204, 2
        %v2552 = vsel %vm612, %v2549, %v2551
        %v2553 = vrot.slane %v2189, 2
        %v2554 = vrot.slane %v2121, 2
        %v2555 = vsel %vm612, %v2553, %v2554
        %v2556 = vrot.slane %v2205, 2
        %v2557 = vsel %vm612, %v2554, %v2556
        %v2558 = vrot.slane %v2190, 2
        %v2559 = vrot.slane %v2124, 2
        %v2560 = vsel %vm612, %v2558, %v2559
        %v2561 = vrot.slane %v2206, 2
        %v2562 = vsel %vm612, %v2559, %v2561
        %2595 = vrot.lane.b32.xlu0 %v2176, 64
        %v2596 = vpop.permute.xlu0 %2595
        %2597 = vrot.lane.b32.xlu0 %v2082, 64
        %v2598 = vpop.permute.xlu0 %2597
        %2599 = vrot.lane.b32.xlu0 %v2177, 64
        %v2600 = vpop.permute.xlu0 %2599
        %2601 = vrot.lane.b32.xlu0 %v2085, 64
        %v2602 = vpop.permute.xlu0 %2601
        %2603 = vrot.lane.b32.xlu0 %v2178, 64
        %v2604 = vpop.permute.xlu0 %2603
        %2605 = vrot.lane.b32.xlu0 %v2088, 64
        %v2606 = vpop.permute.xlu0 %2605
        %2607 = vrot.lane.b32.xlu0 %v2179, 64
        %v2608 = vpop.permute.xlu0 %2607
        %2609 = vrot.lane.b32.xlu0 %v2091, 64
        %v2610 = vpop.permute.xlu0 %2609
        %2611 = vrot.lane.b32.xlu0 %v2180, 64
        %v2612 = vpop.permute.xlu0 %2611
        %2613 = vrot.lane.b32.xlu0 %v2094, 64
        %v2614 = vpop.permute.xlu0 %2613
        %2615 = vrot.lane.b32.xlu0 %v2181, 64
        %v2616 = vpop.permute.xlu0 %2615
        %2617 = vrot.lane.b32.xlu0 %v2097, 64
        %v2618 = vpop.permute.xlu0 %2617
        %2619 = vrot.lane.b32.xlu0 %v2182, 64
        %v2620 = vpop.permute.xlu0 %2619
        %2621 = vrot.lane.b32.xlu0 %v2100, 64
        %v2622 = vpop.permute.xlu0 %2621
        %2623 = vrot.lane.b32.xlu0 %v2183, 64
        %v2624 = vpop.permute.xlu0 %2623
        %2625 = vrot.lane.b32.xlu0 %v2103, 64
        %v2626 = vpop.permute.xlu0 %2625
        %2627 = vrot.lane.b32.xlu0 %v2184, 64
        %v2628 = vpop.permute.xlu0 %2627
        %2629 = vrot.lane.b32.xlu0 %v2106, 64
        %v2630 = vpop.permute.xlu0 %2629
        %2631 = vrot.lane.b32.xlu0 %v2185, 64
        %v2632 = vpop.permute.xlu0 %2631
        %2633 = vrot.lane.b32.xlu0 %v2109, 64
        %v2634 = vpop.permute.xlu0 %2633
        %2635 = vrot.lane.b32.xlu0 %v2186, 64
        %v2636 = vpop.permute.xlu0 %2635
        %2637 = vrot.lane.b32.xlu0 %v2112, 64
        %v2638 = vpop.permute.xlu0 %2637
        %2639 = vrot.lane.b32.xlu0 %v2187, 64
        %v2640 = vpop.permute.xlu0 %2639
        %2641 = vrot.lane.b32.xlu0 %v2115, 64
        %v2642 = vpop.permute.xlu0 %2641
        %2643 = vrot.lane.b32.xlu0 %v2188, 64
        %v2644 = vpop.permute.xlu0 %2643
        %2645 = vrot.lane.b32.xlu0 %v2118, 64
        %v2646 = vpop.permute.xlu0 %2645
        %2647 = vrot.lane.b32.xlu0 %v2189, 64
        %v2648 = vpop.permute.xlu0 %2647
        %2649 = vrot.lane.b32.xlu0 %v2121, 64
        %v2650 = vpop.permute.xlu0 %2649
        %2651 = vrot.lane.b32.xlu0 %v2190, 64
        %v2652 = vpop.permute.xlu0 %2651
        %2653 = vrot.lane.b32.xlu0 %v2124, 64
        %v2654 = vpop.permute.xlu0 %2653
        %2655 = vrot.lane.b32.xlu0 %v2191, 64
        %v2656 = vpop.permute.xlu0 %2655
        %2657 = vrot.lane.b32.xlu0 %v2127, 64
        %v2658 = vpop.permute.xlu0 %2657
        %v2692 = vrot.slane %v2191, 1
        %v2693 = vrot.slane %v2127, 1
        %v2694 = vsel %vm435, %v2692, %v2693
        %v2695 = vrot.slane %v2207, 1
        %v2696 = vsel %vm435, %v2693, %v2695
        %v2729 = vrot.slane %v2191, 2
        %v2730 = vrot.slane %v2127, 2
        %v2731 = vsel %vm612, %v2729, %v2730
        %v2732 = vrot.slane %v2207, 2
        %v2733 = vsel %vm612, %v2730, %v2732
        %2734 = vrot.lane.b32.xlu0 %v2490, 64
        %v2735 = vpop.permute.xlu0 %2734
        %2736 = vrot.lane.b32.xlu0 %v2492, 64
        %v2737 = vpop.permute.xlu0 %2736
        %2738 = vrot.lane.b32.xlu0 %v2495, 64
        %v2739 = vpop.permute.xlu0 %2738
        %2740 = vrot.lane.b32.xlu0 %v2497, 64
        %v2741 = vpop.permute.xlu0 %2740
        %2742 = vrot.lane.b32.xlu0 %v2500, 64
        %v2743 = vpop.permute.xlu0 %2742
        %2744 = vrot.lane.b32.xlu0 %v2502, 64
        %v2745 = vpop.permute.xlu0 %2744
        %2746 = vrot.lane.b32.xlu0 %v2505, 64
        %v2747 = vpop.permute.xlu0 %2746
        %2748 = vrot.lane.b32.xlu0 %v2507, 64
        %v2749 = vpop.permute.xlu0 %2748
        %2750 = vrot.lane.b32.xlu0 %v2510, 64
        %v2751 = vpop.permute.xlu0 %2750
        %2752 = vrot.lane.b32.xlu0 %v2512, 64
        %v2753 = vpop.permute.xlu0 %2752
        %2754 = vrot.lane.b32.xlu0 %v2515, 64
        %v2755 = vpop.permute.xlu0 %2754
        %2756 = vrot.lane.b32.xlu0 %v2517, 64
        %v2757 = vpop.permute.xlu0 %2756
        %2758 = vrot.lane.b32.xlu0 %v2520, 64
        %v2759 = vpop.permute.xlu0 %2758
        %2760 = vrot.lane.b32.xlu0 %v2522, 64
        %v2761 = vpop.permute.xlu0 %2760
        %2762 = vrot.lane.b32.xlu0 %v2525, 64
        %v2763 = vpop.permute.xlu0 %2762
        %2764 = vrot.lane.b32.xlu0 %v2527, 64
        %v2765 = vpop.permute.xlu0 %2764
        %2766 = vrot.lane.b32.xlu0 %v2530, 64
        %v2767 = vpop.permute.xlu0 %2766
        %2768 = vrot.lane.b32.xlu0 %v2532, 64
        %v2769 = vpop.permute.xlu0 %2768
        %2770 = vrot.lane.b32.xlu0 %v2535, 64
        %v2771 = vpop.permute.xlu0 %2770
        %2772 = vrot.lane.b32.xlu0 %v2537, 64
        %v2773 = vpop.permute.xlu0 %2772
        %2774 = vrot.lane.b32.xlu0 %v2540, 64
        %v2775 = vpop.permute.xlu0 %2774
        %2776 = vrot.lane.b32.xlu0 %v2542, 64
        %v2777 = vpop.permute.xlu0 %2776
        %2778 = vrot.lane.b32.xlu0 %v2545, 64
        %v2779 = vpop.permute.xlu0 %2778
        %2780 = vrot.lane.b32.xlu0 %v2547, 64
        %v2781 = vpop.permute.xlu0 %2780
        %2782 = vrot.lane.b32.xlu0 %v2550, 64
        %v2783 = vpop.permute.xlu0 %2782
        %2784 = vrot.lane.b32.xlu0 %v2552, 64
        %v2785 = vpop.permute.xlu0 %2784
        %2786 = vrot.lane.b32.xlu0 %v2555, 64
        %v2787 = vpop.permute.xlu0 %2786
        %2788 = vrot.lane.b32.xlu0 %v2557, 64
        %v2789 = vpop.permute.xlu0 %2788
        %2790 = vrot.lane.b32.xlu0 %v2560, 64
        %v2791 = vpop.permute.xlu0 %2790
        %2792 = vrot.lane.b32.xlu0 %v2562, 64
        %v2793 = vpop.permute.xlu0 %2792
        %2794 = vrot.lane.b32.xlu0 %v2731, 64
        %v2795 = vpop.permute.xlu0 %2794
        %2796 = vrot.lane.b32.xlu0 %v2733, 64
        %v2797 = vpop.permute.xlu0 %2796
        %2830 = vrot.lane.b32.xlu0 %v2694, 64
        %v2831 = vpop.permute.xlu0 %2830
        %2832 = vrot.lane.b32.xlu0 %v2696, 64
        %v2833 = vpop.permute.xlu0 %2832
        %v2838 = vsel %vm991, 0.0, %v2394
        %v2839 = vsel %vm991, %v2176, %v2396
        %v2840 = vsel %vm991, %v2082, %v2398
        %v2841 = vsel %vm991, %v2177, %v2400
        %v2842 = vsel %vm991, %v2085, %v2402
        %v2843 = vsel %vm991, %v2178, %v2404
        %v2844 = vsel %vm991, %v2088, %v2406
        %v2845 = vsel %vm991, %v2179, %v2408
        %v2846 = vsel %vm991, %v2091, %v2410
        %v2847 = vsel %vm991, %v2180, %v2412
        %v2848 = vsel %vm991, %v2094, %v2414
        %v2849 = vsel %vm991, %v2181, %v2416
        %v2850 = vsel %vm991, %v2097, %v2418
        %v2851 = vsel %vm991, %v2182, %v2420
        %v2852 = vsel %vm991, %v2100, %v2422
        %v2853 = vsel %vm991, %v2183, %v2424
        %v2854 = vsel %vm991, %v2103, %v2426
        %v2855 = vsel %vm991, %v2184, %v2428
        %v2856 = vsel %vm991, %v2106, %v2430
        %v2857 = vsel %vm991, %v2185, %v2432
        %v2858 = vsel %vm991, %v2109, %v2434
        %v2859 = vsel %vm991, %v2186, %v2436
        %v2860 = vsel %vm991, %v2112, %v2438
        %v2861 = vsel %vm991, %v2187, %v2440
        %v2862 = vsel %vm991, %v2115, %v2442
        %v2863 = vsel %vm991, %v2188, %v2444
        %v2864 = vsel %vm991, %v2118, %v2446
        %v2865 = vsel %vm991, %v2189, %v2448
        %v2866 = vsel %vm991, %v2121, %v2450
        %v2867 = vsel %vm991, %v2190, %v2452
        %v2868 = vsel %vm991, %v2124, %v2454
        %v2869 = vsel %vm991, %v2487, %v2596
        %v2870 = vsel %vm991, %v2487, %v2598
        %v2871 = vsel %vm991, %v2490, %v2600
        %v2872 = vsel %vm991, %v2492, %v2602
        %v2873 = vsel %vm991, %v2495, %v2604
        %v2874 = vsel %vm991, %v2497, %v2606
        %v2875 = vsel %vm991, %v2500, %v2608
        %v2876 = vsel %vm991, %v2502, %v2610
        %v2877 = vsel %vm991, %v2505, %v2612
        %v2878 = vsel %vm991, %v2507, %v2614
        %v2879 = vsel %vm991, %v2510, %v2616
        %v2880 = vsel %vm991, %v2512, %v2618
        %v2881 = vsel %vm991, %v2515, %v2620
        %v2882 = vsel %vm991, %v2517, %v2622
        %v2883 = vsel %vm991, %v2520, %v2624
        %v2884 = vsel %vm991, %v2522, %v2626
        %v2885 = vsel %vm991, %v2525, %v2628
        %v2886 = vsel %vm991, %v2527, %v2630
        %v2887 = vsel %vm991, %v2530, %v2632
        %v2888 = vsel %vm991, %v2532, %v2634
        %v2889 = vsel %vm991, %v2535, %v2636
        %v2890 = vsel %vm991, %v2537, %v2638
        %v2891 = vsel %vm991, %v2540, %v2640
        %v2892 = vsel %vm991, %v2542, %v2642
        %v2893 = vsel %vm991, %v2545, %v2644
        %v2894 = vsel %vm991, %v2547, %v2646
        %v2895 = vsel %vm991, %v2550, %v2648
        %v2896 = vsel %vm991, %v2552, %v2650
        %v2897 = vsel %vm991, %v2555, %v2652
        %v2898 = vsel %vm991, %v2557, %v2654
        %v2899 = vsel %vm991, %v2560, %v2656
        %v2900 = vsel %vm991, %v2562, %v2658
        %v2901 = vsel %vm991, %v2320, %v2735
        %v2902 = vsel %vm991, %v2322, %v2737
        %v2903 = vsel %vm991, %v2325, %v2739
        %v2904 = vsel %vm991, %v2327, %v2741
        %v2905 = vsel %vm991, %v2330, %v2743
        %v2906 = vsel %vm991, %v2332, %v2745
        %v2907 = vsel %vm991, %v2335, %v2747
        %v2908 = vsel %vm991, %v2337, %v2749
        %v2909 = vsel %vm991, %v2340, %v2751
        %v2910 = vsel %vm991, %v2342, %v2753
        %v2911 = vsel %vm991, %v2345, %v2755
        %v2912 = vsel %vm991, %v2347, %v2757
        %v2913 = vsel %vm991, %v2350, %v2759
        %v2914 = vsel %vm991, %v2352, %v2761
        %v2915 = vsel %vm991, %v2355, %v2763
        %v2916 = vsel %vm991, %v2357, %v2765
        %v2917 = vsel %vm991, %v2360, %v2767
        %v2918 = vsel %vm991, %v2362, %v2769
        %v2919 = vsel %vm991, %v2365, %v2771
        %v2920 = vsel %vm991, %v2367, %v2773
        %v2921 = vsel %vm991, %v2370, %v2775
        %v2922 = vsel %vm991, %v2372, %v2777
        %v2923 = vsel %vm991, %v2375, %v2779
        %v2924 = vsel %vm991, %v2377, %v2781
        %v2925 = vsel %vm991, %v2380, %v2783
        %v2926 = vsel %vm991, %v2382, %v2785
        %v2927 = vsel %vm991, %v2385, %v2787
        %v2928 = vsel %vm991, %v2387, %v2789
        %v2929 = vsel %vm991, %v2390, %v2791
        %v2930 = vsel %vm991, %v2392, %v2793
        %v2931 = vsel %vm991, %v2694, %v2795
        %v2932 = vsel %vm991, %v2696, %v2797
        %v2933 = vsel %vm991, %v2191, %v2831
        %v2934 = vsel %vm991, %v2127, %v2833
        %v2935 = vpack.c.bf16 %v2838, %v2838
        %v2936 = vpack.c.bf16 %v2870, %v2869
        %v2937 = vpack.c.bf16 %v2902, %v2901
        %v2938 = vpack.c.bf16 %v2842, %v2841
        %v2939 = vpack.c.bf16 %v2497, %v2495
        %v2940 = vpack.c.bf16 %v2840, %v2839
        %v2941 = vpack.c.bf16 %v2872, %v2871
        %v2942 = vpack.c.bf16 %v2904, %v2903
        %v2943 = vpack.c.bf16 %v2844, %v2843
        %v2944 = vpack.c.bf16 %v2502, %v2500
        %v2945 = vpack.c.bf16 %v2874, %v2873
        %v2946 = vpack.c.bf16 %v2906, %v2905
        %v2947 = vpack.c.bf16 %v2846, %v2845
        %v2948 = vpack.c.bf16 %v2507, %v2505
        %v2949 = vpack.c.bf16 %v2876, %v2875
        %v2950 = vpack.c.bf16 %v2908, %v2907
        %v2951 = vpack.c.bf16 %v2848, %v2847
        %v2952 = vpack.c.bf16 %v2512, %v2510
        %v2953 = vpack.c.bf16 %v2878, %v2877
        %v2954 = vpack.c.bf16 %v2910, %v2909
        %v2955 = vpack.c.bf16 %v2850, %v2849
        %v2956 = vpack.c.bf16 %v2517, %v2515
        %v2957 = vpack.c.bf16 %v2880, %v2879
        %v2958 = vpack.c.bf16 %v2912, %v2911
        %v2959 = vpack.c.bf16 %v2852, %v2851
        %v2960 = vpack.c.bf16 %v2522, %v2520
        %v2961 = vpack.c.bf16 %v2882, %v2881
        %v2962 = vpack.c.bf16 %v2914, %v2913
        %v2963 = vpack.c.bf16 %v2854, %v2853
        %v2964 = vpack.c.bf16 %v2527, %v2525
        %v2965 = vpack.c.bf16 %v2884, %v2883
        %v2966 = vpack.c.bf16 %v2916, %v2915
        %v2967 = vpack.c.bf16 %v2856, %v2855
        %v2968 = vpack.c.bf16 %v2532, %v2530
        %v2969 = vpack.c.bf16 %v2886, %v2885
        %v2970 = vpack.c.bf16 %v2918, %v2917
        %v2971 = vpack.c.bf16 %v2858, %v2857
        %v2972 = vpack.c.bf16 %v2537, %v2535
        %v2973 = vpack.c.bf16 %v2888, %v2887
        %v2974 = vpack.c.bf16 %v2920, %v2919
        %v2975 = vpack.c.bf16 %v2860, %v2859
        %v2976 = vpack.c.bf16 %v2542, %v2540
        %v2977 = vpack.c.bf16 %v2890, %v2889
        %v2978 = vpack.c.bf16 %v2922, %v2921
        %v2979 = vpack.c.bf16 %v2862, %v2861
        %v2980 = vpack.c.bf16 %v2547, %v2545
        %v2981 = vpack.c.bf16 %v2892, %v2891
        %v2982 = vpack.c.bf16 %v2924, %v2923
        %v2983 = vpack.c.bf16 %v2864, %v2863
        %v2984 = vpack.c.bf16 %v2552, %v2550
        %v2985 = vpack.c.bf16 %v2894, %v2893
        %v2986 = vpack.c.bf16 %v2926, %v2925
        %v2987 = vpack.c.bf16 %v2866, %v2865
        %v2988 = vpack.c.bf16 %v2557, %v2555
        %v2989 = vpack.c.bf16 %v2896, %v2895
        %v2990 = vpack.c.bf16 %v2928, %v2927
        %v2991 = vpack.c.bf16 %v2868, %v2867
        %v2992 = vpack.c.bf16 %v2562, %v2560
        %v2993 = vpack.c.bf16 %v2898, %v2897
        %v2994 = vpack.c.bf16 %v2930, %v2929
        %v2995 = vpack.c.bf16 %v2934, %v2933
        %v2996 = vpack.c.bf16 %v2733, %v2731
        %v2997 = vpack.c.bf16 %v2900, %v2899
        %v2998 = vpack.c.bf16 %v2932, %v2931
        %v2999 = vpack.c.bf16 %v2487, %v2487
        %v3001 = vlaneseq
        %v3002 = vshrl.u32 %v3001, 7
        %v3003 = vsub.s32 0, %v3002
        %v3004 = vrot.slane %v2284, %v3003
        %v3078 = vunpack.c.l.b16 %v2211
        %v3079 = vunpack.c.l.b16 %v2212
        %v3080 = vunpack.c.l.b16 %v2213
        %v3081 = vunpack.c.l.b16 %v2214
        %v3082 = vunpack.c.l.b16 %v2215
        %v3083 = vunpack.c.l.b16 %v2216
        %v3084 = vunpack.c.l.b16 %v2217
        %v3085 = vunpack.c.l.b16 %v2218
        %v3086 = vunpack.c.l.b16 %v2219
        %v3087 = vunpack.c.l.b16 %v2220
        %v3088 = vunpack.c.l.b16 %v2221
        %v3089 = vunpack.c.l.b16 %v2222
        %v3090 = vunpack.c.l.b16 %v2223
        %v3091 = vunpack.c.l.b16 %v2224
        %v3092 = vunpack.c.l.b16 %v2225
        %v3093 = vunpack.c.l.b16 %v2226
        %v3094 = vunpack.c.l.b16 %v2227
        %v3095 = vunpack.c.l.b16 %v2228
        %v3096 = vunpack.c.l.b16 %v2229
        %v3097 = vunpack.c.l.b16 %v2230
        %v3098 = vunpack.c.l.b16 %v2231
        %v3099 = vunpack.c.l.b16 %v2232
        %v3100 = vunpack.c.l.b16 %v2233
        %v3101 = vunpack.c.l.b16 %v2234
        %v3102 = vunpack.c.l.b16 %v2235
        %v3103 = vunpack.c.l.b16 %v2236
        %v3104 = vunpack.c.l.b16 %v2237
        %v3105 = vunpack.c.l.b16 %v2238
        %v3106 = vunpack.c.l.b16 %v2239
        %v3107 = vunpack.c.l.b16 %v2240
        %v3108 = vunpack.c.l.b16 %v2241
        %v3109 = vunpack.c.l.b16 %v2242
        %v3110 = vunpack.c.l.b16 %v2243
        %v3111 = vunpack.c.l.b16 %v2244
        %v3112 = vunpack.c.l.b16 %v2245
        %v3113 = vunpack.c.l.b16 %v2246
        %v3114 = vunpack.c.l.b16 %v2247
        %v3115 = vunpack.c.l.b16 %v2248
        %v3116 = vunpack.c.l.b16 %v2249
        %v3117 = vunpack.c.l.b16 %v2250
        %v3118 = vunpack.c.l.b16 %v2251
        %v3119 = vunpack.c.l.b16 %v2252
        %v3120 = vunpack.c.l.b16 %v2253
        %v3121 = vunpack.c.l.b16 %v2254
        %v3122 = vunpack.c.l.b16 %v2255
        %v3123 = vunpack.c.l.b16 %v2256
        %v3124 = vunpack.c.l.b16 %v2257
        %v3125 = vunpack.c.l.b16 %v2258
        %v3126 = vunpack.c.l.b16 %v2259
        %v3127 = vunpack.c.l.b16 %v2260
        %v3128 = vunpack.c.l.b16 %v2261
        %v3129 = vunpack.c.l.b16 %v2262
        %v3130 = vunpack.c.l.b16 %v2263
        %v3131 = vunpack.c.l.b16 %v2264
        %v3132 = vunpack.c.l.b16 %v2265
        %v3133 = vunpack.c.l.b16 %v2266
        %v3134 = vunpack.c.l.b16 %v2267
        %v3135 = vunpack.c.l.b16 %v2268
        %v3136 = vunpack.c.l.b16 %v2269
        %v3137 = vunpack.c.l.b16 %v2270
        %v3138 = vunpack.c.l.b16 %v2271
        %v3139 = vunpack.c.l.b16 %v2272
        %v3140 = vunpack.c.l.b16 %v2273
        %v3141 = vunpack.c.l.b16 %v2274
        %v3142 = vunpack.c.l.b16 %v2275
        %v3143 = vunpack.c.l.b16 %v2276
        %v3144 = vunpack.c.l.b16 %v2277
        %v3145 = vunpack.c.l.b16 %v2278
        %v3146 = vunpack.c.l.b16 %v2279
        %v3147 = vunpack.c.l.b16 %v2280
        %v3148 = vunpack.c.l.b16 %v2281
        %v3149 = vunpack.c.l.b16 %v2282
        %v3150 = vpack.c.b16 %v3079, %v3078
        %v3151 = vpack.c.b16 %v3081, %v3080
        %v3152 = vpack.c.b16 %v3083, %v3082
        %v3153 = vpack.c.b16 %v3085, %v3084
        %v3154 = vpack.c.b16 %v3087, %v3086
        %v3155 = vpack.c.b16 %v3089, %v3088
        %v3156 = vpack.c.b16 %v3091, %v3090
        %v3157 = vpack.c.b16 %v3093, %v3092
        %v3158 = vpack.c.b16 %v3095, %v3094
        %v3159 = vpack.c.b16 %v3097, %v3096
        %v3160 = vpack.c.b16 %v3099, %v3098
        %v3161 = vpack.c.b16 %v3101, %v3100
        %v3162 = vpack.c.b16 %v3103, %v3102
        %v3163 = vpack.c.b16 %v3105, %v3104
        %v3164 = vpack.c.b16 %v3107, %v3106
        %v3165 = vpack.c.b16 %v3109, %v3108
        %v3166 = vpack.c.b16 %v3111, %v3110
        %v3167 = vpack.c.b16 %v3113, %v3112
        %v3168 = vpack.c.b16 %v3115, %v3114
        %v3169 = vpack.c.b16 %v3117, %v3116
        %v3170 = vpack.c.b16 %v3119, %v3118
        %v3171 = vpack.c.b16 %v3121, %v3120
        %v3172 = vpack.c.b16 %v3123, %v3122
        %v3173 = vpack.c.b16 %v3125, %v3124
        %v3174 = vpack.c.b16 %v3127, %v3126
        %v3175 = vpack.c.b16 %v3129, %v3128
        %v3176 = vpack.c.b16 %v3131, %v3130
        %v3177 = vpack.c.b16 %v3133, %v3132
        %v3178 = vpack.c.b16 %v3135, %v3134
        %v3179 = vpack.c.b16 %v3137, %v3136
        %v3180 = vpack.c.b16 %v3139, %v3138
        %v3181 = vpack.c.b16 %v3141, %v3140
        %v3182 = vpack.c.b16 %v3143, %v3142
        %v3183 = vpack.c.b16 %v3145, %v3144
        %v3184 = vpack.c.b16 %v3147, %v3146
        %v3185 = vpack.c.b16 %v3149, %v3148
        %v3223 = vsel %vm991, %v2939, 0
        %v3226 = vsel %vm991, %v2944, 0
        %v3229 = vsel %vm991, %v2948, 0
        %v3232 = vsel %vm991, %v2952, 0
        %v3235 = vsel %vm991, %v2956, 0
        %v3238 = vsel %vm991, %v2960, 0
        %v3241 = vsel %vm991, %v2964, 0
        %v3244 = vsel %vm991, %v2968, 0
        %v3247 = vsel %vm991, %v2972, 0
        %v3250 = vsel %vm991, %v2976, 0
        %v3253 = vsel %vm991, %v2980, 0
        %v3256 = vsel %vm991, %v2984, 0
        %v3259 = vsel %vm991, %v2988, 0
        %v3262 = vsel %vm991, %v2992, 0
        %v3265 = vsel %vm991, %v2996, 0
        %v3268 = vsel %vm991, %v2999, 0
        %3270 = vmatprep.subr.bf16.mxu0 0
        %3271 = vmatpush1.bf16.msra.mxu0 %v3150
        %3272 = vmatprep.subr.bf16.mxu0 0
        %3273 = vmatpush1.bf16.msra.mxu0 %v3151
        %3274 = vmatprep.subr.bf16.mxu0 0
        %3275 = vmatpush1.bf16.msra.mxu0 %v3152
        %3276 = vmatprep.subr.bf16.mxu0 0
        %3277 = vmatpush1.bf16.msra.mxu0 %v3153
        %3278 = vmatprep.subr.bf16.mxu0 0
        %3279 = vmatpush1.bf16.msra.mxu0 %v3154
        %3280 = vmatprep.subr.bf16.mxu0 0
        %3281 = vmatpush1.bf16.msra.mxu0 %v3155
        %3282 = vmatprep.subr.bf16.mxu0 0
        %3283 = vmatpush1.bf16.msra.mxu0 %v3156
        %3284 = vmatprep.subr.bf16.mxu0 0
        %3285 = vmatpush1.bf16.msra.mxu0 %v3157
        %3286 = vmatprep.subr.bf16.mxu0 0
        %3287 = vmatpush1.bf16.msra.mxu0 %v3158
        %3288 = vmatprep.subr.bf16.mxu0 0
        %3289 = vmatpush1.bf16.msra.mxu0 %v3159
        %3290 = vmatprep.subr.bf16.mxu0 0
        %3291 = vmatpush1.bf16.msra.mxu0 %v3160
        %3292 = vmatprep.subr.bf16.mxu0 0
        %3293 = vmatpush1.bf16.msra.mxu0 %v3161
        %3294 = vmatprep.subr.bf16.mxu0 0
        %3295 = vmatpush1.bf16.msra.mxu0 %v3162
        %3296 = vmatprep.subr.bf16.mxu0 0
        %3297 = vmatpush1.bf16.msra.mxu0 %v3163
        %3298 = vmatprep.subr.bf16.mxu0 0
        %3299 = vmatpush1.bf16.msra.mxu0 %v3164
        %3300 = vmatprep.subr.bf16.mxu0 0
        %3301 = vmatpush1.bf16.msra.mxu0 %v3165
        %3302 = vmatprep.mubr.bf16.mxu0 %v2936
        %3303 = vmatmul.mubr.bf16.gmra.mrb[0].mxu0 %v2935
        %v3304 = vpop.f32.mrb[0].mxu0
        %v3305 = vadd.f32 %v3004, %v3304
        %v3306 = vpop.f32.mrb[0].mxu0
        %v3307 = vpop.f32.mrb[0].mxu0
        %v3308 = vadd.f32 %v3004, %v3307
        %v3309 = vpop.f32.mrb[0].mxu0
        %3310 = vmatprep.mubr.bf16.mxu0 %v2941
        %3311 = vmatmul.mubr.bf16.gmra.mrb[0].mxu0 %v2940
        %v3312 = vpop.f32.mrb[0].mxu0
        %v3313 = vadd.f32 %v3004, %v3312
        %v3314 = vpop.f32.mrb[0].mxu0
        %v3315 = vpop.f32.mrb[0].mxu0
        %v3316 = vadd.f32 %v3004, %v3315
        %v3317 = vpop.f32.mrb[0].mxu0
        %3318 = vmatprep.mubr.bf16.mxu0 %v2945
        %3319 = vmatmul.mubr.bf16.gmra.mrb[0].mxu0 %v2938
        %v3320 = vpop.f32.mrb[0].mxu0
        %v3321 = vadd.f32 %v3004, %v3320
        %v3322 = vpop.f32.mrb[0].mxu0
        %v3323 = vpop.f32.mrb[0].mxu0
        %v3324 = vadd.f32 %v3004, %v3323
        %v3325 = vpop.f32.mrb[0].mxu0
        %3326 = vmatprep.mubr.bf16.mxu0 %v2949
        %3327 = vmatmul.mubr.bf16.gmra.mrb[0].mxu0 %v2943
        %v3328 = vpop.f32.mrb[0].mxu0
        %v3329 = vadd.f32 %v3004, %v3328
        %v3330 = vpop.f32.mrb[0].mxu0
        %v3331 = vpop.f32.mrb[0].mxu0
        %v3332 = vadd.f32 %v3004, %v3331
        %v3333 = vpop.f32.mrb[0].mxu0
        %3334 = vmatprep.mubr.bf16.mxu0 %v2953
        %3335 = vmatmul.mubr.bf16.gmra.mrb[0].mxu0 %v2947
        %v3336 = vpop.f32.mrb[0].mxu0
        %v3337 = vadd.f32 %v3004, %v3336
        %v3338 = vpop.f32.mrb[0].mxu0
        %v3339 = vpop.f32.mrb[0].mxu0
        %v3340 = vadd.f32 %v3004, %v3339
        %v3341 = vpop.f32.mrb[0].mxu0
        %3342 = vmatprep.mubr.bf16.mxu0 %v2957
        %3343 = vmatmul.mubr.bf16.gmra.mrb[0].mxu0 %v2951
        %v3344 = vpop.f32.mrb[0].mxu0
        %v3345 = vadd.f32 %v3004, %v3344
        %v3346 = vpop.f32.mrb[0].mxu0
        %v3347 = vpop.f32.mrb[0].mxu0
        %v3348 = vadd.f32 %v3004, %v3347
        %v3349 = vpop.f32.mrb[0].mxu0
        %3350 = vmatprep.mubr.bf16.mxu0 %v2961
        %3351 = vmatmul.mubr.bf16.gmra.mrb[0].mxu0 %v2955
        %v3352 = vpop.f32.mrb[0].mxu0
        %v3353 = vadd.f32 %v3004, %v3352
        %v3354 = vpop.f32.mrb[0].mxu0
        %v3355 = vpop.f32.mrb[0].mxu0
        %v3356 = vadd.f32 %v3004, %v3355
        %v3357 = vpop.f32.mrb[0].mxu0
        %3358 = vmatprep.mubr.bf16.mxu0 %v2965
        %3359 = vmatmul.mubr.bf16.gmra.mrb[0].mxu0 %v2959
        %v3360 = vpop.f32.mrb[0].mxu0
        %v3361 = vadd.f32 %v3004, %v3360
        %v3362 = vpop.f32.mrb[0].mxu0
        %v3363 = vpop.f32.mrb[0].mxu0
        %v3364 = vadd.f32 %v3004, %v3363
        %v3365 = vpop.f32.mrb[0].mxu0
        %3366 = vmatprep.mubr.bf16.mxu0 %v2969
        %3367 = vmatmul.mubr.bf16.gmra.mrb[0].mxu0 %v2963
        %v3368 = vpop.f32.mrb[0].mxu0
        %v3369 = vadd.f32 %v3004, %v3368
        %v3370 = vpop.f32.mrb[0].mxu0
        %v3371 = vpop.f32.mrb[0].mxu0
        %v3372 = vadd.f32 %v3004, %v3371
        %v3373 = vpop.f32.mrb[0].mxu0
        %3374 = vmatprep.mubr.bf16.mxu0 %v2973
        %3375 = vmatmul.mubr.bf16.gmra.mrb[0].mxu0 %v2967
        %v3376 = vpop.f32.mrb[0].mxu0
        %v3377 = vadd.f32 %v3004, %v3376
        %v3378 = vpop.f32.mrb[0].mxu0
        %v3379 = vpop.f32.mrb[0].mxu0
        %v3380 = vadd.f32 %v3004, %v3379
        %v3381 = vpop.f32.mrb[0].mxu0
        %3382 = vmatprep.mubr.bf16.mxu0 %v2977
        %3383 = vmatmul.mubr.bf16.gmra.mrb[0].mxu0 %v2971
        %v3384 = vpop.f32.mrb[0].mxu0
        %v3385 = vadd.f32 %v3004, %v3384
        %v3386 = vpop.f32.mrb[0].mxu0
        %v3387 = vpop.f32.mrb[0].mxu0
        %v3388 = vadd.f32 %v3004, %v3387
        %v3389 = vpop.f32.mrb[0].mxu0
        %3390 = vmatprep.mubr.bf16.mxu0 %v2981
        %3391 = vmatmul.mubr.bf16.gmra.mrb[0].mxu0 %v2975
        %v3392 = vpop.f32.mrb[0].mxu0
        %v3393 = vadd.f32 %v3004, %v3392
        %v3394 = vpop.f32.mrb[0].mxu0
        %v3395 = vpop.f32.mrb[0].mxu0
        %v3396 = vadd.f32 %v3004, %v3395
        %v3397 = vpop.f32.mrb[0].mxu0
        %3398 = vmatprep.mubr.bf16.mxu0 %v2985
        %3399 = vmatmul.mubr.bf16.gmra.mrb[0].mxu0 %v2979
        %v3400 = vpop.f32.mrb[0].mxu0
        %v3401 = vadd.f32 %v3004, %v3400
        %v3402 = vpop.f32.mrb[0].mxu0
        %v3403 = vpop.f32.mrb[0].mxu0
        %v3404 = vadd.f32 %v3004, %v3403
        %v3405 = vpop.f32.mrb[0].mxu0
        %3406 = vmatprep.mubr.bf16.mxu0 %v2989
        %3407 = vmatmul.mubr.bf16.gmra.mrb[0].mxu0 %v2983
        %v3408 = vpop.f32.mrb[0].mxu0
        %v3409 = vadd.f32 %v3004, %v3408
        %v3410 = vpop.f32.mrb[0].mxu0
        %v3411 = vpop.f32.mrb[0].mxu0
        %v3412 = vadd.f32 %v3004, %v3411
        %v3413 = vpop.f32.mrb[0].mxu0
        %3414 = vmatprep.mubr.bf16.mxu0 %v2993
        %3415 = vmatmul.mubr.bf16.gmra.mrb[0].mxu0 %v2987
        %v3416 = vpop.f32.mrb[0].mxu0
        %v3417 = vadd.f32 %v3004, %v3416
        %v3418 = vpop.f32.mrb[0].mxu0
        %v3419 = vpop.f32.mrb[0].mxu0
        %v3420 = vadd.f32 %v3004, %v3419
        %v3421 = vpop.f32.mrb[0].mxu0
        %3422 = vmatprep.mubr.bf16.mxu0 %v2997
        %3423 = vmatmul.mubr.bf16.gmra.mrb[0].mxu0 %v2991
        %v3424 = vpop.f32.mrb[0].mxu0
        %v3425 = vadd.f32 %v3004, %v3424
        %v3426 = vpop.f32.mrb[0].mxu0
        %v3427 = vpop.f32.mrb[0].mxu0
        %v3428 = vadd.f32 %v3004, %v3427
        %v3429 = vpop.f32.mrb[0].mxu0
        %3430 = vdwg.mxu0
        %3431 = vmatprep.subr.bf16.mxu0 0
        %3432 = vmatpush1.bf16.msra.mxu0 %v3166
        %3433 = vmatprep.subr.bf16.mxu0 0
        %3434 = vmatpush1.bf16.msra.mxu0 %v3167
        %3435 = vmatprep.subr.bf16.mxu0 0
        %3436 = vmatpush1.bf16.msra.mxu0 %v3168
        %3437 = vmatprep.subr.bf16.mxu0 0
        %3438 = vmatpush1.bf16.msra.mxu0 %v3169
        %3439 = vmatprep.subr.bf16.mxu0 0
        %3440 = vmatpush1.bf16.msra.mxu0 %v3170
        %3441 = vmatprep.subr.bf16.mxu0 0
        %3442 = vmatpush1.bf16.msra.mxu0 %v3171
        %3443 = vmatprep.subr.bf16.mxu0 0
        %3444 = vmatpush1.bf16.msra.mxu0 %v3172
        %3445 = vmatprep.subr.bf16.mxu0 0
        %3446 = vmatpush1.bf16.msra.mxu0 %v3173
        %3447 = vmatprep.subr.bf16.mxu0 0
        %3448 = vmatpush1.bf16.msra.mxu0 %v3174
        %3449 = vmatprep.subr.bf16.mxu0 0
        %3450 = vmatpush1.bf16.msra.mxu0 %v3175
        %3451 = vmatprep.subr.bf16.mxu0 0
        %3452 = vmatpush1.bf16.msra.mxu0 %v3176
        %3453 = vmatprep.subr.bf16.mxu0 0
        %3454 = vmatpush1.bf16.msra.mxu0 %v3177
        %3455 = vmatprep.subr.bf16.mxu0 0
        %3456 = vmatpush1.bf16.msra.mxu0 %v3178
        %3457 = vmatprep.subr.bf16.mxu0 0
        %3458 = vmatpush1.bf16.msra.mxu0 %v3179
        %3459 = vmatprep.subr.bf16.mxu0 0
        %3460 = vmatpush1.bf16.msra.mxu0 %v3180
        %3461 = vmatprep.subr.bf16.mxu0 0
        %3462 = vmatpush1.bf16.msra.mxu0 %v3181
        %3463 = vmatprep.mubr.bf16.mxu0 %v2938
        %3464 = vmatmul.mubr.bf16.gmra.mrb[0].mxu0 %v2937
        %v3465 = vpop.f32.mrb[0].mxu0
        %v3466 = vadd.f32 %v3305, %v3465
        %v3467 = vpop.f32.mrb[0].mxu0
        %v3468 = vpop.f32.mrb[0].mxu0
        %v3469 = vadd.f32 %v3308, %v3468
        %v3470 = vpop.f32.mrb[0].mxu0
        %3471 = vmatprep.mubr.bf16.mxu0 %v2943
        %3472 = vmatmul.mubr.bf16.gmra.mrb[0].mxu0 %v2942
        %v3473 = vpop.f32.mrb[0].mxu0
        %v3474 = vadd.f32 %v3313, %v3473
        %v3475 = vpop.f32.mrb[0].mxu0
        %v3476 = vpop.f32.mrb[0].mxu0
        %v3477 = vadd.f32 %v3316, %v3476
        %v3478 = vpop.f32.mrb[0].mxu0
        %3479 = vmatprep.mubr.bf16.mxu0 %v2947
        %3480 = vmatmul.mubr.bf16.gmra.mrb[0].mxu0 %v2946
        %v3481 = vpop.f32.mrb[0].mxu0
        %v3482 = vadd.f32 %v3321, %v3481
        %v3483 = vpop.f32.mrb[0].mxu0
        %v3484 = vpop.f32.mrb[0].mxu0
        %v3485 = vadd.f32 %v3324, %v3484
        %v3486 = vpop.f32.mrb[0].mxu0
        %3487 = vmatprep.mubr.bf16.mxu0 %v2951
        %3488 = vmatmul.mubr.bf16.gmra.mrb[0].mxu0 %v2950
        %v3489 = vpop.f32.mrb[0].mxu0
        %v3490 = vadd.f32 %v3329, %v3489
        %v3491 = vpop.f32.mrb[0].mxu0
        %v3492 = vpop.f32.mrb[0].mxu0
        %v3493 = vadd.f32 %v3332, %v3492
        %v3494 = vpop.f32.mrb[0].mxu0
        %3495 = vmatprep.mubr.bf16.mxu0 %v2955
        %3496 = vmatmul.mubr.bf16.gmra.mrb[0].mxu0 %v2954
        %v3497 = vpop.f32.mrb[0].mxu0
        %v3498 = vadd.f32 %v3337, %v3497
        %v3499 = vpop.f32.mrb[0].mxu0
        %v3500 = vpop.f32.mrb[0].mxu0
        %v3501 = vadd.f32 %v3340, %v3500
        %v3502 = vpop.f32.mrb[0].mxu0
        %3503 = vmatprep.mubr.bf16.mxu0 %v2959
        %3504 = vmatmul.mubr.bf16.gmra.mrb[0].mxu0 %v2958
        %v3505 = vpop.f32.mrb[0].mxu0
        %v3506 = vadd.f32 %v3345, %v3505
        %v3507 = vpop.f32.mrb[0].mxu0
        %v3508 = vpop.f32.mrb[0].mxu0
        %v3509 = vadd.f32 %v3348, %v3508
        %v3510 = vpop.f32.mrb[0].mxu0
        %3511 = vmatprep.mubr.bf16.mxu0 %v2963
        %3512 = vmatmul.mubr.bf16.gmra.mrb[0].mxu0 %v2962
        %v3513 = vpop.f32.mrb[0].mxu0
        %v3514 = vadd.f32 %v3353, %v3513
        %v3515 = vpop.f32.mrb[0].mxu0
        %v3516 = vpop.f32.mrb[0].mxu0
        %v3517 = vadd.f32 %v3356, %v3516
        %v3518 = vpop.f32.mrb[0].mxu0
        %3519 = vmatprep.mubr.bf16.mxu0 %v2967
        %3520 = vmatmul.mubr.bf16.gmra.mrb[0].mxu0 %v2966
        %v3521 = vpop.f32.mrb[0].mxu0
        %v3522 = vadd.f32 %v3361, %v3521
        %v3523 = vpop.f32.mrb[0].mxu0
        %v3524 = vpop.f32.mrb[0].mxu0
        %v3525 = vadd.f32 %v3364, %v3524
        %v3526 = vpop.f32.mrb[0].mxu0
        %3527 = vmatprep.mubr.bf16.mxu0 %v2971
        %3528 = vmatmul.mubr.bf16.gmra.mrb[0].mxu0 %v2970
        %v3529 = vpop.f32.mrb[0].mxu0
        %v3530 = vadd.f32 %v3369, %v3529
        %v3531 = vpop.f32.mrb[0].mxu0
        %v3532 = vpop.f32.mrb[0].mxu0
        %v3533 = vadd.f32 %v3372, %v3532
        %v3534 = vpop.f32.mrb[0].mxu0
        %3535 = vmatprep.mubr.bf16.mxu0 %v2975
        %3536 = vmatmul.mubr.bf16.gmra.mrb[0].mxu0 %v2974
        %v3537 = vpop.f32.mrb[0].mxu0
        %v3538 = vadd.f32 %v3377, %v3537
        %v3539 = vpop.f32.mrb[0].mxu0
        %v3540 = vpop.f32.mrb[0].mxu0
        %v3541 = vadd.f32 %v3380, %v3540
        %v3542 = vpop.f32.mrb[0].mxu0
        %3543 = vmatprep.mubr.bf16.mxu0 %v2979
        %3544 = vmatmul.mubr.bf16.gmra.mrb[0].mxu0 %v2978
        %v3545 = vpop.f32.mrb[0].mxu0
        %v3546 = vadd.f32 %v3385, %v3545
        %v3547 = vpop.f32.mrb[0].mxu0
        %v3548 = vpop.f32.mrb[0].mxu0
        %v3549 = vadd.f32 %v3388, %v3548
        %v3550 = vpop.f32.mrb[0].mxu0
        %3551 = vmatprep.mubr.bf16.mxu0 %v2983
        %3552 = vmatmul.mubr.bf16.gmra.mrb[0].mxu0 %v2982
        %v3553 = vpop.f32.mrb[0].mxu0
        %v3554 = vadd.f32 %v3393, %v3553
        %v3555 = vpop.f32.mrb[0].mxu0
        %v3556 = vpop.f32.mrb[0].mxu0
        %v3557 = vadd.f32 %v3396, %v3556
        %v3558 = vpop.f32.mrb[0].mxu0
        %3559 = vmatprep.mubr.bf16.mxu0 %v2987
        %3560 = vmatmul.mubr.bf16.gmra.mrb[0].mxu0 %v2986
        %v3561 = vpop.f32.mrb[0].mxu0
        %v3562 = vadd.f32 %v3401, %v3561
        %v3563 = vpop.f32.mrb[0].mxu0
        %v3564 = vpop.f32.mrb[0].mxu0
        %v3565 = vadd.f32 %v3404, %v3564
        %v3566 = vpop.f32.mrb[0].mxu0
        %3567 = vmatprep.mubr.bf16.mxu0 %v2991
        %3568 = vmatmul.mubr.bf16.gmra.mrb[0].mxu0 %v2990
        %v3569 = vpop.f32.mrb[0].mxu0
        %v3570 = vadd.f32 %v3409, %v3569
        %v3571 = vpop.f32.mrb[0].mxu0
        %v3572 = vpop.f32.mrb[0].mxu0
        %v3573 = vadd.f32 %v3412, %v3572
        %v3574 = vpop.f32.mrb[0].mxu0
        %3575 = vmatprep.mubr.bf16.mxu0 %v2995
        %3576 = vmatmul.mubr.bf16.gmra.mrb[0].mxu0 %v2994
        %v3577 = vpop.f32.mrb[0].mxu0
        %v3578 = vadd.f32 %v3417, %v3577
        %v3579 = vpop.f32.mrb[0].mxu0
        %v3580 = vpop.f32.mrb[0].mxu0
        %v3581 = vadd.f32 %v3420, %v3580
        %v3582 = vpop.f32.mrb[0].mxu0
        %3583 = vmatprep.mubr.bf16.mxu0 %v2935
        %3584 = vmatmul.mubr.bf16.gmra.mrb[0].mxu0 %v2998
        %v3585 = vpop.f32.mrb[0].mxu0
        %v3586 = vadd.f32 %v3425, %v3585
        %v3587 = vpop.f32.mrb[0].mxu0
        %v3588 = vpop.f32.mrb[0].mxu0
        %v3589 = vadd.f32 %v3428, %v3588
        %v3590 = vpop.f32.mrb[0].mxu0
        %3591 = vdwg.mxu0
        %3592 = vmatprep.subr.bf16.mxu0 0
        %3593 = vmatpush1.bf16.msra.mxu0 %v3182
        %3594 = vmatprep.subr.bf16.mxu0 0
        %3595 = vmatpush1.bf16.msra.mxu0 %v3183
        %3596 = vmatprep.subr.bf16.mxu0 0
        %3597 = vmatpush1.bf16.msra.mxu0 %v3184
        %3598 = vmatprep.subr.bf16.mxu0 0
        %3599 = vmatpush1.bf16.msra.mxu0 %v3185
        %3600 = vmatprep.subr.bf16.mxu0 0
        %3601 = vmatpush1.bf16.msra.mxu0 0
        %3602 = vmatprep.subr.bf16.mxu0 0
        %3603 = vmatpush1.bf16.msra.mxu0 0
        %3604 = vmatprep.subr.bf16.mxu0 0
        %3605 = vmatpush1.bf16.msra.mxu0 0
        %3606 = vmatprep.subr.bf16.mxu0 0
        %3607 = vmatpush1.bf16.msra.mxu0 0
        %3608 = vmatprep.subr.bf16.mxu0 0
        %3609 = vmatpush1.bf16.msra.mxu0 0
        %3610 = vmatprep.subr.bf16.mxu0 0
        %3611 = vmatpush1.bf16.msra.mxu0 0
        %3612 = vmatprep.subr.bf16.mxu0 0
        %3613 = vmatpush1.bf16.msra.mxu0 0
        %3614 = vmatprep.subr.bf16.mxu0 0
        %3615 = vmatpush1.bf16.msra.mxu0 0
        %3616 = vmatprep.subr.bf16.mxu0 0
        %3617 = vmatpush1.bf16.msra.mxu0 0
        %3618 = vmatprep.subr.bf16.mxu0 0
        %3619 = vmatpush1.bf16.msra.mxu0 0
        %3620 = vmatprep.subr.bf16.mxu0 0
        %3621 = vmatpush1.bf16.msra.mxu0 0
        %3622 = vmatprep.subr.bf16.mxu0 0
        %3623 = vmatpush1.bf16.msra.mxu0 0
        %3624 = vmatprep.mubr.bf16.mxu0 0
        %3625 = vmatmul.mubr.bf16.gmra.mrb[0].mxu0 %v3223
        %v3626 = vpop.f32.mrb[0].mxu0
        %v3627 = vadd.f32 %v3466, %v3626
        %v3628 = vpop.f32.mrb[0].mxu0
        %v3629 = vpop.f32.mrb[0].mxu0
        %v3630 = vadd.f32 %v3469, %v3629
        %v3631 = vpop.f32.mrb[0].mxu0
        %3632 = vmatprep.mubr.bf16.mxu0 0
        %3633 = vmatmul.mubr.bf16.gmra.mrb[0].mxu0 %v3226
        %v3634 = vpop.f32.mrb[0].mxu0
        %v3635 = vadd.f32 %v3474, %v3634
        %v3636 = vpop.f32.mrb[0].mxu0
        %v3637 = vpop.f32.mrb[0].mxu0
        %v3638 = vadd.f32 %v3477, %v3637
        %v3639 = vpop.f32.mrb[0].mxu0
        %3640 = vmatprep.mubr.bf16.mxu0 0
        %3641 = vmatmul.mubr.bf16.gmra.mrb[0].mxu0 %v3229
        %v3642 = vpop.f32.mrb[0].mxu0
        %v3643 = vadd.f32 %v3482, %v3642
        %v3644 = vpop.f32.mrb[0].mxu0
        %v3645 = vpop.f32.mrb[0].mxu0
        %v3646 = vadd.f32 %v3485, %v3645
        %v3647 = vpop.f32.mrb[0].mxu0
        %3648 = vmatprep.mubr.bf16.mxu0 0
        %3649 = vmatmul.mubr.bf16.gmra.mrb[0].mxu0 %v3232
        %v3650 = vpop.f32.mrb[0].mxu0
        %v3651 = vadd.f32 %v3490, %v3650
        %v3652 = vpop.f32.mrb[0].mxu0
        %v3653 = vpop.f32.mrb[0].mxu0
        %v3654 = vadd.f32 %v3493, %v3653
        %v3655 = vpop.f32.mrb[0].mxu0
        %3656 = vmatprep.mubr.bf16.mxu0 0
        %3657 = vmatmul.mubr.bf16.gmra.mrb[0].mxu0 %v3235
        %v3658 = vpop.f32.mrb[0].mxu0
        %v3659 = vadd.f32 %v3498, %v3658
        %v3660 = vpop.f32.mrb[0].mxu0
        %v3661 = vpop.f32.mrb[0].mxu0
        %v3662 = vadd.f32 %v3501, %v3661
        %v3663 = vpop.f32.mrb[0].mxu0
        %3664 = vmatprep.mubr.bf16.mxu0 0
        %3665 = vmatmul.mubr.bf16.gmra.mrb[0].mxu0 %v3238
        %v3666 = vpop.f32.mrb[0].mxu0
        %v3667 = vadd.f32 %v3506, %v3666
        %v3668 = vpop.f32.mrb[0].mxu0
        %v3669 = vpop.f32.mrb[0].mxu0
        %v3670 = vadd.f32 %v3509, %v3669
        %v3671 = vpop.f32.mrb[0].mxu0
        %3672 = vmatprep.mubr.bf16.mxu0 0
        %3673 = vmatmul.mubr.bf16.gmra.mrb[0].mxu0 %v3241
        %v3674 = vpop.f32.mrb[0].mxu0
        %v3675 = vadd.f32 %v3514, %v3674
        %v3676 = vpop.f32.mrb[0].mxu0
        %v3677 = vpop.f32.mrb[0].mxu0
        %v3678 = vadd.f32 %v3517, %v3677
        %v3679 = vpop.f32.mrb[0].mxu0
        %3680 = vmatprep.mubr.bf16.mxu0 0
        %3681 = vmatmul.mubr.bf16.gmra.mrb[0].mxu0 %v3244
        %v3682 = vpop.f32.mrb[0].mxu0
        %v3683 = vadd.f32 %v3522, %v3682
        %v3684 = vpop.f32.mrb[0].mxu0
        %v3685 = vpop.f32.mrb[0].mxu0
        %v3686 = vadd.f32 %v3525, %v3685
        %v3687 = vpop.f32.mrb[0].mxu0
        %3688 = vmatprep.mubr.bf16.mxu0 0
        %3689 = vmatmul.mubr.bf16.gmra.mrb[0].mxu0 %v3247
        %v3690 = vpop.f32.mrb[0].mxu0
        %v3691 = vadd.f32 %v3530, %v3690
        %v3692 = vpop.f32.mrb[0].mxu0
        %v3693 = vpop.f32.mrb[0].mxu0
        %v3694 = vadd.f32 %v3533, %v3693
        %v3695 = vpop.f32.mrb[0].mxu0
        %3696 = vmatprep.mubr.bf16.mxu0 0
        %3697 = vmatmul.mubr.bf16.gmra.mrb[0].mxu0 %v3250
        %v3698 = vpop.f32.mrb[0].mxu0
        %v3699 = vadd.f32 %v3538, %v3698
        %v3700 = vpop.f32.mrb[0].mxu0
        %v3701 = vpop.f32.mrb[0].mxu0
        %v3702 = vadd.f32 %v3541, %v3701
        %v3703 = vpop.f32.mrb[0].mxu0
        %3704 = vmatprep.mubr.bf16.mxu0 0
        %3705 = vmatmul.mubr.bf16.gmra.mrb[0].mxu0 %v3253
        %v3706 = vpop.f32.mrb[0].mxu0
        %v3707 = vadd.f32 %v3546, %v3706
        %v3708 = vpop.f32.mrb[0].mxu0
        %v3709 = vpop.f32.mrb[0].mxu0
        %v3710 = vadd.f32 %v3549, %v3709
        %v3711 = vpop.f32.mrb[0].mxu0
        %3712 = vmatprep.mubr.bf16.mxu0 0
        %3713 = vmatmul.mubr.bf16.gmra.mrb[0].mxu0 %v3256
        %v3714 = vpop.f32.mrb[0].mxu0
        %v3715 = vadd.f32 %v3554, %v3714
        %v3716 = vpop.f32.mrb[0].mxu0
        %v3717 = vpop.f32.mrb[0].mxu0
        %v3718 = vadd.f32 %v3557, %v3717
        %v3719 = vpop.f32.mrb[0].mxu0
        %3720 = vmatprep.mubr.bf16.mxu0 0
        %3721 = vmatmul.mubr.bf16.gmra.mrb[0].mxu0 %v3259
        %v3722 = vpop.f32.mrb[0].mxu0
        %v3723 = vadd.f32 %v3562, %v3722
        %v3724 = vpop.f32.mrb[0].mxu0
        %v3725 = vpop.f32.mrb[0].mxu0
        %v3726 = vadd.f32 %v3565, %v3725
        %v3727 = vpop.f32.mrb[0].mxu0
        %3728 = vmatprep.mubr.bf16.mxu0 0
        %3729 = vmatmul.mubr.bf16.gmra.mrb[0].mxu0 %v3262
        %v3730 = vpop.f32.mrb[0].mxu0
        %v3731 = vadd.f32 %v3570, %v3730
        %v3732 = vpop.f32.mrb[0].mxu0
        %v3733 = vpop.f32.mrb[0].mxu0
        %v3734 = vadd.f32 %v3573, %v3733
        %v3735 = vpop.f32.mrb[0].mxu0
        %3736 = vmatprep.mubr.bf16.mxu0 0
        %3737 = vmatmul.mubr.bf16.gmra.mrb[0].mxu0 %v3265
        %v3738 = vpop.f32.mrb[0].mxu0
        %v3739 = vadd.f32 %v3578, %v3738
        %v3740 = vpop.f32.mrb[0].mxu0
        %v3741 = vpop.f32.mrb[0].mxu0
        %v3742 = vadd.f32 %v3581, %v3741
        %v3743 = vpop.f32.mrb[0].mxu0
        %3744 = vmatprep.mubr.bf16.mxu0 0
        %3745 = vmatmul.mubr.bf16.gmra.mrb[0].mxu0 %v3268
        %v3746 = vpop.f32.mrb[0].mxu0
        %v3747 = vadd.f32 %v3586, %v3746
        %v3748 = vpop.f32.mrb[0].mxu0
        %v3749 = vpop.f32.mrb[0].mxu0
        %v3750 = vadd.f32 %v3589, %v3749
        %v3751 = vpop.f32.mrb[0].mxu0
        %3752 = vdwg.mxu0
        %v3753 = vmax.f32 %v3627, 0.0
        %v3754 = vmax.f32 %v3630, 0.0
        %v3755 = vmax.f32 %v3635, 0.0
        %v3756 = vmax.f32 %v3638, 0.0
        %v3757 = vmax.f32 %v3643, 0.0
        %v3758 = vmax.f32 %v3646, 0.0
        %v3759 = vmax.f32 %v3651, 0.0
        %v3760 = vmax.f32 %v3654, 0.0
        %v3761 = vmax.f32 %v3659, 0.0
        %v3762 = vmax.f32 %v3662, 0.0
        %v3763 = vmax.f32 %v3667, 0.0
        %v3764 = vmax.f32 %v3670, 0.0
        %v3765 = vmax.f32 %v3675, 0.0
        %v3766 = vmax.f32 %v3678, 0.0
        %v3767 = vmax.f32 %v3683, 0.0
        %v3768 = vmax.f32 %v3686, 0.0
        %v3769 = vmax.f32 %v3691, 0.0
        %v3770 = vmax.f32 %v3694, 0.0
        %v3771 = vmax.f32 %v3699, 0.0
        %v3772 = vmax.f32 %v3702, 0.0
        %v3773 = vmax.f32 %v3707, 0.0
        %v3774 = vmax.f32 %v3710, 0.0
        %v3775 = vmax.f32 %v3715, 0.0
        %v3776 = vmax.f32 %v3718, 0.0
        %v3777 = vmax.f32 %v3723, 0.0
        %v3778 = vmax.f32 %v3726, 0.0
        %v3779 = vmax.f32 %v3731, 0.0
        %v3780 = vmax.f32 %v3734, 0.0
        %v3781 = vmax.f32 %v3739, 0.0
        %v3782 = vmax.f32 %v3742, 0.0
        %v3783 = vmax.f32 %v3747, 0.0
        %v3784 = vmax.f32 %v3750, 0.0
        %v3817 = vrot.slane %v3753, 7
        %v3818 = vrot.slane %v3754, 7
        %v3819 = vsel %vm2079, %v3817, %v3818
        %v3820 = vrot.slane %v3755, 7
        %v3821 = vrot.slane %v3756, 7
        %v3822 = vsel %vm2079, %v3820, %v3821
        %v3823 = vrot.slane %v3757, 7
        %v3824 = vrot.slane %v3758, 7
        %v3825 = vsel %vm2079, %v3823, %v3824
        %v3826 = vrot.slane %v3759, 7
        %v3827 = vrot.slane %v3760, 7
        %v3828 = vsel %vm2079, %v3826, %v3827
        %v3829 = vrot.slane %v3761, 7
        %v3830 = vrot.slane %v3762, 7
        %v3831 = vsel %vm2079, %v3829, %v3830
        %v3832 = vrot.slane %v3763, 7
        %v3833 = vrot.slane %v3764, 7
        %v3834 = vsel %vm2079, %v3832, %v3833
        %v3835 = vrot.slane %v3765, 7
        %v3836 = vrot.slane %v3766, 7
        %v3837 = vsel %vm2079, %v3835, %v3836
        %v3838 = vrot.slane %v3767, 7
        %v3839 = vrot.slane %v3768, 7
        %v3840 = vsel %vm2079, %v3838, %v3839
        %v3841 = vrot.slane %v3769, 7
        %v3842 = vrot.slane %v3770, 7
        %v3843 = vsel %vm2079, %v3841, %v3842
        %v3844 = vrot.slane %v3771, 7
        %v3845 = vrot.slane %v3772, 7
        %v3846 = vsel %vm2079, %v3844, %v3845
        %v3847 = vrot.slane %v3773, 7
        %v3848 = vrot.slane %v3774, 7
        %v3849 = vsel %vm2079, %v3847, %v3848
        %v3850 = vrot.slane %v3775, 7
        %v3851 = vrot.slane %v3776, 7
        %v3852 = vsel %vm2079, %v3850, %v3851
        %v3853 = vrot.slane %v3777, 7
        %v3854 = vrot.slane %v3778, 7
        %v3855 = vsel %vm2079, %v3853, %v3854
        %v3856 = vrot.slane %v3779, 7
        %v3857 = vrot.slane %v3780, 7
        %v3858 = vsel %vm2079, %v3856, %v3857
        %v3859 = vrot.slane %v3781, 7
        %v3860 = vrot.slane %v3782, 7
        %v3861 = vsel %vm2079, %v3859, %v3860
        %v3862 = vrot.slane %v3783, 7
        %v3863 = vrot.slane %v3784, 7
        %v3864 = vsel %vm2079, %v3862, %v3863
        %v3913 = vsel %vm2079, 0.0, %v3817
        %v3914 = vsel %vm2079, 0.0, %v3820
        %v3915 = vsel %vm2079, 0.0, %v3823
        %v3916 = vsel %vm2079, 0.0, %v3826
        %v3917 = vsel %vm2079, 0.0, %v3829
        %v3918 = vsel %vm2079, 0.0, %v3832
        %v3919 = vsel %vm2079, 0.0, %v3835
        %v3920 = vsel %vm2079, 0.0, %v3838
        %v3921 = vsel %vm2079, 0.0, %v3841
        %v3922 = vsel %vm2079, 0.0, %v3844
        %v3923 = vsel %vm2079, 0.0, %v3847
        %v3924 = vsel %vm2079, 0.0, %v3850
        %v3925 = vsel %vm2079, 0.0, %v3853
        %v3926 = vsel %vm2079, 0.0, %v3856
        %v3927 = vsel %vm2079, 0.0, %v3859
        %v3928 = vsel %vm2079, 0.0, %v3862
        %v3929 = vsel %vm2079, %v3818, 0.0
        %v3930 = vsel %vm2079, %v3821, 0.0
        %v3931 = vsel %vm2079, %v3824, 0.0
        %v3932 = vsel %vm2079, %v3827, 0.0
        %v3933 = vsel %vm2079, %v3830, 0.0
        %v3934 = vsel %vm2079, %v3833, 0.0
        %v3935 = vsel %vm2079, %v3836, 0.0
        %v3936 = vsel %vm2079, %v3839, 0.0
        %v3937 = vsel %vm2079, %v3842, 0.0
        %v3938 = vsel %vm2079, %v3845, 0.0
        %v3939 = vsel %vm2079, %v3848, 0.0
        %v3940 = vsel %vm2079, %v3851, 0.0
        %v3941 = vsel %vm2079, %v3854, 0.0
        %v3942 = vsel %vm2079, %v3857, 0.0
        %v3943 = vsel %vm2079, %v3860, 0.0
        %v3944 = vsel %vm2079, %v3863, 0.0
        %s3945 = sadd.s32 %s2045, 2
        %s3946 = smul.u32 %s3945, 72
        %s3947 = smul.addr %s3946, 4
        %s3948 = scalar_lea.vmem %s1, %s3947
        %v3949 = vld [vmem:[%s3948] sm:$0xf]
        %v3950 = vld [vmem:[%s3948 + $0x4] sm:$0xf]
        %v3951 = vld [vmem:[%s3948 + $0x8] sm:$0xf]
        %v3952 = vld [vmem:[%s3948 + $0xc] sm:$0xf]
        %v3953 = vld [vmem:[%s3948 + $0x10] sm:$0xf]
        %v3954 = vld [vmem:[%s3948 + $0x14] sm:$0xf]
        %v3955 = vld [vmem:[%s3948 + $0x18] sm:$0xf]
        %v3956 = vld [vmem:[%s3948 + $0x1c] sm:$0xf]
        %v3957 = vld [vmem:[%s3948 + $0x20] sm:$0xf]
        %v3958 = vld [vmem:[%s3948 + $0x24] sm:$0xf]
        %v3959 = vld [vmem:[%s3948 + $0x28] sm:$0xf]
        %v3960 = vld [vmem:[%s3948 + $0x2c] sm:$0xf]
        %v3961 = vld [vmem:[%s3948 + $0x30] sm:$0xf]
        %v3962 = vld [vmem:[%s3948 + $0x34] sm:$0xf]
        %v3963 = vld [vmem:[%s3948 + $0x38] sm:$0xf]
        %v3964 = vld [vmem:[%s3948 + $0x3c] sm:$0xf]
        %v3965 = vld [vmem:[%s3948 + $0x40] sm:$0xf]
        %v3966 = vld [vmem:[%s3948 + $0x44] sm:$0xf]
        %v3967 = vld [vmem:[%s3948 + $0x48] sm:$0xf]
        %v3968 = vld [vmem:[%s3948 + $0x4c] sm:$0xf]
        %v3969 = vld [vmem:[%s3948 + $0x50] sm:$0xf]
        %v3970 = vld [vmem:[%s3948 + $0x54] sm:$0xf]
        %v3971 = vld [vmem:[%s3948 + $0x58] sm:$0xf]
        %v3972 = vld [vmem:[%s3948 + $0x5c] sm:$0xf]
        %v3973 = vld [vmem:[%s3948 + $0x60] sm:$0xf]
        %v3974 = vld [vmem:[%s3948 + $0x64] sm:$0xf]
        %v3975 = vld [vmem:[%s3948 + $0x68] sm:$0xf]
        %v3976 = vld [vmem:[%s3948 + $0x6c] sm:$0xf]
        %v3977 = vld [vmem:[%s3948 + $0x70] sm:$0xf]
        %v3978 = vld [vmem:[%s3948 + $0x74] sm:$0xf]
        %v3979 = vld [vmem:[%s3948 + $0x78] sm:$0xf]
        %v3980 = vld [vmem:[%s3948 + $0x7c] sm:$0xf]
        %v3981 = vld [vmem:[%s3948 + $0x80] sm:$0xf]
        %v3982 = vld [vmem:[%s3948 + $0x84] sm:$0xf]
        %v3983 = vld [vmem:[%s3948 + $0x88] sm:$0xf]
        %v3984 = vld [vmem:[%s3948 + $0x8c] sm:$0xf]
        %v3985 = vld [vmem:[%s3948 + $0x90] sm:$0xf]
        %v3986 = vld [vmem:[%s3948 + $0x94] sm:$0xf]
        %v3987 = vld [vmem:[%s3948 + $0x98] sm:$0xf]
        %v3988 = vld [vmem:[%s3948 + $0x9c] sm:$0xf]
        %v3989 = vld [vmem:[%s3948 + $0xa0] sm:$0xf]
        %v3990 = vld [vmem:[%s3948 + $0xa4] sm:$0xf]
        %v3991 = vld [vmem:[%s3948 + $0xa8] sm:$0xf]
        %v3992 = vld [vmem:[%s3948 + $0xac] sm:$0xf]
        %v3993 = vld [vmem:[%s3948 + $0xb0] sm:$0xf]
        %v3994 = vld [vmem:[%s3948 + $0xb4] sm:$0xf]
        %v3995 = vld [vmem:[%s3948 + $0xb8] sm:$0xf]
        %v3996 = vld [vmem:[%s3948 + $0xbc] sm:$0xf]
        %v3997 = vld [vmem:[%s3948 + $0xc0] sm:$0xf]
        %v3998 = vld [vmem:[%s3948 + $0xc4] sm:$0xf]
        %v3999 = vld [vmem:[%s3948 + $0xc8] sm:$0xf]
        %v4000 = vld [vmem:[%s3948 + $0xcc] sm:$0xf]
        %v4001 = vld [vmem:[%s3948 + $0xd0] sm:$0xf]
        %v4002 = vld [vmem:[%s3948 + $0xd4] sm:$0xf]
        %v4003 = vld [vmem:[%s3948 + $0xd8] sm:$0xf]
        %v4004 = vld [vmem:[%s3948 + $0xdc] sm:$0xf]
        %v4005 = vld [vmem:[%s3948 + $0xe0] sm:$0xf]
        %v4006 = vld [vmem:[%s3948 + $0xe4] sm:$0xf]
        %v4007 = vld [vmem:[%s3948 + $0xe8] sm:$0xf]
        %v4008 = vld [vmem:[%s3948 + $0xec] sm:$0xf]
        %v4009 = vld [vmem:[%s3948 + $0xf0] sm:$0xf]
        %v4010 = vld [vmem:[%s3948 + $0xf4] sm:$0xf]
        %v4011 = vld [vmem:[%s3948 + $0xf8] sm:$0xf]
        %v4012 = vld [vmem:[%s3948 + $0xfc] sm:$0xf]
        %v4013 = vld [vmem:[%s3948 + $0x100] sm:$0xf]
        %v4014 = vld [vmem:[%s3948 + $0x104] sm:$0xf]
        %v4015 = vld [vmem:[%s3948 + $0x108] sm:$0xf]
        %v4016 = vld [vmem:[%s3948 + $0x10c] sm:$0xf]
        %v4017 = vld [vmem:[%s3948 + $0x110] sm:$0xf]
        %v4018 = vld [vmem:[%s3948 + $0x114] sm:$0xf]
        %v4019 = vld [vmem:[%s3948 + $0x118] sm:$0xf]
        %v4020 = vld [vmem:[%s3948 + $0x11c] sm:$0xf]
        %s4021 = scalar_lea.vmem %s2, %s3945
        %v4022 = vld [vmem:[%s4021] sm:$0x1]
        %v4053 = vrot.slane %v3913, 1
        %v4054 = vrot.slane %v3819, 1
        %v4055 = vsel %vm435, %v4053, %v4054
        %v4056 = vrot.slane %v3929, 1
        %v4057 = vsel %vm435, %v4054, %v4056
        %v4058 = vrot.slane %v3914, 1
        %v4059 = vrot.slane %v3822, 1
        %v4060 = vsel %vm435, %v4058, %v4059
        %v4061 = vrot.slane %v3930, 1
        %v4062 = vsel %vm435, %v4059, %v4061
        %v4063 = vrot.slane %v3915, 1
        %v4064 = vrot.slane %v3825, 1
        %v4065 = vsel %vm435, %v4063, %v4064
        %v4066 = vrot.slane %v3931, 1
        %v4067 = vsel %vm435, %v4064, %v4066
        %v4068 = vrot.slane %v3916, 1
        %v4069 = vrot.slane %v3828, 1
        %v4070 = vsel %vm435, %v4068, %v4069
        %v4071 = vrot.slane %v3932, 1
        %v4072 = vsel %vm435, %v4069, %v4071
        %v4073 = vrot.slane %v3917, 1
        %v4074 = vrot.slane %v3831, 1
        %v4075 = vsel %vm435, %v4073, %v4074
        %v4076 = vrot.slane %v3933, 1
        %v4077 = vsel %vm435, %v4074, %v4076
        %v4078 = vrot.slane %v3918, 1
        %v4079 = vrot.slane %v3834, 1
        %v4080 = vsel %vm435, %v4078, %v4079
        %v4081 = vrot.slane %v3934, 1
        %v4082 = vsel %vm435, %v4079, %v4081
        %v4083 = vrot.slane %v3919, 1
        %v4084 = vrot.slane %v3837, 1
        %v4085 = vsel %vm435, %v4083, %v4084
        %v4086 = vrot.slane %v3935, 1
        %v4087 = vsel %vm435, %v4084, %v4086
        %v4088 = vrot.slane %v3920, 1
        %v4089 = vrot.slane %v3840, 1
        %v4090 = vsel %vm435, %v4088, %v4089
        %v4091 = vrot.slane %v3936, 1
        %v4092 = vsel %vm435, %v4089, %v4091
        %v4093 = vrot.slane %v3921, 1
        %v4094 = vrot.slane %v3843, 1
        %v4095 = vsel %vm435, %v4093, %v4094
        %v4096 = vrot.slane %v3937, 1
        %v4097 = vsel %vm435, %v4094, %v4096
        %v4098 = vrot.slane %v3922, 1
        %v4099 = vrot.slane %v3846, 1
        %v4100 = vsel %vm435, %v4098, %v4099
        %v4101 = vrot.slane %v3938, 1
        %v4102 = vsel %vm435, %v4099, %v4101
        %v4103 = vrot.slane %v3923, 1
        %v4104 = vrot.slane %v3849, 1
        %v4105 = vsel %vm435, %v4103, %v4104
        %v4106 = vrot.slane %v3939, 1
        %v4107 = vsel %vm435, %v4104, %v4106
        %v4108 = vrot.slane %v3924, 1
        %v4109 = vrot.slane %v3852, 1
        %v4110 = vsel %vm435, %v4108, %v4109
        %v4111 = vrot.slane %v3940, 1
        %v4112 = vsel %vm435, %v4109, %v4111
        %v4113 = vrot.slane %v3925, 1
        %v4114 = vrot.slane %v3855, 1
        %v4115 = vsel %vm435, %v4113, %v4114
        %v4116 = vrot.slane %v3941, 1
        %v4117 = vsel %vm435, %v4114, %v4116
        %v4118 = vrot.slane %v3926, 1
        %v4119 = vrot.slane %v3858, 1
        %v4120 = vsel %vm435, %v4118, %v4119
        %v4121 = vrot.slane %v3942, 1
        %v4122 = vsel %vm435, %v4119, %v4121
        %v4123 = vrot.slane %v3927, 1
        %v4124 = vrot.slane %v3861, 1
        %v4125 = vsel %vm435, %v4123, %v4124
        %v4126 = vrot.slane %v3943, 1
        %v4127 = vsel %vm435, %v4124, %v4126
        %4128 = vrot.lane.b32.xlu0 %v4055, 64
        %v4129 = vpop.permute.xlu0 %4128
        %4130 = vrot.lane.b32.xlu0 %v4057, 64
        %v4131 = vpop.permute.xlu0 %4130
        %4132 = vrot.lane.b32.xlu0 %v4060, 64
        %v4133 = vpop.permute.xlu0 %4132
        %4134 = vrot.lane.b32.xlu0 %v4062, 64
        %v4135 = vpop.permute.xlu0 %4134
        %4136 = vrot.lane.b32.xlu0 %v4065, 64
        %v4137 = vpop.permute.xlu0 %4136
        %4138 = vrot.lane.b32.xlu0 %v4067, 64
        %v4139 = vpop.permute.xlu0 %4138
        %4140 = vrot.lane.b32.xlu0 %v4070, 64
        %v4141 = vpop.permute.xlu0 %4140
        %4142 = vrot.lane.b32.xlu0 %v4072, 64
        %v4143 = vpop.permute.xlu0 %4142
        %4144 = vrot.lane.b32.xlu0 %v4075, 64
        %v4145 = vpop.permute.xlu0 %4144
        %4146 = vrot.lane.b32.xlu0 %v4077, 64
        %v4147 = vpop.permute.xlu0 %4146
        %4148 = vrot.lane.b32.xlu0 %v4080, 64
        %v4149 = vpop.permute.xlu0 %4148
        %4150 = vrot.lane.b32.xlu0 %v4082, 64
        %v4151 = vpop.permute.xlu0 %4150
        %4152 = vrot.lane.b32.xlu0 %v4085, 64
        %v4153 = vpop.permute.xlu0 %4152
        %4154 = vrot.lane.b32.xlu0 %v4087, 64
        %v4155 = vpop.permute.xlu0 %4154
        %4156 = vrot.lane.b32.xlu0 %v4090, 64
        %v4157 = vpop.permute.xlu0 %4156
        %4158 = vrot.lane.b32.xlu0 %v4092, 64
        %v4159 = vpop.permute.xlu0 %4158
        %4160 = vrot.lane.b32.xlu0 %v4095, 64
        %v4161 = vpop.permute.xlu0 %4160
        %4162 = vrot.lane.b32.xlu0 %v4097, 64
        %v4163 = vpop.permute.xlu0 %4162
        %4164 = vrot.lane.b32.xlu0 %v4100, 64
        %v4165 = vpop.permute.xlu0 %4164
        %4166 = vrot.lane.b32.xlu0 %v4102, 64
        %v4167 = vpop.permute.xlu0 %4166
        %4168 = vrot.lane.b32.xlu0 %v4105, 64
        %v4169 = vpop.permute.xlu0 %4168
        %4170 = vrot.lane.b32.xlu0 %v4107, 64
        %v4171 = vpop.permute.xlu0 %4170
        %4172 = vrot.lane.b32.xlu0 %v4110, 64
        %v4173 = vpop.permute.xlu0 %4172
        %4174 = vrot.lane.b32.xlu0 %v4112, 64
        %v4175 = vpop.permute.xlu0 %4174
        %4176 = vrot.lane.b32.xlu0 %v4115, 64
        %v4177 = vpop.permute.xlu0 %4176
        %4178 = vrot.lane.b32.xlu0 %v4117, 64
        %v4179 = vpop.permute.xlu0 %4178
        %4180 = vrot.lane.b32.xlu0 %v4120, 64
        %v4181 = vpop.permute.xlu0 %4180
        %4182 = vrot.lane.b32.xlu0 %v4122, 64
        %v4183 = vpop.permute.xlu0 %4182
        %4184 = vrot.lane.b32.xlu0 %v4125, 64
        %v4185 = vpop.permute.xlu0 %4184
        %4186 = vrot.lane.b32.xlu0 %v4127, 64
        %v4187 = vpop.permute.xlu0 %4186
        %v4218 = vrot.slane %v3913, 2
        %v4219 = vrot.slane %v3819, 2
        %v4220 = vsel %vm612, %v4218, %v4219
        %v4221 = vrot.slane %v3929, 2
        %v4222 = vsel %vm612, %v4219, %v4221
        %v4223 = vrot.slane %v3914, 2
        %v4224 = vrot.slane %v3822, 2
        %v4225 = vsel %vm612, %v4223, %v4224
        %v4226 = vrot.slane %v3930, 2
        %v4227 = vsel %vm612, %v4224, %v4226
        %v4228 = vrot.slane %v3915, 2
        %v4229 = vrot.slane %v3825, 2
        %v4230 = vsel %vm612, %v4228, %v4229
        %v4231 = vrot.slane %v3931, 2
        %v4232 = vsel %vm612, %v4229, %v4231
        %v4233 = vrot.slane %v3916, 2
        %v4234 = vrot.slane %v3828, 2
        %v4235 = vsel %vm612, %v4233, %v4234
        %v4236 = vrot.slane %v3932, 2
        %v4237 = vsel %vm612, %v4234, %v4236
        %v4238 = vrot.slane %v3917, 2
        %v4239 = vrot.slane %v3831, 2
        %v4240 = vsel %vm612, %v4238, %v4239
        %v4241 = vrot.slane %v3933, 2
        %v4242 = vsel %vm612, %v4239, %v4241
        %v4243 = vrot.slane %v3918, 2
        %v4244 = vrot.slane %v3834, 2
        %v4245 = vsel %vm612, %v4243, %v4244
        %v4246 = vrot.slane %v3934, 2
        %v4247 = vsel %vm612, %v4244, %v4246
        %v4248 = vrot.slane %v3919, 2
        %v4249 = vrot.slane %v3837, 2
        %v4250 = vsel %vm612, %v4248, %v4249
        %v4251 = vrot.slane %v3935, 2
        %v4252 = vsel %vm612, %v4249, %v4251
        %v4253 = vrot.slane %v3920, 2
        %v4254 = vrot.slane %v3840, 2
        %v4255 = vsel %vm612, %v4253, %v4254
        %v4256 = vrot.slane %v3936, 2
        %v4257 = vsel %vm612, %v4254, %v4256
        %v4258 = vrot.slane %v3921, 2
        %v4259 = vrot.slane %v3843, 2
        %v4260 = vsel %vm612, %v4258, %v4259
        %v4261 = vrot.slane %v3937, 2
        %v4262 = vsel %vm612, %v4259, %v4261
        %v4263 = vrot.slane %v3922, 2
        %v4264 = vrot.slane %v3846, 2
        %v4265 = vsel %vm612, %v4263, %v4264
        %v4266 = vrot.slane %v3938, 2
        %v4267 = vsel %vm612, %v4264, %v4266
        %v4268 = vrot.slane %v3923, 2
        %v4269 = vrot.slane %v3849, 2
        %v4270 = vsel %vm612, %v4268, %v4269
        %v4271 = vrot.slane %v3939, 2
        %v4272 = vsel %vm612, %v4269, %v4271
        %v4273 = vrot.slane %v3924, 2
        %v4274 = vrot.slane %v3852, 2
        %v4275 = vsel %vm612, %v4273, %v4274
        %v4276 = vrot.slane %v3940, 2
        %v4277 = vsel %vm612, %v4274, %v4276
        %v4278 = vrot.slane %v3925, 2
        %v4279 = vrot.slane %v3855, 2
        %v4280 = vsel %vm612, %v4278, %v4279
        %v4281 = vrot.slane %v3941, 2
        %v4282 = vsel %vm612, %v4279, %v4281
        %v4283 = vrot.slane %v3926, 2
        %v4284 = vrot.slane %v3858, 2
        %v4285 = vsel %vm612, %v4283, %v4284
        %v4286 = vrot.slane %v3942, 2
        %v4287 = vsel %vm612, %v4284, %v4286
        %v4288 = vrot.slane %v3927, 2
        %v4289 = vrot.slane %v3861, 2
        %v4290 = vsel %vm612, %v4288, %v4289
        %v4291 = vrot.slane %v3943, 2
        %v4292 = vsel %vm612, %v4289, %v4291
        %4324 = vrot.lane.b32.xlu0 %v3913, 64
        %v4325 = vpop.permute.xlu0 %4324
        %4326 = vrot.lane.b32.xlu0 %v3819, 64
        %v4327 = vpop.permute.xlu0 %4326
        %4328 = vrot.lane.b32.xlu0 %v3914, 64
        %v4329 = vpop.permute.xlu0 %4328
        %4330 = vrot.lane.b32.xlu0 %v3822, 64
        %v4331 = vpop.permute.xlu0 %4330
        %4332 = vrot.lane.b32.xlu0 %v3915, 64
        %v4333 = vpop.permute.xlu0 %4332
        %4334 = vrot.lane.b32.xlu0 %v3825, 64
        %v4335 = vpop.permute.xlu0 %4334
        %4336 = vrot.lane.b32.xlu0 %v3916, 64
        %v4337 = vpop.permute.xlu0 %4336
        %4338 = vrot.lane.b32.xlu0 %v3828, 64
        %v4339 = vpop.permute.xlu0 %4338
        %4340 = vrot.lane.b32.xlu0 %v3917, 64
        %v4341 = vpop.permute.xlu0 %4340
        %4342 = vrot.lane.b32.xlu0 %v3831, 64
        %v4343 = vpop.permute.xlu0 %4342
        %4344 = vrot.lane.b32.xlu0 %v3918, 64
        %v4345 = vpop.permute.xlu0 %4344
        %4346 = vrot.lane.b32.xlu0 %v3834, 64
        %v4347 = vpop.permute.xlu0 %4346
        %4348 = vrot.lane.b32.xlu0 %v3919, 64
        %v4349 = vpop.permute.xlu0 %4348
        %4350 = vrot.lane.b32.xlu0 %v3837, 64
        %v4351 = vpop.permute.xlu0 %4350
        %4352 = vrot.lane.b32.xlu0 %v3920, 64
        %v4353 = vpop.permute.xlu0 %4352
        %4354 = vrot.lane.b32.xlu0 %v3840, 64
        %v4355 = vpop.permute.xlu0 %4354
        %4356 = vrot.lane.b32.xlu0 %v3921, 64
        %v4357 = vpop.permute.xlu0 %4356
        %4358 = vrot.lane.b32.xlu0 %v3843, 64
        %v4359 = vpop.permute.xlu0 %4358
        %4360 = vrot.lane.b32.xlu0 %v3922, 64
        %v4361 = vpop.permute.xlu0 %4360
        %4362 = vrot.lane.b32.xlu0 %v3846, 64
        %v4363 = vpop.permute.xlu0 %4362
        %4364 = vrot.lane.b32.xlu0 %v3923, 64
        %v4365 = vpop.permute.xlu0 %4364
        %4366 = vrot.lane.b32.xlu0 %v3849, 64
        %v4367 = vpop.permute.xlu0 %4366
        %4368 = vrot.lane.b32.xlu0 %v3924, 64
        %v4369 = vpop.permute.xlu0 %4368
        %4370 = vrot.lane.b32.xlu0 %v3852, 64
        %v4371 = vpop.permute.xlu0 %4370
        %4372 = vrot.lane.b32.xlu0 %v3925, 64
        %v4373 = vpop.permute.xlu0 %4372
        %4374 = vrot.lane.b32.xlu0 %v3855, 64
        %v4375 = vpop.permute.xlu0 %4374
        %4376 = vrot.lane.b32.xlu0 %v3926, 64
        %v4377 = vpop.permute.xlu0 %4376
        %4378 = vrot.lane.b32.xlu0 %v3858, 64
        %v4379 = vpop.permute.xlu0 %4378
        %4380 = vrot.lane.b32.xlu0 %v3927, 64
        %v4381 = vpop.permute.xlu0 %4380
        %4382 = vrot.lane.b32.xlu0 %v3861, 64
        %v4383 = vpop.permute.xlu0 %4382
        %4384 = vrot.lane.b32.xlu0 %v3928, 64
        %v4385 = vpop.permute.xlu0 %4384
        %4386 = vrot.lane.b32.xlu0 %v3864, 64
        %v4387 = vpop.permute.xlu0 %4386
        %v4421 = vrot.slane %v3928, 1
        %v4422 = vrot.slane %v3864, 1
        %v4423 = vsel %vm435, %v4421, %v4422
        %v4424 = vrot.slane %v3944, 1
        %v4425 = vsel %vm435, %v4422, %v4424
        %v4458 = vrot.slane %v3928, 2
        %v4459 = vrot.slane %v3864, 2
        %v4460 = vsel %vm612, %v4458, %v4459
        %v4461 = vrot.slane %v3944, 2
        %v4462 = vsel %vm612, %v4459, %v4461
        %4463 = vrot.lane.b32.xlu0 %v4220, 64
        %v4464 = vpop.permute.xlu0 %4463
        %4465 = vrot.lane.b32.xlu0 %v4222, 64
        %v4466 = vpop.permute.xlu0 %4465
        %4467 = vrot.lane.b32.xlu0 %v4225, 64
        %v4468 = vpop.permute.xlu0 %4467
        %4469 = vrot.lane.b32.xlu0 %v4227, 64
        %v4470 = vpop.permute.xlu0 %4469
        %4471 = vrot.lane.b32.xlu0 %v4230, 64
        %v4472 = vpop.permute.xlu0 %4471
        %4473 = vrot.lane.b32.xlu0 %v4232, 64
        %v4474 = vpop.permute.xlu0 %4473
        %4475 = vrot.lane.b32.xlu0 %v4235, 64
        %v4476 = vpop.permute.xlu0 %4475
        %4477 = vrot.lane.b32.xlu0 %v4237, 64
        %v4478 = vpop.permute.xlu0 %4477
        %4479 = vrot.lane.b32.xlu0 %v4240, 64
        %v4480 = vpop.permute.xlu0 %4479
        %4481 = vrot.lane.b32.xlu0 %v4242, 64
        %v4482 = vpop.permute.xlu0 %4481
        %4483 = vrot.lane.b32.xlu0 %v4245, 64
        %v4484 = vpop.permute.xlu0 %4483
        %4485 = vrot.lane.b32.xlu0 %v4247, 64
        %v4486 = vpop.permute.xlu0 %4485
        %4487 = vrot.lane.b32.xlu0 %v4250, 64
        %v4488 = vpop.permute.xlu0 %4487
        %4489 = vrot.lane.b32.xlu0 %v4252, 64
        %v4490 = vpop.permute.xlu0 %4489
        %4491 = vrot.lane.b32.xlu0 %v4255, 64
        %v4492 = vpop.permute.xlu0 %4491
        %4493 = vrot.lane.b32.xlu0 %v4257, 64
        %v4494 = vpop.permute.xlu0 %4493
        %4495 = vrot.lane.b32.xlu0 %v4260, 64
        %v4496 = vpop.permute.xlu0 %4495
        %4497 = vrot.lane.b32.xlu0 %v4262, 64
        %v4498 = vpop.permute.xlu0 %4497
        %4499 = vrot.lane.b32.xlu0 %v4265, 64
        %v4500 = vpop.permute.xlu0 %4499
        %4501 = vrot.lane.b32.xlu0 %v4267, 64
        %v4502 = vpop.permute.xlu0 %4501
        %4503 = vrot.lane.b32.xlu0 %v4270, 64
        %v4504 = vpop.permute.xlu0 %4503
        %4505 = vrot.lane.b32.xlu0 %v4272, 64
        %v4506 = vpop.permute.xlu0 %4505
        %4507 = vrot.lane.b32.xlu0 %v4275, 64
        %v4508 = vpop.permute.xlu0 %4507
        %4509 = vrot.lane.b32.xlu0 %v4277, 64
        %v4510 = vpop.permute.xlu0 %4509
        %4511 = vrot.lane.b32.xlu0 %v4280, 64
        %v4512 = vpop.permute.xlu0 %4511
        %4513 = vrot.lane.b32.xlu0 %v4282, 64
        %v4514 = vpop.permute.xlu0 %4513
        %4515 = vrot.lane.b32.xlu0 %v4285, 64
        %v4516 = vpop.permute.xlu0 %4515
        %4517 = vrot.lane.b32.xlu0 %v4287, 64
        %v4518 = vpop.permute.xlu0 %4517
        %4519 = vrot.lane.b32.xlu0 %v4290, 64
        %v4520 = vpop.permute.xlu0 %4519
        %4521 = vrot.lane.b32.xlu0 %v4292, 64
        %v4522 = vpop.permute.xlu0 %4521
        %4523 = vrot.lane.b32.xlu0 %v4460, 64
        %v4524 = vpop.permute.xlu0 %4523
        %4525 = vrot.lane.b32.xlu0 %v4462, 64
        %v4526 = vpop.permute.xlu0 %4525
        %4559 = vrot.lane.b32.xlu0 %v4423, 64
        %v4560 = vpop.permute.xlu0 %4559
        %4561 = vrot.lane.b32.xlu0 %v4425, 64
        %v4562 = vpop.permute.xlu0 %4561
        %v4567 = vsel %vm991, %v3913, %v4129
        %v4568 = vsel %vm991, %v3819, %v4131
        %v4569 = vsel %vm991, %v3914, %v4133
        %v4570 = vsel %vm991, %v3822, %v4135
        %v4571 = vsel %vm991, %v3915, %v4137
        %v4572 = vsel %vm991, %v3825, %v4139
        %v4573 = vsel %vm991, %v3916, %v4141
        %v4574 = vsel %vm991, %v3828, %v4143
        %v4575 = vsel %vm991, %v3917, %v4145
        %v4576 = vsel %vm991, %v3831, %v4147
        %v4577 = vsel %vm991, %v3918, %v4149
        %v4578 = vsel %vm991, %v3834, %v4151
        %v4579 = vsel %vm991, %v3919, %v4153
        %v4580 = vsel %vm991, %v3837, %v4155
        %v4581 = vsel %vm991, %v3920, %v4157
        %v4582 = vsel %vm991, %v3840, %v4159
        %v4583 = vsel %vm991, %v3921, %v4161
        %v4584 = vsel %vm991, %v3843, %v4163
        %v4585 = vsel %vm991, %v3922, %v4165
        %v4586 = vsel %vm991, %v3846, %v4167
        %v4587 = vsel %vm991, %v3923, %v4169
        %v4588 = vsel %vm991, %v3849, %v4171
        %v4589 = vsel %vm991, %v3924, %v4173
        %v4590 = vsel %vm991, %v3852, %v4175
        %v4591 = vsel %vm991, %v3925, %v4177
        %v4592 = vsel %vm991, %v3855, %v4179
        %v4593 = vsel %vm991, %v3926, %v4181
        %v4594 = vsel %vm991, %v3858, %v4183
        %v4595 = vsel %vm991, %v3927, %v4185
        %v4596 = vsel %vm991, %v3861, %v4187
        %v4597 = vsel %vm991, %v2487, %v4325
        %v4598 = vsel %vm991, %v2487, %v4327
        %v4599 = vsel %vm991, %v4220, %v4329
        %v4600 = vsel %vm991, %v4222, %v4331
        %v4601 = vsel %vm991, %v4225, %v4333
        %v4602 = vsel %vm991, %v4227, %v4335
        %v4603 = vsel %vm991, %v4230, %v4337
        %v4604 = vsel %vm991, %v4232, %v4339
        %v4605 = vsel %vm991, %v4235, %v4341
        %v4606 = vsel %vm991, %v4237, %v4343
        %v4607 = vsel %vm991, %v4240, %v4345
        %v4608 = vsel %vm991, %v4242, %v4347
        %v4609 = vsel %vm991, %v4245, %v4349
        %v4610 = vsel %vm991, %v4247, %v4351
        %v4611 = vsel %vm991, %v4250, %v4353
        %v4612 = vsel %vm991, %v4252, %v4355
        %v4613 = vsel %vm991, %v4255, %v4357
        %v4614 = vsel %vm991, %v4257, %v4359
        %v4615 = vsel %vm991, %v4260, %v4361
        %v4616 = vsel %vm991, %v4262, %v4363
        %v4617 = vsel %vm991, %v4265, %v4365
        %v4618 = vsel %vm991, %v4267, %v4367
        %v4619 = vsel %vm991, %v4270, %v4369
        %v4620 = vsel %vm991, %v4272, %v4371
        %v4621 = vsel %vm991, %v4275, %v4373
        %v4622 = vsel %vm991, %v4277, %v4375
        %v4623 = vsel %vm991, %v4280, %v4377
        %v4624 = vsel %vm991, %v4282, %v4379
        %v4625 = vsel %vm991, %v4285, %v4381
        %v4626 = vsel %vm991, %v4287, %v4383
        %v4627 = vsel %vm991, %v4290, %v4385
        %v4628 = vsel %vm991, %v4292, %v4387
        %v4629 = vsel %vm991, %v4055, %v4464
        %v4630 = vsel %vm991, %v4057, %v4466
        %v4631 = vsel %vm991, %v4060, %v4468
        %v4632 = vsel %vm991, %v4062, %v4470
        %v4633 = vsel %vm991, %v4065, %v4472
        %v4634 = vsel %vm991, %v4067, %v4474
        %v4635 = vsel %vm991, %v4070, %v4476
        %v4636 = vsel %vm991, %v4072, %v4478
        %v4637 = vsel %vm991, %v4075, %v4480
        %v4638 = vsel %vm991, %v4077, %v4482
        %v4639 = vsel %vm991, %v4080, %v4484
        %v4640 = vsel %vm991, %v4082, %v4486
        %v4641 = vsel %vm991, %v4085, %v4488
        %v4642 = vsel %vm991, %v4087, %v4490
        %v4643 = vsel %vm991, %v4090, %v4492
        %v4644 = vsel %vm991, %v4092, %v4494
        %v4645 = vsel %vm991, %v4095, %v4496
        %v4646 = vsel %vm991, %v4097, %v4498
        %v4647 = vsel %vm991, %v4100, %v4500
        %v4648 = vsel %vm991, %v4102, %v4502
        %v4649 = vsel %vm991, %v4105, %v4504
        %v4650 = vsel %vm991, %v4107, %v4506
        %v4651 = vsel %vm991, %v4110, %v4508
        %v4652 = vsel %vm991, %v4112, %v4510
        %v4653 = vsel %vm991, %v4115, %v4512
        %v4654 = vsel %vm991, %v4117, %v4514
        %v4655 = vsel %vm991, %v4120, %v4516
        %v4656 = vsel %vm991, %v4122, %v4518
        %v4657 = vsel %vm991, %v4125, %v4520
        %v4658 = vsel %vm991, %v4127, %v4522
        %v4659 = vsel %vm991, %v4423, %v4524
        %v4660 = vsel %vm991, %v4425, %v4526
        %v4661 = vsel %vm991, %v3928, %v4560
        %v4662 = vsel %vm991, %v3864, %v4562
        %v4663 = vpack.c.bf16 %v4598, %v4597
        %v4664 = vpack.c.bf16 %v4630, %v4629
        %v4665 = vpack.c.bf16 %v4570, %v4569
        %v4666 = vpack.c.bf16 %v4227, %v4225
        %v4667 = vpack.c.bf16 %v4568, %v4567
        %v4668 = vpack.c.bf16 %v4600, %v4599
        %v4669 = vpack.c.bf16 %v4632, %v4631
        %v4670 = vpack.c.bf16 %v4572, %v4571
        %v4671 = vpack.c.bf16 %v4232, %v4230
        %v4672 = vpack.c.bf16 %v4602, %v4601
        %v4673 = vpack.c.bf16 %v4634, %v4633
        %v4674 = vpack.c.bf16 %v4574, %v4573
        %v4675 = vpack.c.bf16 %v4237, %v4235
        %v4676 = vpack.c.bf16 %v4604, %v4603
        %v4677 = vpack.c.bf16 %v4636, %v4635
        %v4678 = vpack.c.bf16 %v4576, %v4575
        %v4679 = vpack.c.bf16 %v4242, %v4240
        %v4680 = vpack.c.bf16 %v4606, %v4605
        %v4681 = vpack.c.bf16 %v4638, %v4637
        %v4682 = vpack.c.bf16 %v4578, %v4577
        %v4683 = vpack.c.bf16 %v4247, %v4245
        %v4684 = vpack.c.bf16 %v4608, %v4607
        %v4685 = vpack.c.bf16 %v4640, %v4639
        %v4686 = vpack.c.bf16 %v4580, %v4579
        %v4687 = vpack.c.bf16 %v4252, %v4250
        %v4688 = vpack.c.bf16 %v4610, %v4609
        %v4689 = vpack.c.bf16 %v4642, %v4641
        %v4690 = vpack.c.bf16 %v4582, %v4581
        %v4691 = vpack.c.bf16 %v4257, %v4255
        %v4692 = vpack.c.bf16 %v4612, %v4611
        %v4693 = vpack.c.bf16 %v4644, %v4643
        %v4694 = vpack.c.bf16 %v4584, %v4583
        %v4695 = vpack.c.bf16 %v4262, %v4260
        %v4696 = vpack.c.bf16 %v4614, %v4613
        %v4697 = vpack.c.bf16 %v4646, %v4645
        %v4698 = vpack.c.bf16 %v4586, %v4585
        %v4699 = vpack.c.bf16 %v4267, %v4265
        %v4700 = vpack.c.bf16 %v4616, %v4615
        %v4701 = vpack.c.bf16 %v4648, %v4647
        %v4702 = vpack.c.bf16 %v4588, %v4587
        %v4703 = vpack.c.bf16 %v4272, %v4270
        %v4704 = vpack.c.bf16 %v4618, %v4617
        %v4705 = vpack.c.bf16 %v4650, %v4649
        %v4706 = vpack.c.bf16 %v4590, %v4589
        %v4707 = vpack.c.bf16 %v4277, %v4275
        %v4708 = vpack.c.bf16 %v4620, %v4619
        %v4709 = vpack.c.bf16 %v4652, %v4651
        %v4710 = vpack.c.bf16 %v4592, %v4591
        %v4711 = vpack.c.bf16 %v4282, %v4280
        %v4712 = vpack.c.bf16 %v4622, %v4621
        %v4713 = vpack.c.bf16 %v4654, %v4653
        %v4714 = vpack.c.bf16 %v4594, %v4593
        %v4715 = vpack.c.bf16 %v4287, %v4285
        %v4716 = vpack.c.bf16 %v4624, %v4623
        %v4717 = vpack.c.bf16 %v4656, %v4655
        %v4718 = vpack.c.bf16 %v4596, %v4595
        %v4719 = vpack.c.bf16 %v4292, %v4290
        %v4720 = vpack.c.bf16 %v4626, %v4625
        %v4721 = vpack.c.bf16 %v4658, %v4657
        %v4722 = vpack.c.bf16 %v4662, %v4661
        %v4723 = vpack.c.bf16 %v4462, %v4460
        %v4724 = vpack.c.bf16 %v4628, %v4627
        %v4725 = vpack.c.bf16 %v4660, %v4659
        %v4727 = vlaneseq
        %v4728 = vshrl.u32 %v4727, 7
        %v4729 = vsub.s32 0, %v4728
        %v4730 = vrot.slane %v4022, %v4729
        %v4804 = vunpack.c.l.b16 %v3949
        %v4805 = vunpack.c.l.b16 %v3950
        %v4806 = vunpack.c.l.b16 %v3951
        %v4807 = vunpack.c.l.b16 %v3952
        %v4808 = vunpack.c.l.b16 %v3953
        %v4809 = vunpack.c.l.b16 %v3954
        %v4810 = vunpack.c.l.b16 %v3955
        %v4811 = vunpack.c.l.b16 %v3956
        %v4812 = vunpack.c.l.b16 %v3957
        %v4813 = vunpack.c.l.b16 %v3958
        %v4814 = vunpack.c.l.b16 %v3959
        %v4815 = vunpack.c.l.b16 %v3960
        %v4816 = vunpack.c.l.b16 %v3961
        %v4817 = vunpack.c.l.b16 %v3962
        %v4818 = vunpack.c.l.b16 %v3963
        %v4819 = vunpack.c.l.b16 %v3964
        %v4820 = vunpack.c.l.b16 %v3965
        %v4821 = vunpack.c.l.b16 %v3966
        %v4822 = vunpack.c.l.b16 %v3967
        %v4823 = vunpack.c.l.b16 %v3968
        %v4824 = vunpack.c.l.b16 %v3969
        %v4825 = vunpack.c.l.b16 %v3970
        %v4826 = vunpack.c.l.b16 %v3971
        %v4827 = vunpack.c.l.b16 %v3972
        %v4828 = vunpack.c.l.b16 %v3973
        %v4829 = vunpack.c.l.b16 %v3974
        %v4830 = vunpack.c.l.b16 %v3975
        %v4831 = vunpack.c.l.b16 %v3976
        %v4832 = vunpack.c.l.b16 %v3977
        %v4833 = vunpack.c.l.b16 %v3978
        %v4834 = vunpack.c.l.b16 %v3979
        %v4835 = vunpack.c.l.b16 %v3980
        %v4836 = vunpack.c.l.b16 %v3981
        %v4837 = vunpack.c.l.b16 %v3982
        %v4838 = vunpack.c.l.b16 %v3983
        %v4839 = vunpack.c.l.b16 %v3984
        %v4840 = vunpack.c.l.b16 %v3985
        %v4841 = vunpack.c.l.b16 %v3986
        %v4842 = vunpack.c.l.b16 %v3987
        %v4843 = vunpack.c.l.b16 %v3988
        %v4844 = vunpack.c.l.b16 %v3989
        %v4845 = vunpack.c.l.b16 %v3990
        %v4846 = vunpack.c.l.b16 %v3991
        %v4847 = vunpack.c.l.b16 %v3992
        %v4848 = vunpack.c.l.b16 %v3993
        %v4849 = vunpack.c.l.b16 %v3994
        %v4850 = vunpack.c.l.b16 %v3995
        %v4851 = vunpack.c.l.b16 %v3996
        %v4852 = vunpack.c.l.b16 %v3997
        %v4853 = vunpack.c.l.b16 %v3998
        %v4854 = vunpack.c.l.b16 %v3999
        %v4855 = vunpack.c.l.b16 %v4000
        %v4856 = vunpack.c.l.b16 %v4001
        %v4857 = vunpack.c.l.b16 %v4002
        %v4858 = vunpack.c.l.b16 %v4003
        %v4859 = vunpack.c.l.b16 %v4004
        %v4860 = vunpack.c.l.b16 %v4005
        %v4861 = vunpack.c.l.b16 %v4006
        %v4862 = vunpack.c.l.b16 %v4007
        %v4863 = vunpack.c.l.b16 %v4008
        %v4864 = vunpack.c.l.b16 %v4009
        %v4865 = vunpack.c.l.b16 %v4010
        %v4866 = vunpack.c.l.b16 %v4011
        %v4867 = vunpack.c.l.b16 %v4012
        %v4868 = vunpack.c.l.b16 %v4013
        %v4869 = vunpack.c.l.b16 %v4014
        %v4870 = vunpack.c.l.b16 %v4015
        %v4871 = vunpack.c.l.b16 %v4016
        %v4872 = vunpack.c.l.b16 %v4017
        %v4873 = vunpack.c.l.b16 %v4018
        %v4874 = vunpack.c.l.b16 %v4019
        %v4875 = vunpack.c.l.b16 %v4020
        %v4876 = vpack.c.b16 %v4805, %v4804
        %v4877 = vpack.c.b16 %v4807, %v4806
        %v4878 = vpack.c.b16 %v4809, %v4808
        %v4879 = vpack.c.b16 %v4811, %v4810
        %v4880 = vpack.c.b16 %v4813, %v4812
        %v4881 = vpack.c.b16 %v4815, %v4814
        %v4882 = vpack.c.b16 %v4817, %v4816
        %v4883 = vpack.c.b16 %v4819, %v4818
        %v4884 = vpack.c.b16 %v4821, %v4820
        %v4885 = vpack.c.b16 %v4823, %v4822
        %v4886 = vpack.c.b16 %v4825, %v4824
        %v4887 = vpack.c.b16 %v4827, %v4826
        %v4888 = vpack.c.b16 %v4829, %v4828
        %v4889 = vpack.c.b16 %v4831, %v4830
        %v4890 = vpack.c.b16 %v4833, %v4832
        %v4891 = vpack.c.b16 %v4835, %v4834
        %v4892 = vpack.c.b16 %v4837, %v4836
        %v4893 = vpack.c.b16 %v4839, %v4838
        %v4894 = vpack.c.b16 %v4841, %v4840
        %v4895 = vpack.c.b16 %v4843, %v4842
        %v4896 = vpack.c.b16 %v4845, %v4844
        %v4897 = vpack.c.b16 %v4847, %v4846
        %v4898 = vpack.c.b16 %v4849, %v4848
        %v4899 = vpack.c.b16 %v4851, %v4850
        %v4900 = vpack.c.b16 %v4853, %v4852
        %v4901 = vpack.c.b16 %v4855, %v4854
        %v4902 = vpack.c.b16 %v4857, %v4856
        %v4903 = vpack.c.b16 %v4859, %v4858
        %v4904 = vpack.c.b16 %v4861, %v4860
        %v4905 = vpack.c.b16 %v4863, %v4862
        %v4906 = vpack.c.b16 %v4865, %v4864
        %v4907 = vpack.c.b16 %v4867, %v4866
        %v4908 = vpack.c.b16 %v4869, %v4868
        %v4909 = vpack.c.b16 %v4871, %v4870
        %v4910 = vpack.c.b16 %v4873, %v4872
        %v4911 = vpack.c.b16 %v4875, %v4874
        %v4949 = vsel %vm991, %v4666, 0
        %v4952 = vsel %vm991, %v4671, 0
        %v4955 = vsel %vm991, %v4675, 0
        %v4958 = vsel %vm991, %v4679, 0
        %v4961 = vsel %vm991, %v4683, 0
        %v4964 = vsel %vm991, %v4687, 0
        %v4967 = vsel %vm991, %v4691, 0
        %v4970 = vsel %vm991, %v4695, 0
        %v4973 = vsel %vm991, %v4699, 0
        %v4976 = vsel %vm991, %v4703, 0
        %v4979 = vsel %vm991, %v4707, 0
        %v4982 = vsel %vm991, %v4711, 0
        %v4985 = vsel %vm991, %v4715, 0
        %v4988 = vsel %vm991, %v4719, 0
        %v4991 = vsel %vm991, %v4723, 0
        %4993 = vmatprep.subr.bf16.mxu0 0
        %4994 = vmatpush1.bf16.msra.mxu0 %v4876
        %4995 = vmatprep.subr.bf16.mxu0 0
        %4996 = vmatpush1.bf16.msra.mxu0 %v4877
        %4997 = vmatprep.subr.bf16.mxu0 0
        %4998 = vmatpush1.bf16.msra.mxu0 %v4878
        %4999 = vmatprep.subr.bf16.mxu0 0
        %5000 = vmatpush1.bf16.msra.mxu0 %v4879
        %5001 = vmatprep.subr.bf16.mxu0 0
        %5002 = vmatpush1.bf16.msra.mxu0 %v4880
        %5003 = vmatprep.subr.bf16.mxu0 0
        %5004 = vmatpush1.bf16.msra.mxu0 %v4881
        %5005 = vmatprep.subr.bf16.mxu0 0
        %5006 = vmatpush1.bf16.msra.mxu0 %v4882
        %5007 = vmatprep.subr.bf16.mxu0 0
        %5008 = vmatpush1.bf16.msra.mxu0 %v4883
        %5009 = vmatprep.subr.bf16.mxu0 0
        %5010 = vmatpush1.bf16.msra.mxu0 %v4884
        %5011 = vmatprep.subr.bf16.mxu0 0
        %5012 = vmatpush1.bf16.msra.mxu0 %v4885
        %5013 = vmatprep.subr.bf16.mxu0 0
        %5014 = vmatpush1.bf16.msra.mxu0 %v4886
        %5015 = vmatprep.subr.bf16.mxu0 0
        %5016 = vmatpush1.bf16.msra.mxu0 %v4887
        %5017 = vmatprep.subr.bf16.mxu0 0
        %5018 = vmatpush1.bf16.msra.mxu0 %v4888
        %5019 = vmatprep.subr.bf16.mxu0 0
        %5020 = vmatpush1.bf16.msra.mxu0 %v4889
        %5021 = vmatprep.subr.bf16.mxu0 0
        %5022 = vmatpush1.bf16.msra.mxu0 %v4890
        %5023 = vmatprep.subr.bf16.mxu0 0
        %5024 = vmatpush1.bf16.msra.mxu0 %v4891
        %5025 = vmatprep.mubr.bf16.mxu0 %v4663
        %5026 = vmatmul.mubr.bf16.gmra.mrb[0].mxu0 %v2935
        %v5027 = vpop.f32.mrb[0].mxu0
        %v5028 = vadd.f32 %v4730, %v5027
        %v5029 = vpop.f32.mrb[0].mxu0
        %v5030 = vpop.f32.mrb[0].mxu0
        %v5031 = vadd.f32 %v4730, %v5030
        %v5032 = vpop.f32.mrb[0].mxu0
        %5033 = vmatprep.mubr.bf16.mxu0 %v4668
        %5034 = vmatmul.mubr.bf16.gmra.mrb[0].mxu0 %v4667
        %v5035 = vpop.f32.mrb[0].mxu0
        %v5036 = vadd.f32 %v4730, %v5035
        %v5037 = vpop.f32.mrb[0].mxu0
        %v5038 = vpop.f32.mrb[0].mxu0
        %v5039 = vadd.f32 %v4730, %v5038
        %v5040 = vpop.f32.mrb[0].mxu0
        %5041 = vmatprep.mubr.bf16.mxu0 %v4672
        %5042 = vmatmul.mubr.bf16.gmra.mrb[0].mxu0 %v4665
        %v5043 = vpop.f32.mrb[0].mxu0
        %v5044 = vadd.f32 %v4730, %v5043
        %v5045 = vpop.f32.mrb[0].mxu0
        %v5046 = vpop.f32.mrb[0].mxu0
        %v5047 = vadd.f32 %v4730, %v5046
        %v5048 = vpop.f32.mrb[0].mxu0
        %5049 = vmatprep.mubr.bf16.mxu0 %v4676
        %5050 = vmatmul.mubr.bf16.gmra.mrb[0].mxu0 %v4670
        %v5051 = vpop.f32.mrb[0].mxu0
        %v5052 = vadd.f32 %v4730, %v5051
        %v5053 = vpop.f32.mrb[0].mxu0
        %v5054 = vpop.f32.mrb[0].mxu0
        %v5055 = vadd.f32 %v4730, %v5054
        %v5056 = vpop.f32.mrb[0].mxu0
        %5057 = vmatprep.mubr.bf16.mxu0 %v4680
        %5058 = vmatmul.mubr.bf16.gmra.mrb[0].mxu0 %v4674
        %v5059 = vpop.f32.mrb[0].mxu0
        %v5060 = vadd.f32 %v4730, %v5059
        %v5061 = vpop.f32.mrb[0].mxu0
        %v5062 = vpop.f32.mrb[0].mxu0
        %v5063 = vadd.f32 %v4730, %v5062
        %v5064 = vpop.f32.mrb[0].mxu0
        %5065 = vmatprep.mubr.bf16.mxu0 %v4684
        %5066 = vmatmul.mubr.bf16.gmra.mrb[0].mxu0 %v4678
        %v5067 = vpop.f32.mrb[0].mxu0
        %v5068 = vadd.f32 %v4730, %v5067
        %v5069 = vpop.f32.mrb[0].mxu0
        %v5070 = vpop.f32.mrb[0].mxu0
        %v5071 = vadd.f32 %v4730, %v5070
        %v5072 = vpop.f32.mrb[0].mxu0
        %5073 = vmatprep.mubr.bf16.mxu0 %v4688
        %5074 = vmatmul.mubr.bf16.gmra.mrb[0].mxu0 %v4682
        %v5075 = vpop.f32.mrb[0].mxu0
        %v5076 = vadd.f32 %v4730, %v5075
        %v5077 = vpop.f32.mrb[0].mxu0
        %v5078 = vpop.f32.mrb[0].mxu0
        %v5079 = vadd.f32 %v4730, %v5078
        %v5080 = vpop.f32.mrb[0].mxu0
        %5081 = vmatprep.mubr.bf16.mxu0 %v4692
        %5082 = vmatmul.mubr.bf16.gmra.mrb[0].mxu0 %v4686
        %v5083 = vpop.f32.mrb[0].mxu0
        %v5084 = vadd.f32 %v4730, %v5083
        %v5085 = vpop.f32.mrb[0].mxu0
        %v5086 = vpop.f32.mrb[0].mxu0
        %v5087 = vadd.f32 %v4730, %v5086
        %v5088 = vpop.f32.mrb[0].mxu0
        %5089 = vmatprep.mubr.bf16.mxu0 %v4696
        %5090 = vmatmul.mubr.bf16.gmra.mrb[0].mxu0 %v4690
        %v5091 = vpop.f32.mrb[0].mxu0
        %v5092 = vadd.f32 %v4730, %v5091
        %v5093 = vpop.f32.mrb[0].mxu0
        %v5094 = vpop.f32.mrb[0].mxu0
        %v5095 = vadd.f32 %v4730, %v5094
        %v5096 = vpop.f32.mrb[0].mxu0
        %5097 = vmatprep.mubr.bf16.mxu0 %v4700
        %5098 = vmatmul.mubr.bf16.gmra.mrb[0].mxu0 %v4694
        %v5099 = vpop.f32.mrb[0].mxu0
        %v5100 = vadd.f32 %v4730, %v5099
        %v5101 = vpop.f32.mrb[0].mxu0
        %v5102 = vpop.f32.mrb[0].mxu0
        %v5103 = vadd.f32 %v4730, %v5102
        %v5104 = vpop.f32.mrb[0].mxu0
        %5105 = vmatprep.mubr.bf16.mxu0 %v4704
        %5106 = vmatmul.mubr.bf16.gmra.mrb[0].mxu0 %v4698
        %v5107 = vpop.f32.mrb[0].mxu0
        %v5108 = vadd.f32 %v4730, %v5107
        %v5109 = vpop.f32.mrb[0].mxu0
        %v5110 = vpop.f32.mrb[0].mxu0
        %v5111 = vadd.f32 %v4730, %v5110
        %v5112 = vpop.f32.mrb[0].mxu0
        %5113 = vmatprep.mubr.bf16.mxu0 %v4708
        %5114 = vmatmul.mubr.bf16.gmra.mrb[0].mxu0 %v4702
        %v5115 = vpop.f32.mrb[0].mxu0
        %v5116 = vadd.f32 %v4730, %v5115
        %v5117 = vpop.f32.mrb[0].mxu0
        %v5118 = vpop.f32.mrb[0].mxu0
        %v5119 = vadd.f32 %v4730, %v5118
        %v5120 = vpop.f32.mrb[0].mxu0
        %5121 = vmatprep.mubr.bf16.mxu0 %v4712
        %5122 = vmatmul.mubr.bf16.gmra.mrb[0].mxu0 %v4706
        %v5123 = vpop.f32.mrb[0].mxu0
        %v5124 = vadd.f32 %v4730, %v5123
        %v5125 = vpop.f32.mrb[0].mxu0
        %v5126 = vpop.f32.mrb[0].mxu0
        %v5127 = vadd.f32 %v4730, %v5126
        %v5128 = vpop.f32.mrb[0].mxu0
        %5129 = vmatprep.mubr.bf16.mxu0 %v4716
        %5130 = vmatmul.mubr.bf16.gmra.mrb[0].mxu0 %v4710
        %v5131 = vpop.f32.mrb[0].mxu0
        %v5132 = vadd.f32 %v4730, %v5131
        %v5133 = vpop.f32.mrb[0].mxu0
        %v5134 = vpop.f32.mrb[0].mxu0
        %v5135 = vadd.f32 %v4730, %v5134
        %v5136 = vpop.f32.mrb[0].mxu0
        %5137 = vmatprep.mubr.bf16.mxu0 %v4720
        %5138 = vmatmul.mubr.bf16.gmra.mrb[0].mxu0 %v4714
        %v5139 = vpop.f32.mrb[0].mxu0
        %v5140 = vadd.f32 %v4730, %v5139
        %v5141 = vpop.f32.mrb[0].mxu0
        %v5142 = vpop.f32.mrb[0].mxu0
        %v5143 = vadd.f32 %v4730, %v5142
        %v5144 = vpop.f32.mrb[0].mxu0
        %5145 = vmatprep.mubr.bf16.mxu0 %v4724
        %5146 = vmatmul.mubr.bf16.gmra.mrb[0].mxu0 %v4718
        %v5147 = vpop.f32.mrb[0].mxu0
        %v5148 = vadd.f32 %v4730, %v5147
        %v5149 = vpop.f32.mrb[0].mxu0
        %v5150 = vpop.f32.mrb[0].mxu0
        %v5151 = vadd.f32 %v4730, %v5150
        %v5152 = vpop.f32.mrb[0].mxu0
        %5153 = vdwg.mxu0
        %5154 = vmatprep.subr.bf16.mxu0 0
        %5155 = vmatpush1.bf16.msra.mxu0 %v4892
        %5156 = vmatprep.subr.bf16.mxu0 0
        %5157 = vmatpush1.bf16.msra.mxu0 %v4893
        %5158 = vmatprep.subr.bf16.mxu0 0
        %5159 = vmatpush1.bf16.msra.mxu0 %v4894
        %5160 = vmatprep.subr.bf16.mxu0 0
        %5161 = vmatpush1.bf16.msra.mxu0 %v4895
        %5162 = vmatprep.subr.bf16.mxu0 0
        %5163 = vmatpush1.bf16.msra.mxu0 %v4896
        %5164 = vmatprep.subr.bf16.mxu0 0
        %5165 = vmatpush1.bf16.msra.mxu0 %v4897
        %5166 = vmatprep.subr.bf16.mxu0 0
        %5167 = vmatpush1.bf16.msra.mxu0 %v4898
        %5168 = vmatprep.subr.bf16.mxu0 0
        %5169 = vmatpush1.bf16.msra.mxu0 %v4899
        %5170 = vmatprep.subr.bf16.mxu0 0
        %5171 = vmatpush1.bf16.msra.mxu0 %v4900
        %5172 = vmatprep.subr.bf16.mxu0 0
        %5173 = vmatpush1.bf16.msra.mxu0 %v4901
        %5174 = vmatprep.subr.bf16.mxu0 0
        %5175 = vmatpush1.bf16.msra.mxu0 %v4902
        %5176 = vmatprep.subr.bf16.mxu0 0
        %5177 = vmatpush1.bf16.msra.mxu0 %v4903
        %5178 = vmatprep.subr.bf16.mxu0 0
        %5179 = vmatpush1.bf16.msra.mxu0 %v4904
        %5180 = vmatprep.subr.bf16.mxu0 0
        %5181 = vmatpush1.bf16.msra.mxu0 %v4905
        %5182 = vmatprep.subr.bf16.mxu0 0
        %5183 = vmatpush1.bf16.msra.mxu0 %v4906
        %5184 = vmatprep.subr.bf16.mxu0 0
        %5185 = vmatpush1.bf16.msra.mxu0 %v4907
        %5186 = vmatprep.mubr.bf16.mxu0 %v4665
        %5187 = vmatmul.mubr.bf16.gmra.mrb[0].mxu0 %v4664
        %v5188 = vpop.f32.mrb[0].mxu0
        %v5189 = vadd.f32 %v5028, %v5188
        %v5190 = vpop.f32.mrb[0].mxu0
        %v5191 = vpop.f32.mrb[0].mxu0
        %v5192 = vadd.f32 %v5031, %v5191
        %v5193 = vpop.f32.mrb[0].mxu0
        %5194 = vmatprep.mubr.bf16.mxu0 %v4670
        %5195 = vmatmul.mubr.bf16.gmra.mrb[0].mxu0 %v4669
        %v5196 = vpop.f32.mrb[0].mxu0
        %v5197 = vadd.f32 %v5036, %v5196
        %v5198 = vpop.f32.mrb[0].mxu0
        %v5199 = vpop.f32.mrb[0].mxu0
        %v5200 = vadd.f32 %v5039, %v5199
        %v5201 = vpop.f32.mrb[0].mxu0
        %5202 = vmatprep.mubr.bf16.mxu0 %v4674
        %5203 = vmatmul.mubr.bf16.gmra.mrb[0].mxu0 %v4673
        %v5204 = vpop.f32.mrb[0].mxu0
        %v5205 = vadd.f32 %v5044, %v5204
        %v5206 = vpop.f32.mrb[0].mxu0
        %v5207 = vpop.f32.mrb[0].mxu0
        %v5208 = vadd.f32 %v5047, %v5207
        %v5209 = vpop.f32.mrb[0].mxu0
        %5210 = vmatprep.mubr.bf16.mxu0 %v4678
        %5211 = vmatmul.mubr.bf16.gmra.mrb[0].mxu0 %v4677
        %v5212 = vpop.f32.mrb[0].mxu0
        %v5213 = vadd.f32 %v5052, %v5212
        %v5214 = vpop.f32.mrb[0].mxu0
        %v5215 = vpop.f32.mrb[0].mxu0
        %v5216 = vadd.f32 %v5055, %v5215
        %v5217 = vpop.f32.mrb[0].mxu0
        %5218 = vmatprep.mubr.bf16.mxu0 %v4682
        %5219 = vmatmul.mubr.bf16.gmra.mrb[0].mxu0 %v4681
        %v5220 = vpop.f32.mrb[0].mxu0
        %v5221 = vadd.f32 %v5060, %v5220
        %v5222 = vpop.f32.mrb[0].mxu0
        %v5223 = vpop.f32.mrb[0].mxu0
        %v5224 = vadd.f32 %v5063, %v5223
        %v5225 = vpop.f32.mrb[0].mxu0
        %5226 = vmatprep.mubr.bf16.mxu0 %v4686
        %5227 = vmatmul.mubr.bf16.gmra.mrb[0].mxu0 %v4685
        %v5228 = vpop.f32.mrb[0].mxu0
        %v5229 = vadd.f32 %v5068, %v5228
        %v5230 = vpop.f32.mrb[0].mxu0
        %v5231 = vpop.f32.mrb[0].mxu0
        %v5232 = vadd.f32 %v5071, %v5231
        %v5233 = vpop.f32.mrb[0].mxu0
        %5234 = vmatprep.mubr.bf16.mxu0 %v4690
        %5235 = vmatmul.mubr.bf16.gmra.mrb[0].mxu0 %v4689
        %v5236 = vpop.f32.mrb[0].mxu0
        %v5237 = vadd.f32 %v5076, %v5236
        %v5238 = vpop.f32.mrb[0].mxu0
        %v5239 = vpop.f32.mrb[0].mxu0
        %v5240 = vadd.f32 %v5079, %v5239
        %v5241 = vpop.f32.mrb[0].mxu0
        %5242 = vmatprep.mubr.bf16.mxu0 %v4694
        %5243 = vmatmul.mubr.bf16.gmra.mrb[0].mxu0 %v4693
        %v5244 = vpop.f32.mrb[0].mxu0
        %v5245 = vadd.f32 %v5084, %v5244
        %v5246 = vpop.f32.mrb[0].mxu0
        %v5247 = vpop.f32.mrb[0].mxu0
        %v5248 = vadd.f32 %v5087, %v5247
        %v5249 = vpop.f32.mrb[0].mxu0
        %5250 = vmatprep.mubr.bf16.mxu0 %v4698
        %5251 = vmatmul.mubr.bf16.gmra.mrb[0].mxu0 %v4697
        %v5252 = vpop.f32.mrb[0].mxu0
        %v5253 = vadd.f32 %v5092, %v5252
        %v5254 = vpop.f32.mrb[0].mxu0
        %v5255 = vpop.f32.mrb[0].mxu0
        %v5256 = vadd.f32 %v5095, %v5255
        %v5257 = vpop.f32.mrb[0].mxu0
        %5258 = vmatprep.mubr.bf16.mxu0 %v4702
        %5259 = vmatmul.mubr.bf16.gmra.mrb[0].mxu0 %v4701
        %v5260 = vpop.f32.mrb[0].mxu0
        %v5261 = vadd.f32 %v5100, %v5260
        %v5262 = vpop.f32.mrb[0].mxu0
        %v5263 = vpop.f32.mrb[0].mxu0
        %v5264 = vadd.f32 %v5103, %v5263
        %v5265 = vpop.f32.mrb[0].mxu0
        %5266 = vmatprep.mubr.bf16.mxu0 %v4706
        %5267 = vmatmul.mubr.bf16.gmra.mrb[0].mxu0 %v4705
        %v5268 = vpop.f32.mrb[0].mxu0
        %v5269 = vadd.f32 %v5108, %v5268
        %v5270 = vpop.f32.mrb[0].mxu0
        %v5271 = vpop.f32.mrb[0].mxu0
        %v5272 = vadd.f32 %v5111, %v5271
        %v5273 = vpop.f32.mrb[0].mxu0
        %5274 = vmatprep.mubr.bf16.mxu0 %v4710
        %5275 = vmatmul.mubr.bf16.gmra.mrb[0].mxu0 %v4709
        %v5276 = vpop.f32.mrb[0].mxu0
        %v5277 = vadd.f32 %v5116, %v5276
        %v5278 = vpop.f32.mrb[0].mxu0
        %v5279 = vpop.f32.mrb[0].mxu0
        %v5280 = vadd.f32 %v5119, %v5279
        %v5281 = vpop.f32.mrb[0].mxu0
        %5282 = vmatprep.mubr.bf16.mxu0 %v4714
        %5283 = vmatmul.mubr.bf16.gmra.mrb[0].mxu0 %v4713
        %v5284 = vpop.f32.mrb[0].mxu0
        %v5285 = vadd.f32 %v5124, %v5284
        %v5286 = vpop.f32.mrb[0].mxu0
        %v5287 = vpop.f32.mrb[0].mxu0
        %v5288 = vadd.f32 %v5127, %v5287
        %v5289 = vpop.f32.mrb[0].mxu0
        %5290 = vmatprep.mubr.bf16.mxu0 %v4718
        %5291 = vmatmul.mubr.bf16.gmra.mrb[0].mxu0 %v4717
        %v5292 = vpop.f32.mrb[0].mxu0
        %v5293 = vadd.f32 %v5132, %v5292
        %v5294 = vpop.f32.mrb[0].mxu0
        %v5295 = vpop.f32.mrb[0].mxu0
        %v5296 = vadd.f32 %v5135, %v5295
        %v5297 = vpop.f32.mrb[0].mxu0
        %5298 = vmatprep.mubr.bf16.mxu0 %v4722
        %5299 = vmatmul.mubr.bf16.gmra.mrb[0].mxu0 %v4721
        %v5300 = vpop.f32.mrb[0].mxu0
        %v5301 = vadd.f32 %v5140, %v5300
        %v5302 = vpop.f32.mrb[0].mxu0
        %v5303 = vpop.f32.mrb[0].mxu0
        %v5304 = vadd.f32 %v5143, %v5303
        %v5305 = vpop.f32.mrb[0].mxu0
        %5306 = vmatprep.mubr.bf16.mxu0 %v2935
        %5307 = vmatmul.mubr.bf16.gmra.mrb[0].mxu0 %v4725
        %v5308 = vpop.f32.mrb[0].mxu0
        %v5309 = vadd.f32 %v5148, %v5308
        %v5310 = vpop.f32.mrb[0].mxu0
        %v5311 = vpop.f32.mrb[0].mxu0
        %v5312 = vadd.f32 %v5151, %v5311
        %v5313 = vpop.f32.mrb[0].mxu0
        %5314 = vdwg.mxu0
        %5315 = vmatprep.subr.bf16.mxu0 0
        %5316 = vmatpush1.bf16.msra.mxu0 %v4908
        %5317 = vmatprep.subr.bf16.mxu0 0
        %5318 = vmatpush1.bf16.msra.mxu0 %v4909
        %5319 = vmatprep.subr.bf16.mxu0 0
        %5320 = vmatpush1.bf16.msra.mxu0 %v4910
        %5321 = vmatprep.subr.bf16.mxu0 0
        %5322 = vmatpush1.bf16.msra.mxu0 %v4911
        %5323 = vmatprep.subr.bf16.mxu0 0
        %5324 = vmatpush1.bf16.msra.mxu0 0
        %5325 = vmatprep.subr.bf16.mxu0 0
        %5326 = vmatpush1.bf16.msra.mxu0 0
        %5327 = vmatprep.subr.bf16.mxu0 0
        %5328 = vmatpush1.bf16.msra.mxu0 0
        %5329 = vmatprep.subr.bf16.mxu0 0
        %5330 = vmatpush1.bf16.msra.mxu0 0
        %5331 = vmatprep.subr.bf16.mxu0 0
        %5332 = vmatpush1.bf16.msra.mxu0 0
        %5333 = vmatprep.subr.bf16.mxu0 0
        %5334 = vmatpush1.bf16.msra.mxu0 0
        %5335 = vmatprep.subr.bf16.mxu0 0
        %5336 = vmatpush1.bf16.msra.mxu0 0
        %5337 = vmatprep.subr.bf16.mxu0 0
        %5338 = vmatpush1.bf16.msra.mxu0 0
        %5339 = vmatprep.subr.bf16.mxu0 0
        %5340 = vmatpush1.bf16.msra.mxu0 0
        %5341 = vmatprep.subr.bf16.mxu0 0
        %5342 = vmatpush1.bf16.msra.mxu0 0
        %5343 = vmatprep.subr.bf16.mxu0 0
        %5344 = vmatpush1.bf16.msra.mxu0 0
        %5345 = vmatprep.subr.bf16.mxu0 0
        %5346 = vmatpush1.bf16.msra.mxu0 0
        %5347 = vmatprep.mubr.bf16.mxu0 0
        %5348 = vmatmul.mubr.bf16.gmra.mrb[0].mxu0 %v4949
        %v5349 = vpop.f32.mrb[0].mxu0
        %v5350 = vadd.f32 %v5189, %v5349
        %v5351 = vpop.f32.mrb[0].mxu0
        %v5352 = vpop.f32.mrb[0].mxu0
        %v5353 = vadd.f32 %v5192, %v5352
        %v5354 = vpop.f32.mrb[0].mxu0
        %5355 = vmatprep.mubr.bf16.mxu0 0
        %5356 = vmatmul.mubr.bf16.gmra.mrb[0].mxu0 %v4952
        %v5357 = vpop.f32.mrb[0].mxu0
        %v5358 = vadd.f32 %v5197, %v5357
        %v5359 = vpop.f32.mrb[0].mxu0
        %v5360 = vpop.f32.mrb[0].mxu0
        %v5361 = vadd.f32 %v5200, %v5360
        %v5362 = vpop.f32.mrb[0].mxu0
        %5363 = vmatprep.mubr.bf16.mxu0 0
        %5364 = vmatmul.mubr.bf16.gmra.mrb[0].mxu0 %v4955
        %v5365 = vpop.f32.mrb[0].mxu0
        %v5366 = vadd.f32 %v5205, %v5365
        %v5367 = vpop.f32.mrb[0].mxu0
        %v5368 = vpop.f32.mrb[0].mxu0
        %v5369 = vadd.f32 %v5208, %v5368
        %v5370 = vpop.f32.mrb[0].mxu0
        %5371 = vmatprep.mubr.bf16.mxu0 0
        %5372 = vmatmul.mubr.bf16.gmra.mrb[0].mxu0 %v4958
        %v5373 = vpop.f32.mrb[0].mxu0
        %v5374 = vadd.f32 %v5213, %v5373
        %v5375 = vpop.f32.mrb[0].mxu0
        %v5376 = vpop.f32.mrb[0].mxu0
        %v5377 = vadd.f32 %v5216, %v5376
        %v5378 = vpop.f32.mrb[0].mxu0
        %5379 = vmatprep.mubr.bf16.mxu0 0
        %5380 = vmatmul.mubr.bf16.gmra.mrb[0].mxu0 %v4961
        %v5381 = vpop.f32.mrb[0].mxu0
        %v5382 = vadd.f32 %v5221, %v5381
        %v5383 = vpop.f32.mrb[0].mxu0
        %v5384 = vpop.f32.mrb[0].mxu0
        %v5385 = vadd.f32 %v5224, %v5384
        %v5386 = vpop.f32.mrb[0].mxu0
        %5387 = vmatprep.mubr.bf16.mxu0 0
        %5388 = vmatmul.mubr.bf16.gmra.mrb[0].mxu0 %v4964
        %v5389 = vpop.f32.mrb[0].mxu0
        %v5390 = vadd.f32 %v5229, %v5389
        %v5391 = vpop.f32.mrb[0].mxu0
        %v5392 = vpop.f32.mrb[0].mxu0
        %v5393 = vadd.f32 %v5232, %v5392
        %v5394 = vpop.f32.mrb[0].mxu0
        %5395 = vmatprep.mubr.bf16.mxu0 0
        %5396 = vmatmul.mubr.bf16.gmra.mrb[0].mxu0 %v4967
        %v5397 = vpop.f32.mrb[0].mxu0
        %v5398 = vadd.f32 %v5237, %v5397
        %v5399 = vpop.f32.mrb[0].mxu0
        %v5400 = vpop.f32.mrb[0].mxu0
        %v5401 = vadd.f32 %v5240, %v5400
        %v5402 = vpop.f32.mrb[0].mxu0
        %5403 = vmatprep.mubr.bf16.mxu0 0
        %5404 = vmatmul.mubr.bf16.gmra.mrb[0].mxu0 %v4970
        %v5405 = vpop.f32.mrb[0].mxu0
        %v5406 = vadd.f32 %v5245, %v5405
        %v5407 = vpop.f32.mrb[0].mxu0
        %v5408 = vpop.f32.mrb[0].mxu0
        %v5409 = vadd.f32 %v5248, %v5408
        %v5410 = vpop.f32.mrb[0].mxu0
        %5411 = vmatprep.mubr.bf16.mxu0 0
        %5412 = vmatmul.mubr.bf16.gmra.mrb[0].mxu0 %v4973
        %v5413 = vpop.f32.mrb[0].mxu0
        %v5414 = vadd.f32 %v5253, %v5413
        %v5415 = vpop.f32.mrb[0].mxu0
        %v5416 = vpop.f32.mrb[0].mxu0
        %v5417 = vadd.f32 %v5256, %v5416
        %v5418 = vpop.f32.mrb[0].mxu0
        %5419 = vmatprep.mubr.bf16.mxu0 0
        %5420 = vmatmul.mubr.bf16.gmra.mrb[0].mxu0 %v4976
        %v5421 = vpop.f32.mrb[0].mxu0
        %v5422 = vadd.f32 %v5261, %v5421
        %v5423 = vpop.f32.mrb[0].mxu0
        %v5424 = vpop.f32.mrb[0].mxu0
        %v5425 = vadd.f32 %v5264, %v5424
        %v5426 = vpop.f32.mrb[0].mxu0
        %5427 = vmatprep.mubr.bf16.mxu0 0
        %5428 = vmatmul.mubr.bf16.gmra.mrb[0].mxu0 %v4979
        %v5429 = vpop.f32.mrb[0].mxu0
        %v5430 = vadd.f32 %v5269, %v5429
        %v5431 = vpop.f32.mrb[0].mxu0
        %v5432 = vpop.f32.mrb[0].mxu0
        %v5433 = vadd.f32 %v5272, %v5432
        %v5434 = vpop.f32.mrb[0].mxu0
        %5435 = vmatprep.mubr.bf16.mxu0 0
        %5436 = vmatmul.mubr.bf16.gmra.mrb[0].mxu0 %v4982
        %v5437 = vpop.f32.mrb[0].mxu0
        %v5438 = vadd.f32 %v5277, %v5437
        %v5439 = vpop.f32.mrb[0].mxu0
        %v5440 = vpop.f32.mrb[0].mxu0
        %v5441 = vadd.f32 %v5280, %v5440
        %v5442 = vpop.f32.mrb[0].mxu0
        %5443 = vmatprep.mubr.bf16.mxu0 0
        %5444 = vmatmul.mubr.bf16.gmra.mrb[0].mxu0 %v4985
        %v5445 = vpop.f32.mrb[0].mxu0
        %v5446 = vadd.f32 %v5285, %v5445
        %v5447 = vpop.f32.mrb[0].mxu0
        %v5448 = vpop.f32.mrb[0].mxu0
        %v5449 = vadd.f32 %v5288, %v5448
        %v5450 = vpop.f32.mrb[0].mxu0
        %5451 = vmatprep.mubr.bf16.mxu0 0
        %5452 = vmatmul.mubr.bf16.gmra.mrb[0].mxu0 %v4988
        %v5453 = vpop.f32.mrb[0].mxu0
        %v5454 = vadd.f32 %v5293, %v5453
        %v5455 = vpop.f32.mrb[0].mxu0
        %v5456 = vpop.f32.mrb[0].mxu0
        %v5457 = vadd.f32 %v5296, %v5456
        %v5458 = vpop.f32.mrb[0].mxu0
        %5459 = vmatprep.mubr.bf16.mxu0 0
        %5460 = vmatmul.mubr.bf16.gmra.mrb[0].mxu0 %v4991
        %v5461 = vpop.f32.mrb[0].mxu0
        %v5462 = vadd.f32 %v5301, %v5461
        %v5463 = vpop.f32.mrb[0].mxu0
        %v5464 = vpop.f32.mrb[0].mxu0
        %v5465 = vadd.f32 %v5304, %v5464
        %v5466 = vpop.f32.mrb[0].mxu0
        %5467 = vmatprep.mubr.bf16.mxu0 0
        %5468 = vmatmul.mubr.bf16.gmra.mrb[0].mxu0 %v3268
        %v5469 = vpop.f32.mrb[0].mxu0
        %v5470 = vadd.f32 %v5309, %v5469
        %v5471 = vpop.f32.mrb[0].mxu0
        %v5472 = vpop.f32.mrb[0].mxu0
        %v5473 = vadd.f32 %v5312, %v5472
        %v5474 = vpop.f32.mrb[0].mxu0
        %5475 = vdwg.mxu0
        %v5476 = vadd.f32 %v2013, %v5350
        %v5477 = vadd.f32 %v2014, %v5353
        %v5478 = vadd.f32 %v2015, %v5358
        %v5479 = vadd.f32 %v2016, %v5361
        %v5480 = vadd.f32 %v2017, %v5366
        %v5481 = vadd.f32 %v2018, %v5369
        %v5482 = vadd.f32 %v2019, %v5374
        %v5483 = vadd.f32 %v2020, %v5377
        %v5484 = vadd.f32 %v2021, %v5382
        %v5485 = vadd.f32 %v2022, %v5385
        %v5486 = vadd.f32 %v2023, %v5390
        %v5487 = vadd.f32 %v2024, %v5393
        %v5488 = vadd.f32 %v2025, %v5398
        %v5489 = vadd.f32 %v2026, %v5401
        %v5490 = vadd.f32 %v2027, %v5406
        %v5491 = vadd.f32 %v2028, %v5409
        %v5492 = vadd.f32 %v2029, %v5414
        %v5493 = vadd.f32 %v2030, %v5417
        %v5494 = vadd.f32 %v2031, %v5422
        %v5495 = vadd.f32 %v2032, %v5425
        %v5496 = vadd.f32 %v2033, %v5430
        %v5497 = vadd.f32 %v2034, %v5433
        %v5498 = vadd.f32 %v2035, %v5438
        %v5499 = vadd.f32 %v2036, %v5441
        %v5500 = vadd.f32 %v2037, %v5446
        %v5501 = vadd.f32 %v2038, %v5449
        %v5502 = vadd.f32 %v2039, %v5454
        %v5503 = vadd.f32 %v2040, %v5457
        %v5504 = vadd.f32 %v2041, %v5462
        %v5505 = vadd.f32 %v2042, %v5465
        %v5506 = vadd.f32 %v2043, %v5470
        %v5507 = vadd.f32 %v2044, %v5473
        %s5508 = scalar_lea.vmem %s249, %s2008
        %v5509 = vld [vmem:[%s5508] sm:$0x1]
        %v5510 = vadd.f32 %v5509, 1.0
        %v5512 = vlaneseq
        %v5513 = vshrl.u32 %v5512, 7
        %v5514 = vsub.s32 0, %v5513
        %v5515 = vrot.slane %v5510, %v5514
        %v5517 = vmul.f32 %v5476, %v5515
        %v5518 = vmul.f32 %v5477, %v5515
        %v5519 = vmul.f32 %v5478, %v5515
        %v5520 = vmul.f32 %v5479, %v5515
        %v5521 = vmul.f32 %v5480, %v5515
        %v5522 = vmul.f32 %v5481, %v5515
        %v5523 = vmul.f32 %v5482, %v5515
        %v5524 = vmul.f32 %v5483, %v5515
        %v5525 = vmul.f32 %v5484, %v5515
        %v5526 = vmul.f32 %v5485, %v5515
        %v5527 = vmul.f32 %v5486, %v5515
        %v5528 = vmul.f32 %v5487, %v5515
        %v5529 = vmul.f32 %v5488, %v5515
        %v5530 = vmul.f32 %v5489, %v5515
        %v5531 = vmul.f32 %v5490, %v5515
        %v5532 = vmul.f32 %v5491, %v5515
        %v5533 = vmul.f32 %v5492, %v5515
        %v5534 = vmul.f32 %v5493, %v5515
        %v5535 = vmul.f32 %v5494, %v5515
        %v5536 = vmul.f32 %v5495, %v5515
        %v5537 = vmul.f32 %v5496, %v5515
        %v5538 = vmul.f32 %v5497, %v5515
        %v5539 = vmul.f32 %v5498, %v5515
        %v5540 = vmul.f32 %v5499, %v5515
        %v5541 = vmul.f32 %v5500, %v5515
        %v5542 = vmul.f32 %v5501, %v5515
        %v5543 = vmul.f32 %v5502, %v5515
        %v5544 = vmul.f32 %v5503, %v5515
        %v5545 = vmul.f32 %v5504, %v5515
        %v5546 = vmul.f32 %v5505, %v5515
        %v5547 = vmul.f32 %v5506, %v5515
        %v5548 = vmul.f32 %v5507, %v5515
        %s5549 = scalar_lea.vmem %s253, %s2008
        %v5550 = vld [vmem:[%s5549] sm:$0x1]
        %v5552 = vlaneseq
        %v5553 = vshrl.u32 %v5552, 7
        %v5554 = vsub.s32 0, %v5553
        %v5555 = vrot.slane %v5550, %v5554
        %v5557 = vadd.f32 %v5517, %v5555
        %v5558 = vadd.f32 %v5518, %v5555
        %v5559 = vadd.f32 %v5519, %v5555
        %v5560 = vadd.f32 %v5520, %v5555
        %v5561 = vadd.f32 %v5521, %v5555
        %v5562 = vadd.f32 %v5522, %v5555
        %v5563 = vadd.f32 %v5523, %v5555
        %v5564 = vadd.f32 %v5524, %v5555
        %v5565 = vadd.f32 %v5525, %v5555
        %v5566 = vadd.f32 %v5526, %v5555
        %v5567 = vadd.f32 %v5527, %v5555
        %v5568 = vadd.f32 %v5528, %v5555
        %v5569 = vadd.f32 %v5529, %v5555
        %v5570 = vadd.f32 %v5530, %v5555
        %v5571 = vadd.f32 %v5531, %v5555
        %v5572 = vadd.f32 %v5532, %v5555
        %v5573 = vadd.f32 %v5533, %v5555
        %v5574 = vadd.f32 %v5534, %v5555
        %v5575 = vadd.f32 %v5535, %v5555
        %v5576 = vadd.f32 %v5536, %v5555
        %v5577 = vadd.f32 %v5537, %v5555
        %v5578 = vadd.f32 %v5538, %v5555
        %v5579 = vadd.f32 %v5539, %v5555
        %v5580 = vadd.f32 %v5540, %v5555
        %v5581 = vadd.f32 %v5541, %v5555
        %v5582 = vadd.f32 %v5542, %v5555
        %v5583 = vadd.f32 %v5543, %v5555
        %v5584 = vadd.f32 %v5544, %v5555
        %v5585 = vadd.f32 %v5545, %v5555
        %v5586 = vadd.f32 %v5546, %v5555
        %v5587 = vadd.f32 %v5547, %v5555
        %v5588 = vadd.f32 %v5548, %v5555
      $region45: #{_lambda_.7} parent=39 // loop_footer
        %s2012 = sadd.s32 1, %s2008
      $region46: #{_lambda_.7} parent=39 // loop_footer_branch
        %2007 = sbr.rel target = $region42
      $region47: #{_lambda_.7} parent=39 // loop_exit
        _
      %vm5621 = vcmask 1040384
      %v5622 = vrot.slane %v2013, 7
      %v5623 = vrot.slane %v2014, 7
      %v5624 = vsel %vm5621, %v5622, %v5623
      %v5625 = vrot.slane %v2015, 7
      %v5626 = vrot.slane %v2016, 7
      %v5627 = vsel %vm5621, %v5625, %v5626
      %v5628 = vrot.slane %v2017, 7
      %v5629 = vrot.slane %v2018, 7
      %v5630 = vsel %vm5621, %v5628, %v5629
      %v5631 = vrot.slane %v2019, 7
      %v5632 = vrot.slane %v2020, 7
      %v5633 = vsel %vm5621, %v5631, %v5632
      %v5634 = vrot.slane %v2021, 7
      %v5635 = vrot.slane %v2022, 7
      %v5636 = vsel %vm5621, %v5634, %v5635
      %v5637 = vrot.slane %v2023, 7
      %v5638 = vrot.slane %v2024, 7
      %v5639 = vsel %vm5621, %v5637, %v5638
      %v5640 = vrot.slane %v2025, 7
      %v5641 = vrot.slane %v2026, 7
      %v5642 = vsel %vm5621, %v5640, %v5641
      %v5643 = vrot.slane %v2027, 7
      %v5644 = vrot.slane %v2028, 7
      %v5645 = vsel %vm5621, %v5643, %v5644
      %v5646 = vrot.slane %v2029, 7
      %v5647 = vrot.slane %v2030, 7
      %v5648 = vsel %vm5621, %v5646, %v5647
      %v5649 = vrot.slane %v2031, 7
      %v5650 = vrot.slane %v2032, 7
      %v5651 = vsel %vm5621, %v5649, %v5650
      %v5652 = vrot.slane %v2033, 7
      %v5653 = vrot.slane %v2034, 7
      %v5654 = vsel %vm5621, %v5652, %v5653
      %v5655 = vrot.slane %v2035, 7
      %v5656 = vrot.slane %v2036, 7
      %v5657 = vsel %vm5621, %v5655, %v5656
      %v5658 = vrot.slane %v2037, 7
      %v5659 = vrot.slane %v2038, 7
      %v5660 = vsel %vm5621, %v5658, %v5659
      %v5661 = vrot.slane %v2039, 7
      %v5662 = vrot.slane %v2040, 7
      %v5663 = vsel %vm5621, %v5661, %v5662
      %v5664 = vrot.slane %v2041, 7
      %v5665 = vrot.slane %v2042, 7
      %v5666 = vsel %vm5621, %v5664, %v5665
      %v5667 = vrot.slane %v2043, 7
      %v5668 = vrot.slane %v2044, 7
      %v5669 = vsel %vm5621, %v5667, %v5668
      %v5718 = vsel %vm5621, 0.0, %v5622
      %v5719 = vsel %vm5621, 0.0, %v5625
      %v5720 = vsel %vm5621, 0.0, %v5628
      %v5721 = vsel %vm5621, 0.0, %v5631
      %v5722 = vsel %vm5621, 0.0, %v5634
      %v5723 = vsel %vm5621, 0.0, %v5637
      %v5724 = vsel %vm5621, 0.0, %v5640
      %v5725 = vsel %vm5621, 0.0, %v5643
      %v5726 = vsel %vm5621, 0.0, %v5646
      %v5727 = vsel %vm5621, 0.0, %v5649
      %v5728 = vsel %vm5621, 0.0, %v5652
      %v5729 = vsel %vm5621, 0.0, %v5655
      %v5730 = vsel %vm5621, 0.0, %v5658
      %v5731 = vsel %vm5621, 0.0, %v5661
      %v5732 = vsel %vm5621, 0.0, %v5664
      %v5733 = vsel %vm5621, 0.0, %v5667
      %v5734 = vsel %vm5621, %v5623, 0.0
      %v5735 = vsel %vm5621, %v5626, 0.0
      %v5736 = vsel %vm5621, %v5629, 0.0
      %v5737 = vsel %vm5621, %v5632, 0.0
      %v5738 = vsel %vm5621, %v5635, 0.0
      %v5739 = vsel %vm5621, %v5638, 0.0
      %v5740 = vsel %vm5621, %v5641, 0.0
      %v5741 = vsel %vm5621, %v5644, 0.0
      %v5742 = vsel %vm5621, %v5647, 0.0
      %v5743 = vsel %vm5621, %v5650, 0.0
      %v5744 = vsel %vm5621, %v5653, 0.0
      %v5745 = vsel %vm5621, %v5656, 0.0
      %v5746 = vsel %vm5621, %v5659, 0.0
      %v5747 = vsel %vm5621, %v5662, 0.0
      %v5748 = vsel %vm5621, %v5665, 0.0
      %v5749 = vsel %vm5621, %v5668, 0.0
      %s5750 = scalar_lea.vmem %s1, 9504
      %v5751 = vld [vmem:[%s5750] sm:$0xf]
      %v5752 = vld [vmem:[%s5750 + $0x4] sm:$0xf]
      %v5753 = vld [vmem:[%s5750 + $0x8] sm:$0xf]
      %v5754 = vld [vmem:[%s5750 + $0xc] sm:$0xf]
      %v5755 = vld [vmem:[%s5750 + $0x10] sm:$0xf]
      %v5756 = vld [vmem:[%s5750 + $0x14] sm:$0xf]
      %v5757 = vld [vmem:[%s5750 + $0x18] sm:$0xf]
      %v5758 = vld [vmem:[%s5750 + $0x1c] sm:$0xf]
      %v5759 = vld [vmem:[%s5750 + $0x20] sm:$0xf]
      %v5760 = vld [vmem:[%s5750 + $0x24] sm:$0xf]
      %v5761 = vld [vmem:[%s5750 + $0x28] sm:$0xf]
      %v5762 = vld [vmem:[%s5750 + $0x2c] sm:$0xf]
      %v5763 = vld [vmem:[%s5750 + $0x30] sm:$0xf]
      %v5764 = vld [vmem:[%s5750 + $0x34] sm:$0xf]
      %v5765 = vld [vmem:[%s5750 + $0x38] sm:$0xf]
      %v5766 = vld [vmem:[%s5750 + $0x3c] sm:$0xf]
      %v5767 = vld [vmem:[%s5750 + $0x40] sm:$0xf]
      %v5768 = vld [vmem:[%s5750 + $0x44] sm:$0xf]
      %v5769 = vld [vmem:[%s5750 + $0x48] sm:$0xf]
      %v5770 = vld [vmem:[%s5750 + $0x4c] sm:$0xf]
      %v5771 = vld [vmem:[%s5750 + $0x50] sm:$0xf]
      %v5772 = vld [vmem:[%s5750 + $0x54] sm:$0xf]
      %v5773 = vld [vmem:[%s5750 + $0x58] sm:$0xf]
      %v5774 = vld [vmem:[%s5750 + $0x5c] sm:$0xf]
      %v5775 = vld [vmem:[%s5750 + $0x60] sm:$0xf]
      %v5776 = vld [vmem:[%s5750 + $0x64] sm:$0xf]
      %v5777 = vld [vmem:[%s5750 + $0x68] sm:$0xf]
      %v5778 = vld [vmem:[%s5750 + $0x6c] sm:$0xf]
      %v5779 = vld [vmem:[%s5750 + $0x70] sm:$0xf]
      %v5780 = vld [vmem:[%s5750 + $0x74] sm:$0xf]
      %v5781 = vld [vmem:[%s5750 + $0x78] sm:$0xf]
      %v5782 = vld [vmem:[%s5750 + $0x7c] sm:$0xf]
      %v5783 = vld [vmem:[%s5750 + $0x80] sm:$0xf]
      %v5784 = vld [vmem:[%s5750 + $0x84] sm:$0xf]
      %v5785 = vld [vmem:[%s5750 + $0x88] sm:$0xf]
      %v5786 = vld [vmem:[%s5750 + $0x8c] sm:$0xf]
      %v5787 = vld [vmem:[%s5750 + $0x90] sm:$0xf]
      %v5788 = vld [vmem:[%s5750 + $0x94] sm:$0xf]
      %v5789 = vld [vmem:[%s5750 + $0x98] sm:$0xf]
      %v5790 = vld [vmem:[%s5750 + $0x9c] sm:$0xf]
      %v5791 = vld [vmem:[%s5750 + $0xa0] sm:$0xf]
      %v5792 = vld [vmem:[%s5750 + $0xa4] sm:$0xf]
      %v5793 = vld [vmem:[%s5750 + $0xa8] sm:$0xf]
      %v5794 = vld [vmem:[%s5750 + $0xac] sm:$0xf]
      %v5795 = vld [vmem:[%s5750 + $0xb0] sm:$0xf]
      %v5796 = vld [vmem:[%s5750 + $0xb4] sm:$0xf]
      %v5797 = vld [vmem:[%s5750 + $0xb8] sm:$0xf]
      %v5798 = vld [vmem:[%s5750 + $0xbc] sm:$0xf]
      %v5799 = vld [vmem:[%s5750 + $0xc0] sm:$0xf]
      %v5800 = vld [vmem:[%s5750 + $0xc4] sm:$0xf]
      %v5801 = vld [vmem:[%s5750 + $0xc8] sm:$0xf]
      %v5802 = vld [vmem:[%s5750 + $0xcc] sm:$0xf]
      %v5803 = vld [vmem:[%s5750 + $0xd0] sm:$0xf]
      %v5804 = vld [vmem:[%s5750 + $0xd4] sm:$0xf]
      %v5805 = vld [vmem:[%s5750 + $0xd8] sm:$0xf]
      %v5806 = vld [vmem:[%s5750 + $0xdc] sm:$0xf]
      %v5807 = vld [vmem:[%s5750 + $0xe0] sm:$0xf]
      %v5808 = vld [vmem:[%s5750 + $0xe4] sm:$0xf]
      %v5809 = vld [vmem:[%s5750 + $0xe8] sm:$0xf]
      %v5810 = vld [vmem:[%s5750 + $0xec] sm:$0xf]
      %v5811 = vld [vmem:[%s5750 + $0xf0] sm:$0xf]
      %v5812 = vld [vmem:[%s5750 + $0xf4] sm:$0xf]
      %v5813 = vld [vmem:[%s5750 + $0xf8] sm:$0xf]
      %v5814 = vld [vmem:[%s5750 + $0xfc] sm:$0xf]
      %v5815 = vld [vmem:[%s5750 + $0x100] sm:$0xf]
      %v5816 = vld [vmem:[%s5750 + $0x104] sm:$0xf]
      %v5817 = vld [vmem:[%s5750 + $0x108] sm:$0xf]
      %v5818 = vld [vmem:[%s5750 + $0x10c] sm:$0xf]
      %v5819 = vld [vmem:[%s5750 + $0x110] sm:$0xf]
      %v5820 = vld [vmem:[%s5750 + $0x114] sm:$0xf]
      %v5821 = vld [vmem:[%s5750 + $0x118] sm:$0xf]
      %v5822 = vld [vmem:[%s5750 + $0x11c] sm:$0xf]
      %s5823 = scalar_lea.vmem %s2, 33
      %v5824 = vld [vmem:[%s5823] sm:$0x1]
      %v5856 = vrot.slane 0.0, 1
      %v5857 = vsel %vm435, %v5856, %v5856
      %v5858 = vrot.slane %v5718, 1
      %v5859 = vrot.slane %v5624, 1
      %v5860 = vsel %vm435, %v5858, %v5859
      %v5861 = vrot.slane %v5734, 1
      %v5862 = vsel %vm435, %v5859, %v5861
      %v5863 = vrot.slane %v5719, 1
      %v5864 = vrot.slane %v5627, 1
      %v5865 = vsel %vm435, %v5863, %v5864
      %v5866 = vrot.slane %v5735, 1
      %v5867 = vsel %vm435, %v5864, %v5866
      %v5868 = vrot.slane %v5720, 1
      %v5869 = vrot.slane %v5630, 1
      %v5870 = vsel %vm435, %v5868, %v5869
      %v5871 = vrot.slane %v5736, 1
      %v5872 = vsel %vm435, %v5869, %v5871
      %v5873 = vrot.slane %v5721, 1
      %v5874 = vrot.slane %v5633, 1
      %v5875 = vsel %vm435, %v5873, %v5874
      %v5876 = vrot.slane %v5737, 1
      %v5877 = vsel %vm435, %v5874, %v5876
      %v5878 = vrot.slane %v5722, 1
      %v5879 = vrot.slane %v5636, 1
      %v5880 = vsel %vm435, %v5878, %v5879
      %v5881 = vrot.slane %v5738, 1
      %v5882 = vsel %vm435, %v5879, %v5881
      %v5883 = vrot.slane %v5723, 1
      %v5884 = vrot.slane %v5639, 1
      %v5885 = vsel %vm435, %v5883, %v5884
      %v5886 = vrot.slane %v5739, 1
      %v5887 = vsel %vm435, %v5884, %v5886
      %v5888 = vrot.slane %v5724, 1
      %v5889 = vrot.slane %v5642, 1
      %v5890 = vsel %vm435, %v5888, %v5889
      %v5891 = vrot.slane %v5740, 1
      %v5892 = vsel %vm435, %v5889, %v5891
      %v5893 = vrot.slane %v5725, 1
      %v5894 = vrot.slane %v5645, 1
      %v5895 = vsel %vm435, %v5893, %v5894
      %v5896 = vrot.slane %v5741, 1
      %v5897 = vsel %vm435, %v5894, %v5896
      %v5898 = vrot.slane %v5726, 1
      %v5899 = vrot.slane %v5648, 1
      %v5900 = vsel %vm435, %v5898, %v5899
      %v5901 = vrot.slane %v5742, 1
      %v5902 = vsel %vm435, %v5899, %v5901
      %v5903 = vrot.slane %v5727, 1
      %v5904 = vrot.slane %v5651, 1
      %v5905 = vsel %vm435, %v5903, %v5904
      %v5906 = vrot.slane %v5743, 1
      %v5907 = vsel %vm435, %v5904, %v5906
      %v5908 = vrot.slane %v5728, 1
      %v5909 = vrot.slane %v5654, 1
      %v5910 = vsel %vm435, %v5908, %v5909
      %v5911 = vrot.slane %v5744, 1
      %v5912 = vsel %vm435, %v5909, %v5911
      %v5913 = vrot.slane %v5729, 1
      %v5914 = vrot.slane %v5657, 1
      %v5915 = vsel %vm435, %v5913, %v5914
      %v5916 = vrot.slane %v5745, 1
      %v5917 = vsel %vm435, %v5914, %v5916
      %v5918 = vrot.slane %v5730, 1
      %v5919 = vrot.slane %v5660, 1
      %v5920 = vsel %vm435, %v5918, %v5919
      %v5921 = vrot.slane %v5746, 1
      %v5922 = vsel %vm435, %v5919, %v5921
      %v5923 = vrot.slane %v5731, 1
      %v5924 = vrot.slane %v5663, 1
      %v5925 = vsel %vm435, %v5923, %v5924
      %v5926 = vrot.slane %v5747, 1
      %v5927 = vsel %vm435, %v5924, %v5926
      %v5928 = vrot.slane %v5732, 1
      %v5929 = vrot.slane %v5666, 1
      %v5930 = vsel %vm435, %v5928, %v5929
      %v5931 = vrot.slane %v5748, 1
      %v5932 = vsel %vm435, %v5929, %v5931
      %5933 = vrot.lane.b32.xlu0 %v5857, 64
      %v5934 = vpop.permute.xlu0 %5933
      %5935 = vrot.lane.b32.xlu0 %v5860, 64
      %v5936 = vpop.permute.xlu0 %5935
      %5937 = vrot.lane.b32.xlu0 %v5862, 64
      %v5938 = vpop.permute.xlu0 %5937
      %5939 = vrot.lane.b32.xlu0 %v5865, 64
      %v5940 = vpop.permute.xlu0 %5939
      %5941 = vrot.lane.b32.xlu0 %v5867, 64
      %v5942 = vpop.permute.xlu0 %5941
      %5943 = vrot.lane.b32.xlu0 %v5870, 64
      %v5944 = vpop.permute.xlu0 %5943
      %5945 = vrot.lane.b32.xlu0 %v5872, 64
      %v5946 = vpop.permute.xlu0 %5945
      %5947 = vrot.lane.b32.xlu0 %v5875, 64
      %v5948 = vpop.permute.xlu0 %5947
      %5949 = vrot.lane.b32.xlu0 %v5877, 64
      %v5950 = vpop.permute.xlu0 %5949
      %5951 = vrot.lane.b32.xlu0 %v5880, 64
      %v5952 = vpop.permute.xlu0 %5951
      %5953 = vrot.lane.b32.xlu0 %v5882, 64
      %v5954 = vpop.permute.xlu0 %5953
      %5955 = vrot.lane.b32.xlu0 %v5885, 64
      %v5956 = vpop.permute.xlu0 %5955
      %5957 = vrot.lane.b32.xlu0 %v5887, 64
      %v5958 = vpop.permute.xlu0 %5957
      %5959 = vrot.lane.b32.xlu0 %v5890, 64
      %v5960 = vpop.permute.xlu0 %5959
      %5961 = vrot.lane.b32.xlu0 %v5892, 64
      %v5962 = vpop.permute.xlu0 %5961
      %5963 = vrot.lane.b32.xlu0 %v5895, 64
      %v5964 = vpop.permute.xlu0 %5963
      %5965 = vrot.lane.b32.xlu0 %v5897, 64
      %v5966 = vpop.permute.xlu0 %5965
      %5967 = vrot.lane.b32.xlu0 %v5900, 64
      %v5968 = vpop.permute.xlu0 %5967
      %5969 = vrot.lane.b32.xlu0 %v5902, 64
      %v5970 = vpop.permute.xlu0 %5969
      %5971 = vrot.lane.b32.xlu0 %v5905, 64
      %v5972 = vpop.permute.xlu0 %5971
      %5973 = vrot.lane.b32.xlu0 %v5907, 64
      %v5974 = vpop.permute.xlu0 %5973
      %5975 = vrot.lane.b32.xlu0 %v5910, 64
      %v5976 = vpop.permute.xlu0 %5975
      %5977 = vrot.lane.b32.xlu0 %v5912, 64
      %v5978 = vpop.permute.xlu0 %5977
      %5979 = vrot.lane.b32.xlu0 %v5915, 64
      %v5980 = vpop.permute.xlu0 %5979
      %5981 = vrot.lane.b32.xlu0 %v5917, 64
      %v5982 = vpop.permute.xlu0 %5981
      %5983 = vrot.lane.b32.xlu0 %v5920, 64
      %v5984 = vpop.permute.xlu0 %5983
      %5985 = vrot.lane.b32.xlu0 %v5922, 64
      %v5986 = vpop.permute.xlu0 %5985
      %5987 = vrot.lane.b32.xlu0 %v5925, 64
      %v5988 = vpop.permute.xlu0 %5987
      %5989 = vrot.lane.b32.xlu0 %v5927, 64
      %v5990 = vpop.permute.xlu0 %5989
      %5991 = vrot.lane.b32.xlu0 %v5930, 64
      %v5992 = vpop.permute.xlu0 %5991
      %5993 = vrot.lane.b32.xlu0 %v5932, 64
      %v5994 = vpop.permute.xlu0 %5993
      %v6026 = vrot.slane 0.0, 2
      %v6027 = vsel %vm612, %v6026, %v6026
      %v6028 = vrot.slane %v5718, 2
      %v6029 = vrot.slane %v5624, 2
      %v6030 = vsel %vm612, %v6028, %v6029
      %v6031 = vrot.slane %v5734, 2
      %v6032 = vsel %vm612, %v6029, %v6031
      %v6033 = vrot.slane %v5719, 2
      %v6034 = vrot.slane %v5627, 2
      %v6035 = vsel %vm612, %v6033, %v6034
      %v6036 = vrot.slane %v5735, 2
      %v6037 = vsel %vm612, %v6034, %v6036
      %v6038 = vrot.slane %v5720, 2
      %v6039 = vrot.slane %v5630, 2
      %v6040 = vsel %vm612, %v6038, %v6039
      %v6041 = vrot.slane %v5736, 2
      %v6042 = vsel %vm612, %v6039, %v6041
      %v6043 = vrot.slane %v5721, 2
      %v6044 = vrot.slane %v5633, 2
      %v6045 = vsel %vm612, %v6043, %v6044
      %v6046 = vrot.slane %v5737, 2
      %v6047 = vsel %vm612, %v6044, %v6046
      %v6048 = vrot.slane %v5722, 2
      %v6049 = vrot.slane %v5636, 2
      %v6050 = vsel %vm612, %v6048, %v6049
      %v6051 = vrot.slane %v5738, 2
      %v6052 = vsel %vm612, %v6049, %v6051
      %v6053 = vrot.slane %v5723, 2
      %v6054 = vrot.slane %v5639, 2
      %v6055 = vsel %vm612, %v6053, %v6054
      %v6056 = vrot.slane %v5739, 2
      %v6057 = vsel %vm612, %v6054, %v6056
      %v6058 = vrot.slane %v5724, 2
      %v6059 = vrot.slane %v5642, 2
      %v6060 = vsel %vm612, %v6058, %v6059
      %v6061 = vrot.slane %v5740, 2
      %v6062 = vsel %vm612, %v6059, %v6061
      %v6063 = vrot.slane %v5725, 2
      %v6064 = vrot.slane %v5645, 2
      %v6065 = vsel %vm612, %v6063, %v6064
      %v6066 = vrot.slane %v5741, 2
      %v6067 = vsel %vm612, %v6064, %v6066
      %v6068 = vrot.slane %v5726, 2
      %v6069 = vrot.slane %v5648, 2
      %v6070 = vsel %vm612, %v6068, %v6069
      %v6071 = vrot.slane %v5742, 2
      %v6072 = vsel %vm612, %v6069, %v6071
      %v6073 = vrot.slane %v5727, 2
      %v6074 = vrot.slane %v5651, 2
      %v6075 = vsel %vm612, %v6073, %v6074
      %v6076 = vrot.slane %v5743, 2
      %v6077 = vsel %vm612, %v6074, %v6076
      %v6078 = vrot.slane %v5728, 2
      %v6079 = vrot.slane %v5654, 2
      %v6080 = vsel %vm612, %v6078, %v6079
      %v6081 = vrot.slane %v5744, 2
      %v6082 = vsel %vm612, %v6079, %v6081
      %v6083 = vrot.slane %v5729, 2
      %v6084 = vrot.slane %v5657, 2
      %v6085 = vsel %vm612, %v6083, %v6084
      %v6086 = vrot.slane %v5745, 2
      %v6087 = vsel %vm612, %v6084, %v6086
      %v6088 = vrot.slane %v5730, 2
      %v6089 = vrot.slane %v5660, 2
      %v6090 = vsel %vm612, %v6088, %v6089
      %v6091 = vrot.slane %v5746, 2
      %v6092 = vsel %vm612, %v6089, %v6091
      %v6093 = vrot.slane %v5731, 2
      %v6094 = vrot.slane %v5663, 2
      %v6095 = vsel %vm612, %v6093, %v6094
      %v6096 = vrot.slane %v5747, 2
      %v6097 = vsel %vm612, %v6094, %v6096
      %v6098 = vrot.slane %v5732, 2
      %v6099 = vrot.slane %v5666, 2
      %v6100 = vsel %vm612, %v6098, %v6099
      %v6101 = vrot.slane %v5748, 2
      %v6102 = vsel %vm612, %v6099, %v6101
      %6135 = vrot.lane.b32.xlu0 %v5718, 64
      %v6136 = vpop.permute.xlu0 %6135
      %6137 = vrot.lane.b32.xlu0 %v5624, 64
      %v6138 = vpop.permute.xlu0 %6137
      %6139 = vrot.lane.b32.xlu0 %v5719, 64
      %v6140 = vpop.permute.xlu0 %6139
      %6141 = vrot.lane.b32.xlu0 %v5627, 64
      %v6142 = vpop.permute.xlu0 %6141
      %6143 = vrot.lane.b32.xlu0 %v5720, 64
      %v6144 = vpop.permute.xlu0 %6143
      %6145 = vrot.lane.b32.xlu0 %v5630, 64
      %v6146 = vpop.permute.xlu0 %6145
      %6147 = vrot.lane.b32.xlu0 %v5721, 64
      %v6148 = vpop.permute.xlu0 %6147
      %6149 = vrot.lane.b32.xlu0 %v5633, 64
      %v6150 = vpop.permute.xlu0 %6149
      %6151 = vrot.lane.b32.xlu0 %v5722, 64
      %v6152 = vpop.permute.xlu0 %6151
      %6153 = vrot.lane.b32.xlu0 %v5636, 64
      %v6154 = vpop.permute.xlu0 %6153
      %6155 = vrot.lane.b32.xlu0 %v5723, 64
      %v6156 = vpop.permute.xlu0 %6155
      %6157 = vrot.lane.b32.xlu0 %v5639, 64
      %v6158 = vpop.permute.xlu0 %6157
      %6159 = vrot.lane.b32.xlu0 %v5724, 64
      %v6160 = vpop.permute.xlu0 %6159
      %6161 = vrot.lane.b32.xlu0 %v5642, 64
      %v6162 = vpop.permute.xlu0 %6161
      %6163 = vrot.lane.b32.xlu0 %v5725, 64
      %v6164 = vpop.permute.xlu0 %6163
      %6165 = vrot.lane.b32.xlu0 %v5645, 64
      %v6166 = vpop.permute.xlu0 %6165
      %6167 = vrot.lane.b32.xlu0 %v5726, 64
      %v6168 = vpop.permute.xlu0 %6167
      %6169 = vrot.lane.b32.xlu0 %v5648, 64
      %v6170 = vpop.permute.xlu0 %6169
      %6171 = vrot.lane.b32.xlu0 %v5727, 64
      %v6172 = vpop.permute.xlu0 %6171
      %6173 = vrot.lane.b32.xlu0 %v5651, 64
      %v6174 = vpop.permute.xlu0 %6173
      %6175 = vrot.lane.b32.xlu0 %v5728, 64
      %v6176 = vpop.permute.xlu0 %6175
      %6177 = vrot.lane.b32.xlu0 %v5654, 64
      %v6178 = vpop.permute.xlu0 %6177
      %6179 = vrot.lane.b32.xlu0 %v5729, 64
      %v6180 = vpop.permute.xlu0 %6179
      %6181 = vrot.lane.b32.xlu0 %v5657, 64
      %v6182 = vpop.permute.xlu0 %6181
      %6183 = vrot.lane.b32.xlu0 %v5730, 64
      %v6184 = vpop.permute.xlu0 %6183
      %6185 = vrot.lane.b32.xlu0 %v5660, 64
      %v6186 = vpop.permute.xlu0 %6185
      %6187 = vrot.lane.b32.xlu0 %v5731, 64
      %v6188 = vpop.permute.xlu0 %6187
      %6189 = vrot.lane.b32.xlu0 %v5663, 64
      %v6190 = vpop.permute.xlu0 %6189
      %6191 = vrot.lane.b32.xlu0 %v5732, 64
      %v6192 = vpop.permute.xlu0 %6191
      %6193 = vrot.lane.b32.xlu0 %v5666, 64
      %v6194 = vpop.permute.xlu0 %6193
      %6195 = vrot.lane.b32.xlu0 %v5733, 64
      %v6196 = vpop.permute.xlu0 %6195
      %6197 = vrot.lane.b32.xlu0 %v5669, 64
      %v6198 = vpop.permute.xlu0 %6197
      %v6232 = vrot.slane %v5733, 1
      %v6233 = vrot.slane %v5669, 1
      %v6234 = vsel %vm435, %v6232, %v6233
      %v6235 = vrot.slane %v5749, 1
      %v6236 = vsel %vm435, %v6233, %v6235
      %v6269 = vrot.slane %v5733, 2
      %v6270 = vrot.slane %v5669, 2
      %v6271 = vsel %vm612, %v6269, %v6270
      %v6272 = vrot.slane %v5749, 2
      %v6273 = vsel %vm612, %v6270, %v6272
      %6274 = vrot.lane.b32.xlu0 %v6030, 64
      %v6275 = vpop.permute.xlu0 %6274
      %6276 = vrot.lane.b32.xlu0 %v6032, 64
      %v6277 = vpop.permute.xlu0 %6276
      %6278 = vrot.lane.b32.xlu0 %v6035, 64
      %v6279 = vpop.permute.xlu0 %6278
      %6280 = vrot.lane.b32.xlu0 %v6037, 64
      %v6281 = vpop.permute.xlu0 %6280
      %6282 = vrot.lane.b32.xlu0 %v6040, 64
      %v6283 = vpop.permute.xlu0 %6282
      %6284 = vrot.lane.b32.xlu0 %v6042, 64
      %v6285 = vpop.permute.xlu0 %6284
      %6286 = vrot.lane.b32.xlu0 %v6045, 64
      %v6287 = vpop.permute.xlu0 %6286
      %6288 = vrot.lane.b32.xlu0 %v6047, 64
      %v6289 = vpop.permute.xlu0 %6288
      %6290 = vrot.lane.b32.xlu0 %v6050, 64
      %v6291 = vpop.permute.xlu0 %6290
      %6292 = vrot.lane.b32.xlu0 %v6052, 64
      %v6293 = vpop.permute.xlu0 %6292
      %6294 = vrot.lane.b32.xlu0 %v6055, 64
      %v6295 = vpop.permute.xlu0 %6294
      %6296 = vrot.lane.b32.xlu0 %v6057, 64
      %v6297 = vpop.permute.xlu0 %6296
      %6298 = vrot.lane.b32.xlu0 %v6060, 64
      %v6299 = vpop.permute.xlu0 %6298
      %6300 = vrot.lane.b32.xlu0 %v6062, 64
      %v6301 = vpop.permute.xlu0 %6300
      %6302 = vrot.lane.b32.xlu0 %v6065, 64
      %v6303 = vpop.permute.xlu0 %6302
      %6304 = vrot.lane.b32.xlu0 %v6067, 64
      %v6305 = vpop.permute.xlu0 %6304
      %6306 = vrot.lane.b32.xlu0 %v6070, 64
      %v6307 = vpop.permute.xlu0 %6306
      %6308 = vrot.lane.b32.xlu0 %v6072, 64
      %v6309 = vpop.permute.xlu0 %6308
      %6310 = vrot.lane.b32.xlu0 %v6075, 64
      %v6311 = vpop.permute.xlu0 %6310
      %6312 = vrot.lane.b32.xlu0 %v6077, 64
      %v6313 = vpop.permute.xlu0 %6312
      %6314 = vrot.lane.b32.xlu0 %v6080, 64
      %v6315 = vpop.permute.xlu0 %6314
      %6316 = vrot.lane.b32.xlu0 %v6082, 64
      %v6317 = vpop.permute.xlu0 %6316
      %6318 = vrot.lane.b32.xlu0 %v6085, 64
      %v6319 = vpop.permute.xlu0 %6318
      %6320 = vrot.lane.b32.xlu0 %v6087, 64
      %v6321 = vpop.permute.xlu0 %6320
      %6322 = vrot.lane.b32.xlu0 %v6090, 64
      %v6323 = vpop.permute.xlu0 %6322
      %6324 = vrot.lane.b32.xlu0 %v6092, 64
      %v6325 = vpop.permute.xlu0 %6324
      %6326 = vrot.lane.b32.xlu0 %v6095, 64
      %v6327 = vpop.permute.xlu0 %6326
      %6328 = vrot.lane.b32.xlu0 %v6097, 64
      %v6329 = vpop.permute.xlu0 %6328
      %6330 = vrot.lane.b32.xlu0 %v6100, 64
      %v6331 = vpop.permute.xlu0 %6330
      %6332 = vrot.lane.b32.xlu0 %v6102, 64
      %v6333 = vpop.permute.xlu0 %6332
      %6334 = vrot.lane.b32.xlu0 %v6271, 64
      %v6335 = vpop.permute.xlu0 %6334
      %6336 = vrot.lane.b32.xlu0 %v6273, 64
      %v6337 = vpop.permute.xlu0 %6336
      %6370 = vrot.lane.b32.xlu0 %v6234, 64
      %v6371 = vpop.permute.xlu0 %6370
      %6372 = vrot.lane.b32.xlu0 %v6236, 64
      %v6373 = vpop.permute.xlu0 %6372
      %v6378 = vsel %vm991, 0.0, %v5934
      %v6379 = vsel %vm991, %v5718, %v5936
      %v6380 = vsel %vm991, %v5624, %v5938
      %v6381 = vsel %vm991, %v5719, %v5940
      %v6382 = vsel %vm991, %v5627, %v5942
      %v6383 = vsel %vm991, %v5720, %v5944
      %v6384 = vsel %vm991, %v5630, %v5946
      %v6385 = vsel %vm991, %v5721, %v5948
      %v6386 = vsel %vm991, %v5633, %v5950
      %v6387 = vsel %vm991, %v5722, %v5952
      %v6388 = vsel %vm991, %v5636, %v5954
      %v6389 = vsel %vm991, %v5723, %v5956
      %v6390 = vsel %vm991, %v5639, %v5958
      %v6391 = vsel %vm991, %v5724, %v5960
      %v6392 = vsel %vm991, %v5642, %v5962
      %v6393 = vsel %vm991, %v5725, %v5964
      %v6394 = vsel %vm991, %v5645, %v5966
      %v6395 = vsel %vm991, %v5726, %v5968
      %v6396 = vsel %vm991, %v5648, %v5970
      %v6397 = vsel %vm991, %v5727, %v5972
      %v6398 = vsel %vm991, %v5651, %v5974
      %v6399 = vsel %vm991, %v5728, %v5976
      %v6400 = vsel %vm991, %v5654, %v5978
      %v6401 = vsel %vm991, %v5729, %v5980
      %v6402 = vsel %vm991, %v5657, %v5982
      %v6403 = vsel %vm991, %v5730, %v5984
      %v6404 = vsel %vm991, %v5660, %v5986
      %v6405 = vsel %vm991, %v5731, %v5988
      %v6406 = vsel %vm991, %v5663, %v5990
      %v6407 = vsel %vm991, %v5732, %v5992
      %v6408 = vsel %vm991, %v5666, %v5994
      %v6409 = vsel %vm991, %v6027, %v6136
      %v6410 = vsel %vm991, %v6027, %v6138
      %v6411 = vsel %vm991, %v6030, %v6140
      %v6412 = vsel %vm991, %v6032, %v6142
      %v6413 = vsel %vm991, %v6035, %v6144
      %v6414 = vsel %vm991, %v6037, %v6146
      %v6415 = vsel %vm991, %v6040, %v6148
      %v6416 = vsel %vm991, %v6042, %v6150
      %v6417 = vsel %vm991, %v6045, %v6152
      %v6418 = vsel %vm991, %v6047, %v6154
      %v6419 = vsel %vm991, %v6050, %v6156
      %v6420 = vsel %vm991, %v6052, %v6158
      %v6421 = vsel %vm991, %v6055, %v6160
      %v6422 = vsel %vm991, %v6057, %v6162
      %v6423 = vsel %vm991, %v6060, %v6164
      %v6424 = vsel %vm991, %v6062, %v6166
      %v6425 = vsel %vm991, %v6065, %v6168
      %v6426 = vsel %vm991, %v6067, %v6170
      %v6427 = vsel %vm991, %v6070, %v6172
      %v6428 = vsel %vm991, %v6072, %v6174
      %v6429 = vsel %vm991, %v6075, %v6176
      %v6430 = vsel %vm991, %v6077, %v6178
      %v6431 = vsel %vm991, %v6080, %v6180
      %v6432 = vsel %vm991, %v6082, %v6182
      %v6433 = vsel %vm991, %v6085, %v6184
      %v6434 = vsel %vm991, %v6087, %v6186
      %v6435 = vsel %vm991, %v6090, %v6188
      %v6436 = vsel %vm991, %v6092, %v6190
      %v6437 = vsel %vm991, %v6095, %v6192
      %v6438 = vsel %vm991, %v6097, %v6194
      %v6439 = vsel %vm991, %v6100, %v6196
      %v6440 = vsel %vm991, %v6102, %v6198
      %v6441 = vsel %vm991, %v5860, %v6275
      %v6442 = vsel %vm991, %v5862, %v6277
      %v6443 = vsel %vm991, %v5865, %v6279
      %v6444 = vsel %vm991, %v5867, %v6281
      %v6445 = vsel %vm991, %v5870, %v6283
      %v6446 = vsel %vm991, %v5872, %v6285
      %v6447 = vsel %vm991, %v5875, %v6287
      %v6448 = vsel %vm991, %v5877, %v6289
      %v6449 = vsel %vm991, %v5880, %v6291
      %v6450 = vsel %vm991, %v5882, %v6293
      %v6451 = vsel %vm991, %v5885, %v6295
      %v6452 = vsel %vm991, %v5887, %v6297
      %v6453 = vsel %vm991, %v5890, %v6299
      %v6454 = vsel %vm991, %v5892, %v6301
      %v6455 = vsel %vm991, %v5895, %v6303
      %v6456 = vsel %vm991, %v5897, %v6305
      %v6457 = vsel %vm991, %v5900, %v6307
      %v6458 = vsel %vm991, %v5902, %v6309
      %v6459 = vsel %vm991, %v5905, %v6311
      %v6460 = vsel %vm991, %v5907, %v6313
      %v6461 = vsel %vm991, %v5910, %v6315
      %v6462 = vsel %vm991, %v5912, %v6317
      %v6463 = vsel %vm991, %v5915, %v6319
      %v6464 = vsel %vm991, %v5917, %v6321
      %v6465 = vsel %vm991, %v5920, %v6323
      %v6466 = vsel %vm991, %v5922, %v6325
      %v6467 = vsel %vm991, %v5925, %v6327
      %v6468 = vsel %vm991, %v5927, %v6329
      %v6469 = vsel %vm991, %v5930, %v6331
      %v6470 = vsel %vm991, %v5932, %v6333
      %v6471 = vsel %vm991, %v6234, %v6335
      %v6472 = vsel %vm991, %v6236, %v6337
      %v6473 = vsel %vm991, %v5733, %v6371
      %v6474 = vsel %vm991, %v5669, %v6373
      %v6475 = vpack.c.bf16 %v6378, %v6378
      %v6476 = vpack.c.bf16 %v6410, %v6409
      %v6477 = vpack.c.bf16 %v6442, %v6441
      %v6478 = vpack.c.bf16 %v6382, %v6381
      %v6479 = vpack.c.bf16 %v6037, %v6035
      %v6480 = vpack.c.bf16 %v6380, %v6379
      %v6481 = vpack.c.bf16 %v6412, %v6411
      %v6482 = vpack.c.bf16 %v6444, %v6443
      %v6483 = vpack.c.bf16 %v6384, %v6383
      %v6484 = vpack.c.bf16 %v6042, %v6040
      %v6485 = vpack.c.bf16 %v6414, %v6413
      %v6486 = vpack.c.bf16 %v6446, %v6445
      %v6487 = vpack.c.bf16 %v6386, %v6385
      %v6488 = vpack.c.bf16 %v6047, %v6045
      %v6489 = vpack.c.bf16 %v6416, %v6415
      %v6490 = vpack.c.bf16 %v6448, %v6447
      %v6491 = vpack.c.bf16 %v6388, %v6387
      %v6492 = vpack.c.bf16 %v6052, %v6050
      %v6493 = vpack.c.bf16 %v6418, %v6417
      %v6494 = vpack.c.bf16 %v6450, %v6449
      %v6495 = vpack.c.bf16 %v6390, %v6389
      %v6496 = vpack.c.bf16 %v6057, %v6055
      %v6497 = vpack.c.bf16 %v6420, %v6419
      %v6498 = vpack.c.bf16 %v6452, %v6451
      %v6499 = vpack.c.bf16 %v6392, %v6391
      %v6500 = vpack.c.bf16 %v6062, %v6060
      %v6501 = vpack.c.bf16 %v6422, %v6421
      %v6502 = vpack.c.bf16 %v6454, %v6453
      %v6503 = vpack.c.bf16 %v6394, %v6393
      %v6504 = vpack.c.bf16 %v6067, %v6065
      %v6505 = vpack.c.bf16 %v6424, %v6423
      %v6506 = vpack.c.bf16 %v6456, %v6455
      %v6507 = vpack.c.bf16 %v6396, %v6395
      %v6508 = vpack.c.bf16 %v6072, %v6070
      %v6509 = vpack.c.bf16 %v6426, %v6425
      %v6510 = vpack.c.bf16 %v6458, %v6457
      %v6511 = vpack.c.bf16 %v6398, %v6397
      %v6512 = vpack.c.bf16 %v6077, %v6075
      %v6513 = vpack.c.bf16 %v6428, %v6427
      %v6514 = vpack.c.bf16 %v6460, %v6459
      %v6515 = vpack.c.bf16 %v6400, %v6399
      %v6516 = vpack.c.bf16 %v6082, %v6080
      %v6517 = vpack.c.bf16 %v6430, %v6429
      %v6518 = vpack.c.bf16 %v6462, %v6461
      %v6519 = vpack.c.bf16 %v6402, %v6401
      %v6520 = vpack.c.bf16 %v6087, %v6085
      %v6521 = vpack.c.bf16 %v6432, %v6431
      %v6522 = vpack.c.bf16 %v6464, %v6463
      %v6523 = vpack.c.bf16 %v6404, %v6403
      %v6524 = vpack.c.bf16 %v6092, %v6090
      %v6525 = vpack.c.bf16 %v6434, %v6433
      %v6526 = vpack.c.bf16 %v6466, %v6465
      %v6527 = vpack.c.bf16 %v6406, %v6405
      %v6528 = vpack.c.bf16 %v6097, %v6095
      %v6529 = vpack.c.bf16 %v6436, %v6435
      %v6530 = vpack.c.bf16 %v6468, %v6467
      %v6531 = vpack.c.bf16 %v6408, %v6407
      %v6532 = vpack.c.bf16 %v6102, %v6100
      %v6533 = vpack.c.bf16 %v6438, %v6437
      %v6534 = vpack.c.bf16 %v6470, %v6469
      %v6535 = vpack.c.bf16 %v6474, %v6473
      %v6536 = vpack.c.bf16 %v6273, %v6271
      %v6537 = vpack.c.bf16 %v6440, %v6439
      %v6538 = vpack.c.bf16 %v6472, %v6471
      %v6539 = vpack.c.bf16 %v6027, %v6027
      %v6541 = vlaneseq
      %v6542 = vshrl.u32 %v6541, 7
      %v6543 = vsub.s32 0, %v6542
      %v6544 = vrot.slane %v5824, %v6543
      %v6618 = vunpack.c.l.b16 %v5751
      %v6619 = vunpack.c.l.b16 %v5752
      %v6620 = vunpack.c.l.b16 %v5753
      %v6621 = vunpack.c.l.b16 %v5754
      %v6622 = vunpack.c.l.b16 %v5755
      %v6623 = vunpack.c.l.b16 %v5756
      %v6624 = vunpack.c.l.b16 %v5757
      %v6625 = vunpack.c.l.b16 %v5758
      %v6626 = vunpack.c.l.b16 %v5759
      %v6627 = vunpack.c.l.b16 %v5760
      %v6628 = vunpack.c.l.b16 %v5761
      %v6629 = vunpack.c.l.b16 %v5762
      %v6630 = vunpack.c.l.b16 %v5763
      %v6631 = vunpack.c.l.b16 %v5764
      %v6632 = vunpack.c.l.b16 %v5765
      %v6633 = vunpack.c.l.b16 %v5766
      %v6634 = vunpack.c.l.b16 %v5767
      %v6635 = vunpack.c.l.b16 %v5768
      %v6636 = vunpack.c.l.b16 %v5769
      %v6637 = vunpack.c.l.b16 %v5770
      %v6638 = vunpack.c.l.b16 %v5771
      %v6639 = vunpack.c.l.b16 %v5772
      %v6640 = vunpack.c.l.b16 %v5773
      %v6641 = vunpack.c.l.b16 %v5774
      %v6642 = vunpack.c.l.b16 %v5775
      %v6643 = vunpack.c.l.b16 %v5776
      %v6644 = vunpack.c.l.b16 %v5777
      %v6645 = vunpack.c.l.b16 %v5778
      %v6646 = vunpack.c.l.b16 %v5779
      %v6647 = vunpack.c.l.b16 %v5780
      %v6648 = vunpack.c.l.b16 %v5781
      %v6649 = vunpack.c.l.b16 %v5782
      %v6650 = vunpack.c.l.b16 %v5783
      %v6651 = vunpack.c.l.b16 %v5784
      %v6652 = vunpack.c.l.b16 %v5785
      %v6653 = vunpack.c.l.b16 %v5786
      %v6654 = vunpack.c.l.b16 %v5787
      %v6655 = vunpack.c.l.b16 %v5788
      %v6656 = vunpack.c.l.b16 %v5789
      %v6657 = vunpack.c.l.b16 %v5790
      %v6658 = vunpack.c.l.b16 %v5791
      %v6659 = vunpack.c.l.b16 %v5792
      %v6660 = vunpack.c.l.b16 %v5793
      %v6661 = vunpack.c.l.b16 %v5794
      %v6662 = vunpack.c.l.b16 %v5795
      %v6663 = vunpack.c.l.b16 %v5796
      %v6664 = vunpack.c.l.b16 %v5797
      %v6665 = vunpack.c.l.b16 %v5798
      %v6666 = vunpack.c.l.b16 %v5799
      %v6667 = vunpack.c.l.b16 %v5800
      %v6668 = vunpack.c.l.b16 %v5801
      %v6669 = vunpack.c.l.b16 %v5802
      %v6670 = vunpack.c.l.b16 %v5803
      %v6671 = vunpack.c.l.b16 %v5804
      %v6672 = vunpack.c.l.b16 %v5805
      %v6673 = vunpack.c.l.b16 %v5806
      %v6674 = vunpack.c.l.b16 %v5807
      %v6675 = vunpack.c.l.b16 %v5808
      %v6676 = vunpack.c.l.b16 %v5809
      %v6677 = vunpack.c.l.b16 %v5810
      %v6678 = vunpack.c.l.b16 %v5811
      %v6679 = vunpack.c.l.b16 %v5812
      %v6680 = vunpack.c.l.b16 %v5813
      %v6681 = vunpack.c.l.b16 %v5814
      %v6682 = vunpack.c.l.b16 %v5815
      %v6683 = vunpack.c.l.b16 %v5816
      %v6684 = vunpack.c.l.b16 %v5817
      %v6685 = vunpack.c.l.b16 %v5818
      %v6686 = vunpack.c.l.b16 %v5819
      %v6687 = vunpack.c.l.b16 %v5820
      %v6688 = vunpack.c.l.b16 %v5821
      %v6689 = vunpack.c.l.b16 %v5822
      %v6690 = vpack.c.b16 %v6619, %v6618
      %v6691 = vpack.c.b16 %v6621, %v6620
      %v6692 = vpack.c.b16 %v6623, %v6622
      %v6693 = vpack.c.b16 %v6625, %v6624
      %v6694 = vpack.c.b16 %v6627, %v6626
      %v6695 = vpack.c.b16 %v6629, %v6628
      %v6696 = vpack.c.b16 %v6631, %v6630
      %v6697 = vpack.c.b16 %v6633, %v6632
      %v6698 = vpack.c.b16 %v6635, %v6634
      %v6699 = vpack.c.b16 %v6637, %v6636
      %v6700 = vpack.c.b16 %v6639, %v6638
      %v6701 = vpack.c.b16 %v6641, %v6640
      %v6702 = vpack.c.b16 %v6643, %v6642
      %v6703 = vpack.c.b16 %v6645, %v6644
      %v6704 = vpack.c.b16 %v6647, %v6646
      %v6705 = vpack.c.b16 %v6649, %v6648
      %v6706 = vpack.c.b16 %v6651, %v6650
      %v6707 = vpack.c.b16 %v6653, %v6652
      %v6708 = vpack.c.b16 %v6655, %v6654
      %v6709 = vpack.c.b16 %v6657, %v6656
      %v6710 = vpack.c.b16 %v6659, %v6658
      %v6711 = vpack.c.b16 %v6661, %v6660
      %v6712 = vpack.c.b16 %v6663, %v6662
      %v6713 = vpack.c.b16 %v6665, %v6664
      %v6714 = vpack.c.b16 %v6667, %v6666
      %v6715 = vpack.c.b16 %v6669, %v6668
      %v6716 = vpack.c.b16 %v6671, %v6670
      %v6717 = vpack.c.b16 %v6673, %v6672
      %v6718 = vpack.c.b16 %v6675, %v6674
      %v6719 = vpack.c.b16 %v6677, %v6676
      %v6720 = vpack.c.b16 %v6679, %v6678
      %v6721 = vpack.c.b16 %v6681, %v6680
      %v6722 = vpack.c.b16 %v6683, %v6682
      %v6723 = vpack.c.b16 %v6685, %v6684
      %v6724 = vpack.c.b16 %v6687, %v6686
      %v6725 = vpack.c.b16 %v6689, %v6688
      %v6763 = vsel %vm991, %v6479, 0
      %v6766 = vsel %vm991, %v6484, 0
      %v6769 = vsel %vm991, %v6488, 0
      %v6772 = vsel %vm991, %v6492, 0
      %v6775 = vsel %vm991, %v6496, 0
      %v6778 = vsel %vm991, %v6500, 0
      %v6781 = vsel %vm991, %v6504, 0
      %v6784 = vsel %vm991, %v6508, 0
      %v6787 = vsel %vm991, %v6512, 0
      %v6790 = vsel %vm991, %v6516, 0
      %v6793 = vsel %vm991, %v6520, 0
      %v6796 = vsel %vm991, %v6524, 0
      %v6799 = vsel %vm991, %v6528, 0
      %v6802 = vsel %vm991, %v6532, 0
      %v6805 = vsel %vm991, %v6536, 0
      %v6808 = vsel %vm991, %v6539, 0
      %6810 = vmatprep.subr.bf16.mxu0 0
      %6811 = vmatpush1.bf16.msra.mxu0 %v6690
      %6812 = vmatprep.subr.bf16.mxu0 0
      %6813 = vmatpush1.bf16.msra.mxu0 %v6691
      %6814 = vmatprep.subr.bf16.mxu0 0
      %6815 = vmatpush1.bf16.msra.mxu0 %v6692
      %6816 = vmatprep.subr.bf16.mxu0 0
      %6817 = vmatpush1.bf16.msra.mxu0 %v6693
      %6818 = vmatprep.subr.bf16.mxu0 0
      %6819 = vmatpush1.bf16.msra.mxu0 %v6694
      %6820 = vmatprep.subr.bf16.mxu0 0
      %6821 = vmatpush1.bf16.msra.mxu0 %v6695
      %6822 = vmatprep.subr.bf16.mxu0 0
      %6823 = vmatpush1.bf16.msra.mxu0 %v6696
      %6824 = vmatprep.subr.bf16.mxu0 0
      %6825 = vmatpush1.bf16.msra.mxu0 %v6697
      %6826 = vmatprep.subr.bf16.mxu0 0
      %6827 = vmatpush1.bf16.msra.mxu0 %v6698
      %6828 = vmatprep.subr.bf16.mxu0 0
      %6829 = vmatpush1.bf16.msra.mxu0 %v6699
      %6830 = vmatprep.subr.bf16.mxu0 0
      %6831 = vmatpush1.bf16.msra.mxu0 %v6700
      %6832 = vmatprep.subr.bf16.mxu0 0
      %6833 = vmatpush1.bf16.msra.mxu0 %v6701
      %6834 = vmatprep.subr.bf16.mxu0 0
      %6835 = vmatpush1.bf16.msra.mxu0 %v6702
      %6836 = vmatprep.subr.bf16.mxu0 0
      %6837 = vmatpush1.bf16.msra.mxu0 %v6703
      %6838 = vmatprep.subr.bf16.mxu0 0
      %6839 = vmatpush1.bf16.msra.mxu0 %v6704
      %6840 = vmatprep.subr.bf16.mxu0 0
      %6841 = vmatpush1.bf16.msra.mxu0 %v6705
      %6842 = vmatprep.mubr.bf16.mxu0 %v6476
      %6843 = vmatmul.mubr.bf16.gmra.mrb[0].mxu0 %v6475
      %v6844 = vpop.f32.mrb[0].mxu0
      %v6845 = vadd.f32 %v6544, %v6844
      %v6846 = vpop.f32.mrb[0].mxu0
      %v6847 = vpop.f32.mrb[0].mxu0
      %v6848 = vadd.f32 %v6544, %v6847
      %v6849 = vpop.f32.mrb[0].mxu0
      %6850 = vmatprep.mubr.bf16.mxu0 %v6481
      %6851 = vmatmul.mubr.bf16.gmra.mrb[0].mxu0 %v6480
      %v6852 = vpop.f32.mrb[0].mxu0
      %v6853 = vadd.f32 %v6544, %v6852
      %v6854 = vpop.f32.mrb[0].mxu0
      %v6855 = vpop.f32.mrb[0].mxu0
      %v6856 = vadd.f32 %v6544, %v6855
      %v6857 = vpop.f32.mrb[0].mxu0
      %6858 = vmatprep.mubr.bf16.mxu0 %v6485
      %6859 = vmatmul.mubr.bf16.gmra.mrb[0].mxu0 %v6478
      %v6860 = vpop.f32.mrb[0].mxu0
      %v6861 = vadd.f32 %v6544, %v6860
      %v6862 = vpop.f32.mrb[0].mxu0
      %v6863 = vpop.f32.mrb[0].mxu0
      %v6864 = vadd.f32 %v6544, %v6863
      %v6865 = vpop.f32.mrb[0].mxu0
      %6866 = vmatprep.mubr.bf16.mxu0 %v6489
      %6867 = vmatmul.mubr.bf16.gmra.mrb[0].mxu0 %v6483
      %v6868 = vpop.f32.mrb[0].mxu0
      %v6869 = vadd.f32 %v6544, %v6868
      %v6870 = vpop.f32.mrb[0].mxu0
      %v6871 = vpop.f32.mrb[0].mxu0
      %v6872 = vadd.f32 %v6544, %v6871
      %v6873 = vpop.f32.mrb[0].mxu0
      %6874 = vmatprep.mubr.bf16.mxu0 %v6493
      %6875 = vmatmul.mubr.bf16.gmra.mrb[0].mxu0 %v6487
      %v6876 = vpop.f32.mrb[0].mxu0
      %v6877 = vadd.f32 %v6544, %v6876
      %v6878 = vpop.f32.mrb[0].mxu0
      %v6879 = vpop.f32.mrb[0].mxu0
      %v6880 = vadd.f32 %v6544, %v6879
      %v6881 = vpop.f32.mrb[0].mxu0
      %6882 = vmatprep.mubr.bf16.mxu0 %v6497
      %6883 = vmatmul.mubr.bf16.gmra.mrb[0].mxu0 %v6491
      %v6884 = vpop.f32.mrb[0].mxu0
      %v6885 = vadd.f32 %v6544, %v6884
      %v6886 = vpop.f32.mrb[0].mxu0
      %v6887 = vpop.f32.mrb[0].mxu0
      %v6888 = vadd.f32 %v6544, %v6887
      %v6889 = vpop.f32.mrb[0].mxu0
      %6890 = vmatprep.mubr.bf16.mxu0 %v6501
      %6891 = vmatmul.mubr.bf16.gmra.mrb[0].mxu0 %v6495
      %v6892 = vpop.f32.mrb[0].mxu0
      %v6893 = vadd.f32 %v6544, %v6892
      %v6894 = vpop.f32.mrb[0].mxu0
      %v6895 = vpop.f32.mrb[0].mxu0
      %v6896 = vadd.f32 %v6544, %v6895
      %v6897 = vpop.f32.mrb[0].mxu0
      %6898 = vmatprep.mubr.bf16.mxu0 %v6505
      %6899 = vmatmul.mubr.bf16.gmra.mrb[0].mxu0 %v6499
      %v6900 = vpop.f32.mrb[0].mxu0
      %v6901 = vadd.f32 %v6544, %v6900
      %v6902 = vpop.f32.mrb[0].mxu0
      %v6903 = vpop.f32.mrb[0].mxu0
      %v6904 = vadd.f32 %v6544, %v6903
      %v6905 = vpop.f32.mrb[0].mxu0
      %6906 = vmatprep.mubr.bf16.mxu0 %v6509
      %6907 = vmatmul.mubr.bf16.gmra.mrb[0].mxu0 %v6503
      %v6908 = vpop.f32.mrb[0].mxu0
      %v6909 = vadd.f32 %v6544, %v6908
      %v6910 = vpop.f32.mrb[0].mxu0
      %v6911 = vpop.f32.mrb[0].mxu0
      %v6912 = vadd.f32 %v6544, %v6911
      %v6913 = vpop.f32.mrb[0].mxu0
      %6914 = vmatprep.mubr.bf16.mxu0 %v6513
      %6915 = vmatmul.mubr.bf16.gmra.mrb[0].mxu0 %v6507
      %v6916 = vpop.f32.mrb[0].mxu0
      %v6917 = vadd.f32 %v6544, %v6916
      %v6918 = vpop.f32.mrb[0].mxu0
      %v6919 = vpop.f32.mrb[0].mxu0
      %v6920 = vadd.f32 %v6544, %v6919
      %v6921 = vpop.f32.mrb[0].mxu0
      %6922 = vmatprep.mubr.bf16.mxu0 %v6517
      %6923 = vmatmul.mubr.bf16.gmra.mrb[0].mxu0 %v6511
      %v6924 = vpop.f32.mrb[0].mxu0
      %v6925 = vadd.f32 %v6544, %v6924
      %v6926 = vpop.f32.mrb[0].mxu0
      %v6927 = vpop.f32.mrb[0].mxu0
      %v6928 = vadd.f32 %v6544, %v6927
      %v6929 = vpop.f32.mrb[0].mxu0
      %6930 = vmatprep.mubr.bf16.mxu0 %v6521
      %6931 = vmatmul.mubr.bf16.gmra.mrb[0].mxu0 %v6515
      %v6932 = vpop.f32.mrb[0].mxu0
      %v6933 = vadd.f32 %v6544, %v6932
      %v6934 = vpop.f32.mrb[0].mxu0
      %v6935 = vpop.f32.mrb[0].mxu0
      %v6936 = vadd.f32 %v6544, %v6935
      %v6937 = vpop.f32.mrb[0].mxu0
      %6938 = vmatprep.mubr.bf16.mxu0 %v6525
      %6939 = vmatmul.mubr.bf16.gmra.mrb[0].mxu0 %v6519
      %v6940 = vpop.f32.mrb[0].mxu0
      %v6941 = vadd.f32 %v6544, %v6940
      %v6942 = vpop.f32.mrb[0].mxu0
      %v6943 = vpop.f32.mrb[0].mxu0
      %v6944 = vadd.f32 %v6544, %v6943
      %v6945 = vpop.f32.mrb[0].mxu0
      %6946 = vmatprep.mubr.bf16.mxu0 %v6529
      %6947 = vmatmul.mubr.bf16.gmra.mrb[0].mxu0 %v6523
      %v6948 = vpop.f32.mrb[0].mxu0
      %v6949 = vadd.f32 %v6544, %v6948
      %v6950 = vpop.f32.mrb[0].mxu0
      %v6951 = vpop.f32.mrb[0].mxu0
      %v6952 = vadd.f32 %v6544, %v6951
      %v6953 = vpop.f32.mrb[0].mxu0
      %6954 = vmatprep.mubr.bf16.mxu0 %v6533
      %6955 = vmatmul.mubr.bf16.gmra.mrb[0].mxu0 %v6527
      %v6956 = vpop.f32.mrb[0].mxu0
      %v6957 = vadd.f32 %v6544, %v6956
      %v6958 = vpop.f32.mrb[0].mxu0
      %v6959 = vpop.f32.mrb[0].mxu0
      %v6960 = vadd.f32 %v6544, %v6959
      %v6961 = vpop.f32.mrb[0].mxu0
      %6962 = vmatprep.mubr.bf16.mxu0 %v6537
      %6963 = vmatmul.mubr.bf16.gmra.mrb[0].mxu0 %v6531
      %v6964 = vpop.f32.mrb[0].mxu0
      %v6965 = vadd.f32 %v6544, %v6964
      %v6966 = vpop.f32.mrb[0].mxu0
      %v6967 = vpop.f32.mrb[0].mxu0
      %v6968 = vadd.f32 %v6544, %v6967
      %v6969 = vpop.f32.mrb[0].mxu0
      %6970 = vdwg.mxu0
      %6971 = vmatprep.subr.bf16.mxu0 0
      %6972 = vmatpush1.bf16.msra.mxu0 %v6706
      %6973 = vmatprep.subr.bf16.mxu0 0
      %6974 = vmatpush1.bf16.msra.mxu0 %v6707
      %6975 = vmatprep.subr.bf16.mxu0 0
      %6976 = vmatpush1.bf16.msra.mxu0 %v6708
      %6977 = vmatprep.subr.bf16.mxu0 0
      %6978 = vmatpush1.bf16.msra.mxu0 %v6709
      %6979 = vmatprep.subr.bf16.mxu0 0
      %6980 = vmatpush1.bf16.msra.mxu0 %v6710
      %6981 = vmatprep.subr.bf16.mxu0 0
      %6982 = vmatpush1.bf16.msra.mxu0 %v6711
      %6983 = vmatprep.subr.bf16.mxu0 0
      %6984 = vmatpush1.bf16.msra.mxu0 %v6712
      %6985 = vmatprep.subr.bf16.mxu0 0
      %6986 = vmatpush1.bf16.msra.mxu0 %v6713
      %6987 = vmatprep.subr.bf16.mxu0 0
      %6988 = vmatpush1.bf16.msra.mxu0 %v6714
      %6989 = vmatprep.subr.bf16.mxu0 0
      %6990 = vmatpush1.bf16.msra.mxu0 %v6715
      %6991 = vmatprep.subr.bf16.mxu0 0
      %6992 = vmatpush1.bf16.msra.mxu0 %v6716
      %6993 = vmatprep.subr.bf16.mxu0 0
      %6994 = vmatpush1.bf16.msra.mxu0 %v6717
      %6995 = vmatprep.subr.bf16.mxu0 0
      %6996 = vmatpush1.bf16.msra.mxu0 %v6718
      %6997 = vmatprep.subr.bf16.mxu0 0
      %6998 = vmatpush1.bf16.msra.mxu0 %v6719
      %6999 = vmatprep.subr.bf16.mxu0 0
      %7000 = vmatpush1.bf16.msra.mxu0 %v6720
      %7001 = vmatprep.subr.bf16.mxu0 0
      %7002 = vmatpush1.bf16.msra.mxu0 %v6721
      %7003 = vmatprep.mubr.bf16.mxu0 %v6478
      %7004 = vmatmul.mubr.bf16.gmra.mrb[0].mxu0 %v6477
      %v7005 = vpop.f32.mrb[0].mxu0
      %v7006 = vadd.f32 %v6845, %v7005
      %v7007 = vpop.f32.mrb[0].mxu0
      %v7008 = vpop.f32.mrb[0].mxu0
      %v7009 = vadd.f32 %v6848, %v7008
      %v7010 = vpop.f32.mrb[0].mxu0
      %7011 = vmatprep.mubr.bf16.mxu0 %v6483
      %7012 = vmatmul.mubr.bf16.gmra.mrb[0].mxu0 %v6482
      %v7013 = vpop.f32.mrb[0].mxu0
      %v7014 = vadd.f32 %v6853, %v7013
      %v7015 = vpop.f32.mrb[0].mxu0
      %v7016 = vpop.f32.mrb[0].mxu0
      %v7017 = vadd.f32 %v6856, %v7016
      %v7018 = vpop.f32.mrb[0].mxu0
      %7019 = vmatprep.mubr.bf16.mxu0 %v6487
      %7020 = vmatmul.mubr.bf16.gmra.mrb[0].mxu0 %v6486
      %v7021 = vpop.f32.mrb[0].mxu0
      %v7022 = vadd.f32 %v6861, %v7021
      %v7023 = vpop.f32.mrb[0].mxu0
      %v7024 = vpop.f32.mrb[0].mxu0
      %v7025 = vadd.f32 %v6864, %v7024
      %v7026 = vpop.f32.mrb[0].mxu0
      %7027 = vmatprep.mubr.bf16.mxu0 %v6491
      %7028 = vmatmul.mubr.bf16.gmra.mrb[0].mxu0 %v6490
      %v7029 = vpop.f32.mrb[0].mxu0
      %v7030 = vadd.f32 %v6869, %v7029
      %v7031 = vpop.f32.mrb[0].mxu0
      %v7032 = vpop.f32.mrb[0].mxu0
      %v7033 = vadd.f32 %v6872, %v7032
      %v7034 = vpop.f32.mrb[0].mxu0
      %7035 = vmatprep.mubr.bf16.mxu0 %v6495
      %7036 = vmatmul.mubr.bf16.gmra.mrb[0].mxu0 %v6494
      %v7037 = vpop.f32.mrb[0].mxu0
      %v7038 = vadd.f32 %v6877, %v7037
      %v7039 = vpop.f32.mrb[0].mxu0
      %v7040 = vpop.f32.mrb[0].mxu0
      %v7041 = vadd.f32 %v6880, %v7040
      %v7042 = vpop.f32.mrb[0].mxu0
      %7043 = vmatprep.mubr.bf16.mxu0 %v6499
      %7044 = vmatmul.mubr.bf16.gmra.mrb[0].mxu0 %v6498
      %v7045 = vpop.f32.mrb[0].mxu0
      %v7046 = vadd.f32 %v6885, %v7045
      %v7047 = vpop.f32.mrb[0].mxu0
      %v7048 = vpop.f32.mrb[0].mxu0
      %v7049 = vadd.f32 %v6888, %v7048
      %v7050 = vpop.f32.mrb[0].mxu0
      %7051 = vmatprep.mubr.bf16.mxu0 %v6503
      %7052 = vmatmul.mubr.bf16.gmra.mrb[0].mxu0 %v6502
      %v7053 = vpop.f32.mrb[0].mxu0
      %v7054 = vadd.f32 %v6893, %v7053
      %v7055 = vpop.f32.mrb[0].mxu0
      %v7056 = vpop.f32.mrb[0].mxu0
      %v7057 = vadd.f32 %v6896, %v7056
      %v7058 = vpop.f32.mrb[0].mxu0
      %7059 = vmatprep.mubr.bf16.mxu0 %v6507
      %7060 = vmatmul.mubr.bf16.gmra.mrb[0].mxu0 %v6506
      %v7061 = vpop.f32.mrb[0].mxu0
      %v7062 = vadd.f32 %v6901, %v7061
      %v7063 = vpop.f32.mrb[0].mxu0
      %v7064 = vpop.f32.mrb[0].mxu0
      %v7065 = vadd.f32 %v6904, %v7064
      %v7066 = vpop.f32.mrb[0].mxu0
      %7067 = vmatprep.mubr.bf16.mxu0 %v6511
      %7068 = vmatmul.mubr.bf16.gmra.mrb[0].mxu0 %v6510
      %v7069 = vpop.f32.mrb[0].mxu0
      %v7070 = vadd.f32 %v6909, %v7069
      %v7071 = vpop.f32.mrb[0].mxu0
      %v7072 = vpop.f32.mrb[0].mxu0
      %v7073 = vadd.f32 %v6912, %v7072
      %v7074 = vpop.f32.mrb[0].mxu0
      %7075 = vmatprep.mubr.bf16.mxu0 %v6515
      %7076 = vmatmul.mubr.bf16.gmra.mrb[0].mxu0 %v6514
      %v7077 = vpop.f32.mrb[0].mxu0
      %v7078 = vadd.f32 %v6917, %v7077
      %v7079 = vpop.f32.mrb[0].mxu0
      %v7080 = vpop.f32.mrb[0].mxu0
      %v7081 = vadd.f32 %v6920, %v7080
      %v7082 = vpop.f32.mrb[0].mxu0
      %7083 = vmatprep.mubr.bf16.mxu0 %v6519
      %7084 = vmatmul.mubr.bf16.gmra.mrb[0].mxu0 %v6518
      %v7085 = vpop.f32.mrb[0].mxu0
      %v7086 = vadd.f32 %v6925, %v7085
      %v7087 = vpop.f32.mrb[0].mxu0
      %v7088 = vpop.f32.mrb[0].mxu0
      %v7089 = vadd.f32 %v6928, %v7088
      %v7090 = vpop.f32.mrb[0].mxu0
      %7091 = vmatprep.mubr.bf16.mxu0 %v6523
      %7092 = vmatmul.mubr.bf16.gmra.mrb[0].mxu0 %v6522
      %v7093 = vpop.f32.mrb[0].mxu0
      %v7094 = vadd.f32 %v6933, %v7093
      %v7095 = vpop.f32.mrb[0].mxu0
      %v7096 = vpop.f32.mrb[0].mxu0
      %v7097 = vadd.f32 %v6936, %v7096
      %v7098 = vpop.f32.mrb[0].mxu0
      %7099 = vmatprep.mubr.bf16.mxu0 %v6527
      %7100 = vmatmul.mubr.bf16.gmra.mrb[0].mxu0 %v6526
      %v7101 = vpop.f32.mrb[0].mxu0
      %v7102 = vadd.f32 %v6941, %v7101
      %v7103 = vpop.f32.mrb[0].mxu0
      %v7104 = vpop.f32.mrb[0].mxu0
      %v7105 = vadd.f32 %v6944, %v7104
      %v7106 = vpop.f32.mrb[0].mxu0
      %7107 = vmatprep.mubr.bf16.mxu0 %v6531
      %7108 = vmatmul.mubr.bf16.gmra.mrb[0].mxu0 %v6530
      %v7109 = vpop.f32.mrb[0].mxu0
      %v7110 = vadd.f32 %v6949, %v7109
      %v7111 = vpop.f32.mrb[0].mxu0
      %v7112 = vpop.f32.mrb[0].mxu0
      %v7113 = vadd.f32 %v6952, %v7112
      %v7114 = vpop.f32.mrb[0].mxu0
      %7115 = vmatprep.mubr.bf16.mxu0 %v6535
      %7116 = vmatmul.mubr.bf16.gmra.mrb[0].mxu0 %v6534
      %v7117 = vpop.f32.mrb[0].mxu0
      %v7118 = vadd.f32 %v6957, %v7117
      %v7119 = vpop.f32.mrb[0].mxu0
      %v7120 = vpop.f32.mrb[0].mxu0
      %v7121 = vadd.f32 %v6960, %v7120
      %v7122 = vpop.f32.mrb[0].mxu0
      %7123 = vmatprep.mubr.bf16.mxu0 %v6475
      %7124 = vmatmul.mubr.bf16.gmra.mrb[0].mxu0 %v6538
      %v7125 = vpop.f32.mrb[0].mxu0
      %v7126 = vadd.f32 %v6965, %v7125
      %v7127 = vpop.f32.mrb[0].mxu0
      %v7128 = vpop.f32.mrb[0].mxu0
      %v7129 = vadd.f32 %v6968, %v7128
      %v7130 = vpop.f32.mrb[0].mxu0
      %7131 = vdwg.mxu0
      %7132 = vmatprep.subr.bf16.mxu0 0
      %7133 = vmatpush1.bf16.msra.mxu0 %v6722
      %7134 = vmatprep.subr.bf16.mxu0 0
      %7135 = vmatpush1.bf16.msra.mxu0 %v6723
      %7136 = vmatprep.subr.bf16.mxu0 0
      %7137 = vmatpush1.bf16.msra.mxu0 %v6724
      %7138 = vmatprep.subr.bf16.mxu0 0
      %7139 = vmatpush1.bf16.msra.mxu0 %v6725
      %7140 = vmatprep.subr.bf16.mxu0 0
      %7141 = vmatpush1.bf16.msra.mxu0 0
      %7142 = vmatprep.subr.bf16.mxu0 0
      %7143 = vmatpush1.bf16.msra.mxu0 0
      %7144 = vmatprep.subr.bf16.mxu0 0
      %7145 = vmatpush1.bf16.msra.mxu0 0
      %7146 = vmatprep.subr.bf16.mxu0 0
      %7147 = vmatpush1.bf16.msra.mxu0 0
      %7148 = vmatprep.subr.bf16.mxu0 0
      %7149 = vmatpush1.bf16.msra.mxu0 0
      %7150 = vmatprep.subr.bf16.mxu0 0
      %7151 = vmatpush1.bf16.msra.mxu0 0
      %7152 = vmatprep.subr.bf16.mxu0 0
      %7153 = vmatpush1.bf16.msra.mxu0 0
      %7154 = vmatprep.subr.bf16.mxu0 0
      %7155 = vmatpush1.bf16.msra.mxu0 0
      %7156 = vmatprep.subr.bf16.mxu0 0
      %7157 = vmatpush1.bf16.msra.mxu0 0
      %7158 = vmatprep.subr.bf16.mxu0 0
      %7159 = vmatpush1.bf16.msra.mxu0 0
      %7160 = vmatprep.subr.bf16.mxu0 0
      %7161 = vmatpush1.bf16.msra.mxu0 0
      %7162 = vmatprep.subr.bf16.mxu0 0
      %7163 = vmatpush1.bf16.msra.mxu0 0
      %7164 = vmatprep.mubr.bf16.mxu0 0
      %7165 = vmatmul.mubr.bf16.gmra.mrb[0].mxu0 %v6763
      %v7166 = vpop.f32.mrb[0].mxu0
      %v7167 = vadd.f32 %v7006, %v7166
      %v7168 = vpop.f32.mrb[0].mxu0
      %v7169 = vpop.f32.mrb[0].mxu0
      %v7170 = vadd.f32 %v7009, %v7169
      %v7171 = vpop.f32.mrb[0].mxu0
      %7172 = vmatprep.mubr.bf16.mxu0 0
      %7173 = vmatmul.mubr.bf16.gmra.mrb[0].mxu0 %v6766
      %v7174 = vpop.f32.mrb[0].mxu0
      %v7175 = vadd.f32 %v7014, %v7174
      %v7176 = vpop.f32.mrb[0].mxu0
      %v7177 = vpop.f32.mrb[0].mxu0
      %v7178 = vadd.f32 %v7017, %v7177
      %v7179 = vpop.f32.mrb[0].mxu0
      %7180 = vmatprep.mubr.bf16.mxu0 0
      %7181 = vmatmul.mubr.bf16.gmra.mrb[0].mxu0 %v6769
      %v7182 = vpop.f32.mrb[0].mxu0
      %v7183 = vadd.f32 %v7022, %v7182
      %v7184 = vpop.f32.mrb[0].mxu0
      %v7185 = vpop.f32.mrb[0].mxu0
      %v7186 = vadd.f32 %v7025, %v7185
      %v7187 = vpop.f32.mrb[0].mxu0
      %7188 = vmatprep.mubr.bf16.mxu0 0
      %7189 = vmatmul.mubr.bf16.gmra.mrb[0].mxu0 %v6772
      %v7190 = vpop.f32.mrb[0].mxu0
      %v7191 = vadd.f32 %v7030, %v7190
      %v7192 = vpop.f32.mrb[0].mxu0
      %v7193 = vpop.f32.mrb[0].mxu0
      %v7194 = vadd.f32 %v7033, %v7193
      %v7195 = vpop.f32.mrb[0].mxu0
      %7196 = vmatprep.mubr.bf16.mxu0 0
      %7197 = vmatmul.mubr.bf16.gmra.mrb[0].mxu0 %v6775
      %v7198 = vpop.f32.mrb[0].mxu0
      %v7199 = vadd.f32 %v7038, %v7198
      %v7200 = vpop.f32.mrb[0].mxu0
      %v7201 = vpop.f32.mrb[0].mxu0
      %v7202 = vadd.f32 %v7041, %v7201
      %v7203 = vpop.f32.mrb[0].mxu0
      %7204 = vmatprep.mubr.bf16.mxu0 0
      %7205 = vmatmul.mubr.bf16.gmra.mrb[0].mxu0 %v6778
      %v7206 = vpop.f32.mrb[0].mxu0
      %v7207 = vadd.f32 %v7046, %v7206
      %v7208 = vpop.f32.mrb[0].mxu0
      %v7209 = vpop.f32.mrb[0].mxu0
      %v7210 = vadd.f32 %v7049, %v7209
      %v7211 = vpop.f32.mrb[0].mxu0
      %7212 = vmatprep.mubr.bf16.mxu0 0
      %7213 = vmatmul.mubr.bf16.gmra.mrb[0].mxu0 %v6781
      %v7214 = vpop.f32.mrb[0].mxu0
      %v7215 = vadd.f32 %v7054, %v7214
      %v7216 = vpop.f32.mrb[0].mxu0
      %v7217 = vpop.f32.mrb[0].mxu0
      %v7218 = vadd.f32 %v7057, %v7217
      %v7219 = vpop.f32.mrb[0].mxu0
      %7220 = vmatprep.mubr.bf16.mxu0 0
      %7221 = vmatmul.mubr.bf16.gmra.mrb[0].mxu0 %v6784
      %v7222 = vpop.f32.mrb[0].mxu0
      %v7223 = vadd.f32 %v7062, %v7222
      %v7224 = vpop.f32.mrb[0].mxu0
      %v7225 = vpop.f32.mrb[0].mxu0
      %v7226 = vadd.f32 %v7065, %v7225
      %v7227 = vpop.f32.mrb[0].mxu0
      %7228 = vmatprep.mubr.bf16.mxu0 0
      %7229 = vmatmul.mubr.bf16.gmra.mrb[0].mxu0 %v6787
      %v7230 = vpop.f32.mrb[0].mxu0
      %v7231 = vadd.f32 %v7070, %v7230
      %v7232 = vpop.f32.mrb[0].mxu0
      %v7233 = vpop.f32.mrb[0].mxu0
      %v7234 = vadd.f32 %v7073, %v7233
      %v7235 = vpop.f32.mrb[0].mxu0
      %7236 = vmatprep.mubr.bf16.mxu0 0
      %7237 = vmatmul.mubr.bf16.gmra.mrb[0].mxu0 %v6790
      %v7238 = vpop.f32.mrb[0].mxu0
      %v7239 = vadd.f32 %v7078, %v7238
      %v7240 = vpop.f32.mrb[0].mxu0
      %v7241 = vpop.f32.mrb[0].mxu0
      %v7242 = vadd.f32 %v7081, %v7241
      %v7243 = vpop.f32.mrb[0].mxu0
      %7244 = vmatprep.mubr.bf16.mxu0 0
      %7245 = vmatmul.mubr.bf16.gmra.mrb[0].mxu0 %v6793
      %v7246 = vpop.f32.mrb[0].mxu0
      %v7247 = vadd.f32 %v7086, %v7246
      %v7248 = vpop.f32.mrb[0].mxu0
      %v7249 = vpop.f32.mrb[0].mxu0
      %v7250 = vadd.f32 %v7089, %v7249
      %v7251 = vpop.f32.mrb[0].mxu0
      %7252 = vmatprep.mubr.bf16.mxu0 0
      %7253 = vmatmul.mubr.bf16.gmra.mrb[0].mxu0 %v6796
      %v7254 = vpop.f32.mrb[0].mxu0
      %v7255 = vadd.f32 %v7094, %v7254
      %v7256 = vpop.f32.mrb[0].mxu0
      %v7257 = vpop.f32.mrb[0].mxu0
      %v7258 = vadd.f32 %v7097, %v7257
      %v7259 = vpop.f32.mrb[0].mxu0
      %7260 = vmatprep.mubr.bf16.mxu0 0
      %7261 = vmatmul.mubr.bf16.gmra.mrb[0].mxu0 %v6799
      %v7262 = vpop.f32.mrb[0].mxu0
      %v7263 = vadd.f32 %v7102, %v7262
      %v7264 = vpop.f32.mrb[0].mxu0
      %v7265 = vpop.f32.mrb[0].mxu0
      %v7266 = vadd.f32 %v7105, %v7265
      %v7267 = vpop.f32.mrb[0].mxu0
      %7268 = vmatprep.mubr.bf16.mxu0 0
      %7269 = vmatmul.mubr.bf16.gmra.mrb[0].mxu0 %v6802
      %v7270 = vpop.f32.mrb[0].mxu0
      %v7271 = vadd.f32 %v7110, %v7270
      %v7272 = vpop.f32.mrb[0].mxu0
      %v7273 = vpop.f32.mrb[0].mxu0
      %v7274 = vadd.f32 %v7113, %v7273
      %v7275 = vpop.f32.mrb[0].mxu0
      %7276 = vmatprep.mubr.bf16.mxu0 0
      %7277 = vmatmul.mubr.bf16.gmra.mrb[0].mxu0 %v6805
      %v7278 = vpop.f32.mrb[0].mxu0
      %v7279 = vadd.f32 %v7118, %v7278
      %v7280 = vpop.f32.mrb[0].mxu0
      %v7281 = vpop.f32.mrb[0].mxu0
      %v7282 = vadd.f32 %v7121, %v7281
      %v7283 = vpop.f32.mrb[0].mxu0
      %7284 = vmatprep.mubr.bf16.mxu0 0
      %7285 = vmatmul.mubr.bf16.gmra.mrb[0].mxu0 %v6808
      %v7286 = vpop.f32.mrb[0].mxu0
      %v7287 = vadd.f32 %v7126, %v7286
      %v7288 = vpop.f32.mrb[0].mxu0
      %v7289 = vpop.f32.mrb[0].mxu0
      %v7290 = vadd.f32 %v7129, %v7289
      %v7291 = vpop.f32.mrb[0].mxu0
      %7292 = vdwg.mxu0
      %vm7293 = vcmp.ge.f32.partialorder %v7167, 0.0
      %vm7294 = vcmp.ge.f32.partialorder %v7170, 0.0
      %vm7295 = vcmp.ge.f32.partialorder %v7175, 0.0
      %vm7296 = vcmp.ge.f32.partialorder %v7178, 0.0
      %vm7297 = vcmp.ge.f32.partialorder %v7183, 0.0
      %vm7298 = vcmp.ge.f32.partialorder %v7186, 0.0
      %vm7299 = vcmp.ge.f32.partialorder %v7191, 0.0
      %vm7300 = vcmp.ge.f32.partialorder %v7194, 0.0
      %vm7301 = vcmp.ge.f32.partialorder %v7199, 0.0
      %vm7302 = vcmp.ge.f32.partialorder %v7202, 0.0
      %vm7303 = vcmp.ge.f32.partialorder %v7207, 0.0
      %vm7304 = vcmp.ge.f32.partialorder %v7210, 0.0
      %vm7305 = vcmp.ge.f32.partialorder %v7215, 0.0
      %vm7306 = vcmp.ge.f32.partialorder %v7218, 0.0
      %vm7307 = vcmp.ge.f32.partialorder %v7223, 0.0
      %vm7308 = vcmp.ge.f32.partialorder %v7226, 0.0
      %vm7309 = vcmp.ge.f32.partialorder %v7231, 0.0
      %vm7310 = vcmp.ge.f32.partialorder %v7234, 0.0
      %vm7311 = vcmp.ge.f32.partialorder %v7239, 0.0
      %vm7312 = vcmp.ge.f32.partialorder %v7242, 0.0
      %vm7313 = vcmp.ge.f32.partialorder %v7247, 0.0
      %vm7314 = vcmp.ge.f32.partialorder %v7250, 0.0
      %vm7315 = vcmp.ge.f32.partialorder %v7255, 0.0
      %vm7316 = vcmp.ge.f32.partialorder %v7258, 0.0
      %vm7317 = vcmp.ge.f32.partialorder %v7263, 0.0
      %vm7318 = vcmp.ge.f32.partialorder %v7266, 0.0
      %vm7319 = vcmp.ge.f32.partialorder %v7271, 0.0
      %vm7320 = vcmp.ge.f32.partialorder %v7274, 0.0
      %vm7321 = vcmp.ge.f32.partialorder %v7279, 0.0
      %vm7322 = vcmp.ge.f32.partialorder %v7282, 0.0
      %vm7323 = vcmp.ge.f32.partialorder %v7287, 0.0
      %vm7324 = vcmp.ge.f32.partialorder %v7290, 0.0
      %v7325 = vmul.f32 %v7167, 0.1
      %v7326 = vmul.f32 %v7170, 0.1
      %v7327 = vmul.f32 %v7175, 0.1
      %v7328 = vmul.f32 %v7178, 0.1
      %v7329 = vmul.f32 %v7183, 0.1
      %v7330 = vmul.f32 %v7186, 0.1
      %v7331 = vmul.f32 %v7191, 0.1
      %v7332 = vmul.f32 %v7194, 0.1
      %v7333 = vmul.f32 %v7199, 0.1
      %v7334 = vmul.f32 %v7202, 0.1
      %v7335 = vmul.f32 %v7207, 0.1
      %v7336 = vmul.f32 %v7210, 0.1
      %v7337 = vmul.f32 %v7215, 0.1
      %v7338 = vmul.f32 %v7218, 0.1
      %v7339 = vmul.f32 %v7223, 0.1
      %v7340 = vmul.f32 %v7226, 0.1
      %v7341 = vmul.f32 %v7231, 0.1
      %v7342 = vmul.f32 %v7234, 0.1
      %v7343 = vmul.f32 %v7239, 0.1
      %v7344 = vmul.f32 %v7242, 0.1
      %v7345 = vmul.f32 %v7247, 0.1
      %v7346 = vmul.f32 %v7250, 0.1
      %v7347 = vmul.f32 %v7255, 0.1
      %v7348 = vmul.f32 %v7258, 0.1
      %v7349 = vmul.f32 %v7263, 0.1
      %v7350 = vmul.f32 %v7266, 0.1
      %v7351 = vmul.f32 %v7271, 0.1
      %v7352 = vmul.f32 %v7274, 0.1
      %v7353 = vmul.f32 %v7279, 0.1
      %v7354 = vmul.f32 %v7282, 0.1
      %v7355 = vmul.f32 %v7287, 0.1
      %v7356 = vmul.f32 %v7290, 0.1
      %v7357 = vsel %vm7293, %v7167, %v7325
      %v7358 = vsel %vm7294, %v7170, %v7326
      %v7359 = vsel %vm7295, %v7175, %v7327
      %v7360 = vsel %vm7296, %v7178, %v7328
      %v7361 = vsel %vm7297, %v7183, %v7329
      %v7362 = vsel %vm7298, %v7186, %v7330
      %v7363 = vsel %vm7299, %v7191, %v7331
      %v7364 = vsel %vm7300, %v7194, %v7332
      %v7365 = vsel %vm7301, %v7199, %v7333
      %v7366 = vsel %vm7302, %v7202, %v7334
      %v7367 = vsel %vm7303, %v7207, %v7335
      %v7368 = vsel %vm7304, %v7210, %v7336
      %v7369 = vsel %vm7305, %v7215, %v7337
      %v7370 = vsel %vm7306, %v7218, %v7338
      %v7371 = vsel %vm7307, %v7223, %v7339
      %v7372 = vsel %vm7308, %v7226, %v7340
      %v7373 = vsel %vm7309, %v7231, %v7341
      %v7374 = vsel %vm7310, %v7234, %v7342
      %v7375 = vsel %vm7311, %v7239, %v7343
      %v7376 = vsel %vm7312, %v7242, %v7344
      %v7377 = vsel %vm7313, %v7247, %v7345
      %v7378 = vsel %vm7314, %v7250, %v7346
      %v7379 = vsel %vm7315, %v7255, %v7347
      %v7380 = vsel %vm7316, %v7258, %v7348
      %v7381 = vsel %vm7317, %v7263, %v7349
      %v7382 = vsel %vm7318, %v7266, %v7350
      %v7383 = vsel %vm7319, %v7271, %v7351
      %v7384 = vsel %vm7320, %v7274, %v7352
      %v7385 = vsel %vm7321, %v7279, %v7353
      %v7386 = vsel %vm7322, %v7282, %v7354
      %v7387 = vsel %vm7323, %v7287, %v7355
      %v7388 = vsel %vm7324, %v7290, %v7356
      %s7389 = scalar_lea.vmem %s249, 16
      %v7390 = vld [vmem:[%s7389] sm:$0x1]
      %v7391 = vadd.f32 %v7390, 1.0
      %v7393 = vlaneseq
      %v7394 = vshrl.u32 %v7393, 7
      %v7395 = vsub.s32 0, %v7394
      %v7396 = vrot.slane %v7391, %v7395
      %v7398 = vmul.f32 %v7357, %v7396
      %v7399 = vmul.f32 %v7358, %v7396
      %v7400 = vmul.f32 %v7359, %v7396
      %v7401 = vmul.f32 %v7360, %v7396
      %v7402 = vmul.f32 %v7361, %v7396
      %v7403 = vmul.f32 %v7362, %v7396
      %v7404 = vmul.f32 %v7363, %v7396
      %v7405 = vmul.f32 %v7364, %v7396
      %v7406 = vmul.f32 %v7365, %v7396
      %v7407 = vmul.f32 %v7366, %v7396
      %v7408 = vmul.f32 %v7367, %v7396
      %v7409 = vmul.f32 %v7368, %v7396
      %v7410 = vmul.f32 %v7369, %v7396
      %v7411 = vmul.f32 %v7370, %v7396
      %v7412 = vmul.f32 %v7371, %v7396
      %v7413 = vmul.f32 %v7372, %v7396
      %v7414 = vmul.f32 %v7373, %v7396
      %v7415 = vmul.f32 %v7374, %v7396
      %v7416 = vmul.f32 %v7375, %v7396
      %v7417 = vmul.f32 %v7376, %v7396
      %v7418 = vmul.f32 %v7377, %v7396
      %v7419 = vmul.f32 %v7378, %v7396
      %v7420 = vmul.f32 %v7379, %v7396
      %v7421 = vmul.f32 %v7380, %v7396
      %v7422 = vmul.f32 %v7381, %v7396
      %v7423 = vmul.f32 %v7382, %v7396
      %v7424 = vmul.f32 %v7383, %v7396
      %v7425 = vmul.f32 %v7384, %v7396
      %v7426 = vmul.f32 %v7385, %v7396
      %v7427 = vmul.f32 %v7386, %v7396
      %v7428 = vmul.f32 %v7387, %v7396
      %v7429 = vmul.f32 %v7388, %v7396
      %s7430 = scalar_lea.vmem %s253, 16
      %v7431 = vld [vmem:[%s7430] sm:$0x1]
      %v7433 = vlaneseq
      %v7434 = vshrl.u32 %v7433, 7
      %v7435 = vsub.s32 0, %v7434
      %v7436 = vrot.slane %v7431, %v7435
      %v7438 = vadd.f32 %v7398, %v7436
      %v7439 = vadd.f32 %v7399, %v7436
      %v7440 = vadd.f32 %v7400, %v7436
      %v7441 = vadd.f32 %v7401, %v7436
      %v7442 = vadd.f32 %v7402, %v7436
      %v7443 = vadd.f32 %v7403, %v7436
      %v7444 = vadd.f32 %v7404, %v7436
      %v7445 = vadd.f32 %v7405, %v7436
      %v7446 = vadd.f32 %v7406, %v7436
      %v7447 = vadd.f32 %v7407, %v7436
      %v7448 = vadd.f32 %v7408, %v7436
      %v7449 = vadd.f32 %v7409, %v7436
      %v7450 = vadd.f32 %v7410, %v7436
      %v7451 = vadd.f32 %v7411, %v7436
      %v7452 = vadd.f32 %v7412, %v7436
      %v7453 = vadd.f32 %v7413, %v7436
      %v7454 = vadd.f32 %v7414, %v7436
      %v7455 = vadd.f32 %v7415, %v7436
      %v7456 = vadd.f32 %v7416, %v7436
      %v7457 = vadd.f32 %v7417, %v7436
      %v7458 = vadd.f32 %v7418, %v7436
      %v7459 = vadd.f32 %v7419, %v7436
      %v7460 = vadd.f32 %v7420, %v7436
      %v7461 = vadd.f32 %v7421, %v7436
      %v7462 = vadd.f32 %v7422, %v7436
      %v7463 = vadd.f32 %v7423, %v7436
      %v7464 = vadd.f32 %v7424, %v7436
      %v7465 = vadd.f32 %v7425, %v7436
      %v7466 = vadd.f32 %v7426, %v7436
      %v7467 = vadd.f32 %v7427, %v7436
      %v7468 = vadd.f32 %v7428, %v7436
      %v7469 = vadd.f32 %v7429, %v7436
      %v7502 = vrot.slane %v7438, 7
      %v7503 = vrot.slane %v7439, 7
      %v7504 = vsel %vm5621, %v7502, %v7503
      %v7505 = vrot.slane %v7440, 7
      %v7506 = vrot.slane %v7441, 7
      %v7507 = vsel %vm5621, %v7505, %v7506
      %v7508 = vrot.slane %v7442, 7
      %v7509 = vrot.slane %v7443, 7
      %v7510 = vsel %vm5621, %v7508, %v7509
      %v7511 = vrot.slane %v7444, 7
      %v7512 = vrot.slane %v7445, 7
      %v7513 = vsel %vm5621, %v7511, %v7512
      %v7514 = vrot.slane %v7446, 7
      %v7515 = vrot.slane %v7447, 7
      %v7516 = vsel %vm5621, %v7514, %v7515
      %v7517 = vrot.slane %v7448, 7
      %v7518 = vrot.slane %v7449, 7
      %v7519 = vsel %vm5621, %v7517, %v7518
      %v7520 = vrot.slane %v7450, 7
      %v7521 = vrot.slane %v7451, 7
      %v7522 = vsel %vm5621, %v7520, %v7521
      %v7523 = vrot.slane %v7452, 7
      %v7524 = vrot.slane %v7453, 7
      %v7525 = vsel %vm5621, %v7523, %v7524
      %v7526 = vrot.slane %v7454, 7
      %v7527 = vrot.slane %v7455, 7
      %v7528 = vsel %vm5621, %v7526, %v7527
      %v7529 = vrot.slane %v7456, 7
      %v7530 = vrot.slane %v7457, 7
      %v7531 = vsel %vm5621, %v7529, %v7530
      %v7532 = vrot.slane %v7458, 7
      %v7533 = vrot.slane %v7459, 7
      %v7534 = vsel %vm5621, %v7532, %v7533
      %v7535 = vrot.slane %v7460, 7
      %v7536 = vrot.slane %v7461, 7
      %v7537 = vsel %vm5621, %v7535, %v7536
      %v7538 = vrot.slane %v7462, 7
      %v7539 = vrot.slane %v7463, 7
      %v7540 = vsel %vm5621, %v7538, %v7539
      %v7541 = vrot.slane %v7464, 7
      %v7542 = vrot.slane %v7465, 7
      %v7543 = vsel %vm5621, %v7541, %v7542
      %v7544 = vrot.slane %v7466, 7
      %v7545 = vrot.slane %v7467, 7
      %v7546 = vsel %vm5621, %v7544, %v7545
      %v7547 = vrot.slane %v7468, 7
      %v7548 = vrot.slane %v7469, 7
      %v7549 = vsel %vm5621, %v7547, %v7548
      %v7598 = vsel %vm5621, 0.0, %v7502
      %v7599 = vsel %vm5621, 0.0, %v7505
      %v7600 = vsel %vm5621, 0.0, %v7508
      %v7601 = vsel %vm5621, 0.0, %v7511
      %v7602 = vsel %vm5621, 0.0, %v7514
      %v7603 = vsel %vm5621, 0.0, %v7517
      %v7604 = vsel %vm5621, 0.0, %v7520
      %v7605 = vsel %vm5621, 0.0, %v7523
      %v7606 = vsel %vm5621, 0.0, %v7526
      %v7607 = vsel %vm5621, 0.0, %v7529
      %v7608 = vsel %vm5621, 0.0, %v7532
      %v7609 = vsel %vm5621, 0.0, %v7535
      %v7610 = vsel %vm5621, 0.0, %v7538
      %v7611 = vsel %vm5621, 0.0, %v7541
      %v7612 = vsel %vm5621, 0.0, %v7544
      %v7613 = vsel %vm5621, 0.0, %v7547
      %v7614 = vsel %vm5621, %v7503, 0.0
      %v7615 = vsel %vm5621, %v7506, 0.0
      %v7616 = vsel %vm5621, %v7509, 0.0
      %v7617 = vsel %vm5621, %v7512, 0.0
      %v7618 = vsel %vm5621, %v7515, 0.0
      %v7619 = vsel %vm5621, %v7518, 0.0
      %v7620 = vsel %vm5621, %v7521, 0.0
      %v7621 = vsel %vm5621, %v7524, 0.0
      %v7622 = vsel %vm5621, %v7527, 0.0
      %v7623 = vsel %vm5621, %v7530, 0.0
      %v7624 = vsel %vm5621, %v7533, 0.0
      %v7625 = vsel %vm5621, %v7536, 0.0
      %v7626 = vsel %vm5621, %v7539, 0.0
      %v7627 = vsel %vm5621, %v7542, 0.0
      %v7628 = vsel %vm5621, %v7545, 0.0
      %v7629 = vsel %vm5621, %v7548, 0.0
      %s7630 = scalar_lea.vmem %s1, 9792
      %v7631 = vld [vmem:[%s7630] sm:$0xf]
      %v7632 = vld [vmem:[%s7630 + $0x4] sm:$0xf]
      %v7633 = vld [vmem:[%s7630 + $0x8] sm:$0xf]
      %v7634 = vld [vmem:[%s7630 + $0xc] sm:$0xf]
      %v7635 = vld [vmem:[%s7630 + $0x10] sm:$0xf]
      %v7636 = vld [vmem:[%s7630 + $0x14] sm:$0xf]
      %v7637 = vld [vmem:[%s7630 + $0x18] sm:$0xf]
      %v7638 = vld [vmem:[%s7630 + $0x1c] sm:$0xf]
      %v7639 = vld [vmem:[%s7630 + $0x20] sm:$0xf]
      %v7640 = vld [vmem:[%s7630 + $0x24] sm:$0xf]
      %v7641 = vld [vmem:[%s7630 + $0x28] sm:$0xf]
      %v7642 = vld [vmem:[%s7630 + $0x2c] sm:$0xf]
      %v7643 = vld [vmem:[%s7630 + $0x30] sm:$0xf]
      %v7644 = vld [vmem:[%s7630 + $0x34] sm:$0xf]
      %v7645 = vld [vmem:[%s7630 + $0x38] sm:$0xf]
      %v7646 = vld [vmem:[%s7630 + $0x3c] sm:$0xf]
      %v7647 = vld [vmem:[%s7630 + $0x40] sm:$0xf]
      %v7648 = vld [vmem:[%s7630 + $0x44] sm:$0xf]
      %v7649 = vld [vmem:[%s7630 + $0x48] sm:$0xf]
      %v7650 = vld [vmem:[%s7630 + $0x4c] sm:$0xf]
      %v7651 = vld [vmem:[%s7630 + $0x50] sm:$0xf]
      %v7652 = vld [vmem:[%s7630 + $0x54] sm:$0xf]
      %v7653 = vld [vmem:[%s7630 + $0x58] sm:$0xf]
      %v7654 = vld [vmem:[%s7630 + $0x5c] sm:$0xf]
      %v7655 = vld [vmem:[%s7630 + $0x60] sm:$0xf]
      %v7656 = vld [vmem:[%s7630 + $0x64] sm:$0xf]
      %v7657 = vld [vmem:[%s7630 + $0x68] sm:$0xf]
      %v7658 = vld [vmem:[%s7630 + $0x6c] sm:$0xf]
      %v7659 = vld [vmem:[%s7630 + $0x70] sm:$0xf]
      %v7660 = vld [vmem:[%s7630 + $0x74] sm:$0xf]
      %v7661 = vld [vmem:[%s7630 + $0x78] sm:$0xf]
      %v7662 = vld [vmem:[%s7630 + $0x7c] sm:$0xf]
      %v7663 = vld [vmem:[%s7630 + $0x80] sm:$0xf]
      %v7664 = vld [vmem:[%s7630 + $0x84] sm:$0xf]
      %v7665 = vld [vmem:[%s7630 + $0x88] sm:$0xf]
      %v7666 = vld [vmem:[%s7630 + $0x8c] sm:$0xf]
      %v7667 = vld [vmem:[%s7630 + $0x90] sm:$0xf]
      %v7668 = vld [vmem:[%s7630 + $0x94] sm:$0xf]
      %v7669 = vld [vmem:[%s7630 + $0x98] sm:$0xf]
      %v7670 = vld [vmem:[%s7630 + $0x9c] sm:$0xf]
      %v7671 = vld [vmem:[%s7630 + $0xa0] sm:$0xf]
      %v7672 = vld [vmem:[%s7630 + $0xa4] sm:$0xf]
      %v7673 = vld [vmem:[%s7630 + $0xa8] sm:$0xf]
      %v7674 = vld [vmem:[%s7630 + $0xac] sm:$0xf]
      %v7675 = vld [vmem:[%s7630 + $0xb0] sm:$0xf]
      %v7676 = vld [vmem:[%s7630 + $0xb4] sm:$0xf]
      %v7677 = vld [vmem:[%s7630 + $0xb8] sm:$0xf]
      %v7678 = vld [vmem:[%s7630 + $0xbc] sm:$0xf]
      %v7679 = vld [vmem:[%s7630 + $0xc0] sm:$0xf]
      %v7680 = vld [vmem:[%s7630 + $0xc4] sm:$0xf]
      %v7681 = vld [vmem:[%s7630 + $0xc8] sm:$0xf]
      %v7682 = vld [vmem:[%s7630 + $0xcc] sm:$0xf]
      %v7683 = vld [vmem:[%s7630 + $0xd0] sm:$0xf]
      %v7684 = vld [vmem:[%s7630 + $0xd4] sm:$0xf]
      %v7685 = vld [vmem:[%s7630 + $0xd8] sm:$0xf]
      %v7686 = vld [vmem:[%s7630 + $0xdc] sm:$0xf]
      %v7687 = vld [vmem:[%s7630 + $0xe0] sm:$0xf]
      %v7688 = vld [vmem:[%s7630 + $0xe4] sm:$0xf]
      %v7689 = vld [vmem:[%s7630 + $0xe8] sm:$0xf]
      %v7690 = vld [vmem:[%s7630 + $0xec] sm:$0xf]
      %v7691 = vld [vmem:[%s7630 + $0xf0] sm:$0xf]
      %v7692 = vld [vmem:[%s7630 + $0xf4] sm:$0xf]
      %v7693 = vld [vmem:[%s7630 + $0xf8] sm:$0xf]
      %v7694 = vld [vmem:[%s7630 + $0xfc] sm:$0xf]
      %v7695 = vld [vmem:[%s7630 + $0x100] sm:$0xf]
      %v7696 = vld [vmem:[%s7630 + $0x104] sm:$0xf]
      %v7697 = vld [vmem:[%s7630 + $0x108] sm:$0xf]
      %v7698 = vld [vmem:[%s7630 + $0x10c] sm:$0xf]
      %v7699 = vld [vmem:[%s7630 + $0x110] sm:$0xf]
      %v7700 = vld [vmem:[%s7630 + $0x114] sm:$0xf]
      %v7701 = vld [vmem:[%s7630 + $0x118] sm:$0xf]
      %v7702 = vld [vmem:[%s7630 + $0x11c] sm:$0xf]
      %s7703 = scalar_lea.vmem %s2, 34
      %v7704 = vld [vmem:[%s7703] sm:$0x1]
      %v7735 = vrot.slane %v7598, 1
      %v7736 = vrot.slane %v7504, 1
      %v7737 = vsel %vm435, %v7735, %v7736
      %v7738 = vrot.slane %v7614, 1
      %v7739 = vsel %vm435, %v7736, %v7738
      %v7740 = vrot.slane %v7599, 1
      %v7741 = vrot.slane %v7507, 1
      %v7742 = vsel %vm435, %v7740, %v7741
      %v7743 = vrot.slane %v7615, 1
      %v7744 = vsel %vm435, %v7741, %v7743
      %v7745 = vrot.slane %v7600, 1
      %v7746 = vrot.slane %v7510, 1
      %v7747 = vsel %vm435, %v7745, %v7746
      %v7748 = vrot.slane %v7616, 1
      %v7749 = vsel %vm435, %v7746, %v7748
      %v7750 = vrot.slane %v7601, 1
      %v7751 = vrot.slane %v7513, 1
      %v7752 = vsel %vm435, %v7750, %v7751
      %v7753 = vrot.slane %v7617, 1
      %v7754 = vsel %vm435, %v7751, %v7753
      %v7755 = vrot.slane %v7602, 1
      %v7756 = vrot.slane %v7516, 1
      %v7757 = vsel %vm435, %v7755, %v7756
      %v7758 = vrot.slane %v7618, 1
      %v7759 = vsel %vm435, %v7756, %v7758
      %v7760 = vrot.slane %v7603, 1
      %v7761 = vrot.slane %v7519, 1
      %v7762 = vsel %vm435, %v7760, %v7761
      %v7763 = vrot.slane %v7619, 1
      %v7764 = vsel %vm435, %v7761, %v7763
      %v7765 = vrot.slane %v7604, 1
      %v7766 = vrot.slane %v7522, 1
      %v7767 = vsel %vm435, %v7765, %v7766
      %v7768 = vrot.slane %v7620, 1
      %v7769 = vsel %vm435, %v7766, %v7768
      %v7770 = vrot.slane %v7605, 1
      %v7771 = vrot.slane %v7525, 1
      %v7772 = vsel %vm435, %v7770, %v7771
      %v7773 = vrot.slane %v7621, 1
      %v7774 = vsel %vm435, %v7771, %v7773
      %v7775 = vrot.slane %v7606, 1
      %v7776 = vrot.slane %v7528, 1
      %v7777 = vsel %vm435, %v7775, %v7776
      %v7778 = vrot.slane %v7622, 1
      %v7779 = vsel %vm435, %v7776, %v7778
      %v7780 = vrot.slane %v7607, 1
      %v7781 = vrot.slane %v7531, 1
      %v7782 = vsel %vm435, %v7780, %v7781
      %v7783 = vrot.slane %v7623, 1
      %v7784 = vsel %vm435, %v7781, %v7783
      %v7785 = vrot.slane %v7608, 1
      %v7786 = vrot.slane %v7534, 1
      %v7787 = vsel %vm435, %v7785, %v7786
      %v7788 = vrot.slane %v7624, 1
      %v7789 = vsel %vm435, %v7786, %v7788
      %v7790 = vrot.slane %v7609, 1
      %v7791 = vrot.slane %v7537, 1
      %v7792 = vsel %vm435, %v7790, %v7791
      %v7793 = vrot.slane %v7625, 1
      %v7794 = vsel %vm435, %v7791, %v7793
      %v7795 = vrot.slane %v7610, 1
      %v7796 = vrot.slane %v7540, 1
      %v7797 = vsel %vm435, %v7795, %v7796
      %v7798 = vrot.slane %v7626, 1
      %v7799 = vsel %vm435, %v7796, %v7798
      %v7800 = vrot.slane %v7611, 1
      %v7801 = vrot.slane %v7543, 1
      %v7802 = vsel %vm435, %v7800, %v7801
      %v7803 = vrot.slane %v7627, 1
      %v7804 = vsel %vm435, %v7801, %v7803
      %v7805 = vrot.slane %v7612, 1
      %v7806 = vrot.slane %v7546, 1
      %v7807 = vsel %vm435, %v7805, %v7806
      %v7808 = vrot.slane %v7628, 1
      %v7809 = vsel %vm435, %v7806, %v7808
      %7810 = vrot.lane.b32.xlu0 %v7737, 64
      %v7811 = vpop.permute.xlu0 %7810
      %7812 = vrot.lane.b32.xlu0 %v7739, 64
      %v7813 = vpop.permute.xlu0 %7812
      %7814 = vrot.lane.b32.xlu0 %v7742, 64
      %v7815 = vpop.permute.xlu0 %7814
      %7816 = vrot.lane.b32.xlu0 %v7744, 64
      %v7817 = vpop.permute.xlu0 %7816
      %7818 = vrot.lane.b32.xlu0 %v7747, 64
      %v7819 = vpop.permute.xlu0 %7818
      %7820 = vrot.lane.b32.xlu0 %v7749, 64
      %v7821 = vpop.permute.xlu0 %7820
      %7822 = vrot.lane.b32.xlu0 %v7752, 64
      %v7823 = vpop.permute.xlu0 %7822
      %7824 = vrot.lane.b32.xlu0 %v7754, 64
      %v7825 = vpop.permute.xlu0 %7824
      %7826 = vrot.lane.b32.xlu0 %v7757, 64
      %v7827 = vpop.permute.xlu0 %7826
      %7828 = vrot.lane.b32.xlu0 %v7759, 64
      %v7829 = vpop.permute.xlu0 %7828
      %7830 = vrot.lane.b32.xlu0 %v7762, 64
      %v7831 = vpop.permute.xlu0 %7830
      %7832 = vrot.lane.b32.xlu0 %v7764, 64
      %v7833 = vpop.permute.xlu0 %7832
      %7834 = vrot.lane.b32.xlu0 %v7767, 64
      %v7835 = vpop.permute.xlu0 %7834
      %7836 = vrot.lane.b32.xlu0 %v7769, 64
      %v7837 = vpop.permute.xlu0 %7836
      %7838 = vrot.lane.b32.xlu0 %v7772, 64
      %v7839 = vpop.permute.xlu0 %7838
      %7840 = vrot.lane.b32.xlu0 %v7774, 64
      %v7841 = vpop.permute.xlu0 %7840
      %7842 = vrot.lane.b32.xlu0 %v7777, 64
      %v7843 = vpop.permute.xlu0 %7842
      %7844 = vrot.lane.b32.xlu0 %v7779, 64
      %v7845 = vpop.permute.xlu0 %7844
      %7846 = vrot.lane.b32.xlu0 %v7782, 64
      %v7847 = vpop.permute.xlu0 %7846
      %7848 = vrot.lane.b32.xlu0 %v7784, 64
      %v7849 = vpop.permute.xlu0 %7848
      %7850 = vrot.lane.b32.xlu0 %v7787, 64
      %v7851 = vpop.permute.xlu0 %7850
      %7852 = vrot.lane.b32.xlu0 %v7789, 64
      %v7853 = vpop.permute.xlu0 %7852
      %7854 = vrot.lane.b32.xlu0 %v7792, 64
      %v7855 = vpop.permute.xlu0 %7854
      %7856 = vrot.lane.b32.xlu0 %v7794, 64
      %v7857 = vpop.permute.xlu0 %7856
      %7858 = vrot.lane.b32.xlu0 %v7797, 64
      %v7859 = vpop.permute.xlu0 %7858
      %7860 = vrot.lane.b32.xlu0 %v7799, 64
      %v7861 = vpop.permute.xlu0 %7860
      %7862 = vrot.lane.b32.xlu0 %v7802, 64
      %v7863 = vpop.permute.xlu0 %7862
      %7864 = vrot.lane.b32.xlu0 %v7804, 64
      %v7865 = vpop.permute.xlu0 %7864
      %7866 = vrot.lane.b32.xlu0 %v7807, 64
      %v7867 = vpop.permute.xlu0 %7866
      %7868 = vrot.lane.b32.xlu0 %v7809, 64
      %v7869 = vpop.permute.xlu0 %7868
      %v7900 = vrot.slane %v7598, 2
      %v7901 = vrot.slane %v7504, 2
      %v7902 = vsel %vm612, %v7900, %v7901
      %v7903 = vrot.slane %v7614, 2
      %v7904 = vsel %vm612, %v7901, %v7903
      %v7905 = vrot.slane %v7599, 2
      %v7906 = vrot.slane %v7507, 2
      %v7907 = vsel %vm612, %v7905, %v7906
      %v7908 = vrot.slane %v7615, 2
      %v7909 = vsel %vm612, %v7906, %v7908
      %v7910 = vrot.slane %v7600, 2
      %v7911 = vrot.slane %v7510, 2
      %v7912 = vsel %vm612, %v7910, %v7911
      %v7913 = vrot.slane %v7616, 2
      %v7914 = vsel %vm612, %v7911, %v7913
      %v7915 = vrot.slane %v7601, 2
      %v7916 = vrot.slane %v7513, 2
      %v7917 = vsel %vm612, %v7915, %v7916
      %v7918 = vrot.slane %v7617, 2
      %v7919 = vsel %vm612, %v7916, %v7918
      %v7920 = vrot.slane %v7602, 2
      %v7921 = vrot.slane %v7516, 2
      %v7922 = vsel %vm612, %v7920, %v7921
      %v7923 = vrot.slane %v7618, 2
      %v7924 = vsel %vm612, %v7921, %v7923
      %v7925 = vrot.slane %v7603, 2
      %v7926 = vrot.slane %v7519, 2
      %v7927 = vsel %vm612, %v7925, %v7926
      %v7928 = vrot.slane %v7619, 2
      %v7929 = vsel %vm612, %v7926, %v7928
      %v7930 = vrot.slane %v7604, 2
      %v7931 = vrot.slane %v7522, 2
      %v7932 = vsel %vm612, %v7930, %v7931
      %v7933 = vrot.slane %v7620, 2
      %v7934 = vsel %vm612, %v7931, %v7933
      %v7935 = vrot.slane %v7605, 2
      %v7936 = vrot.slane %v7525, 2
      %v7937 = vsel %vm612, %v7935, %v7936
      %v7938 = vrot.slane %v7621, 2
      %v7939 = vsel %vm612, %v7936, %v7938
      %v7940 = vrot.slane %v7606, 2
      %v7941 = vrot.slane %v7528, 2
      %v7942 = vsel %vm612, %v7940, %v7941
      %v7943 = vrot.slane %v7622, 2
      %v7944 = vsel %vm612, %v7941, %v7943
      %v7945 = vrot.slane %v7607, 2
      %v7946 = vrot.slane %v7531, 2
      %v7947 = vsel %vm612, %v7945, %v7946
      %v7948 = vrot.slane %v7623, 2
      %v7949 = vsel %vm612, %v7946, %v7948
      %v7950 = vrot.slane %v7608, 2
      %v7951 = vrot.slane %v7534, 2
      %v7952 = vsel %vm612, %v7950, %v7951
      %v7953 = vrot.slane %v7624, 2
      %v7954 = vsel %vm612, %v7951, %v7953
      %v7955 = vrot.slane %v7609, 2
      %v7956 = vrot.slane %v7537, 2
      %v7957 = vsel %vm612, %v7955, %v7956
      %v7958 = vrot.slane %v7625, 2
      %v7959 = vsel %vm612, %v7956, %v7958
      %v7960 = vrot.slane %v7610, 2
      %v7961 = vrot.slane %v7540, 2
      %v7962 = vsel %vm612, %v7960, %v7961
      %v7963 = vrot.slane %v7626, 2
      %v7964 = vsel %vm612, %v7961, %v7963
      %v7965 = vrot.slane %v7611, 2
      %v7966 = vrot.slane %v7543, 2
      %v7967 = vsel %vm612, %v7965, %v7966
      %v7968 = vrot.slane %v7627, 2
      %v7969 = vsel %vm612, %v7966, %v7968
      %v7970 = vrot.slane %v7612, 2
      %v7971 = vrot.slane %v7546, 2
      %v7972 = vsel %vm612, %v7970, %v7971
      %v7973 = vrot.slane %v7628, 2
      %v7974 = vsel %vm612, %v7971, %v7973
      %8006 = vrot.lane.b32.xlu0 %v7598, 64
      %v8007 = vpop.permute.xlu0 %8006
      %8008 = vrot.lane.b32.xlu0 %v7504, 64
      %v8009 = vpop.permute.xlu0 %8008
      %8010 = vrot.lane.b32.xlu0 %v7599, 64
      %v8011 = vpop.permute.xlu0 %8010
      %8012 = vrot.lane.b32.xlu0 %v7507, 64
      %v8013 = vpop.permute.xlu0 %8012
      %8014 = vrot.lane.b32.xlu0 %v7600, 64
      %v8015 = vpop.permute.xlu0 %8014
      %8016 = vrot.lane.b32.xlu0 %v7510, 64
      %v8017 = vpop.permute.xlu0 %8016
      %8018 = vrot.lane.b32.xlu0 %v7601, 64
      %v8019 = vpop.permute.xlu0 %8018
      %8020 = vrot.lane.b32.xlu0 %v7513, 64
      %v8021 = vpop.permute.xlu0 %8020
      %8022 = vrot.lane.b32.xlu0 %v7602, 64
      %v8023 = vpop.permute.xlu0 %8022
      %8024 = vrot.lane.b32.xlu0 %v7516, 64
      %v8025 = vpop.permute.xlu0 %8024
      %8026 = vrot.lane.b32.xlu0 %v7603, 64
      %v8027 = vpop.permute.xlu0 %8026
      %8028 = vrot.lane.b32.xlu0 %v7519, 64
      %v8029 = vpop.permute.xlu0 %8028
      %8030 = vrot.lane.b32.xlu0 %v7604, 64
      %v8031 = vpop.permute.xlu0 %8030
      %8032 = vrot.lane.b32.xlu0 %v7522, 64
      %v8033 = vpop.permute.xlu0 %8032
      %8034 = vrot.lane.b32.xlu0 %v7605, 64
      %v8035 = vpop.permute.xlu0 %8034
      %8036 = vrot.lane.b32.xlu0 %v7525, 64
      %v8037 = vpop.permute.xlu0 %8036
      %8038 = vrot.lane.b32.xlu0 %v7606, 64
      %v8039 = vpop.permute.xlu0 %8038
      %8040 = vrot.lane.b32.xlu0 %v7528, 64
      %v8041 = vpop.permute.xlu0 %8040
      %8042 = vrot.lane.b32.xlu0 %v7607, 64
      %v8043 = vpop.permute.xlu0 %8042
      %8044 = vrot.lane.b32.xlu0 %v7531, 64
      %v8045 = vpop.permute.xlu0 %8044
      %8046 = vrot.lane.b32.xlu0 %v7608, 64
      %v8047 = vpop.permute.xlu0 %8046
      %8048 = vrot.lane.b32.xlu0 %v7534, 64
      %v8049 = vpop.permute.xlu0 %8048
      %8050 = vrot.lane.b32.xlu0 %v7609, 64
      %v8051 = vpop.permute.xlu0 %8050
      %8052 = vrot.lane.b32.xlu0 %v7537, 64
      %v8053 = vpop.permute.xlu0 %8052
      %8054 = vrot.lane.b32.xlu0 %v7610, 64
      %v8055 = vpop.permute.xlu0 %8054
      %8056 = vrot.lane.b32.xlu0 %v7540, 64
      %v8057 = vpop.permute.xlu0 %8056
      %8058 = vrot.lane.b32.xlu0 %v7611, 64
      %v8059 = vpop.permute.xlu0 %8058
      %8060 = vrot.lane.b32.xlu0 %v7543, 64
      %v8061 = vpop.permute.xlu0 %8060
      %8062 = vrot.lane.b32.xlu0 %v7612, 64
      %v8063 = vpop.permute.xlu0 %8062
      %8064 = vrot.lane.b32.xlu0 %v7546, 64
      %v8065 = vpop.permute.xlu0 %8064
      %8066 = vrot.lane.b32.xlu0 %v7613, 64
      %v8067 = vpop.permute.xlu0 %8066
      %8068 = vrot.lane.b32.xlu0 %v7549, 64
      %v8069 = vpop.permute.xlu0 %8068
      %v8103 = vrot.slane %v7613, 1
      %v8104 = vrot.slane %v7549, 1
      %v8105 = vsel %vm435, %v8103, %v8104
      %v8106 = vrot.slane %v7629, 1
      %v8107 = vsel %vm435, %v8104, %v8106
      %v8140 = vrot.slane %v7613, 2
      %v8141 = vrot.slane %v7549, 2
      %v8142 = vsel %vm612, %v8140, %v8141
      %v8143 = vrot.slane %v7629, 2
      %v8144 = vsel %vm612, %v8141, %v8143
      %8145 = vrot.lane.b32.xlu0 %v7902, 64
      %v8146 = vpop.permute.xlu0 %8145
      %8147 = vrot.lane.b32.xlu0 %v7904, 64
      %v8148 = vpop.permute.xlu0 %8147
      %8149 = vrot.lane.b32.xlu0 %v7907, 64
      %v8150 = vpop.permute.xlu0 %8149
      %8151 = vrot.lane.b32.xlu0 %v7909, 64
      %v8152 = vpop.permute.xlu0 %8151
      %8153 = vrot.lane.b32.xlu0 %v7912, 64
      %v8154 = vpop.permute.xlu0 %8153
      %8155 = vrot.lane.b32.xlu0 %v7914, 64
      %v8156 = vpop.permute.xlu0 %8155
      %8157 = vrot.lane.b32.xlu0 %v7917, 64
      %v8158 = vpop.permute.xlu0 %8157
      %8159 = vrot.lane.b32.xlu0 %v7919, 64
      %v8160 = vpop.permute.xlu0 %8159
      %8161 = vrot.lane.b32.xlu0 %v7922, 64
      %v8162 = vpop.permute.xlu0 %8161
      %8163 = vrot.lane.b32.xlu0 %v7924, 64
      %v8164 = vpop.permute.xlu0 %8163
      %8165 = vrot.lane.b32.xlu0 %v7927, 64
      %v8166 = vpop.permute.xlu0 %8165
      %8167 = vrot.lane.b32.xlu0 %v7929, 64
      %v8168 = vpop.permute.xlu0 %8167
      %8169 = vrot.lane.b32.xlu0 %v7932, 64
      %v8170 = vpop.permute.xlu0 %8169
      %8171 = vrot.lane.b32.xlu0 %v7934, 64
      %v8172 = vpop.permute.xlu0 %8171
      %8173 = vrot.lane.b32.xlu0 %v7937, 64
      %v8174 = vpop.permute.xlu0 %8173
      %8175 = vrot.lane.b32.xlu0 %v7939, 64
      %v8176 = vpop.permute.xlu0 %8175
      %8177 = vrot.lane.b32.xlu0 %v7942, 64
      %v8178 = vpop.permute.xlu0 %8177
      %8179 = vrot.lane.b32.xlu0 %v7944, 64
      %v8180 = vpop.permute.xlu0 %8179
      %8181 = vrot.lane.b32.xlu0 %v7947, 64
      %v8182 = vpop.permute.xlu0 %8181
      %8183 = vrot.lane.b32.xlu0 %v7949, 64
      %v8184 = vpop.permute.xlu0 %8183
      %8185 = vrot.lane.b32.xlu0 %v7952, 64
      %v8186 = vpop.permute.xlu0 %8185
      %8187 = vrot.lane.b32.xlu0 %v7954, 64
      %v8188 = vpop.permute.xlu0 %8187
      %8189 = vrot.lane.b32.xlu0 %v7957, 64
      %v8190 = vpop.permute.xlu0 %8189
      %8191 = vrot.lane.b32.xlu0 %v7959, 64
      %v8192 = vpop.permute.xlu0 %8191
      %8193 = vrot.lane.b32.xlu0 %v7962, 64
      %v8194 = vpop.permute.xlu0 %8193
      %8195 = vrot.lane.b32.xlu0 %v7964, 64
      %v8196 = vpop.permute.xlu0 %8195
      %8197 = vrot.lane.b32.xlu0 %v7967, 64
      %v8198 = vpop.permute.xlu0 %8197
      %8199 = vrot.lane.b32.xlu0 %v7969, 64
      %v8200 = vpop.permute.xlu0 %8199
      %8201 = vrot.lane.b32.xlu0 %v7972, 64
      %v8202 = vpop.permute.xlu0 %8201
      %8203 = vrot.lane.b32.xlu0 %v7974, 64
      %v8204 = vpop.permute.xlu0 %8203
      %8205 = vrot.lane.b32.xlu0 %v8142, 64
      %v8206 = vpop.permute.xlu0 %8205
      %8207 = vrot.lane.b32.xlu0 %v8144, 64
      %v8208 = vpop.permute.xlu0 %8207
      %8241 = vrot.lane.b32.xlu0 %v8105, 64
      %v8242 = vpop.permute.xlu0 %8241
      %8243 = vrot.lane.b32.xlu0 %v8107, 64
      %v8244 = vpop.permute.xlu0 %8243
      %v8249 = vsel %vm991, %v7598, %v7811
      %v8250 = vsel %vm991, %v7504, %v7813
      %v8251 = vsel %vm991, %v7599, %v7815
      %v8252 = vsel %vm991, %v7507, %v7817
      %v8253 = vsel %vm991, %v7600, %v7819
      %v8254 = vsel %vm991, %v7510, %v7821
      %v8255 = vsel %vm991, %v7601, %v7823
      %v8256 = vsel %vm991, %v7513, %v7825
      %v8257 = vsel %vm991, %v7602, %v7827
      %v8258 = vsel %vm991, %v7516, %v7829
      %v8259 = vsel %vm991, %v7603, %v7831
      %v8260 = vsel %vm991, %v7519, %v7833
      %v8261 = vsel %vm991, %v7604, %v7835
      %v8262 = vsel %vm991, %v7522, %v7837
      %v8263 = vsel %vm991, %v7605, %v7839
      %v8264 = vsel %vm991, %v7525, %v7841
      %v8265 = vsel %vm991, %v7606, %v7843
      %v8266 = vsel %vm991, %v7528, %v7845
      %v8267 = vsel %vm991, %v7607, %v7847
      %v8268 = vsel %vm991, %v7531, %v7849
      %v8269 = vsel %vm991, %v7608, %v7851
      %v8270 = vsel %vm991, %v7534, %v7853
      %v8271 = vsel %vm991, %v7609, %v7855
      %v8272 = vsel %vm991, %v7537, %v7857
      %v8273 = vsel %vm991, %v7610, %v7859
      %v8274 = vsel %vm991, %v7540, %v7861
      %v8275 = vsel %vm991, %v7611, %v7863
      %v8276 = vsel %vm991, %v7543, %v7865
      %v8277 = vsel %vm991, %v7612, %v7867
      %v8278 = vsel %vm991, %v7546, %v7869
      %v8279 = vsel %vm991, %v6027, %v8007
      %v8280 = vsel %vm991, %v6027, %v8009
      %v8281 = vsel %vm991, %v7902, %v8011
      %v8282 = vsel %vm991, %v7904, %v8013
      %v8283 = vsel %vm991, %v7907, %v8015
      %v8284 = vsel %vm991, %v7909, %v8017
      %v8285 = vsel %vm991, %v7912, %v8019
      %v8286 = vsel %vm991, %v7914, %v8021
      %v8287 = vsel %vm991, %v7917, %v8023
      %v8288 = vsel %vm991, %v7919, %v8025
      %v8289 = vsel %vm991, %v7922, %v8027
      %v8290 = vsel %vm991, %v7924, %v8029
      %v8291 = vsel %vm991, %v7927, %v8031
      %v8292 = vsel %vm991, %v7929, %v8033
      %v8293 = vsel %vm991, %v7932, %v8035
      %v8294 = vsel %vm991, %v7934, %v8037
      %v8295 = vsel %vm991, %v7937, %v8039
      %v8296 = vsel %vm991, %v7939, %v8041
      %v8297 = vsel %vm991, %v7942, %v8043
      %v8298 = vsel %vm991, %v7944, %v8045
      %v8299 = vsel %vm991, %v7947, %v8047
      %v8300 = vsel %vm991, %v7949, %v8049
      %v8301 = vsel %vm991, %v7952, %v8051
      %v8302 = vsel %vm991, %v7954, %v8053
      %v8303 = vsel %vm991, %v7957, %v8055
      %v8304 = vsel %vm991, %v7959, %v8057
      %v8305 = vsel %vm991, %v7962, %v8059
      %v8306 = vsel %vm991, %v7964, %v8061
      %v8307 = vsel %vm991, %v7967, %v8063
      %v8308 = vsel %vm991, %v7969, %v8065
      %v8309 = vsel %vm991, %v7972, %v8067
      %v8310 = vsel %vm991, %v7974, %v8069
      %v8311 = vsel %vm991, %v7737, %v8146
      %v8312 = vsel %vm991, %v7739, %v8148
      %v8313 = vsel %vm991, %v7742, %v8150
      %v8314 = vsel %vm991, %v7744, %v8152
      %v8315 = vsel %vm991, %v7747, %v8154
      %v8316 = vsel %vm991, %v7749, %v8156
      %v8317 = vsel %vm991, %v7752, %v8158
      %v8318 = vsel %vm991, %v7754, %v8160
      %v8319 = vsel %vm991, %v7757, %v8162
      %v8320 = vsel %vm991, %v7759, %v8164
      %v8321 = vsel %vm991, %v7762, %v8166
      %v8322 = vsel %vm991, %v7764, %v8168
      %v8323 = vsel %vm991, %v7767, %v8170
      %v8324 = vsel %vm991, %v7769, %v8172
      %v8325 = vsel %vm991, %v7772, %v8174
      %v8326 = vsel %vm991, %v7774, %v8176
      %v8327 = vsel %vm991, %v7777, %v8178
      %v8328 = vsel %vm991, %v7779, %v8180
      %v8329 = vsel %vm991, %v7782, %v8182
      %v8330 = vsel %vm991, %v7784, %v8184
      %v8331 = vsel %vm991, %v7787, %v8186
      %v8332 = vsel %vm991, %v7789, %v8188
      %v8333 = vsel %vm991, %v7792, %v8190
      %v8334 = vsel %vm991, %v7794, %v8192
      %v8335 = vsel %vm991, %v7797, %v8194
      %v8336 = vsel %vm991, %v7799, %v8196
      %v8337 = vsel %vm991, %v7802, %v8198
      %v8338 = vsel %vm991, %v7804, %v8200
      %v8339 = vsel %vm991, %v7807, %v8202
      %v8340 = vsel %vm991, %v7809, %v8204
      %v8341 = vsel %vm991, %v8105, %v8206
      %v8342 = vsel %vm991, %v8107, %v8208
      %v8343 = vsel %vm991, %v7613, %v8242
      %v8344 = vsel %vm991, %v7549, %v8244
      %v8345 = vpack.c.bf16 %v8280, %v8279
      %v8346 = vpack.c.bf16 %v8312, %v8311
      %v8347 = vpack.c.bf16 %v8252, %v8251
      %v8348 = vpack.c.bf16 %v7909, %v7907
      %v8349 = vpack.c.bf16 %v8250, %v8249
      %v8350 = vpack.c.bf16 %v8282, %v8281
      %v8351 = vpack.c.bf16 %v8314, %v8313
      %v8352 = vpack.c.bf16 %v8254, %v8253
      %v8353 = vpack.c.bf16 %v7914, %v7912
      %v8354 = vpack.c.bf16 %v8284, %v8283
      %v8355 = vpack.c.bf16 %v8316, %v8315
      %v8356 = vpack.c.bf16 %v8256, %v8255
      %v8357 = vpack.c.bf16 %v7919, %v7917
      %v8358 = vpack.c.bf16 %v8286, %v8285
      %v8359 = vpack.c.bf16 %v8318, %v8317
      %v8360 = vpack.c.bf16 %v8258, %v8257
      %v8361 = vpack.c.bf16 %v7924, %v7922
      %v8362 = vpack.c.bf16 %v8288, %v8287
      %v8363 = vpack.c.bf16 %v8320, %v8319
      %v8364 = vpack.c.bf16 %v8260, %v8259
      %v8365 = vpack.c.bf16 %v7929, %v7927
      %v8366 = vpack.c.bf16 %v8290, %v8289
      %v8367 = vpack.c.bf16 %v8322, %v8321
      %v8368 = vpack.c.bf16 %v8262, %v8261
      %v8369 = vpack.c.bf16 %v7934, %v7932
      %v8370 = vpack.c.bf16 %v8292, %v8291
      %v8371 = vpack.c.bf16 %v8324, %v8323
      %v8372 = vpack.c.bf16 %v8264, %v8263
      %v8373 = vpack.c.bf16 %v7939, %v7937
      %v8374 = vpack.c.bf16 %v8294, %v8293
      %v8375 = vpack.c.bf16 %v8326, %v8325
      %v8376 = vpack.c.bf16 %v8266, %v8265
      %v8377 = vpack.c.bf16 %v7944, %v7942
      %v8378 = vpack.c.bf16 %v8296, %v8295
      %v8379 = vpack.c.bf16 %v8328, %v8327
      %v8380 = vpack.c.bf16 %v8268, %v8267
      %v8381 = vpack.c.bf16 %v7949, %v7947
      %v8382 = vpack.c.bf16 %v8298, %v8297
      %v8383 = vpack.c.bf16 %v8330, %v8329
      %v8384 = vpack.c.bf16 %v8270, %v8269
      %v8385 = vpack.c.bf16 %v7954, %v7952
      %v8386 = vpack.c.bf16 %v8300, %v8299
      %v8387 = vpack.c.bf16 %v8332, %v8331
      %v8388 = vpack.c.bf16 %v8272, %v8271
      %v8389 = vpack.c.bf16 %v7959, %v7957
      %v8390 = vpack.c.bf16 %v8302, %v8301
      %v8391 = vpack.c.bf16 %v8334, %v8333
      %v8392 = vpack.c.bf16 %v8274, %v8273
      %v8393 = vpack.c.bf16 %v7964, %v7962
      %v8394 = vpack.c.bf16 %v8304, %v8303
      %v8395 = vpack.c.bf16 %v8336, %v8335
      %v8396 = vpack.c.bf16 %v8276, %v8275
      %v8397 = vpack.c.bf16 %v7969, %v7967
      %v8398 = vpack.c.bf16 %v8306, %v8305
      %v8399 = vpack.c.bf16 %v8338, %v8337
      %v8400 = vpack.c.bf16 %v8278, %v8277
      %v8401 = vpack.c.bf16 %v7974, %v7972
      %v8402 = vpack.c.bf16 %v8308, %v8307
      %v8403 = vpack.c.bf16 %v8340, %v8339
      %v8404 = vpack.c.bf16 %v8344, %v8343
      %v8405 = vpack.c.bf16 %v8144, %v8142
      %v8406 = vpack.c.bf16 %v8310, %v8309
      %v8407 = vpack.c.bf16 %v8342, %v8341
      %v8409 = vlaneseq
      %v8410 = vshrl.u32 %v8409, 7
      %v8411 = vsub.s32 0, %v8410
      %v8412 = vrot.slane %v7704, %v8411
      %v8486 = vunpack.c.l.b16 %v7631
      %v8487 = vunpack.c.l.b16 %v7632
      %v8488 = vunpack.c.l.b16 %v7633
      %v8489 = vunpack.c.l.b16 %v7634
      %v8490 = vunpack.c.l.b16 %v7635
      %v8491 = vunpack.c.l.b16 %v7636
      %v8492 = vunpack.c.l.b16 %v7637
      %v8493 = vunpack.c.l.b16 %v7638
      %v8494 = vunpack.c.l.b16 %v7639
      %v8495 = vunpack.c.l.b16 %v7640
      %v8496 = vunpack.c.l.b16 %v7641
      %v8497 = vunpack.c.l.b16 %v7642
      %v8498 = vunpack.c.l.b16 %v7643
      %v8499 = vunpack.c.l.b16 %v7644
      %v8500 = vunpack.c.l.b16 %v7645
      %v8501 = vunpack.c.l.b16 %v7646
      %v8502 = vunpack.c.l.b16 %v7647
      %v8503 = vunpack.c.l.b16 %v7648
      %v8504 = vunpack.c.l.b16 %v7649
      %v8505 = vunpack.c.l.b16 %v7650
      %v8506 = vunpack.c.l.b16 %v7651
      %v8507 = vunpack.c.l.b16 %v7652
      %v8508 = vunpack.c.l.b16 %v7653
      %v8509 = vunpack.c.l.b16 %v7654
      %v8510 = vunpack.c.l.b16 %v7655
      %v8511 = vunpack.c.l.b16 %v7656
      %v8512 = vunpack.c.l.b16 %v7657
      %v8513 = vunpack.c.l.b16 %v7658
      %v8514 = vunpack.c.l.b16 %v7659
      %v8515 = vunpack.c.l.b16 %v7660
      %v8516 = vunpack.c.l.b16 %v7661
      %v8517 = vunpack.c.l.b16 %v7662
      %v8518 = vunpack.c.l.b16 %v7663
      %v8519 = vunpack.c.l.b16 %v7664
      %v8520 = vunpack.c.l.b16 %v7665
      %v8521 = vunpack.c.l.b16 %v7666
      %v8522 = vunpack.c.l.b16 %v7667
      %v8523 = vunpack.c.l.b16 %v7668
      %v8524 = vunpack.c.l.b16 %v7669
      %v8525 = vunpack.c.l.b16 %v7670
      %v8526 = vunpack.c.l.b16 %v7671
      %v8527 = vunpack.c.l.b16 %v7672
      %v8528 = vunpack.c.l.b16 %v7673
      %v8529 = vunpack.c.l.b16 %v7674
      %v8530 = vunpack.c.l.b16 %v7675
      %v8531 = vunpack.c.l.b16 %v7676
      %v8532 = vunpack.c.l.b16 %v7677
      %v8533 = vunpack.c.l.b16 %v7678
      %v8534 = vunpack.c.l.b16 %v7679
      %v8535 = vunpack.c.l.b16 %v7680
      %v8536 = vunpack.c.l.b16 %v7681
      %v8537 = vunpack.c.l.b16 %v7682
      %v8538 = vunpack.c.l.b16 %v7683
      %v8539 = vunpack.c.l.b16 %v7684
      %v8540 = vunpack.c.l.b16 %v7685
      %v8541 = vunpack.c.l.b16 %v7686
      %v8542 = vunpack.c.l.b16 %v7687
      %v8543 = vunpack.c.l.b16 %v7688
      %v8544 = vunpack.c.l.b16 %v7689
      %v8545 = vunpack.c.l.b16 %v7690
      %v8546 = vunpack.c.l.b16 %v7691
      %v8547 = vunpack.c.l.b16 %v7692
      %v8548 = vunpack.c.l.b16 %v7693
      %v8549 = vunpack.c.l.b16 %v7694
      %v8550 = vunpack.c.l.b16 %v7695
      %v8551 = vunpack.c.l.b16 %v7696
      %v8552 = vunpack.c.l.b16 %v7697
      %v8553 = vunpack.c.l.b16 %v7698
      %v8554 = vunpack.c.l.b16 %v7699
      %v8555 = vunpack.c.l.b16 %v7700
      %v8556 = vunpack.c.l.b16 %v7701
      %v8557 = vunpack.c.l.b16 %v7702
      %v8558 = vpack.c.b16 %v8487, %v8486
      %v8559 = vpack.c.b16 %v8489, %v8488
      %v8560 = vpack.c.b16 %v8491, %v8490
      %v8561 = vpack.c.b16 %v8493, %v8492
      %v8562 = vpack.c.b16 %v8495, %v8494
      %v8563 = vpack.c.b16 %v8497, %v8496
      %v8564 = vpack.c.b16 %v8499, %v8498
      %v8565 = vpack.c.b16 %v8501, %v8500
      %v8566 = vpack.c.b16 %v8503, %v8502
      %v8567 = vpack.c.b16 %v8505, %v8504
      %v8568 = vpack.c.b16 %v8507, %v8506
      %v8569 = vpack.c.b16 %v8509, %v8508
      %v8570 = vpack.c.b16 %v8511, %v8510
      %v8571 = vpack.c.b16 %v8513, %v8512
      %v8572 = vpack.c.b16 %v8515, %v8514
      %v8573 = vpack.c.b16 %v8517, %v8516
      %v8574 = vpack.c.b16 %v8519, %v8518
      %v8575 = vpack.c.b16 %v8521, %v8520
      %v8576 = vpack.c.b16 %v8523, %v8522
      %v8577 = vpack.c.b16 %v8525, %v8524
      %v8578 = vpack.c.b16 %v8527, %v8526
      %v8579 = vpack.c.b16 %v8529, %v8528
      %v8580 = vpack.c.b16 %v8531, %v8530
      %v8581 = vpack.c.b16 %v8533, %v8532
      %v8582 = vpack.c.b16 %v8535, %v8534
      %v8583 = vpack.c.b16 %v8537, %v8536
      %v8584 = vpack.c.b16 %v8539, %v8538
      %v8585 = vpack.c.b16 %v8541, %v8540
      %v8586 = vpack.c.b16 %v8543, %v8542
      %v8587 = vpack.c.b16 %v8545, %v8544
      %v8588 = vpack.c.b16 %v8547, %v8546
      %v8589 = vpack.c.b16 %v8549, %v8548
      %v8590 = vpack.c.b16 %v8551, %v8550
      %v8591 = vpack.c.b16 %v8553, %v8552
      %v8592 = vpack.c.b16 %v8555, %v8554
      %v8593 = vpack.c.b16 %v8557, %v8556
      %v8631 = vsel %vm991, %v8348, 0
      %v8634 = vsel %vm991, %v8353, 0
      %v8637 = vsel %vm991, %v8357, 0
      %v8640 = vsel %vm991, %v8361, 0
      %v8643 = vsel %vm991, %v8365, 0
      %v8646 = vsel %vm991, %v8369, 0
      %v8649 = vsel %vm991, %v8373, 0
      %v8652 = vsel %vm991, %v8377, 0
      %v8655 = vsel %vm991, %v8381, 0
      %v8658 = vsel %vm991, %v8385, 0
      %v8661 = vsel %vm991, %v8389, 0
      %v8664 = vsel %vm991, %v8393, 0
      %v8667 = vsel %vm991, %v8397, 0
      %v8670 = vsel %vm991, %v8401, 0
      %v8673 = vsel %vm991, %v8405, 0
      %8675 = vmatprep.subr.bf16.mxu0 0
      %8676 = vmatpush1.bf16.msra.mxu0 %v8558
      %8677 = vmatprep.subr.bf16.mxu0 0
      %8678 = vmatpush1.bf16.msra.mxu0 %v8559
      %8679 = vmatprep.subr.bf16.mxu0 0
      %8680 = vmatpush1.bf16.msra.mxu0 %v8560
      %8681 = vmatprep.subr.bf16.mxu0 0
      %8682 = vmatpush1.bf16.msra.mxu0 %v8561
      %8683 = vmatprep.subr.bf16.mxu0 0
      %8684 = vmatpush1.bf16.msra.mxu0 %v8562
      %8685 = vmatprep.subr.bf16.mxu0 0
      %8686 = vmatpush1.bf16.msra.mxu0 %v8563
      %8687 = vmatprep.subr.bf16.mxu0 0
      %8688 = vmatpush1.bf16.msra.mxu0 %v8564
      %8689 = vmatprep.subr.bf16.mxu0 0
      %8690 = vmatpush1.bf16.msra.mxu0 %v8565
      %8691 = vmatprep.subr.bf16.mxu0 0
      %8692 = vmatpush1.bf16.msra.mxu0 %v8566
      %8693 = vmatprep.subr.bf16.mxu0 0
      %8694 = vmatpush1.bf16.msra.mxu0 %v8567
      %8695 = vmatprep.subr.bf16.mxu0 0
      %8696 = vmatpush1.bf16.msra.mxu0 %v8568
      %8697 = vmatprep.subr.bf16.mxu0 0
      %8698 = vmatpush1.bf16.msra.mxu0 %v8569
      %8699 = vmatprep.subr.bf16.mxu0 0
      %8700 = vmatpush1.bf16.msra.mxu0 %v8570
      %8701 = vmatprep.subr.bf16.mxu0 0
      %8702 = vmatpush1.bf16.msra.mxu0 %v8571
      %8703 = vmatprep.subr.bf16.mxu0 0
      %8704 = vmatpush1.bf16.msra.mxu0 %v8572
      %8705 = vmatprep.subr.bf16.mxu0 0
      %8706 = vmatpush1.bf16.msra.mxu0 %v8573
      %8707 = vmatprep.mubr.bf16.mxu0 %v8345
      %8708 = vmatmul.mubr.bf16.gmra.mrb[0].mxu0 %v6475
      %v8709 = vpop.f32.mrb[0].mxu0
      %v8710 = vadd.f32 %v8412, %v8709
      %v8711 = vpop.f32.mrb[0].mxu0
      %v8712 = vpop.f32.mrb[0].mxu0
      %v8713 = vadd.f32 %v8412, %v8712
      %v8714 = vpop.f32.mrb[0].mxu0
      %8715 = vmatprep.mubr.bf16.mxu0 %v8350
      %8716 = vmatmul.mubr.bf16.gmra.mrb[0].mxu0 %v8349
      %v8717 = vpop.f32.mrb[0].mxu0
      %v8718 = vadd.f32 %v8412, %v8717
      %v8719 = vpop.f32.mrb[0].mxu0
      %v8720 = vpop.f32.mrb[0].mxu0
      %v8721 = vadd.f32 %v8412, %v8720
      %v8722 = vpop.f32.mrb[0].mxu0
      %8723 = vmatprep.mubr.bf16.mxu0 %v8354
      %8724 = vmatmul.mubr.bf16.gmra.mrb[0].mxu0 %v8347
      %v8725 = vpop.f32.mrb[0].mxu0
      %v8726 = vadd.f32 %v8412, %v8725
      %v8727 = vpop.f32.mrb[0].mxu0
      %v8728 = vpop.f32.mrb[0].mxu0
      %v8729 = vadd.f32 %v8412, %v8728
      %v8730 = vpop.f32.mrb[0].mxu0
      %8731 = vmatprep.mubr.bf16.mxu0 %v8358
      %8732 = vmatmul.mubr.bf16.gmra.mrb[0].mxu0 %v8352
      %v8733 = vpop.f32.mrb[0].mxu0
      %v8734 = vadd.f32 %v8412, %v8733
      %v8735 = vpop.f32.mrb[0].mxu0
      %v8736 = vpop.f32.mrb[0].mxu0
      %v8737 = vadd.f32 %v8412, %v8736
      %v8738 = vpop.f32.mrb[0].mxu0
      %8739 = vmatprep.mubr.bf16.mxu0 %v8362
      %8740 = vmatmul.mubr.bf16.gmra.mrb[0].mxu0 %v8356
      %v8741 = vpop.f32.mrb[0].mxu0
      %v8742 = vadd.f32 %v8412, %v8741
      %v8743 = vpop.f32.mrb[0].mxu0
      %v8744 = vpop.f32.mrb[0].mxu0
      %v8745 = vadd.f32 %v8412, %v8744
      %v8746 = vpop.f32.mrb[0].mxu0
      %8747 = vmatprep.mubr.bf16.mxu0 %v8366
      %8748 = vmatmul.mubr.bf16.gmra.mrb[0].mxu0 %v8360
      %v8749 = vpop.f32.mrb[0].mxu0
      %v8750 = vadd.f32 %v8412, %v8749
      %v8751 = vpop.f32.mrb[0].mxu0
      %v8752 = vpop.f32.mrb[0].mxu0
      %v8753 = vadd.f32 %v8412, %v8752
      %v8754 = vpop.f32.mrb[0].mxu0
      %8755 = vmatprep.mubr.bf16.mxu0 %v8370
      %8756 = vmatmul.mubr.bf16.gmra.mrb[0].mxu0 %v8364
      %v8757 = vpop.f32.mrb[0].mxu0
      %v8758 = vadd.f32 %v8412, %v8757
      %v8759 = vpop.f32.mrb[0].mxu0
      %v8760 = vpop.f32.mrb[0].mxu0
      %v8761 = vadd.f32 %v8412, %v8760
      %v8762 = vpop.f32.mrb[0].mxu0
      %8763 = vmatprep.mubr.bf16.mxu0 %v8374
      %8764 = vmatmul.mubr.bf16.gmra.mrb[0].mxu0 %v8368
      %v8765 = vpop.f32.mrb[0].mxu0
      %v8766 = vadd.f32 %v8412, %v8765
      %v8767 = vpop.f32.mrb[0].mxu0
      %v8768 = vpop.f32.mrb[0].mxu0
      %v8769 = vadd.f32 %v8412, %v8768
      %v8770 = vpop.f32.mrb[0].mxu0
      %8771 = vmatprep.mubr.bf16.mxu0 %v8378
      %8772 = vmatmul.mubr.bf16.gmra.mrb[0].mxu0 %v8372
      %v8773 = vpop.f32.mrb[0].mxu0
      %v8774 = vadd.f32 %v8412, %v8773
      %v8775 = vpop.f32.mrb[0].mxu0
      %v8776 = vpop.f32.mrb[0].mxu0
      %v8777 = vadd.f32 %v8412, %v8776
      %v8778 = vpop.f32.mrb[0].mxu0
      %8779 = vmatprep.mubr.bf16.mxu0 %v8382
      %8780 = vmatmul.mubr.bf16.gmra.mrb[0].mxu0 %v8376
      %v8781 = vpop.f32.mrb[0].mxu0
      %v8782 = vadd.f32 %v8412, %v8781
      %v8783 = vpop.f32.mrb[0].mxu0
      %v8784 = vpop.f32.mrb[0].mxu0
      %v8785 = vadd.f32 %v8412, %v8784
      %v8786 = vpop.f32.mrb[0].mxu0
      %8787 = vmatprep.mubr.bf16.mxu0 %v8386
      %8788 = vmatmul.mubr.bf16.gmra.mrb[0].mxu0 %v8380
      %v8789 = vpop.f32.mrb[0].mxu0
      %v8790 = vadd.f32 %v8412, %v8789
      %v8791 = vpop.f32.mrb[0].mxu0
      %v8792 = vpop.f32.mrb[0].mxu0
      %v8793 = vadd.f32 %v8412, %v8792
      %v8794 = vpop.f32.mrb[0].mxu0
      %8795 = vmatprep.mubr.bf16.mxu0 %v8390
      %8796 = vmatmul.mubr.bf16.gmra.mrb[0].mxu0 %v8384
      %v8797 = vpop.f32.mrb[0].mxu0
      %v8798 = vadd.f32 %v8412, %v8797
      %v8799 = vpop.f32.mrb[0].mxu0
      %v8800 = vpop.f32.mrb[0].mxu0
      %v8801 = vadd.f32 %v8412, %v8800
      %v8802 = vpop.f32.mrb[0].mxu0
      %8803 = vmatprep.mubr.bf16.mxu0 %v8394
      %8804 = vmatmul.mubr.bf16.gmra.mrb[0].mxu0 %v8388
      %v8805 = vpop.f32.mrb[0].mxu0
      %v8806 = vadd.f32 %v8412, %v8805
      %v8807 = vpop.f32.mrb[0].mxu0
      %v8808 = vpop.f32.mrb[0].mxu0
      %v8809 = vadd.f32 %v8412, %v8808
      %v8810 = vpop.f32.mrb[0].mxu0
      %8811 = vmatprep.mubr.bf16.mxu0 %v8398
      %8812 = vmatmul.mubr.bf16.gmra.mrb[0].mxu0 %v8392
      %v8813 = vpop.f32.mrb[0].mxu0
      %v8814 = vadd.f32 %v8412, %v8813
      %v8815 = vpop.f32.mrb[0].mxu0
      %v8816 = vpop.f32.mrb[0].mxu0
      %v8817 = vadd.f32 %v8412, %v8816
      %v8818 = vpop.f32.mrb[0].mxu0
      %8819 = vmatprep.mubr.bf16.mxu0 %v8402
      %8820 = vmatmul.mubr.bf16.gmra.mrb[0].mxu0 %v8396
      %v8821 = vpop.f32.mrb[0].mxu0
      %v8822 = vadd.f32 %v8412, %v8821
      %v8823 = vpop.f32.mrb[0].mxu0
      %v8824 = vpop.f32.mrb[0].mxu0
      %v8825 = vadd.f32 %v8412, %v8824
      %v8826 = vpop.f32.mrb[0].mxu0
      %8827 = vmatprep.mubr.bf16.mxu0 %v8406
      %8828 = vmatmul.mubr.bf16.gmra.mrb[0].mxu0 %v8400
      %v8829 = vpop.f32.mrb[0].mxu0
      %v8830 = vadd.f32 %v8412, %v8829
      %v8831 = vpop.f32.mrb[0].mxu0
      %v8832 = vpop.f32.mrb[0].mxu0
      %v8833 = vadd.f32 %v8412, %v8832
      %v8834 = vpop.f32.mrb[0].mxu0
      %8835 = vdwg.mxu0
      %8836 = vmatprep.subr.bf16.mxu0 0
      %8837 = vmatpush1.bf16.msra.mxu0 %v8574
      %8838 = vmatprep.subr.bf16.mxu0 0
      %8839 = vmatpush1.bf16.msra.mxu0 %v8575
      %8840 = vmatprep.subr.bf16.mxu0 0
      %8841 = vmatpush1.bf16.msra.mxu0 %v8576
      %8842 = vmatprep.subr.bf16.mxu0 0
      %8843 = vmatpush1.bf16.msra.mxu0 %v8577
      %8844 = vmatprep.subr.bf16.mxu0 0
      %8845 = vmatpush1.bf16.msra.mxu0 %v8578
      %8846 = vmatprep.subr.bf16.mxu0 0
      %8847 = vmatpush1.bf16.msra.mxu0 %v8579
      %8848 = vmatprep.subr.bf16.mxu0 0
      %8849 = vmatpush1.bf16.msra.mxu0 %v8580
      %8850 = vmatprep.subr.bf16.mxu0 0
      %8851 = vmatpush1.bf16.msra.mxu0 %v8581
      %8852 = vmatprep.subr.bf16.mxu0 0
      %8853 = vmatpush1.bf16.msra.mxu0 %v8582
      %8854 = vmatprep.subr.bf16.mxu0 0
      %8855 = vmatpush1.bf16.msra.mxu0 %v8583
      %8856 = vmatprep.subr.bf16.mxu0 0
      %8857 = vmatpush1.bf16.msra.mxu0 %v8584
      %8858 = vmatprep.subr.bf16.mxu0 0
      %8859 = vmatpush1.bf16.msra.mxu0 %v8585
      %8860 = vmatprep.subr.bf16.mxu0 0
      %8861 = vmatpush1.bf16.msra.mxu0 %v8586
      %8862 = vmatprep.subr.bf16.mxu0 0
      %8863 = vmatpush1.bf16.msra.mxu0 %v8587
      %8864 = vmatprep.subr.bf16.mxu0 0
      %8865 = vmatpush1.bf16.msra.mxu0 %v8588
      %8866 = vmatprep.subr.bf16.mxu0 0
      %8867 = vmatpush1.bf16.msra.mxu0 %v8589
      %8868 = vmatprep.mubr.bf16.mxu0 %v8347
      %8869 = vmatmul.mubr.bf16.gmra.mrb[0].mxu0 %v8346
      %v8870 = vpop.f32.mrb[0].mxu0
      %v8871 = vadd.f32 %v8710, %v8870
      %v8872 = vpop.f32.mrb[0].mxu0
      %v8873 = vpop.f32.mrb[0].mxu0
      %v8874 = vadd.f32 %v8713, %v8873
      %v8875 = vpop.f32.mrb[0].mxu0
      %8876 = vmatprep.mubr.bf16.mxu0 %v8352
      %8877 = vmatmul.mubr.bf16.gmra.mrb[0].mxu0 %v8351
      %v8878 = vpop.f32.mrb[0].mxu0
      %v8879 = vadd.f32 %v8718, %v8878
      %v8880 = vpop.f32.mrb[0].mxu0
      %v8881 = vpop.f32.mrb[0].mxu0
      %v8882 = vadd.f32 %v8721, %v8881
      %v8883 = vpop.f32.mrb[0].mxu0
      %8884 = vmatprep.mubr.bf16.mxu0 %v8356
      %8885 = vmatmul.mubr.bf16.gmra.mrb[0].mxu0 %v8355
      %v8886 = vpop.f32.mrb[0].mxu0
      %v8887 = vadd.f32 %v8726, %v8886
      %v8888 = vpop.f32.mrb[0].mxu0
      %v8889 = vpop.f32.mrb[0].mxu0
      %v8890 = vadd.f32 %v8729, %v8889
      %v8891 = vpop.f32.mrb[0].mxu0
      %8892 = vmatprep.mubr.bf16.mxu0 %v8360
      %8893 = vmatmul.mubr.bf16.gmra.mrb[0].mxu0 %v8359
      %v8894 = vpop.f32.mrb[0].mxu0
      %v8895 = vadd.f32 %v8734, %v8894
      %v8896 = vpop.f32.mrb[0].mxu0
      %v8897 = vpop.f32.mrb[0].mxu0
      %v8898 = vadd.f32 %v8737, %v8897
      %v8899 = vpop.f32.mrb[0].mxu0
      %8900 = vmatprep.mubr.bf16.mxu0 %v8364
      %8901 = vmatmul.mubr.bf16.gmra.mrb[0].mxu0 %v8363
      %v8902 = vpop.f32.mrb[0].mxu0
      %v8903 = vadd.f32 %v8742, %v8902
      %v8904 = vpop.f32.mrb[0].mxu0
      %v8905 = vpop.f32.mrb[0].mxu0
      %v8906 = vadd.f32 %v8745, %v8905
      %v8907 = vpop.f32.mrb[0].mxu0
      %8908 = vmatprep.mubr.bf16.mxu0 %v8368
      %8909 = vmatmul.mubr.bf16.gmra.mrb[0].mxu0 %v8367
      %v8910 = vpop.f32.mrb[0].mxu0
      %v8911 = vadd.f32 %v8750, %v8910
      %v8912 = vpop.f32.mrb[0].mxu0
      %v8913 = vpop.f32.mrb[0].mxu0
      %v8914 = vadd.f32 %v8753, %v8913
      %v8915 = vpop.f32.mrb[0].mxu0
      %8916 = vmatprep.mubr.bf16.mxu0 %v8372
      %8917 = vmatmul.mubr.bf16.gmra.mrb[0].mxu0 %v8371
      %v8918 = vpop.f32.mrb[0].mxu0
      %v8919 = vadd.f32 %v8758, %v8918
      %v8920 = vpop.f32.mrb[0].mxu0
      %v8921 = vpop.f32.mrb[0].mxu0
      %v8922 = vadd.f32 %v8761, %v8921
      %v8923 = vpop.f32.mrb[0].mxu0
      %8924 = vmatprep.mubr.bf16.mxu0 %v8376
      %8925 = vmatmul.mubr.bf16.gmra.mrb[0].mxu0 %v8375
      %v8926 = vpop.f32.mrb[0].mxu0
      %v8927 = vadd.f32 %v8766, %v8926
      %v8928 = vpop.f32.mrb[0].mxu0
      %v8929 = vpop.f32.mrb[0].mxu0
      %v8930 = vadd.f32 %v8769, %v8929
      %v8931 = vpop.f32.mrb[0].mxu0
      %8932 = vmatprep.mubr.bf16.mxu0 %v8380
      %8933 = vmatmul.mubr.bf16.gmra.mrb[0].mxu0 %v8379
      %v8934 = vpop.f32.mrb[0].mxu0
      %v8935 = vadd.f32 %v8774, %v8934
      %v8936 = vpop.f32.mrb[0].mxu0
      %v8937 = vpop.f32.mrb[0].mxu0
      %v8938 = vadd.f32 %v8777, %v8937
      %v8939 = vpop.f32.mrb[0].mxu0
      %8940 = vmatprep.mubr.bf16.mxu0 %v8384
      %8941 = vmatmul.mubr.bf16.gmra.mrb[0].mxu0 %v8383
      %v8942 = vpop.f32.mrb[0].mxu0
      %v8943 = vadd.f32 %v8782, %v8942
      %v8944 = vpop.f32.mrb[0].mxu0
      %v8945 = vpop.f32.mrb[0].mxu0
      %v8946 = vadd.f32 %v8785, %v8945
      %v8947 = vpop.f32.mrb[0].mxu0
      %8948 = vmatprep.mubr.bf16.mxu0 %v8388
      %8949 = vmatmul.mubr.bf16.gmra.mrb[0].mxu0 %v8387
      %v8950 = vpop.f32.mrb[0].mxu0
      %v8951 = vadd.f32 %v8790, %v8950
      %v8952 = vpop.f32.mrb[0].mxu0
      %v8953 = vpop.f32.mrb[0].mxu0
      %v8954 = vadd.f32 %v8793, %v8953
      %v8955 = vpop.f32.mrb[0].mxu0
      %8956 = vmatprep.mubr.bf16.mxu0 %v8392
      %8957 = vmatmul.mubr.bf16.gmra.mrb[0].mxu0 %v8391
      %v8958 = vpop.f32.mrb[0].mxu0
      %v8959 = vadd.f32 %v8798, %v8958
      %v8960 = vpop.f32.mrb[0].mxu0
      %v8961 = vpop.f32.mrb[0].mxu0
      %v8962 = vadd.f32 %v8801, %v8961
      %v8963 = vpop.f32.mrb[0].mxu0
      %8964 = vmatprep.mubr.bf16.mxu0 %v8396
      %8965 = vmatmul.mubr.bf16.gmra.mrb[0].mxu0 %v8395
      %v8966 = vpop.f32.mrb[0].mxu0
      %v8967 = vadd.f32 %v8806, %v8966
      %v8968 = vpop.f32.mrb[0].mxu0
      %v8969 = vpop.f32.mrb[0].mxu0
      %v8970 = vadd.f32 %v8809, %v8969
      %v8971 = vpop.f32.mrb[0].mxu0
      %8972 = vmatprep.mubr.bf16.mxu0 %v8400
      %8973 = vmatmul.mubr.bf16.gmra.mrb[0].mxu0 %v8399
      %v8974 = vpop.f32.mrb[0].mxu0
      %v8975 = vadd.f32 %v8814, %v8974
      %v8976 = vpop.f32.mrb[0].mxu0
      %v8977 = vpop.f32.mrb[0].mxu0
      %v8978 = vadd.f32 %v8817, %v8977
      %v8979 = vpop.f32.mrb[0].mxu0
      %8980 = vmatprep.mubr.bf16.mxu0 %v8404
      %8981 = vmatmul.mubr.bf16.gmra.mrb[0].mxu0 %v8403
      %v8982 = vpop.f32.mrb[0].mxu0
      %v8983 = vadd.f32 %v8822, %v8982
      %v8984 = vpop.f32.mrb[0].mxu0
      %v8985 = vpop.f32.mrb[0].mxu0
      %v8986 = vadd.f32 %v8825, %v8985
      %v8987 = vpop.f32.mrb[0].mxu0
      %8988 = vmatprep.mubr.bf16.mxu0 %v6475
      %8989 = vmatmul.mubr.bf16.gmra.mrb[0].mxu0 %v8407
      %v8990 = vpop.f32.mrb[0].mxu0
      %v8991 = vadd.f32 %v8830, %v8990
      %v8992 = vpop.f32.mrb[0].mxu0
      %v8993 = vpop.f32.mrb[0].mxu0
      %v8994 = vadd.f32 %v8833, %v8993
      %v8995 = vpop.f32.mrb[0].mxu0
      %8996 = vdwg.mxu0
      %8997 = vmatprep.subr.bf16.mxu0 0
      %8998 = vmatpush1.bf16.msra.mxu0 %v8590
      %8999 = vmatprep.subr.bf16.mxu0 0
      %9000 = vmatpush1.bf16.msra.mxu0 %v8591
      %9001 = vmatprep.subr.bf16.mxu0 0
      %9002 = vmatpush1.bf16.msra.mxu0 %v8592
      %9003 = vmatprep.subr.bf16.mxu0 0
      %9004 = vmatpush1.bf16.msra.mxu0 %v8593
      %9005 = vmatprep.subr.bf16.mxu0 0
      %9006 = vmatpush1.bf16.msra.mxu0 0
      %9007 = vmatprep.subr.bf16.mxu0 0
      %9008 = vmatpush1.bf16.msra.mxu0 0
      %9009 = vmatprep.subr.bf16.mxu0 0
      %9010 = vmatpush1.bf16.msra.mxu0 0
      %9011 = vmatprep.subr.bf16.mxu0 0
      %9012 = vmatpush1.bf16.msra.mxu0 0
      %9013 = vmatprep.subr.bf16.mxu0 0
      %9014 = vmatpush1.bf16.msra.mxu0 0
      %9015 = vmatprep.subr.bf16.mxu0 0
      %9016 = vmatpush1.bf16.msra.mxu0 0
      %9017 = vmatprep.subr.bf16.mxu0 0
      %9018 = vmatpush1.bf16.msra.mxu0 0
      %9019 = vmatprep.subr.bf16.mxu0 0
      %9020 = vmatpush1.bf16.msra.mxu0 0
      %9021 = vmatprep.subr.bf16.mxu0 0
      %9022 = vmatpush1.bf16.msra.mxu0 0
      %9023 = vmatprep.subr.bf16.mxu0 0
      %9024 = vmatpush1.bf16.msra.mxu0 0
      %9025 = vmatprep.subr.bf16.mxu0 0
      %9026 = vmatpush1.bf16.msra.mxu0 0
      %9027 = vmatprep.subr.bf16.mxu0 0
      %9028 = vmatpush1.bf16.msra.mxu0 0
      %9029 = vmatprep.mubr.bf16.mxu0 0
      %9030 = vmatmul.mubr.bf16.gmra.mrb[0].mxu0 %v8631
      %v9031 = vpop.f32.mrb[0].mxu0
      %v9032 = vadd.f32 %v8871, %v9031
      %v9033 = vpop.f32.mrb[0].mxu0
      %v9034 = vpop.f32.mrb[0].mxu0
      %v9035 = vadd.f32 %v8874, %v9034
      %v9036 = vpop.f32.mrb[0].mxu0
      %9037 = vmatprep.mubr.bf16.mxu0 0
      %9038 = vmatmul.mubr.bf16.gmra.mrb[0].mxu0 %v8634
      %v9039 = vpop.f32.mrb[0].mxu0
      %v9040 = vadd.f32 %v8879, %v9039
      %v9041 = vpop.f32.mrb[0].mxu0
      %v9042 = vpop.f32.mrb[0].mxu0
      %v9043 = vadd.f32 %v8882, %v9042
      %v9044 = vpop.f32.mrb[0].mxu0
      %9045 = vmatprep.mubr.bf16.mxu0 0
      %9046 = vmatmul.mubr.bf16.gmra.mrb[0].mxu0 %v8637
      %v9047 = vpop.f32.mrb[0].mxu0
      %v9048 = vadd.f32 %v8887, %v9047
      %v9049 = vpop.f32.mrb[0].mxu0
      %v9050 = vpop.f32.mrb[0].mxu0
      %v9051 = vadd.f32 %v8890, %v9050
      %v9052 = vpop.f32.mrb[0].mxu0
      %9053 = vmatprep.mubr.bf16.mxu0 0
      %9054 = vmatmul.mubr.bf16.gmra.mrb[0].mxu0 %v8640
      %v9055 = vpop.f32.mrb[0].mxu0
      %v9056 = vadd.f32 %v8895, %v9055
      %v9057 = vpop.f32.mrb[0].mxu0
      %v9058 = vpop.f32.mrb[0].mxu0
      %v9059 = vadd.f32 %v8898, %v9058
      %v9060 = vpop.f32.mrb[0].mxu0
      %9061 = vmatprep.mubr.bf16.mxu0 0
      %9062 = vmatmul.mubr.bf16.gmra.mrb[0].mxu0 %v8643
      %v9063 = vpop.f32.mrb[0].mxu0
      %v9064 = vadd.f32 %v8903, %v9063
      %v9065 = vpop.f32.mrb[0].mxu0
      %v9066 = vpop.f32.mrb[0].mxu0
      %v9067 = vadd.f32 %v8906, %v9066
      %v9068 = vpop.f32.mrb[0].mxu0
      %9069 = vmatprep.mubr.bf16.mxu0 0
      %9070 = vmatmul.mubr.bf16.gmra.mrb[0].mxu0 %v8646
      %v9071 = vpop.f32.mrb[0].mxu0
      %v9072 = vadd.f32 %v8911, %v9071
      %v9073 = vpop.f32.mrb[0].mxu0
      %v9074 = vpop.f32.mrb[0].mxu0
      %v9075 = vadd.f32 %v8914, %v9074
      %v9076 = vpop.f32.mrb[0].mxu0
      %9077 = vmatprep.mubr.bf16.mxu0 0
      %9078 = vmatmul.mubr.bf16.gmra.mrb[0].mxu0 %v8649
      %v9079 = vpop.f32.mrb[0].mxu0
      %v9080 = vadd.f32 %v8919, %v9079
      %v9081 = vpop.f32.mrb[0].mxu0
      %v9082 = vpop.f32.mrb[0].mxu0
      %v9083 = vadd.f32 %v8922, %v9082
      %v9084 = vpop.f32.mrb[0].mxu0
      %9085 = vmatprep.mubr.bf16.mxu0 0
      %9086 = vmatmul.mubr.bf16.gmra.mrb[0].mxu0 %v8652
      %v9087 = vpop.f32.mrb[0].mxu0
      %v9088 = vadd.f32 %v8927, %v9087
      %v9089 = vpop.f32.mrb[0].mxu0
      %v9090 = vpop.f32.mrb[0].mxu0
      %v9091 = vadd.f32 %v8930, %v9090
      %v9092 = vpop.f32.mrb[0].mxu0
      %9093 = vmatprep.mubr.bf16.mxu0 0
      %9094 = vmatmul.mubr.bf16.gmra.mrb[0].mxu0 %v8655
      %v9095 = vpop.f32.mrb[0].mxu0
      %v9096 = vadd.f32 %v8935, %v9095
      %v9097 = vpop.f32.mrb[0].mxu0
      %v9098 = vpop.f32.mrb[0].mxu0
      %v9099 = vadd.f32 %v8938, %v9098
      %v9100 = vpop.f32.mrb[0].mxu0
      %9101 = vmatprep.mubr.bf16.mxu0 0
      %9102 = vmatmul.mubr.bf16.gmra.mrb[0].mxu0 %v8658
      %v9103 = vpop.f32.mrb[0].mxu0
      %v9104 = vadd.f32 %v8943, %v9103
      %v9105 = vpop.f32.mrb[0].mxu0
      %v9106 = vpop.f32.mrb[0].mxu0
      %v9107 = vadd.f32 %v8946, %v9106
      %v9108 = vpop.f32.mrb[0].mxu0
      %9109 = vmatprep.mubr.bf16.mxu0 0
      %9110 = vmatmul.mubr.bf16.gmra.mrb[0].mxu0 %v8661
      %v9111 = vpop.f32.mrb[0].mxu0
      %v9112 = vadd.f32 %v8951, %v9111
      %v9113 = vpop.f32.mrb[0].mxu0
      %v9114 = vpop.f32.mrb[0].mxu0
      %v9115 = vadd.f32 %v8954, %v9114
      %v9116 = vpop.f32.mrb[0].mxu0
      %9117 = vmatprep.mubr.bf16.mxu0 0
      %9118 = vmatmul.mubr.bf16.gmra.mrb[0].mxu0 %v8664
      %v9119 = vpop.f32.mrb[0].mxu0
      %v9120 = vadd.f32 %v8959, %v9119
      %v9121 = vpop.f32.mrb[0].mxu0
      %v9122 = vpop.f32.mrb[0].mxu0
      %v9123 = vadd.f32 %v8962, %v9122
      %v9124 = vpop.f32.mrb[0].mxu0
      %9125 = vmatprep.mubr.bf16.mxu0 0
      %9126 = vmatmul.mubr.bf16.gmra.mrb[0].mxu0 %v8667
      %v9127 = vpop.f32.mrb[0].mxu0
      %v9128 = vadd.f32 %v8967, %v9127
      %v9129 = vpop.f32.mrb[0].mxu0
      %v9130 = vpop.f32.mrb[0].mxu0
      %v9131 = vadd.f32 %v8970, %v9130
      %v9132 = vpop.f32.mrb[0].mxu0
      %9133 = vmatprep.mubr.bf16.mxu0 0
      %9134 = vmatmul.mubr.bf16.gmra.mrb[0].mxu0 %v8670
      %v9135 = vpop.f32.mrb[0].mxu0
      %v9136 = vadd.f32 %v8975, %v9135
      %v9137 = vpop.f32.mrb[0].mxu0
      %v9138 = vpop.f32.mrb[0].mxu0
      %v9139 = vadd.f32 %v8978, %v9138
      %v9140 = vpop.f32.mrb[0].mxu0
      %9141 = vmatprep.mubr.bf16.mxu0 0
      %9142 = vmatmul.mubr.bf16.gmra.mrb[0].mxu0 %v8673
      %v9143 = vpop.f32.mrb[0].mxu0
      %v9144 = vadd.f32 %v8983, %v9143
      %v9145 = vpop.f32.mrb[0].mxu0
      %v9146 = vpop.f32.mrb[0].mxu0
      %v9147 = vadd.f32 %v8986, %v9146
      %v9148 = vpop.f32.mrb[0].mxu0
      %9149 = vmatprep.mubr.bf16.mxu0 0
      %9150 = vmatmul.mubr.bf16.gmra.mrb[0].mxu0 %v6808
      %v9151 = vpop.f32.mrb[0].mxu0
      %v9152 = vadd.f32 %v8991, %v9151
      %v9153 = vpop.f32.mrb[0].mxu0
      %v9154 = vpop.f32.mrb[0].mxu0
      %v9155 = vadd.f32 %v8994, %v9154
      %v9156 = vpop.f32.mrb[0].mxu0
      %9157 = vdwg.mxu0
      %s9158 = scalar_lea.vmem %s249, 17
      %v9159 = vld [vmem:[%s9158] sm:$0x1]
      %v9160 = vadd.f32 %v9159, 1.0
      %v9162 = vlaneseq
      %v9163 = vshrl.u32 %v9162, 7
      %v9164 = vsub.s32 0, %v9163
      %v9165 = vrot.slane %v9160, %v9164
      %v9167 = vmul.f32 %v9032, %v9165
      %v9168 = vmul.f32 %v9035, %v9165
      %v9169 = vmul.f32 %v9040, %v9165
      %v9170 = vmul.f32 %v9043, %v9165
      %v9171 = vmul.f32 %v9048, %v9165
      %v9172 = vmul.f32 %v9051, %v9165
      %v9173 = vmul.f32 %v9056, %v9165
      %v9174 = vmul.f32 %v9059, %v9165
      %v9175 = vmul.f32 %v9064, %v9165
      %v9176 = vmul.f32 %v9067, %v9165
      %v9177 = vmul.f32 %v9072, %v9165
      %v9178 = vmul.f32 %v9075, %v9165
      %v9179 = vmul.f32 %v9080, %v9165
      %v9180 = vmul.f32 %v9083, %v9165
      %v9181 = vmul.f32 %v9088, %v9165
      %v9182 = vmul.f32 %v9091, %v9165
      %v9183 = vmul.f32 %v9096, %v9165
      %v9184 = vmul.f32 %v9099, %v9165
      %v9185 = vmul.f32 %v9104, %v9165
      %v9186 = vmul.f32 %v9107, %v9165
      %v9187 = vmul.f32 %v9112, %v9165
      %v9188 = vmul.f32 %v9115, %v9165
      %v9189 = vmul.f32 %v9120, %v9165
      %v9190 = vmul.f32 %v9123, %v9165
      %v9191 = vmul.f32 %v9128, %v9165
      %v9192 = vmul.f32 %v9131, %v9165
      %v9193 = vmul.f32 %v9136, %v9165
      %v9194 = vmul.f32 %v9139, %v9165
      %v9195 = vmul.f32 %v9144, %v9165
      %v9196 = vmul.f32 %v9147, %v9165
      %v9197 = vmul.f32 %v9152, %v9165
      %v9198 = vmul.f32 %v9155, %v9165
      %s9199 = scalar_lea.vmem %s253, 17
      %v9200 = vld [vmem:[%s9199] sm:$0x1]
      %v9202 = vlaneseq
      %v9203 = vshrl.u32 %v9202, 7
      %v9204 = vsub.s32 0, %v9203
      %v9205 = vrot.slane %v9200, %v9204
      %v9207 = vadd.f32 %v9167, %v9205
      %v9208 = vadd.f32 %v9168, %v9205
      %v9209 = vadd.f32 %v9169, %v9205
      %v9210 = vadd.f32 %v9170, %v9205
      %v9211 = vadd.f32 %v9171, %v9205
      %v9212 = vadd.f32 %v9172, %v9205
      %v9213 = vadd.f32 %v9173, %v9205
      %v9214 = vadd.f32 %v9174, %v9205
      %v9215 = vadd.f32 %v9175, %v9205
      %v9216 = vadd.f32 %v9176, %v9205
      %v9217 = vadd.f32 %v9177, %v9205
      %v9218 = vadd.f32 %v9178, %v9205
      %v9219 = vadd.f32 %v9179, %v9205
      %v9220 = vadd.f32 %v9180, %v9205
      %v9221 = vadd.f32 %v9181, %v9205
      %v9222 = vadd.f32 %v9182, %v9205
      %v9223 = vadd.f32 %v9183, %v9205
      %v9224 = vadd.f32 %v9184, %v9205
      %v9225 = vadd.f32 %v9185, %v9205
      %v9226 = vadd.f32 %v9186, %v9205
      %v9227 = vadd.f32 %v9187, %v9205
      %v9228 = vadd.f32 %v9188, %v9205
      %v9229 = vadd.f32 %v9189, %v9205
      %v9230 = vadd.f32 %v9190, %v9205
      %v9231 = vadd.f32 %v9191, %v9205
      %v9232 = vadd.f32 %v9192, %v9205
      %v9233 = vadd.f32 %v9193, %v9205
      %v9234 = vadd.f32 %v9194, %v9205
      %v9235 = vadd.f32 %v9195, %v9205
      %v9236 = vadd.f32 %v9196, %v9205
      %v9237 = vadd.f32 %v9197, %v9205
      %v9238 = vadd.f32 %v9198, %v9205
      %9239 = vst.msk [vmem:[%s258] sm:$0xff] %vm991, %v9207
      %9240 = vst.msk [vmem:[%s258 + $0x8] sm:$0xff] %vm991, %v9208
      %9241 = vst.msk [vmem:[%s258 + $0x10] sm:$0xff] %vm991, %v9209
      %9242 = vst.msk [vmem:[%s258 + $0x18] sm:$0xff] %vm991, %v9210
      %9243 = vst.msk [vmem:[%s258 + $0x20] sm:$0xff] %vm991, %v9211
      %9244 = vst.msk [vmem:[%s258 + $0x28] sm:$0xff] %vm991, %v9212
      %9245 = vst.msk [vmem:[%s258 + $0x30] sm:$0xff] %vm991, %v9213
      %9246 = vst.msk [vmem:[%s258 + $0x38] sm:$0xff] %vm991, %v9214
      %9247 = vst.msk [vmem:[%s258 + $0x40] sm:$0xff] %vm991, %v9215
      %9248 = vst.msk [vmem:[%s258 + $0x48] sm:$0xff] %vm991, %v9216
      %9249 = vst.msk [vmem:[%s258 + $0x50] sm:$0xff] %vm991, %v9217
      %9250 = vst.msk [vmem:[%s258 + $0x58] sm:$0xff] %vm991, %v9218
      %9251 = vst.msk [vmem:[%s258 + $0x60] sm:$0xff] %vm991, %v9219
      %9252 = vst.msk [vmem:[%s258 + $0x68] sm:$0xff] %vm991, %v9220
      %9253 = vst.msk [vmem:[%s258 + $0x70] sm:$0xff] %vm991, %v9221
      %9254 = vst.msk [vmem:[%s258 + $0x78] sm:$0xff] %vm991, %v9222
      %9255 = vst.msk [vmem:[%s258 + $0x80] sm:$0xff] %vm991, %v9223
      %9256 = vst.msk [vmem:[%s258 + $0x88] sm:$0xff] %vm991, %v9224
      %9257 = vst.msk [vmem:[%s258 + $0x90] sm:$0xff] %vm991, %v9225
      %9258 = vst.msk [vmem:[%s258 + $0x98] sm:$0xff] %vm991, %v9226
      %9259 = vst.msk [vmem:[%s258 + $0xa0] sm:$0xff] %vm991, %v9227
      %9260 = vst.msk [vmem:[%s258 + $0xa8] sm:$0xff] %vm991, %v9228
      %9261 = vst.msk [vmem:[%s258 + $0xb0] sm:$0xff] %vm991, %v9229
      %9262 = vst.msk [vmem:[%s258 + $0xb8] sm:$0xff] %vm991, %v9230
      %9263 = vst.msk [vmem:[%s258 + $0xc0] sm:$0xff] %vm991, %v9231
      %9264 = vst.msk [vmem:[%s258 + $0xc8] sm:$0xff] %vm991, %v9232
      %9265 = vst.msk [vmem:[%s258 + $0xd0] sm:$0xff] %vm991, %v9233
      %9266 = vst.msk [vmem:[%s258 + $0xd8] sm:$0xff] %vm991, %v9234
      %9267 = vst.msk [vmem:[%s258 + $0xe0] sm:$0xff] %vm991, %v9235
      %9268 = vst.msk [vmem:[%s258 + $0xe8] sm:$0xff] %vm991, %v9236
      %9269 = vst.msk [vmem:[%s258 + $0xf0] sm:$0xff] %vm991, %v9237
      %9270 = vst.msk [vmem:[%s258 + $0xf8] sm:$0xff] %vm991, %v9238
      %p9271 = scmp.lt.s32.totalorder %s16, 1
      %s9272 = scalar_select %p9271, %s16, 1
      %s9273 = smul.addr %s9272, 32
      %s9274 = smul.addr %s9273, 8
      %s9275 = scalar_lea.vmem %s5, %s9274
      // Predicated region
      $region48: #{_lambda_.7} parent=39 // pred_check
        %p9276 = pneg %p154
      $region49: #{_lambda_.7} parent=39 // pred_check_branch
        %9278 = sbr.rel (%p9276) target = $region51
      $region50: #{_lambda_.7} parent=39 // pred_region
        _
      $region51: #{_lambda_.7} parent=39 // pred_fallthru
        _
    $region40: #{_lambda_.7} parent=5 // pred_fallthru
      _
    %p9279 = scmp.le.s32.totalorder 2, %s11
    // Predicated region
    $region52: #{_lambda_.7} parent=5 // pred_check
      %p9280 = pneg %p9279
    $region53: #{_lambda_.7} parent=5 // pred_check_branch
      %9282 = sbr.rel (%p9280) target = $region55
    $region54: #{_lambda_.7} parent=5 // pred_region
      %s9283 = ssub.s32 %s11, 2
      // Predicated region
      $region56: #{_lambda_.7} parent=54 // pred_check
        %p9284 = pneg %p160
      $region57: #{_lambda_.7} parent=54 // pred_check_branch
        %9286 = sbr.rel (%p9284) target = $region59
      $region58: #{_lambda_.7} parent=54 // pred_region
        %p9287 = scmp.lt.s32.totalorder %s17, 1
        %s9288 = scalar_select %p9287, %s17, 1
        %s9289 = smul.addr %s9288, 32
        %s9290 = smul.addr %s9289, 8
        %s9291 = scalar_lea.vmem %s5, %s9290
      $region59: #{_lambda_.7} parent=54 // pred_fallthru
        _
    $region55: #{_lambda_.7} parent=5 // pred_fallthru
      _
  $region6: #{_lambda_.7} parent=0 // loop_footer
    %s15 = sadd.s32 1, %s11
  $region7: #{_lambda_.7} parent=0 // loop_footer_branch
    %10 = sbr.rel target = $region3
  $region8: #{_lambda_.7} parent=0 // loop_exit
    _

</llo_original>
